<compile_context>
chip_gen: v7x
topology: tpu7x:2x2x1
jax: 0.10.0
libtpu: 0.0.40
codegen_flags: <defaults>
</compile_context>

<pallas_src>
import jax
import jax.numpy as jnp
from jax.experimental import pallas as pl
from jax.experimental.pallas import tpu as pltpu


# ---------------------------------------------------------------------------
# Kernels 1 & 2: fused matmul + bias + ReLU (bf16 operands, f32 accumulation)
# ---------------------------------------------------------------------------
def _mm_bias_relu_kernel(a_ref, w_ref, b_ref, o_ref):
    acc = jnp.dot(a_ref[...], w_ref[...], preferred_element_type=jnp.float32)
    acc = jnp.maximum(acc + b_ref[...], 0.0)
    o_ref[...] = acc.astype(o_ref.dtype)


def matmul_bias_relu(a, w, b, *, out_dtype=jnp.bfloat16, row_blocks=1):
    M, K = a.shape
    Kw, N = w.shape
    assert K == Kw and M % row_blocks == 0
    tm = M // row_blocks
    return pl.pallas_call(
        _mm_bias_relu_kernel,
        out_shape=jax.ShapeDtypeStruct((M, N), out_dtype),
        grid=(row_blocks,),
        in_specs=[
            pl.BlockSpec((tm, K), lambda i: (i, 0)),
            pl.BlockSpec((K, N), lambda i: (0, 0)),
            pl.BlockSpec((1, N), lambda i: (0, 0)),
        ],
        out_specs=pl.BlockSpec((tm, N), lambda i: (i, 0)),
        compiler_params=pltpu.CompilerParams(
            dimension_semantics=("parallel",)),
    )(a, w, b.reshape(1, N))


# ---------------------------------------------------------------------------
# Kernel 3: fused tail — Conv.fcl -> gated attention -> LSTM cell -> policy
# ---------------------------------------------------------------------------
def _tail_kernel(i2_ref, wfc_ref, bfc_ref,
                 x_ref, wi_ref, bi_ref,
                 wfl_ref, bfl_ref,
                 h0_ref, c0_ref, wih_ref, whh_ref, bl_ref,
                 te_ref, wph_ref, wpt_ref, bp_ref,
                 logit_ref, h_ref, c_ref):
    f32 = jnp.float32
    bf16 = jnp.bfloat16

    # Conv.fcl : I_feat = flatten_nhwc(conv2) @ Wfc + bfc            (B, 64)
    i_feat = (jnp.dot(i2_ref[...], wfc_ref[...], preferred_element_type=f32)
              + bfc_ref[...])

    # g = sigmoid(instr_map(x)).squeeze(1)                           (B, 64)
    g = jax.nn.sigmoid(
        jnp.dot(x_ref[...].astype(bf16), wi_ref[...],
                preferred_element_type=f32) + bi_ref[...])

    # u = I * g ; v = relu(fcl(u))                                   (B, 256)
    u = i_feat * g
    v = jnp.maximum(
        jnp.dot(u.astype(bf16), wfl_ref[...], preferred_element_type=f32)
        + bfl_ref[...], 0.0)

    # single-step LSTM cell, PyTorch gate order [i, f, g, o]
    gates = (jnp.dot(v.astype(bf16), wih_ref[...], preferred_element_type=f32)
             + jnp.dot(h0_ref[...].astype(bf16), whh_ref[...],
                       preferred_element_type=f32)
             + bl_ref[...])                                          # (B, 1024)
    H = 256
    i_g = jax.nn.sigmoid(gates[:, 0 * H:1 * H])
    f_g = jax.nn.sigmoid(gates[:, 1 * H:2 * H])
    g_g = jnp.tanh(gates[:, 2 * H:3 * H])
    o_g = jax.nn.sigmoid(gates[:, 3 * H:4 * H])
    c_new = f_g * c0_ref[...] + i_g * g_g
    h_new = o_g * jnp.tanh(c_new)
    h_ref[...] = h_new
    c_ref[...] = c_new

    # policy head on concat([h, t_emb]) with split, lane-padded weights
    logit_ref[...] = (
        jnp.dot(h_new.astype(bf16), wph_ref[...], preferred_element_type=f32)
        + jnp.dot(te_ref[...].astype(bf16), wpt_ref[...],
                  preferred_element_type=f32)
        + bp_ref[...])


def fused_tail(i2, wfc, bfc, x, wi, bi, wfl, bfl, h0, c0, wih, whh, bl,
               t_emb, wph, wpt, bpol):
    B = x.shape[0]
    ins = (i2, wfc, bfc, x, wi, bi, wfl, bfl, h0, c0, wih, whh, bl,
           t_emb, wph, wpt, bpol)
    in_specs = [pl.BlockSpec(a.shape, lambda *_, n=a.ndim: (0,) * n)
                for a in ins]
    return pl.pallas_call(
        _tail_kernel,
        out_shape=(
            jax.ShapeDtypeStruct((B, 128), jnp.float32),   # padded policy logits
            jax.ShapeDtypeStruct((B, 256), jnp.float32),   # h_t
            jax.ShapeDtypeStruct((B, 256), jnp.float32),   # c_t
        ),
        grid=(1,),
        in_specs=in_specs,
        out_specs=(
            pl.BlockSpec((B, 128), lambda *_: (0, 0)),
            pl.BlockSpec((B, 256), lambda *_: (0, 0)),
            pl.BlockSpec((B, 256), lambda *_: (0, 0)),
        ),
    )(*ins)


# ---------------------------------------------------------------------------
# Full GA forward
# ---------------------------------------------------------------------------
def ga_forward(params, x, I_img, h_t, c_t, t):
    B = x.shape[0]
    bf16 = jnp.bfloat16

    # ---- Conv branch, NHWC end-to-end --------------------------------------
    # conv1(1->128, k8, s4) + ReLU : patches via one fused XLA op, matmul in Pallas.
    img = I_img.astype(bf16)                                   # (B,1,100,100)
    p1 = jax.lax.conv_general_dilated_patches(
        img, filter_shape=(8, 8), window_strides=(4, 4), padding="VALID",
        dimension_numbers=("NCHW", "OIHW", "NHWC"))            # (B,24,24,64), feat=(kh,kw)
    p1 = p1.reshape(B * 24 * 24, 64).astype(bf16)
    act1 = matmul_bias_relu(p1, params["conv1_w"], params["conv1_b"],
                            out_dtype=bf16, row_blocks=2)      # (1152,128) bf16
    act1 = act1.reshape(B, 24, 24, 128)                        # NHWC, free reshape

    # conv2(128->64, k4, s2) + ReLU : strided-slice im2col (fuses to one XLA
    # gather, bf16) + one MXU-friendly (242,2048)@(2048,64) Pallas matmul.
    cols = [act1[:, i:i + 21:2, j:j + 21:2, :]
            for i in range(4) for j in range(4)]               # 16 x (B,11,11,128)
    p2 = jnp.concatenate(cols, axis=-1)                        # (B,11,11,2048), feat=(kh,kw,c)
    p2 = p2.reshape(B * 11 * 11, 16 * 128)
    act2 = matmul_bias_relu(p2, params["conv2_w"], params["conv2_b"],
                            out_dtype=bf16, row_blocks=1)      # (242,64) bf16
    i2 = act2.reshape(B, 11 * 11 * 64)                         # NHWC flatten, free

    # ---- fused tail ---------------------------------------------------------
    x_sq = x.reshape(B, 256)
    h0 = h_t.reshape(B, 256)
    c0 = c_t.reshape(B, 256)
    t_emb = jnp.take(params["time_embed"], t, axis=0).astype(jnp.float32)  # (B,32)

    logits_pad, h_new, c_new = fused_tail(
        i2, params["convfc_w"], params["convfc_b"].reshape(1, 64),
        x_sq, params["instr_w"], params["instr_b"].reshape(1, 64),
        params["fcl_w"], params["fcl_b"].reshape(1, 256),
        h0, c0, params["lstm_wih"], params["lstm_whh"],
        params["lstm_b"].reshape(1, 1024),
        t_emb, params["policy_wh"], params["policy_wt"],
        params["policy_b"].reshape(1, 128))

    a_t = logits_pad[:, :4]
    return a_t, (h_new.reshape(1, B, 256), c_new.reshape(1, B, 256))


# ---------------------------------------------------------------------------
# Deterministic parameter init (PyTorch layouts, permuted once to kernel layouts)
# ---------------------------------------------------------------------------
def init_params(key, max_route_len=55):
    ks = jax.random.split(key, 17)

    def w(k, shape, scale=0.05):
        return (scale * jax.random.normal(k, shape)).astype(jnp.float32)

    bf16 = jnp.bfloat16

    # PyTorch-layout tensors (documenting the exact semantic mapping).
    conv1_w_pt = w(ks[0], (128, 1, 8, 8))        # Conv2d(1,128,8,4).weight
    conv2_w_pt = w(ks[1], (64, 128, 4, 4))       # Conv2d(128,64,4,2).weight
    convfc_w_pt = w(ks[2], (64, 64 * 11 * 11))   # Conv.fcl.weight, in = NCHW flatten
    instr_w_pt = w(ks[3], (64, 256))             # instr_map.weight
    fcl_w_pt = w(ks[4], (256, 64))               # fcl[0].weight
    wih_pt = w(ks[5], (1024, 256))               # lstm.weight_ih_l0, gates [i,f,g,o]
    whh_pt = w(ks[6], (1024, 256))               # lstm.weight_hh_l0
    policy_w_pt = w(ks[7], (4, 288))             # policy.weight on [h(256), t(32)]

    return dict(
        # conv1: im2col rows ordered (kh,kw) — matches conv_general_dilated_patches (Cin=1)
        conv1_w=conv1_w_pt.reshape(128, 64).T.astype(bf16),
        conv1_b=w(ks[8], (128,)),
        # conv2: im2col rows ordered (kh,kw,cin) — matches the slice+concat patch order
        conv2_w=conv2_w_pt.transpose(2, 3, 1, 0).reshape(2048, 64).astype(bf16),
        conv2_b=w(ks[9], (64,)),
        # Conv.fcl: rows permuted from NCHW flatten (c,h,w) to NHWC flatten (h,w,c)
        convfc_w=convfc_w_pt.reshape(64, 64, 11, 11)
                             .transpose(2, 3, 1, 0).reshape(7744, 64).astype(bf16),
        convfc_b=w(ks[10], (64,)),
        instr_w=instr_w_pt.T.astype(bf16),
        instr_b=w(ks[11], (64,)),
        fcl_w=fcl_w_pt.T.astype(bf16),
        fcl_b=w(ks[12], (256,)),
        lstm_wih=wih_pt.T.astype(bf16),           # (256, 1024)
        lstm_whh=whh_pt.T.astype(bf16),           # (256, 1024)
        lstm_b=(w(ks[13], (1024,)) + w(ks[14], (1024,))),   # b_ih + b_hh folded
        # policy: split h / t parts, N padded 4 -> 128 for lane-dense stores
        policy_wh=jnp.pad(policy_w_pt[:, :256].T, ((0, 0), (0, 124))).astype(bf16),
        policy_wt=jnp.pad(policy_w_pt[:, 256:].T, ((0, 0), (0, 124))).astype(bf16),
        policy_b=jnp.pad(w(ks[15], (4,)), (0, 124)),
        time_embed=w(ks[16], (max_route_len, 32), scale=1.0),
    )


if __name__ == "__main__":
    key = jax.random.PRNGKey(0)
    kp, kx, ki, kh, kc = jax.random.split(key, 5)
    B = 2

    params = init_params(kp)
    x = jax.random.normal(kx, (B, 1, 256), dtype=jnp.float32)           # instruction feat
    I_img = jax.random.normal(ki, (B, 1, 100, 100), dtype=jnp.float32)  # NCHW image
    h_t = jax.random.normal(kh, (1, B, 256), dtype=jnp.float32)
    c_t = jax.random.normal(kc, (1, B, 256), dtype=jnp.float32)
    t = jnp.array([0, 3], dtype=jnp.int32)

    fwd = jax.jit(ga_forward)
    a_t, (h_new, c_new) = fwd(params, x, I_img, h_t, c_t, t)
    jax.block_until_ready((a_t, h_new, c_new))

    assert a_t.shape == (B, 4)
    assert h_new.shape == (1, B, 256) and c_new.shape == (1, B, 256)
    print("KERNEL_OK")
</pallas_src>

<mosaic_0001>
module attributes {stable_mosaic.version = 11 : i64} {
  func.func @_mm_bias_relu_kernel(%arg0: i32, %arg1: memref<576x64xbf16, #tpu.memory_space<vmem>>, %arg2: memref<64x128xbf16, #tpu.memory_space<vmem>>, %arg3: memref<1x128xf32, #tpu.memory_space<vmem>>, %arg4: memref<576x128xbf16, #tpu.memory_space<vmem>>) attributes {dimension_semantics = [#tpu.dimension_semantics<parallel>], iteration_bounds = array<i64: 2>, scalar_prefetch = 0 : i64, scratch_operands = 0 : i64, tpu.core_type = #tpu.core_type<tc>, window_params = [{transform_indices = @transform_0, window_bounds = array<i64: 576, 64>}, {pipeline_mode = #tpu.pipeline_mode<synchronous>, transform_indices = @transform_1, window_bounds = array<i64: 64, 128>}, {pipeline_mode = #tpu.pipeline_mode<synchronous>, transform_indices = @transform_2, window_bounds = array<i64: 1, 128>}, {transform_indices = @transform_3, window_bounds = array<i64: 576, 128>}]} {
    %c0 = arith.constant 0 : index
    %c0_0 = arith.constant 0 : index
    %0 = vector.load %arg1[%c0, %c0_0] : memref<576x64xbf16, #tpu.memory_space<vmem>>, vector<576x64xbf16>
    %c0_1 = arith.constant 0 : index
    %c0_2 = arith.constant 0 : index
    %1 = vector.load %arg2[%c0_1, %c0_2] : memref<64x128xbf16, #tpu.memory_space<vmem>>, vector<64x128xbf16>
    %cst = arith.constant dense<0.000000e+00> : vector<576x128xf32>
    %2 = tpu.matmul %0, %1, %cst {dimension_numbers = #tpu.dot_dimension_numbers<[1], [0], [0], [1], [0, 0, 1, 1], [], []>} : vector<576x64xbf16>, vector<64x128xbf16>, vector<576x128xf32> -> vector<576x128xf32>
    %c0_3 = arith.constant 0 : index
    %c0_4 = arith.constant 0 : index
    %3 = vector.load %arg3[%c0_3, %c0_4] : memref<1x128xf32, #tpu.memory_space<vmem>>, vector<1x128xf32>
    %4 = vector.broadcast %3 : vector<1x128xf32> to vector<576x128xf32>
    %5 = arith.addf %2, %4 : vector<576x128xf32>
    %cst_5 = arith.constant 0.000000e+00 : f32
    %6 = vector.broadcast %cst_5 : f32 to vector<576x128xf32>
    %7 = arith.maximumf %5, %6 : vector<576x128xf32>
    %8 = arith.truncf %7 : vector<576x128xf32> to vector<576x128xbf16>
    %c0_6 = arith.constant 0 : index
    %c0_7 = arith.constant 0 : index
    %9 = vector.load %arg4[%c0_6, %c0_7] : memref<576x128xbf16, #tpu.memory_space<vmem>>, vector<576x128xbf16>
    tpu.vector_store %arg4[%c0_6, %c0_7], %8 {strides = array<i32>} : memref<576x128xbf16, #tpu.memory_space<vmem>>, vector<576x128xbf16>,
    return
  }
  func.func @transform_0(%arg0: i32) -> (i32, i32) {
    %c0_i32 = arith.constant 0 : i32
    %c0_i32_0 = arith.constant 0 : i32
    return %arg0, %c0_i32 : i32, i32
  }
  func.func @transform_1(%arg0: i32) -> (i32, i32) {
    %c0_i32 = arith.constant 0 : i32
    %c0_i32_0 = arith.constant 0 : i32
    %c0_i32_1 = arith.constant 0 : i32
    return %c0_i32, %c0_i32_0 : i32, i32
  }
  func.func @transform_2(%arg0: i32) -> (i32, i32) {
    %c0_i32 = arith.constant 0 : i32
    %c0_i32_0 = arith.constant 0 : i32
    %c0_i32_1 = arith.constant 0 : i32
    return %c0_i32, %c0_i32_0 : i32, i32
  }
  func.func @transform_3(%arg0: i32) -> (i32, i32) {
    %c0_i32 = arith.constant 0 : i32
    %c0_i32_0 = arith.constant 0 : i32
    return %arg0, %c0_i32 : i32, i32
  }
}

module attributes {stable_mosaic.version = 11 : i64} {
  func.func @_mm_bias_relu_kernel(%arg0: i32, %arg1: memref<242x2048xbf16, #tpu.memory_space<vmem>>, %arg2: memref<2048x64xbf16, #tpu.memory_space<vmem>>, %arg3: memref<1x64xf32, #tpu.memory_space<vmem>>, %arg4: memref<242x64xbf16, #tpu.memory_space<vmem>>) attributes {dimension_semantics = [#tpu.dimension_semantics<parallel>], iteration_bounds = array<i64: 1>, scalar_prefetch = 0 : i64, scratch_operands = 0 : i64, tpu.core_type = #tpu.core_type<tc>, window_params = [{transform_indices = @transform_0, window_bounds = array<i64: 242, 2048>}, {pipeline_mode = #tpu.pipeline_mode<synchronous>, transform_indices = @transform_1, window_bounds = array<i64: 2048, 64>}, {pipeline_mode = #tpu.pipeline_mode<synchronous>, transform_indices = @transform_2, window_bounds = array<i64: 1, 64>}, {transform_indices = @transform_3, window_bounds = array<i64: 242, 64>}]} {
    %c0 = arith.constant 0 : index
    %c0_0 = arith.constant 0 : index
    %0 = vector.load %arg1[%c0, %c0_0] : memref<242x2048xbf16, #tpu.memory_space<vmem>>, vector<242x2048xbf16>
    %c0_1 = arith.constant 0 : index
    %c0_2 = arith.constant 0 : index
    %1 = vector.load %arg2[%c0_1, %c0_2] : memref<2048x64xbf16, #tpu.memory_space<vmem>>, vector<2048x64xbf16>
    %cst = arith.constant dense<0.000000e+00> : vector<242x64xf32>
    %2 = tpu.matmul %0, %1, %cst {dimension_numbers = #tpu.dot_dimension_numbers<[1], [0], [0], [1], [0, 0, 1, 1], [], []>} : vector<242x2048xbf16>, vector<2048x64xbf16>, vector<242x64xf32> -> vector<242x64xf32>
    %c0_3 = arith.constant 0 : index
    %c0_4 = arith.constant 0 : index
    %3 = vector.load %arg3[%c0_3, %c0_4] : memref<1x64xf32, #tpu.memory_space<vmem>>, vector<1x64xf32>
    %4 = vector.broadcast %3 : vector<1x64xf32> to vector<242x64xf32>
    %5 = arith.addf %2, %4 : vector<242x64xf32>
    %cst_5 = arith.constant 0.000000e+00 : f32
    %6 = vector.broadcast %cst_5 : f32 to vector<242x64xf32>
    %7 = arith.maximumf %5, %6 : vector<242x64xf32>
    %8 = arith.truncf %7 : vector<242x64xf32> to vector<242x64xbf16>
    %c0_6 = arith.constant 0 : index
    %c0_7 = arith.constant 0 : index
    %9 = vector.load %arg4[%c0_6, %c0_7] : memref<242x64xbf16, #tpu.memory_space<vmem>>, vector<242x64xbf16>
    tpu.vector_store %arg4[%c0_6, %c0_7], %8 {strides = array<i32>} : memref<242x64xbf16, #tpu.memory_space<vmem>>, vector<242x64xbf16>,
    return
  }
  func.func @transform_0(%arg0: i32) -> (i32, i32) {
    %c0_i32 = arith.constant 0 : i32
    %c0_i32_0 = arith.constant 0 : i32
    return %arg0, %c0_i32 : i32, i32
  }
  func.func @transform_1(%arg0: i32) -> (i32, i32) {
    %c0_i32 = arith.constant 0 : i32
    %c0_i32_0 = arith.constant 0 : i32
    %c0_i32_1 = arith.constant 0 : i32
    return %c0_i32, %c0_i32_0 : i32, i32
  }
  func.func @transform_2(%arg0: i32) -> (i32, i32) {
    %c0_i32 = arith.constant 0 : i32
    %c0_i32_0 = arith.constant 0 : i32
    %c0_i32_1 = arith.constant 0 : i32
    return %c0_i32, %c0_i32_0 : i32, i32
  }
  func.func @transform_3(%arg0: i32) -> (i32, i32) {
    %c0_i32 = arith.constant 0 : i32
    %c0_i32_0 = arith.constant 0 : i32
    return %arg0, %c0_i32 : i32, i32
  }
}

module attributes {stable_mosaic.version = 11 : i64} {
  func.func @_tail_kernel(%arg0: i32, %arg1: memref<2x7744xbf16, #tpu.memory_space<vmem>>, %arg2: memref<7744x64xbf16, #tpu.memory_space<vmem>>, %arg3: memref<1x64xf32, #tpu.memory_space<vmem>>, %arg4: memref<2x256xf32, #tpu.memory_space<vmem>>, %arg5: memref<256x64xbf16, #tpu.memory_space<vmem>>, %arg6: memref<1x64xf32, #tpu.memory_space<vmem>>, %arg7: memref<64x256xbf16, #tpu.memory_space<vmem>>, %arg8: memref<1x256xf32, #tpu.memory_space<vmem>>, %arg9: memref<2x256xf32, #tpu.memory_space<vmem>>, %arg10: memref<2x256xf32, #tpu.memory_space<vmem>>, %arg11: memref<256x1024xbf16, #tpu.memory_space<vmem>>, %arg12: memref<256x1024xbf16, #tpu.memory_space<vmem>>, %arg13: memref<1x1024xf32, #tpu.memory_space<vmem>>, %arg14: memref<2x32xf32, #tpu.memory_space<vmem>>, %arg15: memref<256x128xbf16, #tpu.memory_space<vmem>>, %arg16: memref<32x128xbf16, #tpu.memory_space<vmem>>, %arg17: memref<1x128xf32, #tpu.memory_space<vmem>>, %arg18: memref<2x128xf32, #tpu.memory_space<vmem>>, %arg19: memref<2x256xf32, #tpu.memory_space<vmem>>, %arg20: memref<2x256xf32, #tpu.memory_space<vmem>>) attributes {dimension_semantics = [#tpu.dimension_semantics<arbitrary>], iteration_bounds = array<i64: 1>, scalar_prefetch = 0 : i64, scratch_operands = 0 : i64, tpu.core_type = #tpu.core_type<tc>, window_params = [{pipeline_mode = #tpu.pipeline_mode<synchronous>, transform_indices = @transform_0, window_bounds = array<i64: 2, 7744>}, {pipeline_mode = #tpu.pipeline_mode<synchronous>, transform_indices = @transform_1, window_bounds = array<i64: 7744, 64>}, {pipeline_mode = #tpu.pipeline_mode<synchronous>, transform_indices = @transform_2, window_bounds = array<i64: 1, 64>}, {pipeline_mode = #tpu.pipeline_mode<synchronous>, transform_indices = @transform_3, window_bounds = array<i64: 2, 256>}, {pipeline_mode = #tpu.pipeline_mode<synchronous>, transform_indices = @transform_4, window_bounds = array<i64: 256, 64>}, {pipeline_mode = #tpu.pipeline_mode<synchronous>, transform_indices = @transform_5, window_bounds = array<i64: 1, 64>}, {pipeline_mode = #tpu.pipeline_mode<synchronous>, transform_indices = @transform_6, window_bounds = array<i64: 64, 256>}, {pipeline_mode = #tpu.pipeline_mode<synchronous>, transform_indices = @transform_7, window_bounds = array<i64: 1, 256>}, {pipeline_mode = #tpu.pipeline_mode<synchronous>, transform_indices = @transform_8, window_bounds = array<i64: 2, 256>}, {pipeline_mode = #tpu.pipeline_mode<synchronous>, transform_indices = @transform_9, window_bounds = array<i64: 2, 256>}, {pipeline_mode = #tpu.pipeline_mode<synchronous>, transform_indices = @transform_10, window_bounds = array<i64: 256, 1024>}, {pipeline_mode = #tpu.pipeline_mode<synchronous>, transform_indices = @transform_11, window_bounds = array<i64: 256, 1024>}, {pipeline_mode = #tpu.pipeline_mode<synchronous>, transform_indices = @transform_12, window_bounds = array<i64: 1, 1024>}, {pipeline_mode = #tpu.pipeline_mode<synchronous>, transform_indices = @transform_13, window_bounds = array<i64: 2, 32>}, {pipeline_mode = #tpu.pipeline_mode<synchronous>, transform_indices = @transform_14, window_bounds = array<i64: 256, 128>}, {pipeline_mode = #tpu.pipeline_mode<synchronous>, transform_indices = @transform_15, window_bounds = array<i64: 32, 128>}, {pipeline_mode = #tpu.pipeline_mode<synchronous>, transform_indices = @transform_16, window_bounds = array<i64: 1, 128>}, {pipeline_mode = #tpu.pipeline_mode<synchronous>, transform_indices = @transform_17, window_bounds = array<i64: 2, 128>}, {pipeline_mode = #tpu.pipeline_mode<synchronous>, transform_indices = @transform_18, window_bounds = array<i64: 2, 256>}, {pipeline_mode = #tpu.pipeline_mode<synchronous>, transform_indices = @transform_19, window_bounds = array<i64: 2, 256>}]} {
    %c0 = arith.constant 0 : index
    %c0_0 = arith.constant 0 : index
    %0 = vector.load %arg1[%c0, %c0_0] : memref<2x7744xbf16, #tpu.memory_space<vmem>>, vector<2x7744xbf16>
    %c0_1 = arith.constant 0 : index
    %c0_2 = arith.constant 0 : index
    %1 = vector.load %arg2[%c0_1, %c0_2] : memref<7744x64xbf16, #tpu.memory_space<vmem>>, vector<7744x64xbf16>
    %cst = arith.constant dense<0.000000e+00> : vector<2x64xf32>
    %2 = tpu.matmul %0, %1, %cst {dimension_numbers = #tpu.dot_dimension_numbers<[1], [0], [0], [1], [0, 0, 1, 1], [], []>} : vector<2x7744xbf16>, vector<7744x64xbf16>, vector<2x64xf32> -> vector<2x64xf32>
    %c0_3 = arith.constant 0 : index
    %c0_4 = arith.constant 0 : index
    %3 = vector.load %arg3[%c0_3, %c0_4] : memref<1x64xf32, #tpu.memory_space<vmem>>, vector<1x64xf32>
    %4 = vector.broadcast %3 : vector<1x64xf32> to vector<2x64xf32>
    %5 = arith.addf %2, %4 : vector<2x64xf32>
    %c0_5 = arith.constant 0 : index
    %c0_6 = arith.constant 0 : index
    %6 = vector.load %arg4[%c0_5, %c0_6] : memref<2x256xf32, #tpu.memory_space<vmem>>, vector<2x256xf32>
    %7 = arith.truncf %6 : vector<2x256xf32> to vector<2x256xbf16>
    %c0_7 = arith.constant 0 : index
    %c0_8 = arith.constant 0 : index
    %8 = vector.load %arg5[%c0_7, %c0_8] : memref<256x64xbf16, #tpu.memory_space<vmem>>, vector<256x64xbf16>
    %cst_9 = arith.constant dense<0.000000e+00> : vector<2x64xf32>
    %9 = tpu.matmul %7, %8, %cst_9 {dimension_numbers = #tpu.dot_dimension_numbers<[1], [0], [0], [1], [0, 0, 1, 1], [], []>} : vector<2x256xbf16>, vector<256x64xbf16>, vector<2x64xf32> -> vector<2x64xf32>
    %c0_10 = arith.constant 0 : index
    %c0_11 = arith.constant 0 : index
    %10 = vector.load %arg6[%c0_10, %c0_11] : memref<1x64xf32, #tpu.memory_space<vmem>>, vector<1x64xf32>
    %11 = vector.broadcast %10 : vector<1x64xf32> to vector<2x64xf32>
    %12 = arith.addf %9, %11 : vector<2x64xf32>
    %13 = arith.negf %12 : vector<2x64xf32>
    %14 = math.exp %13 : vector<2x64xf32>
    %cst_12 = arith.constant 1.000000e+00 : f32
    %15 = vector.broadcast %cst_12 : f32 to vector<2x64xf32>
    %16 = arith.addf %15, %14 : vector<2x64xf32>
    %17 = arith.divf %15, %16 : vector<2x64xf32>
    %18 = arith.mulf %5, %17 : vector<2x64xf32>
    %19 = arith.truncf %18 : vector<2x64xf32> to vector<2x64xbf16>
    %c0_13 = arith.constant 0 : index
    %c0_14 = arith.constant 0 : index
    %20 = vector.load %arg7[%c0_13, %c0_14] : memref<64x256xbf16, #tpu.memory_space<vmem>>, vector<64x256xbf16>
    %cst_15 = arith.constant dense<0.000000e+00> : vector<2x256xf32>
    %21 = tpu.matmul %19, %20, %cst_15 {dimension_numbers = #tpu.dot_dimension_numbers<[1], [0], [0], [1], [0, 0, 1, 1], [], []>} : vector<2x64xbf16>, vector<64x256xbf16>, vector<2x256xf32> -> vector<2x256xf32>
    %c0_16 = arith.constant 0 : index
    %c0_17 = arith.constant 0 : index
    %22 = vector.load %arg8[%c0_16, %c0_17] : memref<1x256xf32, #tpu.memory_space<vmem>>, vector<1x256xf32>
    %23 = vector.broadcast %22 : vector<1x256xf32> to vector<2x256xf32>
    %24 = arith.addf %21, %23 : vector<2x256xf32>
    %cst_18 = arith.constant 0.000000e+00 : f32
    %25 = vector.broadcast %cst_18 : f32 to vector<2x256xf32>
    %26 = arith.maximumf %24, %25 : vector<2x256xf32>
    %27 = arith.truncf %26 : vector<2x256xf32> to vector<2x256xbf16>
    %c0_19 = arith.constant 0 : index
    %c0_20 = arith.constant 0 : index
    %28 = vector.load %arg11[%c0_19, %c0_20] : memref<256x1024xbf16, #tpu.memory_space<vmem>>, vector<256x1024xbf16>
    %cst_21 = arith.constant dense<0.000000e+00> : vector<2x1024xf32>
    %29 = tpu.matmul %27, %28, %cst_21 {dimension_numbers = #tpu.dot_dimension_numbers<[1], [0], [0], [1], [0, 0, 1, 1], [], []>} : vector<2x256xbf16>, vector<256x1024xbf16>, vector<2x1024xf32> -> vector<2x1024xf32>
    %c0_22 = arith.constant 0 : index
    %c0_23 = arith.constant 0 : index
    %30 = vector.load %arg9[%c0_22, %c0_23] : memref<2x256xf32, #tpu.memory_space<vmem>>, vector<2x256xf32>
    %31 = arith.truncf %30 : vector<2x256xf32> to vector<2x256xbf16>
    %c0_24 = arith.constant 0 : index
    %c0_25 = arith.constant 0 : index
    %32 = vector.load %arg12[%c0_24, %c0_25] : memref<256x1024xbf16, #tpu.memory_space<vmem>>, vector<256x1024xbf16>
    %cst_26 = arith.constant dense<0.000000e+00> : vector<2x1024xf32>
    %33 = tpu.matmul %31, %32, %cst_26 {dimension_numbers = #tpu.dot_dimension_numbers<[1], [0], [0], [1], [0, 0, 1, 1], [], []>} : vector<2x256xbf16>, vector<256x1024xbf16>, vector<2x1024xf32> -> vector<2x1024xf32>
    %34 = arith.addf %29, %33 : vector<2x1024xf32>
    %c0_27 = arith.constant 0 : index
    %c0_28 = arith.constant 0 : index
    %35 = vector.load %arg13[%c0_27, %c0_28] : memref<1x1024xf32, #tpu.memory_space<vmem>>, vector<1x1024xf32>
    %36 = vector.broadcast %35 : vector<1x1024xf32> to vector<2x1024xf32>
    %37 = arith.addf %34, %36 : vector<2x1024xf32>
    %38 = vector.extract_strided_slice %37 {offsets = [0, 0], sizes = [2, 256], strides = [1, 1]} : vector<2x1024xf32> to vector<2x256xf32>
    %39 = arith.negf %38 : vector<2x256xf32>
    %40 = math.exp %39 : vector<2x256xf32>
    %cst_29 = arith.constant 1.000000e+00 : f32
    %41 = vector.broadcast %cst_29 : f32 to vector<2x256xf32>
    %42 = arith.addf %41, %40 : vector<2x256xf32>
    %43 = arith.divf %41, %42 : vector<2x256xf32>
    %44 = vector.extract_strided_slice %37 {offsets = [0, 256], sizes = [2, 256], strides = [1, 1]} : vector<2x1024xf32> to vector<2x256xf32>
    %45 = arith.negf %44 : vector<2x256xf32>
    %46 = math.exp %45 : vector<2x256xf32>
    %cst_30 = arith.constant 1.000000e+00 : f32
    %47 = vector.broadcast %cst_30 : f32 to vector<2x256xf32>
    %48 = arith.addf %47, %46 : vector<2x256xf32>
    %49 = arith.divf %47, %48 : vector<2x256xf32>
    %50 = vector.extract_strided_slice %37 {offsets = [0, 512], sizes = [2, 256], strides = [1, 1]} : vector<2x1024xf32> to vector<2x256xf32>
    %51 = math.tanh %50 : vector<2x256xf32>
    %52 = vector.extract_strided_slice %37 {offsets = [0, 768], sizes = [2, 256], strides = [1, 1]} : vector<2x1024xf32> to vector<2x256xf32>
    %53 = arith.negf %52 : vector<2x256xf32>
    %54 = math.exp %53 : vector<2x256xf32>
    %cst_31 = arith.constant 1.000000e+00 : f32
    %55 = vector.broadcast %cst_31 : f32 to vector<2x256xf32>
    %56 = arith.addf %55, %54 : vector<2x256xf32>
    %57 = arith.divf %55, %56 : vector<2x256xf32>
    %c0_32 = arith.constant 0 : index
    %c0_33 = arith.constant 0 : index
    %58 = vector.load %arg10[%c0_32, %c0_33] : memref<2x256xf32, #tpu.memory_space<vmem>>, vector<2x256xf32>
    %59 = arith.mulf %49, %58 : vector<2x256xf32>
    %60 = arith.mulf %43, %51 : vector<2x256xf32>
    %61 = arith.addf %59, %60 : vector<2x256xf32>
    %62 = math.tanh %61 : vector<2x256xf32>
    %63 = arith.mulf %57, %62 : vector<2x256xf32>
    %c0_34 = arith.constant 0 : index
    %c0_35 = arith.constant 0 : index
    %64 = vector.load %arg19[%c0_34, %c0_35] : memref<2x256xf32, #tpu.memory_space<vmem>>, vector<2x256xf32>
    tpu.vector_store %arg19[%c0_34, %c0_35], %63 {strides = array<i32>} : memref<2x256xf32, #tpu.memory_space<vmem>>, vector<2x256xf32>,
    %c0_36 = arith.constant 0 : index
    %c0_37 = arith.constant 0 : index
    %65 = vector.load %arg20[%c0_36, %c0_37] : memref<2x256xf32, #tpu.memory_space<vmem>>, vector<2x256xf32>
    tpu.vector_store %arg20[%c0_36, %c0_37], %61 {strides = array<i32>} : memref<2x256xf32, #tpu.memory_space<vmem>>, vector<2x256xf32>,
    %66 = arith.truncf %63 : vector<2x256xf32> to vector<2x256xbf16>
    %c0_38 = arith.constant 0 : index
    %c0_39 = arith.constant 0 : index
    %67 = vector.load %arg15[%c0_38, %c0_39] : memref<256x128xbf16, #tpu.memory_space<vmem>>, vector<256x128xbf16>
    %cst_40 = arith.constant dense<0.000000e+00> : vector<2x128xf32>
    %68 = tpu.matmul %66, %67, %cst_40 {dimension_numbers = #tpu.dot_dimension_numbers<[1], [0], [0], [1], [0, 0, 1, 1], [], []>} : vector<2x256xbf16>, vector<256x128xbf16>, vector<2x128xf32> -> vector<2x128xf32>
    %c0_41 = arith.constant 0 : index
    %c0_42 = arith.constant 0 : index
    %69 = vector.load %arg14[%c0_41, %c0_42] : memref<2x32xf32, #tpu.memory_space<vmem>>, vector<2x32xf32>
    %70 = arith.truncf %69 : vector<2x32xf32> to vector<2x32xbf16>
    %c0_43 = arith.constant 0 : index
    %c0_44 = arith.constant 0 : index
    %71 = vector.load %arg16[%c0_43, %c0_44] : memref<32x128xbf16, #tpu.memory_space<vmem>>, vector<32x128xbf16>
    %cst_45 = arith.constant dense<0.000000e+00> : vector<2x128xf32>
    %72 = tpu.matmul %70, %71, %cst_45 {dimension_numbers = #tpu.dot_dimension_numbers<[1], [0], [0], [1], [0, 0, 1, 1], [], []>} : vector<2x32xbf16>, vector<32x128xbf16>, vector<2x128xf32> -> vector<2x128xf32>
    %73 = arith.addf %68, %72 : vector<2x128xf32>
    %c0_46 = arith.constant 0 : index
    %c0_47 = arith.constant 0 : index
    %74 = vector.load %arg17[%c0_46, %c0_47] : memref<1x128xf32, #tpu.memory_space<vmem>>, vector<1x128xf32>
    %75 = vector.broadcast %74 : vector<1x128xf32> to vector<2x128xf32>
    %76 = arith.addf %73, %75 : vector<2x128xf32>
    %c0_48 = arith.constant 0 : index
    %c0_49 = arith.constant 0 : index
    %77 = vector.load %arg18[%c0_48, %c0_49] : memref<2x128xf32, #tpu.memory_space<vmem>>, vector<2x128xf32>
    tpu.vector_store %arg18[%c0_48, %c0_49], %76 {strides = array<i32>} : memref<2x128xf32, #tpu.memory_space<vmem>>, vector<2x128xf32>,
    return
  }
  func.func @transform_0(%arg0: i32) -> (i32, i32) {
    %c0_i32 = arith.constant 0 : i32
    %c0_i32_0 = arith.constant 0 : i32
    %c0_i32_1 = arith.constant 0 : i32
    return %c0_i32, %c0_i32_0 : i32, i32
  }
  func.func @transform_1(%arg0: i32) -> (i32, i32) {
    %c0_i32 = arith.constant 0 : i32
    %c0_i32_0 = arith.constant 0 : i32
    %c0_i32_1 = arith.constant 0 : i32
    return %c0_i32, %c0_i32_0 : i32, i32
  }
  func.func @transform_2(%arg0: i32) -> (i32, i32) {
    %c0_i32 = arith.constant 0 : i32
    %c0_i32_0 = arith.constant 0 : i32
    %c0_i32_1 = arith.constant 0 : i32
    return %c0_i32, %c0_i32_0 : i32, i32
  }
  func.func @transform_3(%arg0: i32) -> (i32, i32) {
    %c0_i32 = arith.constant 0 : i32
    %c0_i32_0 = arith.constant 0 : i32
    %c0_i32_1 = arith.constant 0 : i32
    return %c0_i32, %c0_i32_0 : i32, i32
  }
  func.func @transform_4(%arg0: i32) -> (i32, i32) {
    %c0_i32 = arith.constant 0 : i32
    %c0_i32_0 = arith.constant 0 : i32
    %c0_i32_1 = arith.constant 0 : i32
    return %c0_i32, %c0_i32_0 : i32, i32
  }
  func.func @transform_5(%arg0: i32) -> (i32, i32) {
    %c0_i32 = arith.constant 0 : i32
    %c0_i32_0 = arith.constant 0 : i32
    %c0_i32_1 = arith.constant 0 : i32
    return %c0_i32, %c0_i32_0 : i32, i32
  }
  func.func @transform_6(%arg0: i32) -> (i32, i32) {
    %c0_i32 = arith.constant 0 : i32
    %c0_i32_0 = arith.constant 0 : i32
    %c0_i32_1 = arith.constant 0 : i32
    return %c0_i32, %c0_i32_0 : i32, i32
  }
  func.func @transform_7(%arg0: i32) -> (i32, i32) {
    %c0_i32 = arith.constant 0 : i32
    %c0_i32_0 = arith.constant 0 : i32
    %c0_i32_1 = arith.constant 0 : i32
    return %c0_i32, %c0_i32_0 : i32, i32
  }
  func.func @transform_8(%arg0: i32) -> (i32, i32) {
    %c0_i32 = arith.constant 0 : i32
    %c0_i32_0 = arith.constant 0 : i32
    %c0_i32_1 = arith.constant 0 : i32
    return %c0_i32, %c0_i32_0 : i32, i32
  }
  func.func @transform_9(%arg0: i32) -> (i32, i32) {
    %c0_i32 = arith.constant 0 : i32
    %c0_i32_0 = arith.constant 0 : i32
    %c0_i32_1 = arith.constant 0 : i32
    return %c0_i32, %c0_i32_0 : i32, i32
  }
  func.func @transform_10(%arg0: i32) -> (i32, i32) {
    %c0_i32 = arith.constant 0 : i32
    %c0_i32_0 = arith.constant 0 : i32
    %c0_i32_1 = arith.constant 0 : i32
    return %c0_i32, %c0_i32_0 : i32, i32
  }
  func.func @transform_11(%arg0: i32) -> (i32, i32) {
    %c0_i32 = arith.constant 0 : i32
    %c0_i32_0 = arith.constant 0 : i32
    %c0_i32_1 = arith.constant 0 : i32
    return %c0_i32, %c0_i32_0 : i32, i32
  }
  func.func @transform_12(%arg0: i32) -> (i32, i32) {
    %c0_i32 = arith.constant 0 : i32
    %c0_i32_0 = arith.constant 0 : i32
    %c0_i32_1 = arith.constant 0 : i32
    return %c0_i32, %c0_i32_0 : i32, i32
  }
  func.func @transform_13(%arg0: i32) -> (i32, i32) {
    %c0_i32 = arith.constant 0 : i32
    %c0_i32_0 = arith.constant 0 : i32
    %c0_i32_1 = arith.constant 0 : i32
    return %c0_i32, %c0_i32_0 : i32, i32
  }
  func.func @transform_14(%arg0: i32) -> (i32, i32) {
    %c0_i32 = arith.constant 0 : i32
    %c0_i32_0 = arith.constant 0 : i32
    %c0_i32_1 = arith.constant 0 : i32
    return %c0_i32, %c0_i32_0 : i32, i32
  }
  func.func @transform_15(%arg0: i32) -> (i32, i32) {
    %c0_i32 = arith.constant 0 : i32
    %c0_i32_0 = arith.constant 0 : i32
    %c0_i32_1 = arith.constant 0 : i32
    return %c0_i32, %c0_i32_0 : i32, i32
  }
  func.func @transform_16(%arg0: i32) -> (i32, i32) {
    %c0_i32 = arith.constant 0 : i32
    %c0_i32_0 = arith.constant 0 : i32
    %c0_i32_1 = arith.constant 0 : i32
    return %c0_i32, %c0_i32_0 : i32, i32
  }
  func.func @transform_17(%arg0: i32) -> (i32, i32) {
    %c0_i32 = arith.constant 0 : i32
    %c0_i32_0 = arith.constant 0 : i32
    %c0_i32_1 = arith.constant 0 : i32
    return %c0_i32, %c0_i32_0 : i32, i32
  }
  func.func @transform_18(%arg0: i32) -> (i32, i32) {
    %c0_i32 = arith.constant 0 : i32
    %c0_i32_0 = arith.constant 0 : i32
    %c0_i32_1 = arith.constant 0 : i32
    return %c0_i32, %c0_i32_0 : i32, i32
  }
  func.func @transform_19(%arg0: i32) -> (i32, i32) {
    %c0_i32 = arith.constant 0 : i32
    %c0_i32_0 = arith.constant 0 : i32
    %c0_i32_1 = arith.constant 0 : i32
    return %c0_i32, %c0_i32_0 : i32, i32
  }
}

</mosaic_0001>

<llo_original>
// kernel: ga_forward.3
$region0: #{ga_forward.3}
  #allocation0 [shape = 'u32[]', space=smem, size = 0x4, offset = 0x4, fixed_abs, tag = 'smem constant byte address 0x4 - core index']
  #allocation1 [shape = 'u32[144,128]{1,0:T(1,128)}', space=vmem, size = 0x12000, scoped, tag = 'internal scratch']
  %s0 = inlined_call_operand.vmem [shape: bf16[1152,64], index: 0, kind: input, shape index: {}]
  %s1 = inlined_call_operand.vmem [shape: bf16[64,128], index: 1, kind: input, shape index: {}]
  %s2 = inlined_call_operand.vmem [shape: f32[1,128], index: 2, kind: input, shape index: {}]
  %s3 = inlined_call_operand.vmem [shape: bf16[1152,128], index: 3, kind: output, shape index: {}]
  %s4 = sld [smem:[#allocation0]]
  $region45: #{ga_forward.3} parent=0
    _
  %s6 = ssub.s32 1, %s4
  %s7 = scalar_select 0, %s6, %s4
  loop: start=0, step=1, limit=4
  $region2: #{ga_forward.3} parent=0 // loop_pre_header
    _
  $region3: #{ga_forward.3} parent=0 // loop_header
    %s9 = sphi 0, %s13
    %p10 = scmp.ge.s32.totalorder %s9, 4
    %s19 = sphi 0, %s21
    %s22 = sphi 0, %s19
    %s23 = sphi 0, %s22
    %s39 = sphi 0, %s23
    %s43 = sphi 0, %s43
    %s45 = sphi 0, %s43
    %s46 = sphi 0, %s45
    %s60 = sphi 0, %s46
    %s64 = sphi 0, %s64
    %s66 = sphi 0, %s64
    %s67 = sphi 0, %s66
    %s81 = sphi 0, %s67
    %s87 = sphi 0, %s89
    %s90 = sphi 0, %s87
    %s91 = sphi 0, %s90
    %s107 = sphi 0, %s91
  $region4: #{ga_forward.3} parent=0 // loop_header_branch
    %12 = sbr.rel (%p10) target = $region8
  $region5: #{ga_forward.3} parent=0 // loop_body
    %s14 = ssub.s32 %s9, 1
    %s15 = ssub.s32 %s9, 2
    %s16 = sadd.s32 %s9, 1
    %s17 = ssub.s32 %s9, %s16
    %p18 = scmp.eq.s32.totalorder %s17, 0
    %s20 = sadd.s32 %s19, 1
    %s21 = scalar_select %p18, %s19, %s20
    %p24 = pneg %p18
    %p25 = scmp.eq.s32.totalorder %s9, 1
    %p26 = por %p24, %p25
    %p27 = scmp.ne.s32.totalorder %s19, %s22
    %p28 = scmp.eq.s32.totalorder %s9, 0
    %p29 = por %p27, %p28
    %p30 = scmp.ne.s32.totalorder %s19, %s22
    %p31 = scmp.eq.s32.totalorder %s14, 1
    %p32 = por %p30, %p31
    %p33 = scmp.ne.s32.totalorder %s22, %s23
    %p34 = scmp.eq.s32.totalorder %s14, 0
    %p35 = por %p33, %p34
    %p36 = scmp.ne.s32.totalorder %s22, %s23
    %p37 = scmp.eq.s32.totalorder %s15, 1
    %p38 = por %p36, %p37
    %p40 = scmp.ne.s32.totalorder %s23, %s39
    %p41 = scmp.eq.s32.totalorder %s15, 0
    %p42 = por %p40, %p41
    %s44 = sadd.s32 %s43, 1
    %p47 = scmp.eq.s32.totalorder %s9, 1
    %p48 = scmp.ne.s32.totalorder %s43, %s45
    %p49 = scmp.eq.s32.totalorder %s9, 0
    %p50 = por %p48, %p49
    %p51 = scmp.ne.s32.totalorder %s43, %s45
    %p52 = scmp.eq.s32.totalorder %s14, 1
    %p53 = por %p51, %p52
    %p54 = scmp.ne.s32.totalorder %s45, %s46
    %p55 = scmp.eq.s32.totalorder %s14, 0
    %p56 = por %p54, %p55
    %p57 = scmp.ne.s32.totalorder %s45, %s46
    %p58 = scmp.eq.s32.totalorder %s15, 1
    %p59 = por %p57, %p58
    %p61 = scmp.ne.s32.totalorder %s46, %s60
    %p62 = scmp.eq.s32.totalorder %s15, 0
    %p63 = por %p61, %p62
    %s65 = sadd.s32 %s64, 1
    %p68 = scmp.eq.s32.totalorder %s9, 1
    %p69 = scmp.ne.s32.totalorder %s64, %s66
    %p70 = scmp.eq.s32.totalorder %s9, 0
    %p71 = por %p69, %p70
    %p72 = scmp.ne.s32.totalorder %s64, %s66
    %p73 = scmp.eq.s32.totalorder %s14, 1
    %p74 = por %p72, %p73
    %p75 = scmp.ne.s32.totalorder %s66, %s67
    %p76 = scmp.eq.s32.totalorder %s14, 0
    %p77 = por %p75, %p76
    %p78 = scmp.ne.s32.totalorder %s66, %s67
    %p79 = scmp.eq.s32.totalorder %s15, 1
    %p80 = por %p78, %p79
    %p82 = scmp.ne.s32.totalorder %s67, %s81
    %p83 = scmp.eq.s32.totalorder %s15, 0
    %p84 = por %p82, %p83
    %s85 = ssub.s32 %s9, %s16
    %p86 = scmp.eq.s32.totalorder %s85, 0
    %s88 = sadd.s32 %s87, 1
    %s89 = scalar_select %p86, %s87, %s88
    %p92 = pneg %p86
    %p93 = scmp.eq.s32.totalorder %s9, 1
    %p94 = por %p92, %p93
    %p95 = scmp.ne.s32.totalorder %s87, %s90
    %p96 = scmp.eq.s32.totalorder %s9, 0
    %p97 = por %p95, %p96
    %p98 = scmp.ne.s32.totalorder %s87, %s90
    %p99 = scmp.eq.s32.totalorder %s14, 1
    %p100 = por %p98, %p99
    %p101 = scmp.ne.s32.totalorder %s90, %s91
    %p102 = scmp.eq.s32.totalorder %s14, 0
    %p103 = por %p101, %p102
    %p104 = scmp.ne.s32.totalorder %s90, %s91
    %p105 = scmp.eq.s32.totalorder %s15, 1
    %p106 = por %p104, %p105
    %p108 = scmp.ne.s32.totalorder %s91, %s107
    %p109 = scmp.eq.s32.totalorder %s15, 0
    %p110 = por %p108, %p109
    %p111 = scmp.le.s32.totalorder 1, %s9
    %p112 = scmp.lt.s32.totalorder %s9, 3
    %p113 = pnand %p111, %p112
    %p114 = pneg %p113
    // Predicated region
    $region9: #{ga_forward.3} parent=5 // pred_check
      _
    $region10: #{ga_forward.3} parent=5 // pred_check_branch
      %116 = sbr.rel (%p113) target = $region12
    $region11: #{ga_forward.3} parent=5 // pred_region
      %s117 = ssub.s32 %s9, 1
      // Predicated region
      $region13: #{ga_forward.3} parent=11 // pred_check
        %p118 = pneg %p56
      $region14: #{ga_forward.3} parent=11 // pred_check_branch
        %120 = sbr.rel (%p118) target = $region16
      $region15: #{ga_forward.3} parent=11 // pred_region
        _
      $region16: #{ga_forward.3} parent=11 // pred_fallthru
        _
      // Predicated region
      $region17: #{ga_forward.3} parent=11 // pred_check
        %p121 = pneg %p77
      $region18: #{ga_forward.3} parent=11 // pred_check_branch
        %123 = sbr.rel (%p121) target = $region20
      $region19: #{ga_forward.3} parent=11 // pred_region
        _
      $region20: #{ga_forward.3} parent=11 // pred_fallthru
        _
    $region12: #{ga_forward.3} parent=5 // pred_fallthru
      _
    %p124 = scmp.lt.s32.totalorder %s9, 2
    // Predicated region
    $region21: #{ga_forward.3} parent=5 // pred_check
      %p125 = pneg %p124
    $region22: #{ga_forward.3} parent=5 // pred_check_branch
      %127 = sbr.rel (%p125) target = $region24
    $region23: #{ga_forward.3} parent=5 // pred_region
      // Predicated region
      $region25: #{ga_forward.3} parent=23 // pred_check
        %p128 = pneg %p29
      $region26: #{ga_forward.3} parent=23 // pred_check_branch
        %130 = sbr.rel (%p128) target = $region28
      $region27: #{ga_forward.3} parent=23 // pred_region
        %s131 = smul.u32 72, %s9
        %p132 = scmp.lt.s32.totalorder %s131, 143
        %s133 = scalar_select %p132, %s131, 143
        %s134 = smul.addr %s133, 4
        %s135 = scalar_lea.vmem %s0, %s134
        %s136 = smul.u32 72, %s9
      $region28: #{ga_forward.3} parent=23 // pred_fallthru
        _
    $region24: #{ga_forward.3} parent=5 // pred_fallthru
      _
    %p137 = scmp.le.s32.totalorder 1, %s9
    %p138 = scmp.lt.s32.totalorder %s9, 3
    %p139 = pnand %p137, %p138
    %p140 = pneg %p139
    // Predicated region
    $region29: #{ga_forward.3} parent=5 // pred_check
      _
    $region30: #{ga_forward.3} parent=5 // pred_check_branch
      %142 = sbr.rel (%p139) target = $region32
    $region31: #{ga_forward.3} parent=5 // pred_region
      %s143 = ssub.s32 %s9, 1
      %s144 = smul.u32 72, %s14
      %p145 = scmp.lt.s32.totalorder %s144, 143
      %s146 = scalar_select %p145, %s144, 143
      %s147 = smul.addr %s146, 4
      %s148 = scalar_lea.vmem %s0, %s147
      %p149 = pneg %p35
      %p150 = pneg %p32
      %p151 = pneg %p56
      %p152 = pneg %p53
      %p153 = pneg %p77
      %p154 = pneg %p74
      %p155 = pneg %p103
      %p156 = pneg %p100
      %s157 = smul.u32 72, %s14
      %p158 = scmp.lt.s32.totalorder %s157, 143
      %s159 = scalar_select %p158, %s157, 143
      %s160 = smul.addr %s159, 4
      %s161 = scalar_lea.vmem %s3, %s160
      %s162 = smul.u32 72, %s14
      %p163 = scmp.lt.s32.totalorder %s162, 143
      %s164 = scalar_select %p163, %s162, 143
      %s165 = smul.addr %s164, 4
      %s166 = scalar_lea.vmem %s0, %s165
      %s167 = smul.u32 72, %s14
      %s168 = smul.u32 72, %s14
      %p169 = scmp.lt.s32.totalorder %s168, 143
      %s170 = scalar_select %p169, %s168, 143
      %s171 = smul.addr %s170, 4
      %s172 = scalar_lea.vmem %s3, %s171
      %s173 = smul.u32 72, %s14
      %v175 = vld [vmem:[%s166] sm:$0xf]
      %v176 = vld [vmem:[%s166 + $0x4] sm:$0xf]
      %v177 = vld [vmem:[%s166 + $0x8] sm:$0xf]
      %v178 = vld [vmem:[%s166 + $0xc] sm:$0xf]
      %v179 = vld [vmem:[%s166 + $0x10] sm:$0xf]
      %v180 = vld [vmem:[%s166 + $0x14] sm:$0xf]
      %v181 = vld [vmem:[%s166 + $0x18] sm:$0xf]
      %v182 = vld [vmem:[%s166 + $0x1c] sm:$0xf]
      %v183 = vld [vmem:[%s166 + $0x20] sm:$0xf]
      %v184 = vld [vmem:[%s166 + $0x24] sm:$0xf]
      %v185 = vld [vmem:[%s166 + $0x28] sm:$0xf]
      %v186 = vld [vmem:[%s166 + $0x2c] sm:$0xf]
      %v187 = vld [vmem:[%s166 + $0x30] sm:$0xf]
      %v188 = vld [vmem:[%s166 + $0x34] sm:$0xf]
      %v189 = vld [vmem:[%s166 + $0x38] sm:$0xf]
      %v190 = vld [vmem:[%s166 + $0x3c] sm:$0xf]
      %v191 = vld [vmem:[%s166 + $0x40] sm:$0xf]
      %v192 = vld [vmem:[%s166 + $0x44] sm:$0xf]
      %v193 = vld [vmem:[%s166 + $0x48] sm:$0xf]
      %v194 = vld [vmem:[%s166 + $0x4c] sm:$0xf]
      %v195 = vld [vmem:[%s166 + $0x50] sm:$0xf]
      %v196 = vld [vmem:[%s166 + $0x54] sm:$0xf]
      %v197 = vld [vmem:[%s166 + $0x58] sm:$0xf]
      %v198 = vld [vmem:[%s166 + $0x5c] sm:$0xf]
      %v199 = vld [vmem:[%s166 + $0x60] sm:$0xf]
      %v200 = vld [vmem:[%s166 + $0x64] sm:$0xf]
      %v201 = vld [vmem:[%s166 + $0x68] sm:$0xf]
      %v202 = vld [vmem:[%s166 + $0x6c] sm:$0xf]
      %v203 = vld [vmem:[%s166 + $0x70] sm:$0xf]
      %v204 = vld [vmem:[%s166 + $0x74] sm:$0xf]
      %v205 = vld [vmem:[%s166 + $0x78] sm:$0xf]
      %v206 = vld [vmem:[%s166 + $0x7c] sm:$0xf]
      %v207 = vld [vmem:[%s166 + $0x80] sm:$0xf]
      %v208 = vld [vmem:[%s166 + $0x84] sm:$0xf]
      %v209 = vld [vmem:[%s166 + $0x88] sm:$0xf]
      %v210 = vld [vmem:[%s166 + $0x8c] sm:$0xf]
      %v211 = vld [vmem:[%s166 + $0x90] sm:$0xf]
      %v212 = vld [vmem:[%s166 + $0x94] sm:$0xf]
      %v213 = vld [vmem:[%s166 + $0x98] sm:$0xf]
      %v214 = vld [vmem:[%s166 + $0x9c] sm:$0xf]
      %v215 = vld [vmem:[%s166 + $0xa0] sm:$0xf]
      %v216 = vld [vmem:[%s166 + $0xa4] sm:$0xf]
      %v217 = vld [vmem:[%s166 + $0xa8] sm:$0xf]
      %v218 = vld [vmem:[%s166 + $0xac] sm:$0xf]
      %v219 = vld [vmem:[%s166 + $0xb0] sm:$0xf]
      %v220 = vld [vmem:[%s166 + $0xb4] sm:$0xf]
      %v221 = vld [vmem:[%s166 + $0xb8] sm:$0xf]
      %v222 = vld [vmem:[%s166 + $0xbc] sm:$0xf]
      %v223 = vld [vmem:[%s166 + $0xc0] sm:$0xf]
      %v224 = vld [vmem:[%s166 + $0xc4] sm:$0xf]
      %v225 = vld [vmem:[%s166 + $0xc8] sm:$0xf]
      %v226 = vld [vmem:[%s166 + $0xcc] sm:$0xf]
      %v227 = vld [vmem:[%s166 + $0xd0] sm:$0xf]
      %v228 = vld [vmem:[%s166 + $0xd4] sm:$0xf]
      %v229 = vld [vmem:[%s166 + $0xd8] sm:$0xf]
      %v230 = vld [vmem:[%s166 + $0xdc] sm:$0xf]
      %v231 = vld [vmem:[%s166 + $0xe0] sm:$0xf]
      %v232 = vld [vmem:[%s166 + $0xe4] sm:$0xf]
      %v233 = vld [vmem:[%s166 + $0xe8] sm:$0xf]
      %v234 = vld [vmem:[%s166 + $0xec] sm:$0xf]
      %v235 = vld [vmem:[%s166 + $0xf0] sm:$0xf]
      %v236 = vld [vmem:[%s166 + $0xf4] sm:$0xf]
      %v237 = vld [vmem:[%s166 + $0xf8] sm:$0xf]
      %v238 = vld [vmem:[%s166 + $0xfc] sm:$0xf]
      %v239 = vld [vmem:[%s166 + $0x100] sm:$0xf]
      %v240 = vld [vmem:[%s166 + $0x104] sm:$0xf]
      %v241 = vld [vmem:[%s166 + $0x108] sm:$0xf]
      %v242 = vld [vmem:[%s166 + $0x10c] sm:$0xf]
      %v243 = vld [vmem:[%s166 + $0x110] sm:$0xf]
      %v244 = vld [vmem:[%s166 + $0x114] sm:$0xf]
      %v245 = vld [vmem:[%s166 + $0x118] sm:$0xf]
      %v246 = vld [vmem:[%s166 + $0x11c] sm:$0xf]
      %v247 = vld [vmem:[%s1] sm:$0xf]
      %v248 = vld [vmem:[%s1 + $0x4] sm:$0xf]
      %v249 = vld [vmem:[%s1 + $0x8] sm:$0xf]
      %v250 = vld [vmem:[%s1 + $0xc] sm:$0xf]
      %v251 = vld [vmem:[%s1 + $0x10] sm:$0xf]
      %v252 = vld [vmem:[%s1 + $0x14] sm:$0xf]
      %v253 = vld [vmem:[%s1 + $0x18] sm:$0xf]
      %v254 = vld [vmem:[%s1 + $0x1c] sm:$0xf]
      %v255 = vld [vmem:[%s2] sm:$0x1]
      %v257 = vlaneseq
      %v258 = vshrl.u32 %v257, 7
      %v259 = vsub.s32 0, %v258
      %v260 = vrot.slane %v255, %v259
      %v334 = vunpack.c.l.b16 %v175
      %v335 = vunpack.c.l.b16 %v176
      %v336 = vunpack.c.l.b16 %v177
      %v337 = vunpack.c.l.b16 %v178
      %v338 = vunpack.c.l.b16 %v179
      %v339 = vunpack.c.l.b16 %v180
      %v340 = vunpack.c.l.b16 %v181
      %v341 = vunpack.c.l.b16 %v182
      %v342 = vunpack.c.l.b16 %v183
      %v343 = vunpack.c.l.b16 %v184
      %v344 = vunpack.c.l.b16 %v185
      %v345 = vunpack.c.l.b16 %v186
      %v346 = vunpack.c.l.b16 %v187
      %v347 = vunpack.c.l.b16 %v188
      %v348 = vunpack.c.l.b16 %v189
      %v349 = vunpack.c.l.b16 %v190
      %v350 = vunpack.c.l.b16 %v191
      %v351 = vunpack.c.l.b16 %v192
      %v352 = vunpack.c.l.b16 %v193
      %v353 = vunpack.c.l.b16 %v194
      %v354 = vunpack.c.l.b16 %v195
      %v355 = vunpack.c.l.b16 %v196
      %v356 = vunpack.c.l.b16 %v197
      %v357 = vunpack.c.l.b16 %v198
      %v358 = vunpack.c.l.b16 %v199
      %v359 = vunpack.c.l.b16 %v200
      %v360 = vunpack.c.l.b16 %v201
      %v361 = vunpack.c.l.b16 %v202
      %v362 = vunpack.c.l.b16 %v203
      %v363 = vunpack.c.l.b16 %v204
      %v364 = vunpack.c.l.b16 %v205
      %v365 = vunpack.c.l.b16 %v206
      %v366 = vunpack.c.l.b16 %v207
      %v367 = vunpack.c.l.b16 %v208
      %v368 = vunpack.c.l.b16 %v209
      %v369 = vunpack.c.l.b16 %v210
      %v370 = vunpack.c.l.b16 %v211
      %v371 = vunpack.c.l.b16 %v212
      %v372 = vunpack.c.l.b16 %v213
      %v373 = vunpack.c.l.b16 %v214
      %v374 = vunpack.c.l.b16 %v215
      %v375 = vunpack.c.l.b16 %v216
      %v376 = vunpack.c.l.b16 %v217
      %v377 = vunpack.c.l.b16 %v218
      %v378 = vunpack.c.l.b16 %v219
      %v379 = vunpack.c.l.b16 %v220
      %v380 = vunpack.c.l.b16 %v221
      %v381 = vunpack.c.l.b16 %v222
      %v382 = vunpack.c.l.b16 %v223
      %v383 = vunpack.c.l.b16 %v224
      %v384 = vunpack.c.l.b16 %v225
      %v385 = vunpack.c.l.b16 %v226
      %v386 = vunpack.c.l.b16 %v227
      %v387 = vunpack.c.l.b16 %v228
      %v388 = vunpack.c.l.b16 %v229
      %v389 = vunpack.c.l.b16 %v230
      %v390 = vunpack.c.l.b16 %v231
      %v391 = vunpack.c.l.b16 %v232
      %v392 = vunpack.c.l.b16 %v233
      %v393 = vunpack.c.l.b16 %v234
      %v394 = vunpack.c.l.b16 %v235
      %v395 = vunpack.c.l.b16 %v236
      %v396 = vunpack.c.l.b16 %v237
      %v397 = vunpack.c.l.b16 %v238
      %v398 = vunpack.c.l.b16 %v239
      %v399 = vunpack.c.l.b16 %v240
      %v400 = vunpack.c.l.b16 %v241
      %v401 = vunpack.c.l.b16 %v242
      %v402 = vunpack.c.l.b16 %v243
      %v403 = vunpack.c.l.b16 %v244
      %v404 = vunpack.c.l.b16 %v245
      %v405 = vunpack.c.l.b16 %v246
      %v406 = vpack.c.b16 %v335, %v334
      %v407 = vpack.c.b16 %v337, %v336
      %v408 = vpack.c.b16 %v339, %v338
      %v409 = vpack.c.b16 %v341, %v340
      %v410 = vpack.c.b16 %v343, %v342
      %v411 = vpack.c.b16 %v345, %v344
      %v412 = vpack.c.b16 %v347, %v346
      %v413 = vpack.c.b16 %v349, %v348
      %v414 = vpack.c.b16 %v351, %v350
      %v415 = vpack.c.b16 %v353, %v352
      %v416 = vpack.c.b16 %v355, %v354
      %v417 = vpack.c.b16 %v357, %v356
      %v418 = vpack.c.b16 %v359, %v358
      %v419 = vpack.c.b16 %v361, %v360
      %v420 = vpack.c.b16 %v363, %v362
      %v421 = vpack.c.b16 %v365, %v364
      %v422 = vpack.c.b16 %v367, %v366
      %v423 = vpack.c.b16 %v369, %v368
      %v424 = vpack.c.b16 %v371, %v370
      %v425 = vpack.c.b16 %v373, %v372
      %v426 = vpack.c.b16 %v375, %v374
      %v427 = vpack.c.b16 %v377, %v376
      %v428 = vpack.c.b16 %v379, %v378
      %v429 = vpack.c.b16 %v381, %v380
      %v430 = vpack.c.b16 %v383, %v382
      %v431 = vpack.c.b16 %v385, %v384
      %v432 = vpack.c.b16 %v387, %v386
      %v433 = vpack.c.b16 %v389, %v388
      %v434 = vpack.c.b16 %v391, %v390
      %v435 = vpack.c.b16 %v393, %v392
      %v436 = vpack.c.b16 %v395, %v394
      %v437 = vpack.c.b16 %v397, %v396
      %v438 = vpack.c.b16 %v399, %v398
      %v439 = vpack.c.b16 %v401, %v400
      %v440 = vpack.c.b16 %v403, %v402
      %v441 = vpack.c.b16 %v405, %v404
      %v450 = vunpack.c.l.b16 %v247
      %v451 = vunpack.c.l.b16 %v248
      %v452 = vunpack.c.l.b16 %v249
      %v453 = vunpack.c.l.b16 %v250
      %v454 = vunpack.c.l.b16 %v251
      %v455 = vunpack.c.l.b16 %v252
      %v456 = vunpack.c.l.b16 %v253
      %v457 = vunpack.c.l.b16 %v254
      %v458 = vpack.c.b16 %v451, %v450
      %v459 = vpack.c.b16 %v453, %v452
      %v460 = vpack.c.b16 %v455, %v454
      %v461 = vpack.c.b16 %v457, %v456
      %vm466 = vcmask 523264
      %v468 = vsel %vm466, %v406, 0
      %v471 = vsel %vm466, %v407, 0
      %v474 = vsel %vm466, %v408, 0
      %v477 = vsel %vm466, %v409, 0
      %v480 = vsel %vm466, %v410, 0
      %v483 = vsel %vm466, %v411, 0
      %v486 = vsel %vm466, %v412, 0
      %v489 = vsel %vm466, %v413, 0
      %v492 = vsel %vm466, %v414, 0
      %v495 = vsel %vm466, %v415, 0
      %v498 = vsel %vm466, %v416, 0
      %v501 = vsel %vm466, %v417, 0
      %v504 = vsel %vm466, %v418, 0
      %v507 = vsel %vm466, %v419, 0
      %v510 = vsel %vm466, %v420, 0
      %v513 = vsel %vm466, %v421, 0
      %v516 = vsel %vm466, %v422, 0
      %v519 = vsel %vm466, %v423, 0
      %v522 = vsel %vm466, %v424, 0
      %v525 = vsel %vm466, %v425, 0
      %v528 = vsel %vm466, %v426, 0
      %v531 = vsel %vm466, %v427, 0
      %v534 = vsel %vm466, %v428, 0
      %v537 = vsel %vm466, %v429, 0
      %v540 = vsel %vm466, %v430, 0
      %v543 = vsel %vm466, %v431, 0
      %v546 = vsel %vm466, %v432, 0
      %v549 = vsel %vm466, %v433, 0
      %v552 = vsel %vm466, %v434, 0
      %v555 = vsel %vm466, %v435, 0
      %v558 = vsel %vm466, %v436, 0
      %v561 = vsel %vm466, %v437, 0
      %v564 = vsel %vm466, %v438, 0
      %v567 = vsel %vm466, %v439, 0
      %v570 = vsel %vm466, %v440, 0
      %v573 = vsel %vm466, %v441, 0
      %575 = vmatprep.subr.bf16.mxu0 0
      %576 = vmatpush1.bf16.msra.mxu0 %v458
      %577 = vmatprep.subr.bf16.mxu0 0
      %578 = vmatpush1.bf16.msra.mxu0 %v459
      %579 = vmatprep.subr.bf16.mxu0 0
      %580 = vmatpush1.bf16.msra.mxu0 %v460
      %581 = vmatprep.subr.bf16.mxu0 0
      %582 = vmatpush1.bf16.msra.mxu0 %v461
      %583 = vmatprep.subr.bf16.mxu0 0
      %584 = vmatpush1.bf16.msra.mxu0 0
      %585 = vmatprep.subr.bf16.mxu0 0
      %586 = vmatpush1.bf16.msra.mxu0 0
      %587 = vmatprep.subr.bf16.mxu0 0
      %588 = vmatpush1.bf16.msra.mxu0 0
      %589 = vmatprep.subr.bf16.mxu0 0
      %590 = vmatpush1.bf16.msra.mxu0 0
      %591 = vmatprep.subr.bf16.mxu0 0
      %592 = vmatpush1.bf16.msra.mxu0 0
      %593 = vmatprep.subr.bf16.mxu0 0
      %594 = vmatpush1.bf16.msra.mxu0 0
      %595 = vmatprep.subr.bf16.mxu0 0
      %596 = vmatpush1.bf16.msra.mxu0 0
      %597 = vmatprep.subr.bf16.mxu0 0
      %598 = vmatpush1.bf16.msra.mxu0 0
      %599 = vmatprep.subr.bf16.mxu0 0
      %600 = vmatpush1.bf16.msra.mxu0 0
      %601 = vmatprep.subr.bf16.mxu0 0
      %602 = vmatpush1.bf16.msra.mxu0 0
      %603 = vmatprep.subr.bf16.mxu0 0
      %604 = vmatpush1.bf16.msra.mxu0 0
      %605 = vmatprep.subr.bf16.mxu0 0
      %606 = vmatpush1.bf16.msra.mxu0 0
      %607 = vmatprep.mubr.bf16.mxu0 0
      %608 = vmatmul.mubr.bf16.gmra.mrb[0].mxu0 %v468
      %v609 = vpop.f32.mrb[0].mxu0
      %v610 = vadd.f32 %v260, %v609
      %v611 = vpop.f32.mrb[0].mxu0
      %v612 = vpop.f32.mrb[0].mxu0
      %v613 = vadd.f32 %v260, %v612
      %v614 = vpop.f32.mrb[0].mxu0
      %615 = vmatprep.mubr.bf16.mxu0 0
      %616 = vmatmul.mubr.bf16.gmra.mrb[0].mxu0 %v471
      %v617 = vpop.f32.mrb[0].mxu0
      %v618 = vadd.f32 %v260, %v617
      %v619 = vpop.f32.mrb[0].mxu0
      %v620 = vpop.f32.mrb[0].mxu0
      %v621 = vadd.f32 %v260, %v620
      %v622 = vpop.f32.mrb[0].mxu0
      %623 = vmatprep.mubr.bf16.mxu0 0
      %624 = vmatmul.mubr.bf16.gmra.mrb[0].mxu0 %v474
      %v625 = vpop.f32.mrb[0].mxu0
      %v626 = vadd.f32 %v260, %v625
      %v627 = vpop.f32.mrb[0].mxu0
      %v628 = vpop.f32.mrb[0].mxu0
      %v629 = vadd.f32 %v260, %v628
      %v630 = vpop.f32.mrb[0].mxu0
      %631 = vmatprep.mubr.bf16.mxu0 0
      %632 = vmatmul.mubr.bf16.gmra.mrb[0].mxu0 %v477
      %v633 = vpop.f32.mrb[0].mxu0
      %v634 = vadd.f32 %v260, %v633
      %v635 = vpop.f32.mrb[0].mxu0
      %v636 = vpop.f32.mrb[0].mxu0
      %v637 = vadd.f32 %v260, %v636
      %v638 = vpop.f32.mrb[0].mxu0
      %639 = vmatprep.mubr.bf16.mxu0 0
      %640 = vmatmul.mubr.bf16.gmra.mrb[0].mxu0 %v480
      %v641 = vpop.f32.mrb[0].mxu0
      %v642 = vadd.f32 %v260, %v641
      %v643 = vpop.f32.mrb[0].mxu0
      %v644 = vpop.f32.mrb[0].mxu0
      %v645 = vadd.f32 %v260, %v644
      %v646 = vpop.f32.mrb[0].mxu0
      %647 = vmatprep.mubr.bf16.mxu0 0
      %648 = vmatmul.mubr.bf16.gmra.mrb[0].mxu0 %v483
      %v649 = vpop.f32.mrb[0].mxu0
      %v650 = vadd.f32 %v260, %v649
      %v651 = vpop.f32.mrb[0].mxu0
      %v652 = vpop.f32.mrb[0].mxu0
      %v653 = vadd.f32 %v260, %v652
      %v654 = vpop.f32.mrb[0].mxu0
      %655 = vmatprep.mubr.bf16.mxu0 0
      %656 = vmatmul.mubr.bf16.gmra.mrb[0].mxu0 %v486
      %v657 = vpop.f32.mrb[0].mxu0
      %v658 = vadd.f32 %v260, %v657
      %v659 = vpop.f32.mrb[0].mxu0
      %v660 = vpop.f32.mrb[0].mxu0
      %v661 = vadd.f32 %v260, %v660
      %v662 = vpop.f32.mrb[0].mxu0
      %663 = vmatprep.mubr.bf16.mxu0 0
      %664 = vmatmul.mubr.bf16.gmra.mrb[0].mxu0 %v489
      %v665 = vpop.f32.mrb[0].mxu0
      %v666 = vadd.f32 %v260, %v665
      %v667 = vpop.f32.mrb[0].mxu0
      %v668 = vpop.f32.mrb[0].mxu0
      %v669 = vadd.f32 %v260, %v668
      %v670 = vpop.f32.mrb[0].mxu0
      %671 = vmatprep.mubr.bf16.mxu0 0
      %672 = vmatmul.mubr.bf16.gmra.mrb[0].mxu0 %v492
      %v673 = vpop.f32.mrb[0].mxu0
      %v674 = vadd.f32 %v260, %v673
      %v675 = vpop.f32.mrb[0].mxu0
      %v676 = vpop.f32.mrb[0].mxu0
      %v677 = vadd.f32 %v260, %v676
      %v678 = vpop.f32.mrb[0].mxu0
      %679 = vmatprep.mubr.bf16.mxu0 0
      %680 = vmatmul.mubr.bf16.gmra.mrb[0].mxu0 %v495
      %v681 = vpop.f32.mrb[0].mxu0
      %v682 = vadd.f32 %v260, %v681
      %v683 = vpop.f32.mrb[0].mxu0
      %v684 = vpop.f32.mrb[0].mxu0
      %v685 = vadd.f32 %v260, %v684
      %v686 = vpop.f32.mrb[0].mxu0
      %687 = vmatprep.mubr.bf16.mxu0 0
      %688 = vmatmul.mubr.bf16.gmra.mrb[0].mxu0 %v498
      %v689 = vpop.f32.mrb[0].mxu0
      %v690 = vadd.f32 %v260, %v689
      %v691 = vpop.f32.mrb[0].mxu0
      %v692 = vpop.f32.mrb[0].mxu0
      %v693 = vadd.f32 %v260, %v692
      %v694 = vpop.f32.mrb[0].mxu0
      %695 = vmatprep.mubr.bf16.mxu0 0
      %696 = vmatmul.mubr.bf16.gmra.mrb[0].mxu0 %v501
      %v697 = vpop.f32.mrb[0].mxu0
      %v698 = vadd.f32 %v260, %v697
      %v699 = vpop.f32.mrb[0].mxu0
      %v700 = vpop.f32.mrb[0].mxu0
      %v701 = vadd.f32 %v260, %v700
      %v702 = vpop.f32.mrb[0].mxu0
      %703 = vmatprep.mubr.bf16.mxu0 0
      %704 = vmatmul.mubr.bf16.gmra.mrb[0].mxu0 %v504
      %v705 = vpop.f32.mrb[0].mxu0
      %v706 = vadd.f32 %v260, %v705
      %v707 = vpop.f32.mrb[0].mxu0
      %v708 = vpop.f32.mrb[0].mxu0
      %v709 = vadd.f32 %v260, %v708
      %v710 = vpop.f32.mrb[0].mxu0
      %711 = vmatprep.mubr.bf16.mxu0 0
      %712 = vmatmul.mubr.bf16.gmra.mrb[0].mxu0 %v507
      %v713 = vpop.f32.mrb[0].mxu0
      %v714 = vadd.f32 %v260, %v713
      %v715 = vpop.f32.mrb[0].mxu0
      %v716 = vpop.f32.mrb[0].mxu0
      %v717 = vadd.f32 %v260, %v716
      %v718 = vpop.f32.mrb[0].mxu0
      %719 = vmatprep.mubr.bf16.mxu0 0
      %720 = vmatmul.mubr.bf16.gmra.mrb[0].mxu0 %v510
      %v721 = vpop.f32.mrb[0].mxu0
      %v722 = vadd.f32 %v260, %v721
      %v723 = vpop.f32.mrb[0].mxu0
      %v724 = vpop.f32.mrb[0].mxu0
      %v725 = vadd.f32 %v260, %v724
      %v726 = vpop.f32.mrb[0].mxu0
      %727 = vmatprep.mubr.bf16.mxu0 0
      %728 = vmatmul.mubr.bf16.gmra.mrb[0].mxu0 %v513
      %v729 = vpop.f32.mrb[0].mxu0
      %v730 = vadd.f32 %v260, %v729
      %v731 = vpop.f32.mrb[0].mxu0
      %v732 = vpop.f32.mrb[0].mxu0
      %v733 = vadd.f32 %v260, %v732
      %v734 = vpop.f32.mrb[0].mxu0
      %735 = vmatprep.mubr.bf16.mxu0 0
      %736 = vmatmul.mubr.bf16.gmra.mrb[0].mxu0 %v516
      %v737 = vpop.f32.mrb[0].mxu0
      %v738 = vadd.f32 %v260, %v737
      %v739 = vpop.f32.mrb[0].mxu0
      %v740 = vpop.f32.mrb[0].mxu0
      %v741 = vadd.f32 %v260, %v740
      %v742 = vpop.f32.mrb[0].mxu0
      %743 = vmatprep.mubr.bf16.mxu0 0
      %744 = vmatmul.mubr.bf16.gmra.mrb[0].mxu0 %v519
      %v745 = vpop.f32.mrb[0].mxu0
      %v746 = vadd.f32 %v260, %v745
      %v747 = vpop.f32.mrb[0].mxu0
      %v748 = vpop.f32.mrb[0].mxu0
      %v749 = vadd.f32 %v260, %v748
      %v750 = vpop.f32.mrb[0].mxu0
      %751 = vmatprep.mubr.bf16.mxu0 0
      %752 = vmatmul.mubr.bf16.gmra.mrb[0].mxu0 %v522
      %v753 = vpop.f32.mrb[0].mxu0
      %v754 = vadd.f32 %v260, %v753
      %v755 = vpop.f32.mrb[0].mxu0
      %v756 = vpop.f32.mrb[0].mxu0
      %v757 = vadd.f32 %v260, %v756
      %v758 = vpop.f32.mrb[0].mxu0
      %759 = vmatprep.mubr.bf16.mxu0 0
      %760 = vmatmul.mubr.bf16.gmra.mrb[0].mxu0 %v525
      %v761 = vpop.f32.mrb[0].mxu0
      %v762 = vadd.f32 %v260, %v761
      %v763 = vpop.f32.mrb[0].mxu0
      %v764 = vpop.f32.mrb[0].mxu0
      %v765 = vadd.f32 %v260, %v764
      %v766 = vpop.f32.mrb[0].mxu0
      %767 = vmatprep.mubr.bf16.mxu0 0
      %768 = vmatmul.mubr.bf16.gmra.mrb[0].mxu0 %v528
      %v769 = vpop.f32.mrb[0].mxu0
      %v770 = vadd.f32 %v260, %v769
      %v771 = vpop.f32.mrb[0].mxu0
      %v772 = vpop.f32.mrb[0].mxu0
      %v773 = vadd.f32 %v260, %v772
      %v774 = vpop.f32.mrb[0].mxu0
      %775 = vmatprep.mubr.bf16.mxu0 0
      %776 = vmatmul.mubr.bf16.gmra.mrb[0].mxu0 %v531
      %v777 = vpop.f32.mrb[0].mxu0
      %v778 = vadd.f32 %v260, %v777
      %v779 = vpop.f32.mrb[0].mxu0
      %v780 = vpop.f32.mrb[0].mxu0
      %v781 = vadd.f32 %v260, %v780
      %v782 = vpop.f32.mrb[0].mxu0
      %783 = vmatprep.mubr.bf16.mxu0 0
      %784 = vmatmul.mubr.bf16.gmra.mrb[0].mxu0 %v534
      %v785 = vpop.f32.mrb[0].mxu0
      %v786 = vadd.f32 %v260, %v785
      %v787 = vpop.f32.mrb[0].mxu0
      %v788 = vpop.f32.mrb[0].mxu0
      %v789 = vadd.f32 %v260, %v788
      %v790 = vpop.f32.mrb[0].mxu0
      %791 = vmatprep.mubr.bf16.mxu0 0
      %792 = vmatmul.mubr.bf16.gmra.mrb[0].mxu0 %v537
      %v793 = vpop.f32.mrb[0].mxu0
      %v794 = vadd.f32 %v260, %v793
      %v795 = vpop.f32.mrb[0].mxu0
      %v796 = vpop.f32.mrb[0].mxu0
      %v797 = vadd.f32 %v260, %v796
      %v798 = vpop.f32.mrb[0].mxu0
      %799 = vmatprep.mubr.bf16.mxu0 0
      %800 = vmatmul.mubr.bf16.gmra.mrb[0].mxu0 %v540
      %v801 = vpop.f32.mrb[0].mxu0
      %v802 = vadd.f32 %v260, %v801
      %v803 = vpop.f32.mrb[0].mxu0
      %v804 = vpop.f32.mrb[0].mxu0
      %v805 = vadd.f32 %v260, %v804
      %v806 = vpop.f32.mrb[0].mxu0
      %807 = vmatprep.mubr.bf16.mxu0 0
      %808 = vmatmul.mubr.bf16.gmra.mrb[0].mxu0 %v543
      %v809 = vpop.f32.mrb[0].mxu0
      %v810 = vadd.f32 %v260, %v809
      %v811 = vpop.f32.mrb[0].mxu0
      %v812 = vpop.f32.mrb[0].mxu0
      %v813 = vadd.f32 %v260, %v812
      %v814 = vpop.f32.mrb[0].mxu0
      %815 = vmatprep.mubr.bf16.mxu0 0
      %816 = vmatmul.mubr.bf16.gmra.mrb[0].mxu0 %v546
      %v817 = vpop.f32.mrb[0].mxu0
      %v818 = vadd.f32 %v260, %v817
      %v819 = vpop.f32.mrb[0].mxu0
      %v820 = vpop.f32.mrb[0].mxu0
      %v821 = vadd.f32 %v260, %v820
      %v822 = vpop.f32.mrb[0].mxu0
      %823 = vmatprep.mubr.bf16.mxu0 0
      %824 = vmatmul.mubr.bf16.gmra.mrb[0].mxu0 %v549
      %v825 = vpop.f32.mrb[0].mxu0
      %v826 = vadd.f32 %v260, %v825
      %v827 = vpop.f32.mrb[0].mxu0
      %v828 = vpop.f32.mrb[0].mxu0
      %v829 = vadd.f32 %v260, %v828
      %v830 = vpop.f32.mrb[0].mxu0
      %831 = vmatprep.mubr.bf16.mxu0 0
      %832 = vmatmul.mubr.bf16.gmra.mrb[0].mxu0 %v552
      %v833 = vpop.f32.mrb[0].mxu0
      %v834 = vadd.f32 %v260, %v833
      %v835 = vpop.f32.mrb[0].mxu0
      %v836 = vpop.f32.mrb[0].mxu0
      %v837 = vadd.f32 %v260, %v836
      %v838 = vpop.f32.mrb[0].mxu0
      %839 = vmatprep.mubr.bf16.mxu0 0
      %840 = vmatmul.mubr.bf16.gmra.mrb[0].mxu0 %v555
      %v841 = vpop.f32.mrb[0].mxu0
      %v842 = vadd.f32 %v260, %v841
      %v843 = vpop.f32.mrb[0].mxu0
      %v844 = vpop.f32.mrb[0].mxu0
      %v845 = vadd.f32 %v260, %v844
      %v846 = vpop.f32.mrb[0].mxu0
      %847 = vmatprep.mubr.bf16.mxu0 0
      %848 = vmatmul.mubr.bf16.gmra.mrb[0].mxu0 %v558
      %v849 = vpop.f32.mrb[0].mxu0
      %v850 = vadd.f32 %v260, %v849
      %v851 = vpop.f32.mrb[0].mxu0
      %v852 = vpop.f32.mrb[0].mxu0
      %v853 = vadd.f32 %v260, %v852
      %v854 = vpop.f32.mrb[0].mxu0
      %855 = vmatprep.mubr.bf16.mxu0 0
      %856 = vmatmul.mubr.bf16.gmra.mrb[0].mxu0 %v561
      %v857 = vpop.f32.mrb[0].mxu0
      %v858 = vadd.f32 %v260, %v857
      %v859 = vpop.f32.mrb[0].mxu0
      %v860 = vpop.f32.mrb[0].mxu0
      %v861 = vadd.f32 %v260, %v860
      %v862 = vpop.f32.mrb[0].mxu0
      %863 = vmatprep.mubr.bf16.mxu0 0
      %864 = vmatmul.mubr.bf16.gmra.mrb[0].mxu0 %v564
      %v865 = vpop.f32.mrb[0].mxu0
      %v866 = vadd.f32 %v260, %v865
      %v867 = vpop.f32.mrb[0].mxu0
      %v868 = vpop.f32.mrb[0].mxu0
      %v869 = vadd.f32 %v260, %v868
      %v870 = vpop.f32.mrb[0].mxu0
      %871 = vmatprep.mubr.bf16.mxu0 0
      %872 = vmatmul.mubr.bf16.gmra.mrb[0].mxu0 %v567
      %v873 = vpop.f32.mrb[0].mxu0
      %v874 = vadd.f32 %v260, %v873
      %v875 = vpop.f32.mrb[0].mxu0
      %v876 = vpop.f32.mrb[0].mxu0
      %v877 = vadd.f32 %v260, %v876
      %v878 = vpop.f32.mrb[0].mxu0
      %879 = vmatprep.mubr.bf16.mxu0 0
      %880 = vmatmul.mubr.bf16.gmra.mrb[0].mxu0 %v570
      %v881 = vpop.f32.mrb[0].mxu0
      %v882 = vadd.f32 %v260, %v881
      %v883 = vpop.f32.mrb[0].mxu0
      %v884 = vpop.f32.mrb[0].mxu0
      %v885 = vadd.f32 %v260, %v884
      %v886 = vpop.f32.mrb[0].mxu0
      %887 = vmatprep.mubr.bf16.mxu0 0
      %888 = vmatmul.mubr.bf16.gmra.mrb[0].mxu0 %v573
      %v889 = vpop.f32.mrb[0].mxu0
      %v890 = vadd.f32 %v260, %v889
      %v891 = vpop.f32.mrb[0].mxu0
      %v892 = vpop.f32.mrb[0].mxu0
      %v893 = vadd.f32 %v260, %v892
      %v894 = vpop.f32.mrb[0].mxu0
      %895 = vdwg.mxu0
      %v896 = vmax.f32 %v610, 0.0
      %v897 = vmax.f32 %v613, 0.0
      %v898 = vmax.f32 %v618, 0.0
      %v899 = vmax.f32 %v621, 0.0
      %v900 = vmax.f32 %v626, 0.0
      %v901 = vmax.f32 %v629, 0.0
      %v902 = vmax.f32 %v634, 0.0
      %v903 = vmax.f32 %v637, 0.0
      %v904 = vmax.f32 %v642, 0.0
      %v905 = vmax.f32 %v645, 0.0
      %v906 = vmax.f32 %v650, 0.0
      %v907 = vmax.f32 %v653, 0.0
      %v908 = vmax.f32 %v658, 0.0
      %v909 = vmax.f32 %v661, 0.0
      %v910 = vmax.f32 %v666, 0.0
      %v911 = vmax.f32 %v669, 0.0
      %v912 = vmax.f32 %v674, 0.0
      %v913 = vmax.f32 %v677, 0.0
      %v914 = vmax.f32 %v682, 0.0
      %v915 = vmax.f32 %v685, 0.0
      %v916 = vmax.f32 %v690, 0.0
      %v917 = vmax.f32 %v693, 0.0
      %v918 = vmax.f32 %v698, 0.0
      %v919 = vmax.f32 %v701, 0.0
      %v920 = vmax.f32 %v706, 0.0
      %v921 = vmax.f32 %v709, 0.0
      %v922 = vmax.f32 %v714, 0.0
      %v923 = vmax.f32 %v717, 0.0
      %v924 = vmax.f32 %v722, 0.0
      %v925 = vmax.f32 %v725, 0.0
      %v926 = vmax.f32 %v730, 0.0
      %v927 = vmax.f32 %v733, 0.0
      %v928 = vmax.f32 %v738, 0.0
      %v929 = vmax.f32 %v741, 0.0
      %v930 = vmax.f32 %v746, 0.0
      %v931 = vmax.f32 %v749, 0.0
      %v932 = vmax.f32 %v754, 0.0
      %v933 = vmax.f32 %v757, 0.0
      %v934 = vmax.f32 %v762, 0.0
      %v935 = vmax.f32 %v765, 0.0
      %v936 = vmax.f32 %v770, 0.0
      %v937 = vmax.f32 %v773, 0.0
      %v938 = vmax.f32 %v778, 0.0
      %v939 = vmax.f32 %v781, 0.0
      %v940 = vmax.f32 %v786, 0.0
      %v941 = vmax.f32 %v789, 0.0
      %v942 = vmax.f32 %v794, 0.0
      %v943 = vmax.f32 %v797, 0.0
      %v944 = vmax.f32 %v802, 0.0
      %v945 = vmax.f32 %v805, 0.0
      %v946 = vmax.f32 %v810, 0.0
      %v947 = vmax.f32 %v813, 0.0
      %v948 = vmax.f32 %v818, 0.0
      %v949 = vmax.f32 %v821, 0.0
      %v950 = vmax.f32 %v826, 0.0
      %v951 = vmax.f32 %v829, 0.0
      %v952 = vmax.f32 %v834, 0.0
      %v953 = vmax.f32 %v837, 0.0
      %v954 = vmax.f32 %v842, 0.0
      %v955 = vmax.f32 %v845, 0.0
      %v956 = vmax.f32 %v850, 0.0
      %v957 = vmax.f32 %v853, 0.0
      %v958 = vmax.f32 %v858, 0.0
      %v959 = vmax.f32 %v861, 0.0
      %v960 = vmax.f32 %v866, 0.0
      %v961 = vmax.f32 %v869, 0.0
      %v962 = vmax.f32 %v874, 0.0
      %v963 = vmax.f32 %v877, 0.0
      %v964 = vmax.f32 %v882, 0.0
      %v965 = vmax.f32 %v885, 0.0
      %v966 = vmax.f32 %v890, 0.0
      %v967 = vmax.f32 %v893, 0.0
      %v968 = vpack.c.bf16 %v897, %v896
      %v969 = vpack.c.bf16 %v899, %v898
      %v970 = vpack.c.bf16 %v901, %v900
      %v971 = vpack.c.bf16 %v903, %v902
      %v972 = vpack.c.bf16 %v905, %v904
      %v973 = vpack.c.bf16 %v907, %v906
      %v974 = vpack.c.bf16 %v909, %v908
      %v975 = vpack.c.bf16 %v911, %v910
      %v976 = vpack.c.bf16 %v913, %v912
      %v977 = vpack.c.bf16 %v915, %v914
      %v978 = vpack.c.bf16 %v917, %v916
      %v979 = vpack.c.bf16 %v919, %v918
      %v980 = vpack.c.bf16 %v921, %v920
      %v981 = vpack.c.bf16 %v923, %v922
      %v982 = vpack.c.bf16 %v925, %v924
      %v983 = vpack.c.bf16 %v927, %v926
      %v984 = vpack.c.bf16 %v929, %v928
      %v985 = vpack.c.bf16 %v931, %v930
      %v986 = vpack.c.bf16 %v933, %v932
      %v987 = vpack.c.bf16 %v935, %v934
      %v988 = vpack.c.bf16 %v937, %v936
      %v989 = vpack.c.bf16 %v939, %v938
      %v990 = vpack.c.bf16 %v941, %v940
      %v991 = vpack.c.bf16 %v943, %v942
      %v992 = vpack.c.bf16 %v945, %v944
      %v993 = vpack.c.bf16 %v947, %v946
      %v994 = vpack.c.bf16 %v949, %v948
      %v995 = vpack.c.bf16 %v951, %v950
      %v996 = vpack.c.bf16 %v953, %v952
      %v997 = vpack.c.bf16 %v955, %v954
      %v998 = vpack.c.bf16 %v957, %v956
      %v999 = vpack.c.bf16 %v959, %v958
      %v1000 = vpack.c.bf16 %v961, %v960
      %v1001 = vpack.c.bf16 %v963, %v962
      %v1002 = vpack.c.bf16 %v965, %v964
      %v1003 = vpack.c.bf16 %v967, %v966
      %v1040 = vunpack.c.l.b16 %v968
      %v1041 = vunpack.c.h.b16 %v968
      %v1042 = vunpack.c.l.b16 %v969
      %v1043 = vunpack.c.h.b16 %v969
      %v1044 = vunpack.c.l.b16 %v970
      %v1045 = vunpack.c.h.b16 %v970
      %v1046 = vunpack.c.l.b16 %v971
      %v1047 = vunpack.c.h.b16 %v971
      %v1048 = vunpack.c.l.b16 %v972
      %v1049 = vunpack.c.h.b16 %v972
      %v1050 = vunpack.c.l.b16 %v973
      %v1051 = vunpack.c.h.b16 %v973
      %v1052 = vunpack.c.l.b16 %v974
      %v1053 = vunpack.c.h.b16 %v974
      %v1054 = vunpack.c.l.b16 %v975
      %v1055 = vunpack.c.h.b16 %v975
      %v1056 = vunpack.c.l.b16 %v976
      %v1057 = vunpack.c.h.b16 %v976
      %v1058 = vunpack.c.l.b16 %v977
      %v1059 = vunpack.c.h.b16 %v977
      %v1060 = vunpack.c.l.b16 %v978
      %v1061 = vunpack.c.h.b16 %v978
      %v1062 = vunpack.c.l.b16 %v979
      %v1063 = vunpack.c.h.b16 %v979
      %v1064 = vunpack.c.l.b16 %v980
      %v1065 = vunpack.c.h.b16 %v980
      %v1066 = vunpack.c.l.b16 %v981
      %v1067 = vunpack.c.h.b16 %v981
      %v1068 = vunpack.c.l.b16 %v982
      %v1069 = vunpack.c.h.b16 %v982
      %v1070 = vunpack.c.l.b16 %v983
      %v1071 = vunpack.c.h.b16 %v983
      %v1072 = vunpack.c.l.b16 %v984
      %v1073 = vunpack.c.h.b16 %v984
      %v1074 = vunpack.c.l.b16 %v985
      %v1075 = vunpack.c.h.b16 %v985
      %v1076 = vunpack.c.l.b16 %v986
      %v1077 = vunpack.c.h.b16 %v986
      %v1078 = vunpack.c.l.b16 %v987
      %v1079 = vunpack.c.h.b16 %v987
      %v1080 = vunpack.c.l.b16 %v988
      %v1081 = vunpack.c.h.b16 %v988
      %v1082 = vunpack.c.l.b16 %v989
      %v1083 = vunpack.c.h.b16 %v989
      %v1084 = vunpack.c.l.b16 %v990
      %v1085 = vunpack.c.h.b16 %v990
      %v1086 = vunpack.c.l.b16 %v991
      %v1087 = vunpack.c.h.b16 %v991
      %v1088 = vunpack.c.l.b16 %v992
      %v1089 = vunpack.c.h.b16 %v992
      %v1090 = vunpack.c.l.b16 %v993
      %v1091 = vunpack.c.h.b16 %v993
      %v1092 = vunpack.c.l.b16 %v994
      %v1093 = vunpack.c.h.b16 %v994
      %v1094 = vunpack.c.l.b16 %v995
      %v1095 = vunpack.c.h.b16 %v995
      %v1096 = vunpack.c.l.b16 %v996
      %v1097 = vunpack.c.h.b16 %v996
      %v1098 = vunpack.c.l.b16 %v997
      %v1099 = vunpack.c.h.b16 %v997
      %v1100 = vunpack.c.l.b16 %v998
      %v1101 = vunpack.c.h.b16 %v998
      %v1102 = vunpack.c.l.b16 %v999
      %v1103 = vunpack.c.h.b16 %v999
      %v1104 = vunpack.c.l.b16 %v1000
      %v1105 = vunpack.c.h.b16 %v1000
      %v1106 = vunpack.c.l.b16 %v1001
      %v1107 = vunpack.c.h.b16 %v1001
      %v1108 = vunpack.c.l.b16 %v1002
      %v1109 = vunpack.c.h.b16 %v1002
      %v1110 = vunpack.c.l.b16 %v1003
      %v1111 = vunpack.c.h.b16 %v1003
      %v1112 = vpack.c.b16 %v1040, %v1040
      %v1113 = vpack.c.b16 %v1041, %v1041
      %v1114 = vpack.c.b16 %v1042, %v1042
      %v1115 = vpack.c.b16 %v1043, %v1043
      %v1116 = vpack.c.b16 %v1044, %v1044
      %v1117 = vpack.c.b16 %v1045, %v1045
      %v1118 = vpack.c.b16 %v1046, %v1046
      %v1119 = vpack.c.b16 %v1047, %v1047
      %v1120 = vpack.c.b16 %v1048, %v1048
      %v1121 = vpack.c.b16 %v1049, %v1049
      %v1122 = vpack.c.b16 %v1050, %v1050
      %v1123 = vpack.c.b16 %v1051, %v1051
      %v1124 = vpack.c.b16 %v1052, %v1052
      %v1125 = vpack.c.b16 %v1053, %v1053
      %v1126 = vpack.c.b16 %v1054, %v1054
      %v1127 = vpack.c.b16 %v1055, %v1055
      %v1128 = vpack.c.b16 %v1056, %v1056
      %v1129 = vpack.c.b16 %v1057, %v1057
      %v1130 = vpack.c.b16 %v1058, %v1058
      %v1131 = vpack.c.b16 %v1059, %v1059
      %v1132 = vpack.c.b16 %v1060, %v1060
      %v1133 = vpack.c.b16 %v1061, %v1061
      %v1134 = vpack.c.b16 %v1062, %v1062
      %v1135 = vpack.c.b16 %v1063, %v1063
      %v1136 = vpack.c.b16 %v1064, %v1064
      %v1137 = vpack.c.b16 %v1065, %v1065
      %v1138 = vpack.c.b16 %v1066, %v1066
      %v1139 = vpack.c.b16 %v1067, %v1067
      %v1140 = vpack.c.b16 %v1068, %v1068
      %v1141 = vpack.c.b16 %v1069, %v1069
      %v1142 = vpack.c.b16 %v1070, %v1070
      %v1143 = vpack.c.b16 %v1071, %v1071
      %v1144 = vpack.c.b16 %v1072, %v1072
      %v1145 = vpack.c.b16 %v1073, %v1073
      %v1146 = vpack.c.b16 %v1074, %v1074
      %v1147 = vpack.c.b16 %v1075, %v1075
      %v1148 = vpack.c.b16 %v1076, %v1076
      %v1149 = vpack.c.b16 %v1077, %v1077
      %v1150 = vpack.c.b16 %v1078, %v1078
      %v1151 = vpack.c.b16 %v1079, %v1079
      %v1152 = vpack.c.b16 %v1080, %v1080
      %v1153 = vpack.c.b16 %v1081, %v1081
      %v1154 = vpack.c.b16 %v1082, %v1082
      %v1155 = vpack.c.b16 %v1083, %v1083
      %v1156 = vpack.c.b16 %v1084, %v1084
      %v1157 = vpack.c.b16 %v1085, %v1085
      %v1158 = vpack.c.b16 %v1086, %v1086
      %v1159 = vpack.c.b16 %v1087, %v1087
      %v1160 = vpack.c.b16 %v1088, %v1088
      %v1161 = vpack.c.b16 %v1089, %v1089
      %v1162 = vpack.c.b16 %v1090, %v1090
      %v1163 = vpack.c.b16 %v1091, %v1091
      %v1164 = vpack.c.b16 %v1092, %v1092
      %v1165 = vpack.c.b16 %v1093, %v1093
      %v1166 = vpack.c.b16 %v1094, %v1094
      %v1167 = vpack.c.b16 %v1095, %v1095
      %v1168 = vpack.c.b16 %v1096, %v1096
      %v1169 = vpack.c.b16 %v1097, %v1097
      %v1170 = vpack.c.b16 %v1098, %v1098
      %v1171 = vpack.c.b16 %v1099, %v1099
      %v1172 = vpack.c.b16 %v1100, %v1100
      %v1173 = vpack.c.b16 %v1101, %v1101
      %v1174 = vpack.c.b16 %v1102, %v1102
      %v1175 = vpack.c.b16 %v1103, %v1103
      %v1176 = vpack.c.b16 %v1104, %v1104
      %v1177 = vpack.c.b16 %v1105, %v1105
      %v1178 = vpack.c.b16 %v1106, %v1106
      %v1179 = vpack.c.b16 %v1107, %v1107
      %v1180 = vpack.c.b16 %v1108, %v1108
      %v1181 = vpack.c.b16 %v1109, %v1109
      %v1182 = vpack.c.b16 %v1110, %v1110
      %v1183 = vpack.c.b16 %v1111, %v1111
      %1256 = vst [vmem:[%s172] sm:$0xf] %v1112
      %1257 = vst [vmem:[%s172 + $0x4] sm:$0xf] %v1113
      %1258 = vst [vmem:[%s172 + $0x8] sm:$0xf] %v1114
      %1259 = vst [vmem:[%s172 + $0xc] sm:$0xf] %v1115
      %1260 = vst [vmem:[%s172 + $0x10] sm:$0xf] %v1116
      %1261 = vst [vmem:[%s172 + $0x14] sm:$0xf] %v1117
      %1262 = vst [vmem:[%s172 + $0x18] sm:$0xf] %v1118
      %1263 = vst [vmem:[%s172 + $0x1c] sm:$0xf] %v1119
      %1264 = vst [vmem:[%s172 + $0x20] sm:$0xf] %v1120
      %1265 = vst [vmem:[%s172 + $0x24] sm:$0xf] %v1121
      %1266 = vst [vmem:[%s172 + $0x28] sm:$0xf] %v1122
      %1267 = vst [vmem:[%s172 + $0x2c] sm:$0xf] %v1123
      %1268 = vst [vmem:[%s172 + $0x30] sm:$0xf] %v1124
      %1269 = vst [vmem:[%s172 + $0x34] sm:$0xf] %v1125
      %1270 = vst [vmem:[%s172 + $0x38] sm:$0xf] %v1126
      %1271 = vst [vmem:[%s172 + $0x3c] sm:$0xf] %v1127
      %1272 = vst [vmem:[%s172 + $0x40] sm:$0xf] %v1128
      %1273 = vst [vmem:[%s172 + $0x44] sm:$0xf] %v1129
      %1274 = vst [vmem:[%s172 + $0x48] sm:$0xf] %v1130
      %1275 = vst [vmem:[%s172 + $0x4c] sm:$0xf] %v1131
      %1276 = vst [vmem:[%s172 + $0x50] sm:$0xf] %v1132
      %1277 = vst [vmem:[%s172 + $0x54] sm:$0xf] %v1133
      %1278 = vst [vmem:[%s172 + $0x58] sm:$0xf] %v1134
      %1279 = vst [vmem:[%s172 + $0x5c] sm:$0xf] %v1135
      %1280 = vst [vmem:[%s172 + $0x60] sm:$0xf] %v1136
      %1281 = vst [vmem:[%s172 + $0x64] sm:$0xf] %v1137
      %1282 = vst [vmem:[%s172 + $0x68] sm:$0xf] %v1138
      %1283 = vst [vmem:[%s172 + $0x6c] sm:$0xf] %v1139
      %1284 = vst [vmem:[%s172 + $0x70] sm:$0xf] %v1140
      %1285 = vst [vmem:[%s172 + $0x74] sm:$0xf] %v1141
      %1286 = vst [vmem:[%s172 + $0x78] sm:$0xf] %v1142
      %1287 = vst [vmem:[%s172 + $0x7c] sm:$0xf] %v1143
      %1288 = vst [vmem:[%s172 + $0x80] sm:$0xf] %v1144
      %1289 = vst [vmem:[%s172 + $0x84] sm:$0xf] %v1145
      %1290 = vst [vmem:[%s172 + $0x88] sm:$0xf] %v1146
      %1291 = vst [vmem:[%s172 + $0x8c] sm:$0xf] %v1147
      %1292 = vst [vmem:[%s172 + $0x90] sm:$0xf] %v1148
      %1293 = vst [vmem:[%s172 + $0x94] sm:$0xf] %v1149
      %1294 = vst [vmem:[%s172 + $0x98] sm:$0xf] %v1150
      %1295 = vst [vmem:[%s172 + $0x9c] sm:$0xf] %v1151
      %1296 = vst [vmem:[%s172 + $0xa0] sm:$0xf] %v1152
      %1297 = vst [vmem:[%s172 + $0xa4] sm:$0xf] %v1153
      %1298 = vst [vmem:[%s172 + $0xa8] sm:$0xf] %v1154
      %1299 = vst [vmem:[%s172 + $0xac] sm:$0xf] %v1155
      %1300 = vst [vmem:[%s172 + $0xb0] sm:$0xf] %v1156
      %1301 = vst [vmem:[%s172 + $0xb4] sm:$0xf] %v1157
      %1302 = vst [vmem:[%s172 + $0xb8] sm:$0xf] %v1158
      %1303 = vst [vmem:[%s172 + $0xbc] sm:$0xf] %v1159
      %1304 = vst [vmem:[%s172 + $0xc0] sm:$0xf] %v1160
      %1305 = vst [vmem:[%s172 + $0xc4] sm:$0xf] %v1161
      %1306 = vst [vmem:[%s172 + $0xc8] sm:$0xf] %v1162
      %1307 = vst [vmem:[%s172 + $0xcc] sm:$0xf] %v1163
      %1308 = vst [vmem:[%s172 + $0xd0] sm:$0xf] %v1164
      %1309 = vst [vmem:[%s172 + $0xd4] sm:$0xf] %v1165
      %1310 = vst [vmem:[%s172 + $0xd8] sm:$0xf] %v1166
      %1311 = vst [vmem:[%s172 + $0xdc] sm:$0xf] %v1167
      %1312 = vst [vmem:[%s172 + $0xe0] sm:$0xf] %v1168
      %1313 = vst [vmem:[%s172 + $0xe4] sm:$0xf] %v1169
      %1314 = vst [vmem:[%s172 + $0xe8] sm:$0xf] %v1170
      %1315 = vst [vmem:[%s172 + $0xec] sm:$0xf] %v1171
      %1316 = vst [vmem:[%s172 + $0xf0] sm:$0xf] %v1172
      %1317 = vst [vmem:[%s172 + $0xf4] sm:$0xf] %v1173
      %1318 = vst [vmem:[%s172 + $0xf8] sm:$0xf] %v1174
      %1319 = vst [vmem:[%s172 + $0xfc] sm:$0xf] %v1175
      %1320 = vst [vmem:[%s172 + $0x100] sm:$0xf] %v1176
      %1321 = vst [vmem:[%s172 + $0x104] sm:$0xf] %v1177
      %1322 = vst [vmem:[%s172 + $0x108] sm:$0xf] %v1178
      %1323 = vst [vmem:[%s172 + $0x10c] sm:$0xf] %v1179
      %1324 = vst [vmem:[%s172 + $0x110] sm:$0xf] %v1180
      %1325 = vst [vmem:[%s172 + $0x114] sm:$0xf] %v1181
      %1326 = vst [vmem:[%s172 + $0x118] sm:$0xf] %v1182
      %1327 = vst [vmem:[%s172 + $0x11c] sm:$0xf] %v1183
      %s1328 = smul.u32 72, %s14
      %p1329 = scmp.lt.s32.totalorder %s1328, 143
      %s1330 = scalar_select %p1329, %s1328, 143
      %s1331 = smul.addr %s1330, 4
      %s1332 = scalar_lea.vmem %s3, %s1331
      // Predicated region
      $region33: #{ga_forward.3} parent=31 // pred_check
        %p1333 = pneg %p100
      $region34: #{ga_forward.3} parent=31 // pred_check_branch
        %1335 = sbr.rel (%p1333) target = $region36
      $region35: #{ga_forward.3} parent=31 // pred_region
        %s1336 = smul.u32 72, %s14
      $region36: #{ga_forward.3} parent=31 // pred_fallthru
        _
    $region32: #{ga_forward.3} parent=5 // pred_fallthru
      _
    %p1337 = scmp.le.s32.totalorder 2, %s9
    // Predicated region
    $region37: #{ga_forward.3} parent=5 // pred_check
      %p1338 = pneg %p1337
    $region38: #{ga_forward.3} parent=5 // pred_check_branch
      %1340 = sbr.rel (%p1338) target = $region40
    $region39: #{ga_forward.3} parent=5 // pred_region
      %s1341 = ssub.s32 %s9, 2
      // Predicated region
      $region41: #{ga_forward.3} parent=39 // pred_check
        %p1342 = pneg %p106
      $region42: #{ga_forward.3} parent=39 // pred_check_branch
        %1344 = sbr.rel (%p1342) target = $region44
      $region43: #{ga_forward.3} parent=39 // pred_region
        %s1345 = smul.u32 72, %s15
        %p1346 = scmp.lt.s32.totalorder %s1345, 143
        %s1347 = scalar_select %p1346, %s1345, 143
        %s1348 = smul.addr %s1347, 4
        %s1349 = scalar_lea.vmem %s3, %s1348
      $region44: #{ga_forward.3} parent=39 // pred_fallthru
        _
    $region40: #{ga_forward.3} parent=5 // pred_fallthru
      _
  $region6: #{ga_forward.3} parent=0 // loop_footer
    %s13 = sadd.s32 1, %s9
  $region7: #{ga_forward.3} parent=0 // loop_footer_branch
    %8 = sbr.rel target = $region3
  $region8: #{ga_forward.3} parent=0 // loop_exit
    _

// kernel: ga_forward.4
$region0: #{ga_forward.4}
  #allocation0 [shape = 'u32[]', space=smem, size = 0x4, offset = 0x4, fixed_abs, tag = 'smem constant byte address 0x4 - core index']
  #allocation1 [shape = 'u32[144,128]{1,0:T(1,128)}', space=vmem, size = 0x12000, scoped, tag = 'internal scratch']
  %s0 = inlined_call_operand.vmem [shape: bf16[242,2048], index: 0, kind: input, shape index: {}]
  %s1 = inlined_call_operand.vmem [shape: bf16[2048,64], index: 1, kind: input, shape index: {}]
  %s2 = inlined_call_operand.vmem [shape: f32[1,64], index: 2, kind: input, shape index: {}]
  %s3 = inlined_call_operand.vmem [shape: bf16[242,64], index: 3, kind: output, shape index: {}]
  %s4 = sld [smem:[#allocation0]]
  $region22: #{ga_forward.4} parent=0
    _
  %s6 = ssub.s32 1, %s4
  %s7 = scalar_select 0, %s6, %s4
  // Predicated region
  $region2: #{ga_forward.4} parent=0 // pred_check
    _
  $region3: #{ga_forward.4} parent=0 // pred_check_branch
    %9 = sbr.rel (0) target = $region5
  $region4: #{ga_forward.4} parent=0 // pred_region
    _
  $region5: #{ga_forward.4} parent=0 // pred_fallthru
    _
  // Predicated region
  $region6: #{ga_forward.4} parent=0 // pred_check
    _
  $region7: #{ga_forward.4} parent=0 // pred_check_branch
    %11 = sbr.rel (0) target = $region9
  $region8: #{ga_forward.4} parent=0 // pred_region
    _
  $region9: #{ga_forward.4} parent=0 // pred_fallthru
    _
  // Predicated region
  $region10: #{ga_forward.4} parent=0 // pred_check
    _
  $region11: #{ga_forward.4} parent=0 // pred_check_branch
    %13 = sbr.rel (0) target = $region13
  $region12: #{ga_forward.4} parent=0 // pred_region
    _
  $region13: #{ga_forward.4} parent=0 // pred_fallthru
    _
  %v15 = vld [vmem:[%s0] sm:$0xff]
  %v16 = vld [vmem:[%s0 + $0x8] sm:$0xff]
  %v17 = vld [vmem:[%s0 + $0x10] sm:$0xff]
  %v18 = vld [vmem:[%s0 + $0x18] sm:$0xff]
  %v19 = vld [vmem:[%s0 + $0x20] sm:$0xff]
  %v20 = vld [vmem:[%s0 + $0x28] sm:$0xff]
  %v21 = vld [vmem:[%s0 + $0x30] sm:$0xff]
  %v22 = vld [vmem:[%s0 + $0x38] sm:$0xff]
  %v23 = vld [vmem:[%s0 + $0x40] sm:$0xff]
  %v24 = vld [vmem:[%s0 + $0x48] sm:$0xff]
  %v25 = vld [vmem:[%s0 + $0x50] sm:$0xff]
  %v26 = vld [vmem:[%s0 + $0x58] sm:$0xff]
  %v27 = vld [vmem:[%s0 + $0x60] sm:$0xff]
  %v28 = vld [vmem:[%s0 + $0x68] sm:$0xff]
  %v29 = vld [vmem:[%s0 + $0x70] sm:$0xff]
  %v30 = vld [vmem:[%s0 + $0x78] sm:$0xff]
  %v31 = vld [vmem:[%s0 + $0x80] sm:$0xff]
  %v32 = vld [vmem:[%s0 + $0x88] sm:$0xff]
  %v33 = vld [vmem:[%s0 + $0x90] sm:$0xff]
  %v34 = vld [vmem:[%s0 + $0x98] sm:$0xff]
  %v35 = vld [vmem:[%s0 + $0xa0] sm:$0xff]
  %v36 = vld [vmem:[%s0 + $0xa8] sm:$0xff]
  %v37 = vld [vmem:[%s0 + $0xb0] sm:$0xff]
  %v38 = vld [vmem:[%s0 + $0xb8] sm:$0xff]
  %v39 = vld [vmem:[%s0 + $0xc0] sm:$0xff]
  %v40 = vld [vmem:[%s0 + $0xc8] sm:$0xff]
  %v41 = vld [vmem:[%s0 + $0xd0] sm:$0xff]
  %v42 = vld [vmem:[%s0 + $0xd8] sm:$0xff]
  %v43 = vld [vmem:[%s0 + $0xe0] sm:$0xff]
  %v44 = vld [vmem:[%s0 + $0xe8] sm:$0xff]
  %v45 = vld [vmem:[%s0 + $0xf0] sm:$0xff]
  %v46 = vld [vmem:[%s0 + $0xf8] sm:$0xff]
  %v47 = vld [vmem:[%s0 + $0x100] sm:$0xff]
  %v48 = vld [vmem:[%s0 + $0x108] sm:$0xff]
  %v49 = vld [vmem:[%s0 + $0x110] sm:$0xff]
  %v50 = vld [vmem:[%s0 + $0x118] sm:$0xff]
  %v51 = vld [vmem:[%s0 + $0x120] sm:$0xff]
  %v52 = vld [vmem:[%s0 + $0x128] sm:$0xff]
  %v53 = vld [vmem:[%s0 + $0x130] sm:$0xff]
  %v54 = vld [vmem:[%s0 + $0x138] sm:$0xff]
  %v55 = vld [vmem:[%s0 + $0x140] sm:$0xff]
  %v56 = vld [vmem:[%s0 + $0x148] sm:$0xff]
  %v57 = vld [vmem:[%s0 + $0x150] sm:$0xff]
  %v58 = vld [vmem:[%s0 + $0x158] sm:$0xff]
  %v59 = vld [vmem:[%s0 + $0x160] sm:$0xff]
  %v60 = vld [vmem:[%s0 + $0x168] sm:$0xff]
  %v61 = vld [vmem:[%s0 + $0x170] sm:$0xff]
  %v62 = vld [vmem:[%s0 + $0x178] sm:$0xff]
  %v63 = vld [vmem:[%s0 + $0x180] sm:$0xff]
  %v64 = vld [vmem:[%s0 + $0x188] sm:$0xff]
  %v65 = vld [vmem:[%s0 + $0x190] sm:$0xff]
  %v66 = vld [vmem:[%s0 + $0x198] sm:$0xff]
  %v67 = vld [vmem:[%s0 + $0x1a0] sm:$0xff]
  %v68 = vld [vmem:[%s0 + $0x1a8] sm:$0xff]
  %v69 = vld [vmem:[%s0 + $0x1b0] sm:$0xff]
  %v70 = vld [vmem:[%s0 + $0x1b8] sm:$0xff]
  %v71 = vld [vmem:[%s0 + $0x1c0] sm:$0xff]
  %v72 = vld [vmem:[%s0 + $0x1c8] sm:$0xff]
  %v73 = vld [vmem:[%s0 + $0x1d0] sm:$0xff]
  %v74 = vld [vmem:[%s0 + $0x1d8] sm:$0xff]
  %v75 = vld [vmem:[%s0 + $0x1e0] sm:$0xff]
  %v76 = vld [vmem:[%s0 + $0x1e8] sm:$0xff]
  %v77 = vld [vmem:[%s0 + $0x1f0] sm:$0xff]
  %v78 = vld [vmem:[%s0 + $0x1f8] sm:$0xff]
  %v79 = vld [vmem:[%s0 + $0x200] sm:$0xff]
  %v80 = vld [vmem:[%s0 + $0x208] sm:$0xff]
  %v81 = vld [vmem:[%s0 + $0x210] sm:$0xff]
  %v82 = vld [vmem:[%s0 + $0x218] sm:$0xff]
  %v83 = vld [vmem:[%s0 + $0x220] sm:$0xff]
  %v84 = vld [vmem:[%s0 + $0x228] sm:$0xff]
  %v85 = vld [vmem:[%s0 + $0x230] sm:$0xff]
  %v86 = vld [vmem:[%s0 + $0x238] sm:$0xff]
  %v87 = vld [vmem:[%s0 + $0x240] sm:$0xff]
  %v88 = vld [vmem:[%s0 + $0x248] sm:$0xff]
  %v89 = vld [vmem:[%s0 + $0x250] sm:$0xff]
  %v90 = vld [vmem:[%s0 + $0x258] sm:$0xff]
  %v91 = vld [vmem:[%s0 + $0x260] sm:$0xff]
  %v92 = vld [vmem:[%s0 + $0x268] sm:$0xff]
  %v93 = vld [vmem:[%s0 + $0x270] sm:$0xff]
  %v94 = vld [vmem:[%s0 + $0x278] sm:$0xff]
  %v95 = vld [vmem:[%s0 + $0x280] sm:$0xff]
  %v96 = vld [vmem:[%s0 + $0x288] sm:$0xff]
  %v97 = vld [vmem:[%s0 + $0x290] sm:$0xff]
  %v98 = vld [vmem:[%s0 + $0x298] sm:$0xff]
  %v99 = vld [vmem:[%s0 + $0x2a0] sm:$0xff]
  %v100 = vld [vmem:[%s0 + $0x2a8] sm:$0xff]
  %v101 = vld [vmem:[%s0 + $0x2b0] sm:$0xff]
  %v102 = vld [vmem:[%s0 + $0x2b8] sm:$0xff]
  %v103 = vld [vmem:[%s0 + $0x2c0] sm:$0xff]
  %v104 = vld [vmem:[%s0 + $0x2c8] sm:$0xff]
  %v105 = vld [vmem:[%s0 + $0x2d0] sm:$0xff]
  %v106 = vld [vmem:[%s0 + $0x2d8] sm:$0xff]
  %v107 = vld [vmem:[%s0 + $0x2e0] sm:$0xff]
  %v108 = vld [vmem:[%s0 + $0x2e8] sm:$0xff]
  %v109 = vld [vmem:[%s0 + $0x2f0] sm:$0xff]
  %v110 = vld [vmem:[%s0 + $0x2f8] sm:$0xff]
  %v111 = vld [vmem:[%s0 + $0x300] sm:$0xff]
  %v112 = vld [vmem:[%s0 + $0x308] sm:$0xff]
  %v113 = vld [vmem:[%s0 + $0x310] sm:$0xff]
  %v114 = vld [vmem:[%s0 + $0x318] sm:$0xff]
  %v115 = vld [vmem:[%s0 + $0x320] sm:$0xff]
  %v116 = vld [vmem:[%s0 + $0x328] sm:$0xff]
  %v117 = vld [vmem:[%s0 + $0x330] sm:$0xff]
  %v118 = vld [vmem:[%s0 + $0x338] sm:$0xff]
  %v119 = vld [vmem:[%s0 + $0x340] sm:$0xff]
  %v120 = vld [vmem:[%s0 + $0x348] sm:$0xff]
  %v121 = vld [vmem:[%s0 + $0x350] sm:$0xff]
  %v122 = vld [vmem:[%s0 + $0x358] sm:$0xff]
  %v123 = vld [vmem:[%s0 + $0x360] sm:$0xff]
  %v124 = vld [vmem:[%s0 + $0x368] sm:$0xff]
  %v125 = vld [vmem:[%s0 + $0x370] sm:$0xff]
  %v126 = vld [vmem:[%s0 + $0x378] sm:$0xff]
  %v127 = vld [vmem:[%s0 + $0x380] sm:$0xff]
  %v128 = vld [vmem:[%s0 + $0x388] sm:$0xff]
  %v129 = vld [vmem:[%s0 + $0x390] sm:$0xff]
  %v130 = vld [vmem:[%s0 + $0x398] sm:$0xff]
  %v131 = vld [vmem:[%s0 + $0x3a0] sm:$0xff]
  %v132 = vld [vmem:[%s0 + $0x3a8] sm:$0xff]
  %v133 = vld [vmem:[%s0 + $0x3b0] sm:$0xff]
  %v134 = vld [vmem:[%s0 + $0x3b8] sm:$0xff]
  %v135 = vld [vmem:[%s0 + $0x3c0] sm:$0xff]
  %v136 = vld [vmem:[%s0 + $0x3c8] sm:$0xff]
  %v137 = vld [vmem:[%s0 + $0x3d0] sm:$0xff]
  %v138 = vld [vmem:[%s0 + $0x3d8] sm:$0xff]
  %v139 = vld [vmem:[%s0 + $0x3e0] sm:$0xff]
  %v140 = vld [vmem:[%s0 + $0x3e8] sm:$0xff]
  %v141 = vld [vmem:[%s0 + $0x3f0] sm:$0xff]
  %v142 = vld [vmem:[%s0 + $0x3f8] sm:$0xff]
  %v143 = vld [vmem:[%s0 + $0x400] sm:$0xff]
  %v144 = vld [vmem:[%s0 + $0x408] sm:$0xff]
  %v145 = vld [vmem:[%s0 + $0x410] sm:$0xff]
  %v146 = vld [vmem:[%s0 + $0x418] sm:$0xff]
  %v147 = vld [vmem:[%s0 + $0x420] sm:$0xff]
  %v148 = vld [vmem:[%s0 + $0x428] sm:$0xff]
  %v149 = vld [vmem:[%s0 + $0x430] sm:$0xff]
  %v150 = vld [vmem:[%s0 + $0x438] sm:$0xff]
  %v151 = vld [vmem:[%s0 + $0x440] sm:$0xff]
  %v152 = vld [vmem:[%s0 + $0x448] sm:$0xff]
  %v153 = vld [vmem:[%s0 + $0x450] sm:$0xff]
  %v154 = vld [vmem:[%s0 + $0x458] sm:$0xff]
  %v155 = vld [vmem:[%s0 + $0x460] sm:$0xff]
  %v156 = vld [vmem:[%s0 + $0x468] sm:$0xff]
  %v157 = vld [vmem:[%s0 + $0x470] sm:$0xff]
  %v158 = vld [vmem:[%s0 + $0x478] sm:$0xff]
  %v159 = vld [vmem:[%s0 + $0x480] sm:$0xff]
  %v160 = vld [vmem:[%s0 + $0x488] sm:$0xff]
  %v161 = vld [vmem:[%s0 + $0x490] sm:$0xff]
  %v162 = vld [vmem:[%s0 + $0x498] sm:$0xff]
  %v163 = vld [vmem:[%s0 + $0x4a0] sm:$0xff]
  %v164 = vld [vmem:[%s0 + $0x4a8] sm:$0xff]
  %v165 = vld [vmem:[%s0 + $0x4b0] sm:$0xff]
  %v166 = vld [vmem:[%s0 + $0x4b8] sm:$0xff]
  %v167 = vld [vmem:[%s0 + $0x4c0] sm:$0xff]
  %v168 = vld [vmem:[%s0 + $0x4c8] sm:$0xff]
  %v169 = vld [vmem:[%s0 + $0x4d0] sm:$0xff]
  %v170 = vld [vmem:[%s0 + $0x4d8] sm:$0xff]
  %v171 = vld [vmem:[%s0 + $0x4e0] sm:$0xff]
  %v172 = vld [vmem:[%s0 + $0x4e8] sm:$0xff]
  %v173 = vld [vmem:[%s0 + $0x4f0] sm:$0xff]
  %v174 = vld [vmem:[%s0 + $0x4f8] sm:$0xff]
  %v175 = vld [vmem:[%s0 + $0x500] sm:$0xff]
  %v176 = vld [vmem:[%s0 + $0x508] sm:$0xff]
  %v177 = vld [vmem:[%s0 + $0x510] sm:$0xff]
  %v178 = vld [vmem:[%s0 + $0x518] sm:$0xff]
  %v179 = vld [vmem:[%s0 + $0x520] sm:$0xff]
  %v180 = vld [vmem:[%s0 + $0x528] sm:$0xff]
  %v181 = vld [vmem:[%s0 + $0x530] sm:$0xff]
  %v182 = vld [vmem:[%s0 + $0x538] sm:$0xff]
  %v183 = vld [vmem:[%s0 + $0x540] sm:$0xff]
  %v184 = vld [vmem:[%s0 + $0x548] sm:$0xff]
  %v185 = vld [vmem:[%s0 + $0x550] sm:$0xff]
  %v186 = vld [vmem:[%s0 + $0x558] sm:$0xff]
  %v187 = vld [vmem:[%s0 + $0x560] sm:$0xff]
  %v188 = vld [vmem:[%s0 + $0x568] sm:$0xff]
  %v189 = vld [vmem:[%s0 + $0x570] sm:$0xff]
  %v190 = vld [vmem:[%s0 + $0x578] sm:$0xff]
  %v191 = vld [vmem:[%s0 + $0x580] sm:$0xff]
  %v192 = vld [vmem:[%s0 + $0x588] sm:$0xff]
  %v193 = vld [vmem:[%s0 + $0x590] sm:$0xff]
  %v194 = vld [vmem:[%s0 + $0x598] sm:$0xff]
  %v195 = vld [vmem:[%s0 + $0x5a0] sm:$0xff]
  %v196 = vld [vmem:[%s0 + $0x5a8] sm:$0xff]
  %v197 = vld [vmem:[%s0 + $0x5b0] sm:$0xff]
  %v198 = vld [vmem:[%s0 + $0x5b8] sm:$0xff]
  %v199 = vld [vmem:[%s0 + $0x5c0] sm:$0xff]
  %v200 = vld [vmem:[%s0 + $0x5c8] sm:$0xff]
  %v201 = vld [vmem:[%s0 + $0x5d0] sm:$0xff]
  %v202 = vld [vmem:[%s0 + $0x5d8] sm:$0xff]
  %v203 = vld [vmem:[%s0 + $0x5e0] sm:$0xff]
  %v204 = vld [vmem:[%s0 + $0x5e8] sm:$0xff]
  %v205 = vld [vmem:[%s0 + $0x5f0] sm:$0xff]
  %v206 = vld [vmem:[%s0 + $0x5f8] sm:$0xff]
  %v207 = vld [vmem:[%s0 + $0x600] sm:$0xff]
  %v208 = vld [vmem:[%s0 + $0x608] sm:$0xff]
  %v209 = vld [vmem:[%s0 + $0x610] sm:$0xff]
  %v210 = vld [vmem:[%s0 + $0x618] sm:$0xff]
  %v211 = vld [vmem:[%s0 + $0x620] sm:$0xff]
  %v212 = vld [vmem:[%s0 + $0x628] sm:$0xff]
  %v213 = vld [vmem:[%s0 + $0x630] sm:$0xff]
  %v214 = vld [vmem:[%s0 + $0x638] sm:$0xff]
  %v215 = vld [vmem:[%s0 + $0x640] sm:$0xff]
  %v216 = vld [vmem:[%s0 + $0x648] sm:$0xff]
  %v217 = vld [vmem:[%s0 + $0x650] sm:$0xff]
  %v218 = vld [vmem:[%s0 + $0x658] sm:$0xff]
  %v219 = vld [vmem:[%s0 + $0x660] sm:$0xff]
  %v220 = vld [vmem:[%s0 + $0x668] sm:$0xff]
  %v221 = vld [vmem:[%s0 + $0x670] sm:$0xff]
  %v222 = vld [vmem:[%s0 + $0x678] sm:$0xff]
  %v223 = vld [vmem:[%s0 + $0x680] sm:$0xff]
  %v224 = vld [vmem:[%s0 + $0x688] sm:$0xff]
  %v225 = vld [vmem:[%s0 + $0x690] sm:$0xff]
  %v226 = vld [vmem:[%s0 + $0x698] sm:$0xff]
  %v227 = vld [vmem:[%s0 + $0x6a0] sm:$0xff]
  %v228 = vld [vmem:[%s0 + $0x6a8] sm:$0xff]
  %v229 = vld [vmem:[%s0 + $0x6b0] sm:$0xff]
  %v230 = vld [vmem:[%s0 + $0x6b8] sm:$0xff]
  %v231 = vld [vmem:[%s0 + $0x6c0] sm:$0xff]
  %v232 = vld [vmem:[%s0 + $0x6c8] sm:$0xff]
  %v233 = vld [vmem:[%s0 + $0x6d0] sm:$0xff]
  %v234 = vld [vmem:[%s0 + $0x6d8] sm:$0xff]
  %v235 = vld [vmem:[%s0 + $0x6e0] sm:$0xff]
  %v236 = vld [vmem:[%s0 + $0x6e8] sm:$0xff]
  %v237 = vld [vmem:[%s0 + $0x6f0] sm:$0xff]
  %v238 = vld [vmem:[%s0 + $0x6f8] sm:$0xff]
  %v239 = vld [vmem:[%s0 + $0x700] sm:$0xff]
  %v240 = vld [vmem:[%s0 + $0x708] sm:$0xff]
  %v241 = vld [vmem:[%s0 + $0x710] sm:$0xff]
  %v242 = vld [vmem:[%s0 + $0x718] sm:$0xff]
  %v243 = vld [vmem:[%s0 + $0x720] sm:$0xff]
  %v244 = vld [vmem:[%s0 + $0x728] sm:$0xff]
  %v245 = vld [vmem:[%s0 + $0x730] sm:$0xff]
  %v246 = vld [vmem:[%s0 + $0x738] sm:$0xff]
  %v247 = vld [vmem:[%s0 + $0x740] sm:$0xff]
  %v248 = vld [vmem:[%s0 + $0x748] sm:$0xff]
  %v249 = vld [vmem:[%s0 + $0x750] sm:$0xff]
  %v250 = vld [vmem:[%s0 + $0x758] sm:$0xff]
  %v251 = vld [vmem:[%s0 + $0x760] sm:$0xff]
  %v252 = vld [vmem:[%s0 + $0x768] sm:$0xff]
  %v253 = vld [vmem:[%s0 + $0x770] sm:$0xff]
  %v254 = vld [vmem:[%s0 + $0x778] sm:$0xff]
  %v255 = vld [vmem:[%s0 + $0x780] sm:$0x11]
  %v256 = vld [vmem:[%s0 + $0x788] sm:$0x11]
  %v257 = vld [vmem:[%s0 + $0x790] sm:$0x11]
  %v258 = vld [vmem:[%s0 + $0x798] sm:$0x11]
  %v259 = vld [vmem:[%s0 + $0x7a0] sm:$0x11]
  %v260 = vld [vmem:[%s0 + $0x7a8] sm:$0x11]
  %v261 = vld [vmem:[%s0 + $0x7b0] sm:$0x11]
  %v262 = vld [vmem:[%s0 + $0x7b8] sm:$0x11]
  %v263 = vld [vmem:[%s1] sm:$0xf]
  %v264 = vld [vmem:[%s1 + $0x4] sm:$0xf]
  %v265 = vld [vmem:[%s1 + $0x8] sm:$0xf]
  %v266 = vld [vmem:[%s1 + $0xc] sm:$0xf]
  %v267 = vld [vmem:[%s1 + $0x10] sm:$0xf]
  %v268 = vld [vmem:[%s1 + $0x14] sm:$0xf]
  %v269 = vld [vmem:[%s1 + $0x18] sm:$0xf]
  %v270 = vld [vmem:[%s1 + $0x1c] sm:$0xf]
  %v271 = vld [vmem:[%s1 + $0x20] sm:$0xf]
  %v272 = vld [vmem:[%s1 + $0x24] sm:$0xf]
  %v273 = vld [vmem:[%s1 + $0x28] sm:$0xf]
  %v274 = vld [vmem:[%s1 + $0x2c] sm:$0xf]
  %v275 = vld [vmem:[%s1 + $0x30] sm:$0xf]
  %v276 = vld [vmem:[%s1 + $0x34] sm:$0xf]
  %v277 = vld [vmem:[%s1 + $0x38] sm:$0xf]
  %v278 = vld [vmem:[%s1 + $0x3c] sm:$0xf]
  %v279 = vld [vmem:[%s1 + $0x40] sm:$0xf]
  %v280 = vld [vmem:[%s1 + $0x44] sm:$0xf]
  %v281 = vld [vmem:[%s1 + $0x48] sm:$0xf]
  %v282 = vld [vmem:[%s1 + $0x4c] sm:$0xf]
  %v283 = vld [vmem:[%s1 + $0x50] sm:$0xf]
  %v284 = vld [vmem:[%s1 + $0x54] sm:$0xf]
  %v285 = vld [vmem:[%s1 + $0x58] sm:$0xf]
  %v286 = vld [vmem:[%s1 + $0x5c] sm:$0xf]
  %v287 = vld [vmem:[%s1 + $0x60] sm:$0xf]
  %v288 = vld [vmem:[%s1 + $0x64] sm:$0xf]
  %v289 = vld [vmem:[%s1 + $0x68] sm:$0xf]
  %v290 = vld [vmem:[%s1 + $0x6c] sm:$0xf]
  %v291 = vld [vmem:[%s1 + $0x70] sm:$0xf]
  %v292 = vld [vmem:[%s1 + $0x74] sm:$0xf]
  %v293 = vld [vmem:[%s1 + $0x78] sm:$0xf]
  %v294 = vld [vmem:[%s1 + $0x7c] sm:$0xf]
  %v295 = vld [vmem:[%s1 + $0x80] sm:$0xf]
  %v296 = vld [vmem:[%s1 + $0x84] sm:$0xf]
  %v297 = vld [vmem:[%s1 + $0x88] sm:$0xf]
  %v298 = vld [vmem:[%s1 + $0x8c] sm:$0xf]
  %v299 = vld [vmem:[%s1 + $0x90] sm:$0xf]
  %v300 = vld [vmem:[%s1 + $0x94] sm:$0xf]
  %v301 = vld [vmem:[%s1 + $0x98] sm:$0xf]
  %v302 = vld [vmem:[%s1 + $0x9c] sm:$0xf]
  %v303 = vld [vmem:[%s1 + $0xa0] sm:$0xf]
  %v304 = vld [vmem:[%s1 + $0xa4] sm:$0xf]
  %v305 = vld [vmem:[%s1 + $0xa8] sm:$0xf]
  %v306 = vld [vmem:[%s1 + $0xac] sm:$0xf]
  %v307 = vld [vmem:[%s1 + $0xb0] sm:$0xf]
  %v308 = vld [vmem:[%s1 + $0xb4] sm:$0xf]
  %v309 = vld [vmem:[%s1 + $0xb8] sm:$0xf]
  %v310 = vld [vmem:[%s1 + $0xbc] sm:$0xf]
  %v311 = vld [vmem:[%s1 + $0xc0] sm:$0xf]
  %v312 = vld [vmem:[%s1 + $0xc4] sm:$0xf]
  %v313 = vld [vmem:[%s1 + $0xc8] sm:$0xf]
  %v314 = vld [vmem:[%s1 + $0xcc] sm:$0xf]
  %v315 = vld [vmem:[%s1 + $0xd0] sm:$0xf]
  %v316 = vld [vmem:[%s1 + $0xd4] sm:$0xf]
  %v317 = vld [vmem:[%s1 + $0xd8] sm:$0xf]
  %v318 = vld [vmem:[%s1 + $0xdc] sm:$0xf]
  %v319 = vld [vmem:[%s1 + $0xe0] sm:$0xf]
  %v320 = vld [vmem:[%s1 + $0xe4] sm:$0xf]
  %v321 = vld [vmem:[%s1 + $0xe8] sm:$0xf]
  %v322 = vld [vmem:[%s1 + $0xec] sm:$0xf]
  %v323 = vld [vmem:[%s1 + $0xf0] sm:$0xf]
  %v324 = vld [vmem:[%s1 + $0xf4] sm:$0xf]
  %v325 = vld [vmem:[%s1 + $0xf8] sm:$0xf]
  %v326 = vld [vmem:[%s1 + $0xfc] sm:$0xf]
  %v327 = vld [vmem:[%s1 + $0x100] sm:$0xf]
  %v328 = vld [vmem:[%s1 + $0x104] sm:$0xf]
  %v329 = vld [vmem:[%s1 + $0x108] sm:$0xf]
  %v330 = vld [vmem:[%s1 + $0x10c] sm:$0xf]
  %v331 = vld [vmem:[%s1 + $0x110] sm:$0xf]
  %v332 = vld [vmem:[%s1 + $0x114] sm:$0xf]
  %v333 = vld [vmem:[%s1 + $0x118] sm:$0xf]
  %v334 = vld [vmem:[%s1 + $0x11c] sm:$0xf]
  %v335 = vld [vmem:[%s1 + $0x120] sm:$0xf]
  %v336 = vld [vmem:[%s1 + $0x124] sm:$0xf]
  %v337 = vld [vmem:[%s1 + $0x128] sm:$0xf]
  %v338 = vld [vmem:[%s1 + $0x12c] sm:$0xf]
  %v339 = vld [vmem:[%s1 + $0x130] sm:$0xf]
  %v340 = vld [vmem:[%s1 + $0x134] sm:$0xf]
  %v341 = vld [vmem:[%s1 + $0x138] sm:$0xf]
  %v342 = vld [vmem:[%s1 + $0x13c] sm:$0xf]
  %v343 = vld [vmem:[%s1 + $0x140] sm:$0xf]
  %v344 = vld [vmem:[%s1 + $0x144] sm:$0xf]
  %v345 = vld [vmem:[%s1 + $0x148] sm:$0xf]
  %v346 = vld [vmem:[%s1 + $0x14c] sm:$0xf]
  %v347 = vld [vmem:[%s1 + $0x150] sm:$0xf]
  %v348 = vld [vmem:[%s1 + $0x154] sm:$0xf]
  %v349 = vld [vmem:[%s1 + $0x158] sm:$0xf]
  %v350 = vld [vmem:[%s1 + $0x15c] sm:$0xf]
  %v351 = vld [vmem:[%s1 + $0x160] sm:$0xf]
  %v352 = vld [vmem:[%s1 + $0x164] sm:$0xf]
  %v353 = vld [vmem:[%s1 + $0x168] sm:$0xf]
  %v354 = vld [vmem:[%s1 + $0x16c] sm:$0xf]
  %v355 = vld [vmem:[%s1 + $0x170] sm:$0xf]
  %v356 = vld [vmem:[%s1 + $0x174] sm:$0xf]
  %v357 = vld [vmem:[%s1 + $0x178] sm:$0xf]
  %v358 = vld [vmem:[%s1 + $0x17c] sm:$0xf]
  %v359 = vld [vmem:[%s1 + $0x180] sm:$0xf]
  %v360 = vld [vmem:[%s1 + $0x184] sm:$0xf]
  %v361 = vld [vmem:[%s1 + $0x188] sm:$0xf]
  %v362 = vld [vmem:[%s1 + $0x18c] sm:$0xf]
  %v363 = vld [vmem:[%s1 + $0x190] sm:$0xf]
  %v364 = vld [vmem:[%s1 + $0x194] sm:$0xf]
  %v365 = vld [vmem:[%s1 + $0x198] sm:$0xf]
  %v366 = vld [vmem:[%s1 + $0x19c] sm:$0xf]
  %v367 = vld [vmem:[%s1 + $0x1a0] sm:$0xf]
  %v368 = vld [vmem:[%s1 + $0x1a4] sm:$0xf]
  %v369 = vld [vmem:[%s1 + $0x1a8] sm:$0xf]
  %v370 = vld [vmem:[%s1 + $0x1ac] sm:$0xf]
  %v371 = vld [vmem:[%s1 + $0x1b0] sm:$0xf]
  %v372 = vld [vmem:[%s1 + $0x1b4] sm:$0xf]
  %v373 = vld [vmem:[%s1 + $0x1b8] sm:$0xf]
  %v374 = vld [vmem:[%s1 + $0x1bc] sm:$0xf]
  %v375 = vld [vmem:[%s1 + $0x1c0] sm:$0xf]
  %v376 = vld [vmem:[%s1 + $0x1c4] sm:$0xf]
  %v377 = vld [vmem:[%s1 + $0x1c8] sm:$0xf]
  %v378 = vld [vmem:[%s1 + $0x1cc] sm:$0xf]
  %v379 = vld [vmem:[%s1 + $0x1d0] sm:$0xf]
  %v380 = vld [vmem:[%s1 + $0x1d4] sm:$0xf]
  %v381 = vld [vmem:[%s1 + $0x1d8] sm:$0xf]
  %v382 = vld [vmem:[%s1 + $0x1dc] sm:$0xf]
  %v383 = vld [vmem:[%s1 + $0x1e0] sm:$0xf]
  %v384 = vld [vmem:[%s1 + $0x1e4] sm:$0xf]
  %v385 = vld [vmem:[%s1 + $0x1e8] sm:$0xf]
  %v386 = vld [vmem:[%s1 + $0x1ec] sm:$0xf]
  %v387 = vld [vmem:[%s1 + $0x1f0] sm:$0xf]
  %v388 = vld [vmem:[%s1 + $0x1f4] sm:$0xf]
  %v389 = vld [vmem:[%s1 + $0x1f8] sm:$0xf]
  %v390 = vld [vmem:[%s1 + $0x1fc] sm:$0xf]
  %v391 = vld [vmem:[%s1 + $0x200] sm:$0xf]
  %v392 = vld [vmem:[%s1 + $0x204] sm:$0xf]
  %v393 = vld [vmem:[%s1 + $0x208] sm:$0xf]
  %v394 = vld [vmem:[%s1 + $0x20c] sm:$0xf]
  %v395 = vld [vmem:[%s1 + $0x210] sm:$0xf]
  %v396 = vld [vmem:[%s1 + $0x214] sm:$0xf]
  %v397 = vld [vmem:[%s1 + $0x218] sm:$0xf]
  %v398 = vld [vmem:[%s1 + $0x21c] sm:$0xf]
  %v399 = vld [vmem:[%s1 + $0x220] sm:$0xf]
  %v400 = vld [vmem:[%s1 + $0x224] sm:$0xf]
  %v401 = vld [vmem:[%s1 + $0x228] sm:$0xf]
  %v402 = vld [vmem:[%s1 + $0x22c] sm:$0xf]
  %v403 = vld [vmem:[%s1 + $0x230] sm:$0xf]
  %v404 = vld [vmem:[%s1 + $0x234] sm:$0xf]
  %v405 = vld [vmem:[%s1 + $0x238] sm:$0xf]
  %v406 = vld [vmem:[%s1 + $0x23c] sm:$0xf]
  %v407 = vld [vmem:[%s1 + $0x240] sm:$0xf]
  %v408 = vld [vmem:[%s1 + $0x244] sm:$0xf]
  %v409 = vld [vmem:[%s1 + $0x248] sm:$0xf]
  %v410 = vld [vmem:[%s1 + $0x24c] sm:$0xf]
  %v411 = vld [vmem:[%s1 + $0x250] sm:$0xf]
  %v412 = vld [vmem:[%s1 + $0x254] sm:$0xf]
  %v413 = vld [vmem:[%s1 + $0x258] sm:$0xf]
  %v414 = vld [vmem:[%s1 + $0x25c] sm:$0xf]
  %v415 = vld [vmem:[%s1 + $0x260] sm:$0xf]
  %v416 = vld [vmem:[%s1 + $0x264] sm:$0xf]
  %v417 = vld [vmem:[%s1 + $0x268] sm:$0xf]
  %v418 = vld [vmem:[%s1 + $0x26c] sm:$0xf]
  %v419 = vld [vmem:[%s1 + $0x270] sm:$0xf]
  %v420 = vld [vmem:[%s1 + $0x274] sm:$0xf]
  %v421 = vld [vmem:[%s1 + $0x278] sm:$0xf]
  %v422 = vld [vmem:[%s1 + $0x27c] sm:$0xf]
  %v423 = vld [vmem:[%s1 + $0x280] sm:$0xf]
  %v424 = vld [vmem:[%s1 + $0x284] sm:$0xf]
  %v425 = vld [vmem:[%s1 + $0x288] sm:$0xf]
  %v426 = vld [vmem:[%s1 + $0x28c] sm:$0xf]
  %v427 = vld [vmem:[%s1 + $0x290] sm:$0xf]
  %v428 = vld [vmem:[%s1 + $0x294] sm:$0xf]
  %v429 = vld [vmem:[%s1 + $0x298] sm:$0xf]
  %v430 = vld [vmem:[%s1 + $0x29c] sm:$0xf]
  %v431 = vld [vmem:[%s1 + $0x2a0] sm:$0xf]
  %v432 = vld [vmem:[%s1 + $0x2a4] sm:$0xf]
  %v433 = vld [vmem:[%s1 + $0x2a8] sm:$0xf]
  %v434 = vld [vmem:[%s1 + $0x2ac] sm:$0xf]
  %v435 = vld [vmem:[%s1 + $0x2b0] sm:$0xf]
  %v436 = vld [vmem:[%s1 + $0x2b4] sm:$0xf]
  %v437 = vld [vmem:[%s1 + $0x2b8] sm:$0xf]
  %v438 = vld [vmem:[%s1 + $0x2bc] sm:$0xf]
  %v439 = vld [vmem:[%s1 + $0x2c0] sm:$0xf]
  %v440 = vld [vmem:[%s1 + $0x2c4] sm:$0xf]
  %v441 = vld [vmem:[%s1 + $0x2c8] sm:$0xf]
  %v442 = vld [vmem:[%s1 + $0x2cc] sm:$0xf]
  %v443 = vld [vmem:[%s1 + $0x2d0] sm:$0xf]
  %v444 = vld [vmem:[%s1 + $0x2d4] sm:$0xf]
  %v445 = vld [vmem:[%s1 + $0x2d8] sm:$0xf]
  %v446 = vld [vmem:[%s1 + $0x2dc] sm:$0xf]
  %v447 = vld [vmem:[%s1 + $0x2e0] sm:$0xf]
  %v448 = vld [vmem:[%s1 + $0x2e4] sm:$0xf]
  %v449 = vld [vmem:[%s1 + $0x2e8] sm:$0xf]
  %v450 = vld [vmem:[%s1 + $0x2ec] sm:$0xf]
  %v451 = vld [vmem:[%s1 + $0x2f0] sm:$0xf]
  %v452 = vld [vmem:[%s1 + $0x2f4] sm:$0xf]
  %v453 = vld [vmem:[%s1 + $0x2f8] sm:$0xf]
  %v454 = vld [vmem:[%s1 + $0x2fc] sm:$0xf]
  %v455 = vld [vmem:[%s1 + $0x300] sm:$0xf]
  %v456 = vld [vmem:[%s1 + $0x304] sm:$0xf]
  %v457 = vld [vmem:[%s1 + $0x308] sm:$0xf]
  %v458 = vld [vmem:[%s1 + $0x30c] sm:$0xf]
  %v459 = vld [vmem:[%s1 + $0x310] sm:$0xf]
  %v460 = vld [vmem:[%s1 + $0x314] sm:$0xf]
  %v461 = vld [vmem:[%s1 + $0x318] sm:$0xf]
  %v462 = vld [vmem:[%s1 + $0x31c] sm:$0xf]
  %v463 = vld [vmem:[%s1 + $0x320] sm:$0xf]
  %v464 = vld [vmem:[%s1 + $0x324] sm:$0xf]
  %v465 = vld [vmem:[%s1 + $0x328] sm:$0xf]
  %v466 = vld [vmem:[%s1 + $0x32c] sm:$0xf]
  %v467 = vld [vmem:[%s1 + $0x330] sm:$0xf]
  %v468 = vld [vmem:[%s1 + $0x334] sm:$0xf]
  %v469 = vld [vmem:[%s1 + $0x338] sm:$0xf]
  %v470 = vld [vmem:[%s1 + $0x33c] sm:$0xf]
  %v471 = vld [vmem:[%s1 + $0x340] sm:$0xf]
  %v472 = vld [vmem:[%s1 + $0x344] sm:$0xf]
  %v473 = vld [vmem:[%s1 + $0x348] sm:$0xf]
  %v474 = vld [vmem:[%s1 + $0x34c] sm:$0xf]
  %v475 = vld [vmem:[%s1 + $0x350] sm:$0xf]
  %v476 = vld [vmem:[%s1 + $0x354] sm:$0xf]
  %v477 = vld [vmem:[%s1 + $0x358] sm:$0xf]
  %v478 = vld [vmem:[%s1 + $0x35c] sm:$0xf]
  %v479 = vld [vmem:[%s1 + $0x360] sm:$0xf]
  %v480 = vld [vmem:[%s1 + $0x364] sm:$0xf]
  %v481 = vld [vmem:[%s1 + $0x368] sm:$0xf]
  %v482 = vld [vmem:[%s1 + $0x36c] sm:$0xf]
  %v483 = vld [vmem:[%s1 + $0x370] sm:$0xf]
  %v484 = vld [vmem:[%s1 + $0x374] sm:$0xf]
  %v485 = vld [vmem:[%s1 + $0x378] sm:$0xf]
  %v486 = vld [vmem:[%s1 + $0x37c] sm:$0xf]
  %v487 = vld [vmem:[%s1 + $0x380] sm:$0xf]
  %v488 = vld [vmem:[%s1 + $0x384] sm:$0xf]
  %v489 = vld [vmem:[%s1 + $0x388] sm:$0xf]
  %v490 = vld [vmem:[%s1 + $0x38c] sm:$0xf]
  %v491 = vld [vmem:[%s1 + $0x390] sm:$0xf]
  %v492 = vld [vmem:[%s1 + $0x394] sm:$0xf]
  %v493 = vld [vmem:[%s1 + $0x398] sm:$0xf]
  %v494 = vld [vmem:[%s1 + $0x39c] sm:$0xf]
  %v495 = vld [vmem:[%s1 + $0x3a0] sm:$0xf]
  %v496 = vld [vmem:[%s1 + $0x3a4] sm:$0xf]
  %v497 = vld [vmem:[%s1 + $0x3a8] sm:$0xf]
  %v498 = vld [vmem:[%s1 + $0x3ac] sm:$0xf]
  %v499 = vld [vmem:[%s1 + $0x3b0] sm:$0xf]
  %v500 = vld [vmem:[%s1 + $0x3b4] sm:$0xf]
  %v501 = vld [vmem:[%s1 + $0x3b8] sm:$0xf]
  %v502 = vld [vmem:[%s1 + $0x3bc] sm:$0xf]
  %v503 = vld [vmem:[%s1 + $0x3c0] sm:$0xf]
  %v504 = vld [vmem:[%s1 + $0x3c4] sm:$0xf]
  %v505 = vld [vmem:[%s1 + $0x3c8] sm:$0xf]
  %v506 = vld [vmem:[%s1 + $0x3cc] sm:$0xf]
  %v507 = vld [vmem:[%s1 + $0x3d0] sm:$0xf]
  %v508 = vld [vmem:[%s1 + $0x3d4] sm:$0xf]
  %v509 = vld [vmem:[%s1 + $0x3d8] sm:$0xf]
  %v510 = vld [vmem:[%s1 + $0x3dc] sm:$0xf]
  %v511 = vld [vmem:[%s1 + $0x3e0] sm:$0xf]
  %v512 = vld [vmem:[%s1 + $0x3e4] sm:$0xf]
  %v513 = vld [vmem:[%s1 + $0x3e8] sm:$0xf]
  %v514 = vld [vmem:[%s1 + $0x3ec] sm:$0xf]
  %v515 = vld [vmem:[%s1 + $0x3f0] sm:$0xf]
  %v516 = vld [vmem:[%s1 + $0x3f4] sm:$0xf]
  %v517 = vld [vmem:[%s1 + $0x3f8] sm:$0xf]
  %v518 = vld [vmem:[%s1 + $0x3fc] sm:$0xf]
  %v519 = vld [vmem:[%s2] sm:$0x1]
  %v521 = vlaneseq
  %v522 = vshrl.u32 %v521, 7
  %v523 = vsub.s32 0, %v522
  %v524 = vrot.slane %v519, %v523
  %v774 = vunpack.c.l.b16 %v15
  %v775 = vunpack.c.h.b16 %v15
  %v776 = vunpack.c.l.b16 %v16
  %v777 = vunpack.c.h.b16 %v16
  %v778 = vunpack.c.l.b16 %v17
  %v779 = vunpack.c.h.b16 %v17
  %v780 = vunpack.c.l.b16 %v18
  %v781 = vunpack.c.h.b16 %v18
  %v782 = vunpack.c.l.b16 %v19
  %v783 = vunpack.c.h.b16 %v19
  %v784 = vunpack.c.l.b16 %v20
  %v785 = vunpack.c.h.b16 %v20
  %v786 = vunpack.c.l.b16 %v21
  %v787 = vunpack.c.h.b16 %v21
  %v788 = vunpack.c.l.b16 %v22
  %v789 = vunpack.c.h.b16 %v22
  %v790 = vunpack.c.l.b16 %v23
  %v791 = vunpack.c.h.b16 %v23
  %v792 = vunpack.c.l.b16 %v24
  %v793 = vunpack.c.h.b16 %v24
  %v794 = vunpack.c.l.b16 %v25
  %v795 = vunpack.c.h.b16 %v25
  %v796 = vunpack.c.l.b16 %v26
  %v797 = vunpack.c.h.b16 %v26
  %v798 = vunpack.c.l.b16 %v27
  %v799 = vunpack.c.h.b16 %v27
  %v800 = vunpack.c.l.b16 %v28
  %v801 = vunpack.c.h.b16 %v28
  %v802 = vunpack.c.l.b16 %v29
  %v803 = vunpack.c.h.b16 %v29
  %v804 = vunpack.c.l.b16 %v30
  %v805 = vunpack.c.h.b16 %v30
  %v806 = vunpack.c.l.b16 %v31
  %v807 = vunpack.c.h.b16 %v31
  %v808 = vunpack.c.l.b16 %v32
  %v809 = vunpack.c.h.b16 %v32
  %v810 = vunpack.c.l.b16 %v33
  %v811 = vunpack.c.h.b16 %v33
  %v812 = vunpack.c.l.b16 %v34
  %v813 = vunpack.c.h.b16 %v34
  %v814 = vunpack.c.l.b16 %v35
  %v815 = vunpack.c.h.b16 %v35
  %v816 = vunpack.c.l.b16 %v36
  %v817 = vunpack.c.h.b16 %v36
  %v818 = vunpack.c.l.b16 %v37
  %v819 = vunpack.c.h.b16 %v37
  %v820 = vunpack.c.l.b16 %v38
  %v821 = vunpack.c.h.b16 %v38
  %v822 = vunpack.c.l.b16 %v39
  %v823 = vunpack.c.h.b16 %v39
  %v824 = vunpack.c.l.b16 %v40
  %v825 = vunpack.c.h.b16 %v40
  %v826 = vunpack.c.l.b16 %v41
  %v827 = vunpack.c.h.b16 %v41
  %v828 = vunpack.c.l.b16 %v42
  %v829 = vunpack.c.h.b16 %v42
  %v830 = vunpack.c.l.b16 %v43
  %v831 = vunpack.c.h.b16 %v43
  %v832 = vunpack.c.l.b16 %v44
  %v833 = vunpack.c.h.b16 %v44
  %v834 = vunpack.c.l.b16 %v45
  %v835 = vunpack.c.h.b16 %v45
  %v836 = vunpack.c.l.b16 %v46
  %v837 = vunpack.c.h.b16 %v46
  %v838 = vunpack.c.l.b16 %v47
  %v839 = vunpack.c.h.b16 %v47
  %v840 = vunpack.c.l.b16 %v48
  %v841 = vunpack.c.h.b16 %v48
  %v842 = vunpack.c.l.b16 %v49
  %v843 = vunpack.c.h.b16 %v49
  %v844 = vunpack.c.l.b16 %v50
  %v845 = vunpack.c.h.b16 %v50
  %v846 = vunpack.c.l.b16 %v51
  %v847 = vunpack.c.h.b16 %v51
  %v848 = vunpack.c.l.b16 %v52
  %v849 = vunpack.c.h.b16 %v52
  %v850 = vunpack.c.l.b16 %v53
  %v851 = vunpack.c.h.b16 %v53
  %v852 = vunpack.c.l.b16 %v54
  %v853 = vunpack.c.h.b16 %v54
  %v854 = vunpack.c.l.b16 %v55
  %v855 = vunpack.c.h.b16 %v55
  %v856 = vunpack.c.l.b16 %v56
  %v857 = vunpack.c.h.b16 %v56
  %v858 = vunpack.c.l.b16 %v57
  %v859 = vunpack.c.h.b16 %v57
  %v860 = vunpack.c.l.b16 %v58
  %v861 = vunpack.c.h.b16 %v58
  %v862 = vunpack.c.l.b16 %v59
  %v863 = vunpack.c.h.b16 %v59
  %v864 = vunpack.c.l.b16 %v60
  %v865 = vunpack.c.h.b16 %v60
  %v866 = vunpack.c.l.b16 %v61
  %v867 = vunpack.c.h.b16 %v61
  %v868 = vunpack.c.l.b16 %v62
  %v869 = vunpack.c.h.b16 %v62
  %v870 = vunpack.c.l.b16 %v63
  %v871 = vunpack.c.h.b16 %v63
  %v872 = vunpack.c.l.b16 %v64
  %v873 = vunpack.c.h.b16 %v64
  %v874 = vunpack.c.l.b16 %v65
  %v875 = vunpack.c.h.b16 %v65
  %v876 = vunpack.c.l.b16 %v66
  %v877 = vunpack.c.h.b16 %v66
  %v878 = vunpack.c.l.b16 %v67
  %v879 = vunpack.c.h.b16 %v67
  %v880 = vunpack.c.l.b16 %v68
  %v881 = vunpack.c.h.b16 %v68
  %v882 = vunpack.c.l.b16 %v69
  %v883 = vunpack.c.h.b16 %v69
  %v884 = vunpack.c.l.b16 %v70
  %v885 = vunpack.c.h.b16 %v70
  %v886 = vunpack.c.l.b16 %v71
  %v887 = vunpack.c.h.b16 %v71
  %v888 = vunpack.c.l.b16 %v72
  %v889 = vunpack.c.h.b16 %v72
  %v890 = vunpack.c.l.b16 %v73
  %v891 = vunpack.c.h.b16 %v73
  %v892 = vunpack.c.l.b16 %v74
  %v893 = vunpack.c.h.b16 %v74
  %v894 = vunpack.c.l.b16 %v75
  %v895 = vunpack.c.h.b16 %v75
  %v896 = vunpack.c.l.b16 %v76
  %v897 = vunpack.c.h.b16 %v76
  %v898 = vunpack.c.l.b16 %v77
  %v899 = vunpack.c.h.b16 %v77
  %v900 = vunpack.c.l.b16 %v78
  %v901 = vunpack.c.h.b16 %v78
  %v902 = vunpack.c.l.b16 %v79
  %v903 = vunpack.c.h.b16 %v79
  %v904 = vunpack.c.l.b16 %v80
  %v905 = vunpack.c.h.b16 %v80
  %v906 = vunpack.c.l.b16 %v81
  %v907 = vunpack.c.h.b16 %v81
  %v908 = vunpack.c.l.b16 %v82
  %v909 = vunpack.c.h.b16 %v82
  %v910 = vunpack.c.l.b16 %v83
  %v911 = vunpack.c.h.b16 %v83
  %v912 = vunpack.c.l.b16 %v84
  %v913 = vunpack.c.h.b16 %v84
  %v914 = vunpack.c.l.b16 %v85
  %v915 = vunpack.c.h.b16 %v85
  %v916 = vunpack.c.l.b16 %v86
  %v917 = vunpack.c.h.b16 %v86
  %v918 = vunpack.c.l.b16 %v87
  %v919 = vunpack.c.h.b16 %v87
  %v920 = vunpack.c.l.b16 %v88
  %v921 = vunpack.c.h.b16 %v88
  %v922 = vunpack.c.l.b16 %v89
  %v923 = vunpack.c.h.b16 %v89
  %v924 = vunpack.c.l.b16 %v90
  %v925 = vunpack.c.h.b16 %v90
  %v926 = vunpack.c.l.b16 %v91
  %v927 = vunpack.c.h.b16 %v91
  %v928 = vunpack.c.l.b16 %v92
  %v929 = vunpack.c.h.b16 %v92
  %v930 = vunpack.c.l.b16 %v93
  %v931 = vunpack.c.h.b16 %v93
  %v932 = vunpack.c.l.b16 %v94
  %v933 = vunpack.c.h.b16 %v94
  %v934 = vunpack.c.l.b16 %v95
  %v935 = vunpack.c.h.b16 %v95
  %v936 = vunpack.c.l.b16 %v96
  %v937 = vunpack.c.h.b16 %v96
  %v938 = vunpack.c.l.b16 %v97
  %v939 = vunpack.c.h.b16 %v97
  %v940 = vunpack.c.l.b16 %v98
  %v941 = vunpack.c.h.b16 %v98
  %v942 = vunpack.c.l.b16 %v99
  %v943 = vunpack.c.h.b16 %v99
  %v944 = vunpack.c.l.b16 %v100
  %v945 = vunpack.c.h.b16 %v100
  %v946 = vunpack.c.l.b16 %v101
  %v947 = vunpack.c.h.b16 %v101
  %v948 = vunpack.c.l.b16 %v102
  %v949 = vunpack.c.h.b16 %v102
  %v950 = vunpack.c.l.b16 %v103
  %v951 = vunpack.c.h.b16 %v103
  %v952 = vunpack.c.l.b16 %v104
  %v953 = vunpack.c.h.b16 %v104
  %v954 = vunpack.c.l.b16 %v105
  %v955 = vunpack.c.h.b16 %v105
  %v956 = vunpack.c.l.b16 %v106
  %v957 = vunpack.c.h.b16 %v106
  %v958 = vunpack.c.l.b16 %v107
  %v959 = vunpack.c.h.b16 %v107
  %v960 = vunpack.c.l.b16 %v108
  %v961 = vunpack.c.h.b16 %v108
  %v962 = vunpack.c.l.b16 %v109
  %v963 = vunpack.c.h.b16 %v109
  %v964 = vunpack.c.l.b16 %v110
  %v965 = vunpack.c.h.b16 %v110
  %v966 = vunpack.c.l.b16 %v111
  %v967 = vunpack.c.h.b16 %v111
  %v968 = vunpack.c.l.b16 %v112
  %v969 = vunpack.c.h.b16 %v112
  %v970 = vunpack.c.l.b16 %v113
  %v971 = vunpack.c.h.b16 %v113
  %v972 = vunpack.c.l.b16 %v114
  %v973 = vunpack.c.h.b16 %v114
  %v974 = vunpack.c.l.b16 %v115
  %v975 = vunpack.c.h.b16 %v115
  %v976 = vunpack.c.l.b16 %v116
  %v977 = vunpack.c.h.b16 %v116
  %v978 = vunpack.c.l.b16 %v117
  %v979 = vunpack.c.h.b16 %v117
  %v980 = vunpack.c.l.b16 %v118
  %v981 = vunpack.c.h.b16 %v118
  %v982 = vunpack.c.l.b16 %v119
  %v983 = vunpack.c.h.b16 %v119
  %v984 = vunpack.c.l.b16 %v120
  %v985 = vunpack.c.h.b16 %v120
  %v986 = vunpack.c.l.b16 %v121
  %v987 = vunpack.c.h.b16 %v121
  %v988 = vunpack.c.l.b16 %v122
  %v989 = vunpack.c.h.b16 %v122
  %v990 = vunpack.c.l.b16 %v123
  %v991 = vunpack.c.h.b16 %v123
  %v992 = vunpack.c.l.b16 %v124
  %v993 = vunpack.c.h.b16 %v124
  %v994 = vunpack.c.l.b16 %v125
  %v995 = vunpack.c.h.b16 %v125
  %v996 = vunpack.c.l.b16 %v126
  %v997 = vunpack.c.h.b16 %v126
  %v998 = vunpack.c.l.b16 %v127
  %v999 = vunpack.c.h.b16 %v127
  %v1000 = vunpack.c.l.b16 %v128
  %v1001 = vunpack.c.h.b16 %v128
  %v1002 = vunpack.c.l.b16 %v129
  %v1003 = vunpack.c.h.b16 %v129
  %v1004 = vunpack.c.l.b16 %v130
  %v1005 = vunpack.c.h.b16 %v130
  %v1006 = vunpack.c.l.b16 %v131
  %v1007 = vunpack.c.h.b16 %v131
  %v1008 = vunpack.c.l.b16 %v132
  %v1009 = vunpack.c.h.b16 %v132
  %v1010 = vunpack.c.l.b16 %v133
  %v1011 = vunpack.c.h.b16 %v133
  %v1012 = vunpack.c.l.b16 %v134
  %v1013 = vunpack.c.h.b16 %v134
  %v1014 = vunpack.c.l.b16 %v135
  %v1015 = vunpack.c.h.b16 %v135
  %v1016 = vunpack.c.l.b16 %v136
  %v1017 = vunpack.c.h.b16 %v136
  %v1018 = vunpack.c.l.b16 %v137
  %v1019 = vunpack.c.h.b16 %v137
  %v1020 = vunpack.c.l.b16 %v138
  %v1021 = vunpack.c.h.b16 %v138
  %v1022 = vunpack.c.l.b16 %v139
  %v1023 = vunpack.c.h.b16 %v139
  %v1024 = vunpack.c.l.b16 %v140
  %v1025 = vunpack.c.h.b16 %v140
  %v1026 = vunpack.c.l.b16 %v141
  %v1027 = vunpack.c.h.b16 %v141
  %v1028 = vunpack.c.l.b16 %v142
  %v1029 = vunpack.c.h.b16 %v142
  %v1030 = vunpack.c.l.b16 %v143
  %v1031 = vunpack.c.h.b16 %v143
  %v1032 = vunpack.c.l.b16 %v144
  %v1033 = vunpack.c.h.b16 %v144
  %v1034 = vunpack.c.l.b16 %v145
  %v1035 = vunpack.c.h.b16 %v145
  %v1036 = vunpack.c.l.b16 %v146
  %v1037 = vunpack.c.h.b16 %v146
  %v1038 = vunpack.c.l.b16 %v147
  %v1039 = vunpack.c.h.b16 %v147
  %v1040 = vunpack.c.l.b16 %v148
  %v1041 = vunpack.c.h.b16 %v148
  %v1042 = vunpack.c.l.b16 %v149
  %v1043 = vunpack.c.h.b16 %v149
  %v1044 = vunpack.c.l.b16 %v150
  %v1045 = vunpack.c.h.b16 %v150
  %v1046 = vunpack.c.l.b16 %v151
  %v1047 = vunpack.c.h.b16 %v151
  %v1048 = vunpack.c.l.b16 %v152
  %v1049 = vunpack.c.h.b16 %v152
  %v1050 = vunpack.c.l.b16 %v153
  %v1051 = vunpack.c.h.b16 %v153
  %v1052 = vunpack.c.l.b16 %v154
  %v1053 = vunpack.c.h.b16 %v154
  %v1054 = vunpack.c.l.b16 %v155
  %v1055 = vunpack.c.h.b16 %v155
  %v1056 = vunpack.c.l.b16 %v156
  %v1057 = vunpack.c.h.b16 %v156
  %v1058 = vunpack.c.l.b16 %v157
  %v1059 = vunpack.c.h.b16 %v157
  %v1060 = vunpack.c.l.b16 %v158
  %v1061 = vunpack.c.h.b16 %v158
  %v1062 = vunpack.c.l.b16 %v159
  %v1063 = vunpack.c.h.b16 %v159
  %v1064 = vunpack.c.l.b16 %v160
  %v1065 = vunpack.c.h.b16 %v160
  %v1066 = vunpack.c.l.b16 %v161
  %v1067 = vunpack.c.h.b16 %v161
  %v1068 = vunpack.c.l.b16 %v162
  %v1069 = vunpack.c.h.b16 %v162
  %v1070 = vunpack.c.l.b16 %v163
  %v1071 = vunpack.c.h.b16 %v163
  %v1072 = vunpack.c.l.b16 %v164
  %v1073 = vunpack.c.h.b16 %v164
  %v1074 = vunpack.c.l.b16 %v165
  %v1075 = vunpack.c.h.b16 %v165
  %v1076 = vunpack.c.l.b16 %v166
  %v1077 = vunpack.c.h.b16 %v166
  %v1078 = vunpack.c.l.b16 %v167
  %v1079 = vunpack.c.h.b16 %v167
  %v1080 = vunpack.c.l.b16 %v168
  %v1081 = vunpack.c.h.b16 %v168
  %v1082 = vunpack.c.l.b16 %v169
  %v1083 = vunpack.c.h.b16 %v169
  %v1084 = vunpack.c.l.b16 %v170
  %v1085 = vunpack.c.h.b16 %v170
  %v1086 = vunpack.c.l.b16 %v171
  %v1087 = vunpack.c.h.b16 %v171
  %v1088 = vunpack.c.l.b16 %v172
  %v1089 = vunpack.c.h.b16 %v172
  %v1090 = vunpack.c.l.b16 %v173
  %v1091 = vunpack.c.h.b16 %v173
  %v1092 = vunpack.c.l.b16 %v174
  %v1093 = vunpack.c.h.b16 %v174
  %v1094 = vunpack.c.l.b16 %v175
  %v1095 = vunpack.c.h.b16 %v175
  %v1096 = vunpack.c.l.b16 %v176
  %v1097 = vunpack.c.h.b16 %v176
  %v1098 = vunpack.c.l.b16 %v177
  %v1099 = vunpack.c.h.b16 %v177
  %v1100 = vunpack.c.l.b16 %v178
  %v1101 = vunpack.c.h.b16 %v178
  %v1102 = vunpack.c.l.b16 %v179
  %v1103 = vunpack.c.h.b16 %v179
  %v1104 = vunpack.c.l.b16 %v180
  %v1105 = vunpack.c.h.b16 %v180
  %v1106 = vunpack.c.l.b16 %v181
  %v1107 = vunpack.c.h.b16 %v181
  %v1108 = vunpack.c.l.b16 %v182
  %v1109 = vunpack.c.h.b16 %v182
  %v1110 = vunpack.c.l.b16 %v183
  %v1111 = vunpack.c.h.b16 %v183
  %v1112 = vunpack.c.l.b16 %v184
  %v1113 = vunpack.c.h.b16 %v184
  %v1114 = vunpack.c.l.b16 %v185
  %v1115 = vunpack.c.h.b16 %v185
  %v1116 = vunpack.c.l.b16 %v186
  %v1117 = vunpack.c.h.b16 %v186
  %v1118 = vunpack.c.l.b16 %v187
  %v1119 = vunpack.c.h.b16 %v187
  %v1120 = vunpack.c.l.b16 %v188
  %v1121 = vunpack.c.h.b16 %v188
  %v1122 = vunpack.c.l.b16 %v189
  %v1123 = vunpack.c.h.b16 %v189
  %v1124 = vunpack.c.l.b16 %v190
  %v1125 = vunpack.c.h.b16 %v190
  %v1126 = vunpack.c.l.b16 %v191
  %v1127 = vunpack.c.h.b16 %v191
  %v1128 = vunpack.c.l.b16 %v192
  %v1129 = vunpack.c.h.b16 %v192
  %v1130 = vunpack.c.l.b16 %v193
  %v1131 = vunpack.c.h.b16 %v193
  %v1132 = vunpack.c.l.b16 %v194
  %v1133 = vunpack.c.h.b16 %v194
  %v1134 = vunpack.c.l.b16 %v195
  %v1135 = vunpack.c.h.b16 %v195
  %v1136 = vunpack.c.l.b16 %v196
  %v1137 = vunpack.c.h.b16 %v196
  %v1138 = vunpack.c.l.b16 %v197
  %v1139 = vunpack.c.h.b16 %v197
  %v1140 = vunpack.c.l.b16 %v198
  %v1141 = vunpack.c.h.b16 %v198
  %v1142 = vunpack.c.l.b16 %v199
  %v1143 = vunpack.c.h.b16 %v199
  %v1144 = vunpack.c.l.b16 %v200
  %v1145 = vunpack.c.h.b16 %v200
  %v1146 = vunpack.c.l.b16 %v201
  %v1147 = vunpack.c.h.b16 %v201
  %v1148 = vunpack.c.l.b16 %v202
  %v1149 = vunpack.c.h.b16 %v202
  %v1150 = vunpack.c.l.b16 %v203
  %v1151 = vunpack.c.h.b16 %v203
  %v1152 = vunpack.c.l.b16 %v204
  %v1153 = vunpack.c.h.b16 %v204
  %v1154 = vunpack.c.l.b16 %v205
  %v1155 = vunpack.c.h.b16 %v205
  %v1156 = vunpack.c.l.b16 %v206
  %v1157 = vunpack.c.h.b16 %v206
  %v1158 = vunpack.c.l.b16 %v207
  %v1159 = vunpack.c.h.b16 %v207
  %v1160 = vunpack.c.l.b16 %v208
  %v1161 = vunpack.c.h.b16 %v208
  %v1162 = vunpack.c.l.b16 %v209
  %v1163 = vunpack.c.h.b16 %v209
  %v1164 = vunpack.c.l.b16 %v210
  %v1165 = vunpack.c.h.b16 %v210
  %v1166 = vunpack.c.l.b16 %v211
  %v1167 = vunpack.c.h.b16 %v211
  %v1168 = vunpack.c.l.b16 %v212
  %v1169 = vunpack.c.h.b16 %v212
  %v1170 = vunpack.c.l.b16 %v213
  %v1171 = vunpack.c.h.b16 %v213
  %v1172 = vunpack.c.l.b16 %v214
  %v1173 = vunpack.c.h.b16 %v214
  %v1174 = vunpack.c.l.b16 %v215
  %v1175 = vunpack.c.h.b16 %v215
  %v1176 = vunpack.c.l.b16 %v216
  %v1177 = vunpack.c.h.b16 %v216
  %v1178 = vunpack.c.l.b16 %v217
  %v1179 = vunpack.c.h.b16 %v217
  %v1180 = vunpack.c.l.b16 %v218
  %v1181 = vunpack.c.h.b16 %v218
  %v1182 = vunpack.c.l.b16 %v219
  %v1183 = vunpack.c.h.b16 %v219
  %v1184 = vunpack.c.l.b16 %v220
  %v1185 = vunpack.c.h.b16 %v220
  %v1186 = vunpack.c.l.b16 %v221
  %v1187 = vunpack.c.h.b16 %v221
  %v1188 = vunpack.c.l.b16 %v222
  %v1189 = vunpack.c.h.b16 %v222
  %v1190 = vunpack.c.l.b16 %v223
  %v1191 = vunpack.c.h.b16 %v223
  %v1192 = vunpack.c.l.b16 %v224
  %v1193 = vunpack.c.h.b16 %v224
  %v1194 = vunpack.c.l.b16 %v225
  %v1195 = vunpack.c.h.b16 %v225
  %v1196 = vunpack.c.l.b16 %v226
  %v1197 = vunpack.c.h.b16 %v226
  %v1198 = vunpack.c.l.b16 %v227
  %v1199 = vunpack.c.h.b16 %v227
  %v1200 = vunpack.c.l.b16 %v228
  %v1201 = vunpack.c.h.b16 %v228
  %v1202 = vunpack.c.l.b16 %v229
  %v1203 = vunpack.c.h.b16 %v229
  %v1204 = vunpack.c.l.b16 %v230
  %v1205 = vunpack.c.h.b16 %v230
  %v1206 = vunpack.c.l.b16 %v231
  %v1207 = vunpack.c.h.b16 %v231
  %v1208 = vunpack.c.l.b16 %v232
  %v1209 = vunpack.c.h.b16 %v232
  %v1210 = vunpack.c.l.b16 %v233
  %v1211 = vunpack.c.h.b16 %v233
  %v1212 = vunpack.c.l.b16 %v234
  %v1213 = vunpack.c.h.b16 %v234
  %v1214 = vunpack.c.l.b16 %v235
  %v1215 = vunpack.c.h.b16 %v235
  %v1216 = vunpack.c.l.b16 %v236
  %v1217 = vunpack.c.h.b16 %v236
  %v1218 = vunpack.c.l.b16 %v237
  %v1219 = vunpack.c.h.b16 %v237
  %v1220 = vunpack.c.l.b16 %v238
  %v1221 = vunpack.c.h.b16 %v238
  %v1222 = vunpack.c.l.b16 %v239
  %v1223 = vunpack.c.h.b16 %v239
  %v1224 = vunpack.c.l.b16 %v240
  %v1225 = vunpack.c.h.b16 %v240
  %v1226 = vunpack.c.l.b16 %v241
  %v1227 = vunpack.c.h.b16 %v241
  %v1228 = vunpack.c.l.b16 %v242
  %v1229 = vunpack.c.h.b16 %v242
  %v1230 = vunpack.c.l.b16 %v243
  %v1231 = vunpack.c.h.b16 %v243
  %v1232 = vunpack.c.l.b16 %v244
  %v1233 = vunpack.c.h.b16 %v244
  %v1234 = vunpack.c.l.b16 %v245
  %v1235 = vunpack.c.h.b16 %v245
  %v1236 = vunpack.c.l.b16 %v246
  %v1237 = vunpack.c.h.b16 %v246
  %v1238 = vunpack.c.l.b16 %v247
  %v1239 = vunpack.c.h.b16 %v247
  %v1240 = vunpack.c.l.b16 %v248
  %v1241 = vunpack.c.h.b16 %v248
  %v1242 = vunpack.c.l.b16 %v249
  %v1243 = vunpack.c.h.b16 %v249
  %v1244 = vunpack.c.l.b16 %v250
  %v1245 = vunpack.c.h.b16 %v250
  %v1246 = vunpack.c.l.b16 %v251
  %v1247 = vunpack.c.h.b16 %v251
  %v1248 = vunpack.c.l.b16 %v252
  %v1249 = vunpack.c.h.b16 %v252
  %v1250 = vunpack.c.l.b16 %v253
  %v1251 = vunpack.c.h.b16 %v253
  %v1252 = vunpack.c.l.b16 %v254
  %v1253 = vunpack.c.h.b16 %v254
  %v1254 = vunpack.c.l.b16 %v255
  %v1255 = vunpack.c.h.b16 %v255
  %v1256 = vunpack.c.l.b16 %v256
  %v1257 = vunpack.c.h.b16 %v256
  %v1258 = vunpack.c.l.b16 %v257
  %v1259 = vunpack.c.h.b16 %v257
  %v1260 = vunpack.c.l.b16 %v258
  %v1261 = vunpack.c.h.b16 %v258
  %v1262 = vunpack.c.l.b16 %v259
  %v1263 = vunpack.c.h.b16 %v259
  %v1264 = vunpack.c.l.b16 %v260
  %v1265 = vunpack.c.h.b16 %v260
  %v1266 = vunpack.c.l.b16 %v261
  %v1267 = vunpack.c.h.b16 %v261
  %v1268 = vunpack.c.l.b16 %v262
  %v1269 = vunpack.c.h.b16 %v262
  %v1270 = vpack.c.b16 %v790, %v774
  %v1271 = vpack.c.b16 %v791, %v775
  %v1272 = vpack.c.b16 %v792, %v776
  %v1273 = vpack.c.b16 %v793, %v777
  %v1274 = vpack.c.b16 %v794, %v778
  %v1275 = vpack.c.b16 %v795, %v779
  %v1276 = vpack.c.b16 %v796, %v780
  %v1277 = vpack.c.b16 %v797, %v781
  %v1278 = vpack.c.b16 %v798, %v782
  %v1279 = vpack.c.b16 %v799, %v783
  %v1280 = vpack.c.b16 %v800, %v784
  %v1281 = vpack.c.b16 %v801, %v785
  %v1282 = vpack.c.b16 %v802, %v786
  %v1283 = vpack.c.b16 %v803, %v787
  %v1284 = vpack.c.b16 %v804, %v788
  %v1285 = vpack.c.b16 %v805, %v789
  %v1286 = vpack.c.b16 %v822, %v806
  %v1287 = vpack.c.b16 %v823, %v807
  %v1288 = vpack.c.b16 %v824, %v808
  %v1289 = vpack.c.b16 %v825, %v809
  %v1290 = vpack.c.b16 %v826, %v810
  %v1291 = vpack.c.b16 %v827, %v811
  %v1292 = vpack.c.b16 %v828, %v812
  %v1293 = vpack.c.b16 %v829, %v813
  %v1294 = vpack.c.b16 %v830, %v814
  %v1295 = vpack.c.b16 %v831, %v815
  %v1296 = vpack.c.b16 %v832, %v816
  %v1297 = vpack.c.b16 %v833, %v817
  %v1298 = vpack.c.b16 %v834, %v818
  %v1299 = vpack.c.b16 %v835, %v819
  %v1300 = vpack.c.b16 %v836, %v820
  %v1301 = vpack.c.b16 %v837, %v821
  %v1302 = vpack.c.b16 %v854, %v838
  %v1303 = vpack.c.b16 %v855, %v839
  %v1304 = vpack.c.b16 %v856, %v840
  %v1305 = vpack.c.b16 %v857, %v841
  %v1306 = vpack.c.b16 %v858, %v842
  %v1307 = vpack.c.b16 %v859, %v843
  %v1308 = vpack.c.b16 %v860, %v844
  %v1309 = vpack.c.b16 %v861, %v845
  %v1310 = vpack.c.b16 %v862, %v846
  %v1311 = vpack.c.b16 %v863, %v847
  %v1312 = vpack.c.b16 %v864, %v848
  %v1313 = vpack.c.b16 %v865, %v849
  %v1314 = vpack.c.b16 %v866, %v850
  %v1315 = vpack.c.b16 %v867, %v851
  %v1316 = vpack.c.b16 %v868, %v852
  %v1317 = vpack.c.b16 %v869, %v853
  %v1318 = vpack.c.b16 %v886, %v870
  %v1319 = vpack.c.b16 %v887, %v871
  %v1320 = vpack.c.b16 %v888, %v872
  %v1321 = vpack.c.b16 %v889, %v873
  %v1322 = vpack.c.b16 %v890, %v874
  %v1323 = vpack.c.b16 %v891, %v875
  %v1324 = vpack.c.b16 %v892, %v876
  %v1325 = vpack.c.b16 %v893, %v877
  %v1326 = vpack.c.b16 %v894, %v878
  %v1327 = vpack.c.b16 %v895, %v879
  %v1328 = vpack.c.b16 %v896, %v880
  %v1329 = vpack.c.b16 %v897, %v881
  %v1330 = vpack.c.b16 %v898, %v882
  %v1331 = vpack.c.b16 %v899, %v883
  %v1332 = vpack.c.b16 %v900, %v884
  %v1333 = vpack.c.b16 %v901, %v885
  %v1334 = vpack.c.b16 %v918, %v902
  %v1335 = vpack.c.b16 %v919, %v903
  %v1336 = vpack.c.b16 %v920, %v904
  %v1337 = vpack.c.b16 %v921, %v905
  %v1338 = vpack.c.b16 %v922, %v906
  %v1339 = vpack.c.b16 %v923, %v907
  %v1340 = vpack.c.b16 %v924, %v908
  %v1341 = vpack.c.b16 %v925, %v909
  %v1342 = vpack.c.b16 %v926, %v910
  %v1343 = vpack.c.b16 %v927, %v911
  %v1344 = vpack.c.b16 %v928, %v912
  %v1345 = vpack.c.b16 %v929, %v913
  %v1346 = vpack.c.b16 %v930, %v914
  %v1347 = vpack.c.b16 %v931, %v915
  %v1348 = vpack.c.b16 %v932, %v916
  %v1349 = vpack.c.b16 %v933, %v917
  %v1350 = vpack.c.b16 %v950, %v934
  %v1351 = vpack.c.b16 %v951, %v935
  %v1352 = vpack.c.b16 %v952, %v936
  %v1353 = vpack.c.b16 %v953, %v937
  %v1354 = vpack.c.b16 %v954, %v938
  %v1355 = vpack.c.b16 %v955, %v939
  %v1356 = vpack.c.b16 %v956, %v940
  %v1357 = vpack.c.b16 %v957, %v941
  %v1358 = vpack.c.b16 %v958, %v942
  %v1359 = vpack.c.b16 %v959, %v943
  %v1360 = vpack.c.b16 %v960, %v944
  %v1361 = vpack.c.b16 %v961, %v945
  %v1362 = vpack.c.b16 %v962, %v946
  %v1363 = vpack.c.b16 %v963, %v947
  %v1364 = vpack.c.b16 %v964, %v948
  %v1365 = vpack.c.b16 %v965, %v949
  %v1366 = vpack.c.b16 %v982, %v966
  %v1367 = vpack.c.b16 %v983, %v967
  %v1368 = vpack.c.b16 %v984, %v968
  %v1369 = vpack.c.b16 %v985, %v969
  %v1370 = vpack.c.b16 %v986, %v970
  %v1371 = vpack.c.b16 %v987, %v971
  %v1372 = vpack.c.b16 %v988, %v972
  %v1373 = vpack.c.b16 %v989, %v973
  %v1374 = vpack.c.b16 %v990, %v974
  %v1375 = vpack.c.b16 %v991, %v975
  %v1376 = vpack.c.b16 %v992, %v976
  %v1377 = vpack.c.b16 %v993, %v977
  %v1378 = vpack.c.b16 %v994, %v978
  %v1379 = vpack.c.b16 %v995, %v979
  %v1380 = vpack.c.b16 %v996, %v980
  %v1381 = vpack.c.b16 %v997, %v981
  %v1382 = vpack.c.b16 %v1014, %v998
  %v1383 = vpack.c.b16 %v1015, %v999
  %v1384 = vpack.c.b16 %v1016, %v1000
  %v1385 = vpack.c.b16 %v1017, %v1001
  %v1386 = vpack.c.b16 %v1018, %v1002
  %v1387 = vpack.c.b16 %v1019, %v1003
  %v1388 = vpack.c.b16 %v1020, %v1004
  %v1389 = vpack.c.b16 %v1021, %v1005
  %v1390 = vpack.c.b16 %v1022, %v1006
  %v1391 = vpack.c.b16 %v1023, %v1007
  %v1392 = vpack.c.b16 %v1024, %v1008
  %v1393 = vpack.c.b16 %v1025, %v1009
  %v1394 = vpack.c.b16 %v1026, %v1010
  %v1395 = vpack.c.b16 %v1027, %v1011
  %v1396 = vpack.c.b16 %v1028, %v1012
  %v1397 = vpack.c.b16 %v1029, %v1013
  %v1398 = vpack.c.b16 %v1046, %v1030
  %v1399 = vpack.c.b16 %v1047, %v1031
  %v1400 = vpack.c.b16 %v1048, %v1032
  %v1401 = vpack.c.b16 %v1049, %v1033
  %v1402 = vpack.c.b16 %v1050, %v1034
  %v1403 = vpack.c.b16 %v1051, %v1035
  %v1404 = vpack.c.b16 %v1052, %v1036
  %v1405 = vpack.c.b16 %v1053, %v1037
  %v1406 = vpack.c.b16 %v1054, %v1038
  %v1407 = vpack.c.b16 %v1055, %v1039
  %v1408 = vpack.c.b16 %v1056, %v1040
  %v1409 = vpack.c.b16 %v1057, %v1041
  %v1410 = vpack.c.b16 %v1058, %v1042
  %v1411 = vpack.c.b16 %v1059, %v1043
  %v1412 = vpack.c.b16 %v1060, %v1044
  %v1413 = vpack.c.b16 %v1061, %v1045
  %v1414 = vpack.c.b16 %v1078, %v1062
  %v1415 = vpack.c.b16 %v1079, %v1063
  %v1416 = vpack.c.b16 %v1080, %v1064
  %v1417 = vpack.c.b16 %v1081, %v1065
  %v1418 = vpack.c.b16 %v1082, %v1066
  %v1419 = vpack.c.b16 %v1083, %v1067
  %v1420 = vpack.c.b16 %v1084, %v1068
  %v1421 = vpack.c.b16 %v1085, %v1069
  %v1422 = vpack.c.b16 %v1086, %v1070
  %v1423 = vpack.c.b16 %v1087, %v1071
  %v1424 = vpack.c.b16 %v1088, %v1072
  %v1425 = vpack.c.b16 %v1089, %v1073
  %v1426 = vpack.c.b16 %v1090, %v1074
  %v1427 = vpack.c.b16 %v1091, %v1075
  %v1428 = vpack.c.b16 %v1092, %v1076
  %v1429 = vpack.c.b16 %v1093, %v1077
  %v1430 = vpack.c.b16 %v1110, %v1094
  %v1431 = vpack.c.b16 %v1111, %v1095
  %v1432 = vpack.c.b16 %v1112, %v1096
  %v1433 = vpack.c.b16 %v1113, %v1097
  %v1434 = vpack.c.b16 %v1114, %v1098
  %v1435 = vpack.c.b16 %v1115, %v1099
  %v1436 = vpack.c.b16 %v1116, %v1100
  %v1437 = vpack.c.b16 %v1117, %v1101
  %v1438 = vpack.c.b16 %v1118, %v1102
  %v1439 = vpack.c.b16 %v1119, %v1103
  %v1440 = vpack.c.b16 %v1120, %v1104
  %v1441 = vpack.c.b16 %v1121, %v1105
  %v1442 = vpack.c.b16 %v1122, %v1106
  %v1443 = vpack.c.b16 %v1123, %v1107
  %v1444 = vpack.c.b16 %v1124, %v1108
  %v1445 = vpack.c.b16 %v1125, %v1109
  %v1446 = vpack.c.b16 %v1142, %v1126
  %v1447 = vpack.c.b16 %v1143, %v1127
  %v1448 = vpack.c.b16 %v1144, %v1128
  %v1449 = vpack.c.b16 %v1145, %v1129
  %v1450 = vpack.c.b16 %v1146, %v1130
  %v1451 = vpack.c.b16 %v1147, %v1131
  %v1452 = vpack.c.b16 %v1148, %v1132
  %v1453 = vpack.c.b16 %v1149, %v1133
  %v1454 = vpack.c.b16 %v1150, %v1134
  %v1455 = vpack.c.b16 %v1151, %v1135
  %v1456 = vpack.c.b16 %v1152, %v1136
  %v1457 = vpack.c.b16 %v1153, %v1137
  %v1458 = vpack.c.b16 %v1154, %v1138
  %v1459 = vpack.c.b16 %v1155, %v1139
  %v1460 = vpack.c.b16 %v1156, %v1140
  %v1461 = vpack.c.b16 %v1157, %v1141
  %v1462 = vpack.c.b16 %v1174, %v1158
  %v1463 = vpack.c.b16 %v1175, %v1159
  %v1464 = vpack.c.b16 %v1176, %v1160
  %v1465 = vpack.c.b16 %v1177, %v1161
  %v1466 = vpack.c.b16 %v1178, %v1162
  %v1467 = vpack.c.b16 %v1179, %v1163
  %v1468 = vpack.c.b16 %v1180, %v1164
  %v1469 = vpack.c.b16 %v1181, %v1165
  %v1470 = vpack.c.b16 %v1182, %v1166
  %v1471 = vpack.c.b16 %v1183, %v1167
  %v1472 = vpack.c.b16 %v1184, %v1168
  %v1473 = vpack.c.b16 %v1185, %v1169
  %v1474 = vpack.c.b16 %v1186, %v1170
  %v1475 = vpack.c.b16 %v1187, %v1171
  %v1476 = vpack.c.b16 %v1188, %v1172
  %v1477 = vpack.c.b16 %v1189, %v1173
  %v1478 = vpack.c.b16 %v1206, %v1190
  %v1479 = vpack.c.b16 %v1207, %v1191
  %v1480 = vpack.c.b16 %v1208, %v1192
  %v1481 = vpack.c.b16 %v1209, %v1193
  %v1482 = vpack.c.b16 %v1210, %v1194
  %v1483 = vpack.c.b16 %v1211, %v1195
  %v1484 = vpack.c.b16 %v1212, %v1196
  %v1485 = vpack.c.b16 %v1213, %v1197
  %v1486 = vpack.c.b16 %v1214, %v1198
  %v1487 = vpack.c.b16 %v1215, %v1199
  %v1488 = vpack.c.b16 %v1216, %v1200
  %v1489 = vpack.c.b16 %v1217, %v1201
  %v1490 = vpack.c.b16 %v1218, %v1202
  %v1491 = vpack.c.b16 %v1219, %v1203
  %v1492 = vpack.c.b16 %v1220, %v1204
  %v1493 = vpack.c.b16 %v1221, %v1205
  %v1494 = vpack.c.b16 %v1238, %v1222
  %v1495 = vpack.c.b16 %v1239, %v1223
  %v1496 = vpack.c.b16 %v1240, %v1224
  %v1497 = vpack.c.b16 %v1241, %v1225
  %v1498 = vpack.c.b16 %v1242, %v1226
  %v1499 = vpack.c.b16 %v1243, %v1227
  %v1500 = vpack.c.b16 %v1244, %v1228
  %v1501 = vpack.c.b16 %v1245, %v1229
  %v1502 = vpack.c.b16 %v1246, %v1230
  %v1503 = vpack.c.b16 %v1247, %v1231
  %v1504 = vpack.c.b16 %v1248, %v1232
  %v1505 = vpack.c.b16 %v1249, %v1233
  %v1506 = vpack.c.b16 %v1250, %v1234
  %v1507 = vpack.c.b16 %v1251, %v1235
  %v1508 = vpack.c.b16 %v1252, %v1236
  %v1509 = vpack.c.b16 %v1253, %v1237
  %v1510 = vpack.c.b16 %v1254, %v1254
  %v1511 = vpack.c.b16 %v1255, %v1255
  %v1512 = vpack.c.b16 %v1256, %v1256
  %v1513 = vpack.c.b16 %v1257, %v1257
  %v1514 = vpack.c.b16 %v1258, %v1258
  %v1515 = vpack.c.b16 %v1259, %v1259
  %v1516 = vpack.c.b16 %v1260, %v1260
  %v1517 = vpack.c.b16 %v1261, %v1261
  %v1518 = vpack.c.b16 %v1262, %v1262
  %v1519 = vpack.c.b16 %v1263, %v1263
  %v1520 = vpack.c.b16 %v1264, %v1264
  %v1521 = vpack.c.b16 %v1265, %v1265
  %v1522 = vpack.c.b16 %v1266, %v1266
  %v1523 = vpack.c.b16 %v1267, %v1267
  %v1524 = vpack.c.b16 %v1268, %v1268
  %v1525 = vpack.c.b16 %v1269, %v1269
  %v2038 = vunpack.c.l.b16 %v263
  %v2039 = vunpack.c.l.b16 %v264
  %v2040 = vunpack.c.l.b16 %v265
  %v2041 = vunpack.c.l.b16 %v266
  %v2042 = vunpack.c.l.b16 %v267
  %v2043 = vunpack.c.l.b16 %v268
  %v2044 = vunpack.c.l.b16 %v269
  %v2045 = vunpack.c.l.b16 %v270
  %v2046 = vunpack.c.l.b16 %v271
  %v2047 = vunpack.c.l.b16 %v272
  %v2048 = vunpack.c.l.b16 %v273
  %v2049 = vunpack.c.l.b16 %v274
  %v2050 = vunpack.c.l.b16 %v275
  %v2051 = vunpack.c.l.b16 %v276
  %v2052 = vunpack.c.l.b16 %v277
  %v2053 = vunpack.c.l.b16 %v278
  %v2054 = vunpack.c.l.b16 %v279
  %v2055 = vunpack.c.l.b16 %v280
  %v2056 = vunpack.c.l.b16 %v281
  %v2057 = vunpack.c.l.b16 %v282
  %v2058 = vunpack.c.l.b16 %v283
  %v2059 = vunpack.c.l.b16 %v284
  %v2060 = vunpack.c.l.b16 %v285
  %v2061 = vunpack.c.l.b16 %v286
  %v2062 = vunpack.c.l.b16 %v287
  %v2063 = vunpack.c.l.b16 %v288
  %v2064 = vunpack.c.l.b16 %v289
  %v2065 = vunpack.c.l.b16 %v290
  %v2066 = vunpack.c.l.b16 %v291
  %v2067 = vunpack.c.l.b16 %v292
  %v2068 = vunpack.c.l.b16 %v293
  %v2069 = vunpack.c.l.b16 %v294
  %v2070 = vunpack.c.l.b16 %v295
  %v2071 = vunpack.c.l.b16 %v296
  %v2072 = vunpack.c.l.b16 %v297
  %v2073 = vunpack.c.l.b16 %v298
  %v2074 = vunpack.c.l.b16 %v299
  %v2075 = vunpack.c.l.b16 %v300
  %v2076 = vunpack.c.l.b16 %v301
  %v2077 = vunpack.c.l.b16 %v302
  %v2078 = vunpack.c.l.b16 %v303
  %v2079 = vunpack.c.l.b16 %v304
  %v2080 = vunpack.c.l.b16 %v305
  %v2081 = vunpack.c.l.b16 %v306
  %v2082 = vunpack.c.l.b16 %v307
  %v2083 = vunpack.c.l.b16 %v308
  %v2084 = vunpack.c.l.b16 %v309
  %v2085 = vunpack.c.l.b16 %v310
  %v2086 = vunpack.c.l.b16 %v311
  %v2087 = vunpack.c.l.b16 %v312
  %v2088 = vunpack.c.l.b16 %v313
  %v2089 = vunpack.c.l.b16 %v314
  %v2090 = vunpack.c.l.b16 %v315
  %v2091 = vunpack.c.l.b16 %v316
  %v2092 = vunpack.c.l.b16 %v317
  %v2093 = vunpack.c.l.b16 %v318
  %v2094 = vunpack.c.l.b16 %v319
  %v2095 = vunpack.c.l.b16 %v320
  %v2096 = vunpack.c.l.b16 %v321
  %v2097 = vunpack.c.l.b16 %v322
  %v2098 = vunpack.c.l.b16 %v323
  %v2099 = vunpack.c.l.b16 %v324
  %v2100 = vunpack.c.l.b16 %v325
  %v2101 = vunpack.c.l.b16 %v326
  %v2102 = vunpack.c.l.b16 %v327
  %v2103 = vunpack.c.l.b16 %v328
  %v2104 = vunpack.c.l.b16 %v329
  %v2105 = vunpack.c.l.b16 %v330
  %v2106 = vunpack.c.l.b16 %v331
  %v2107 = vunpack.c.l.b16 %v332
  %v2108 = vunpack.c.l.b16 %v333
  %v2109 = vunpack.c.l.b16 %v334
  %v2110 = vunpack.c.l.b16 %v335
  %v2111 = vunpack.c.l.b16 %v336
  %v2112 = vunpack.c.l.b16 %v337
  %v2113 = vunpack.c.l.b16 %v338
  %v2114 = vunpack.c.l.b16 %v339
  %v2115 = vunpack.c.l.b16 %v340
  %v2116 = vunpack.c.l.b16 %v341
  %v2117 = vunpack.c.l.b16 %v342
  %v2118 = vunpack.c.l.b16 %v343
  %v2119 = vunpack.c.l.b16 %v344
  %v2120 = vunpack.c.l.b16 %v345
  %v2121 = vunpack.c.l.b16 %v346
  %v2122 = vunpack.c.l.b16 %v347
  %v2123 = vunpack.c.l.b16 %v348
  %v2124 = vunpack.c.l.b16 %v349
  %v2125 = vunpack.c.l.b16 %v350
  %v2126 = vunpack.c.l.b16 %v351
  %v2127 = vunpack.c.l.b16 %v352
  %v2128 = vunpack.c.l.b16 %v353
  %v2129 = vunpack.c.l.b16 %v354
  %v2130 = vunpack.c.l.b16 %v355
  %v2131 = vunpack.c.l.b16 %v356
  %v2132 = vunpack.c.l.b16 %v357
  %v2133 = vunpack.c.l.b16 %v358
  %v2134 = vunpack.c.l.b16 %v359
  %v2135 = vunpack.c.l.b16 %v360
  %v2136 = vunpack.c.l.b16 %v361
  %v2137 = vunpack.c.l.b16 %v362
  %v2138 = vunpack.c.l.b16 %v363
  %v2139 = vunpack.c.l.b16 %v364
  %v2140 = vunpack.c.l.b16 %v365
  %v2141 = vunpack.c.l.b16 %v366
  %v2142 = vunpack.c.l.b16 %v367
  %v2143 = vunpack.c.l.b16 %v368
  %v2144 = vunpack.c.l.b16 %v369
  %v2145 = vunpack.c.l.b16 %v370
  %v2146 = vunpack.c.l.b16 %v371
  %v2147 = vunpack.c.l.b16 %v372
  %v2148 = vunpack.c.l.b16 %v373
  %v2149 = vunpack.c.l.b16 %v374
  %v2150 = vunpack.c.l.b16 %v375
  %v2151 = vunpack.c.l.b16 %v376
  %v2152 = vunpack.c.l.b16 %v377
  %v2153 = vunpack.c.l.b16 %v378
  %v2154 = vunpack.c.l.b16 %v379
  %v2155 = vunpack.c.l.b16 %v380
  %v2156 = vunpack.c.l.b16 %v381
  %v2157 = vunpack.c.l.b16 %v382
  %v2158 = vunpack.c.l.b16 %v383
  %v2159 = vunpack.c.l.b16 %v384
  %v2160 = vunpack.c.l.b16 %v385
  %v2161 = vunpack.c.l.b16 %v386
  %v2162 = vunpack.c.l.b16 %v387
  %v2163 = vunpack.c.l.b16 %v388
  %v2164 = vunpack.c.l.b16 %v389
  %v2165 = vunpack.c.l.b16 %v390
  %v2166 = vunpack.c.l.b16 %v391
  %v2167 = vunpack.c.l.b16 %v392
  %v2168 = vunpack.c.l.b16 %v393
  %v2169 = vunpack.c.l.b16 %v394
  %v2170 = vunpack.c.l.b16 %v395
  %v2171 = vunpack.c.l.b16 %v396
  %v2172 = vunpack.c.l.b16 %v397
  %v2173 = vunpack.c.l.b16 %v398
  %v2174 = vunpack.c.l.b16 %v399
  %v2175 = vunpack.c.l.b16 %v400
  %v2176 = vunpack.c.l.b16 %v401
  %v2177 = vunpack.c.l.b16 %v402
  %v2178 = vunpack.c.l.b16 %v403
  %v2179 = vunpack.c.l.b16 %v404
  %v2180 = vunpack.c.l.b16 %v405
  %v2181 = vunpack.c.l.b16 %v406
  %v2182 = vunpack.c.l.b16 %v407
  %v2183 = vunpack.c.l.b16 %v408
  %v2184 = vunpack.c.l.b16 %v409
  %v2185 = vunpack.c.l.b16 %v410
  %v2186 = vunpack.c.l.b16 %v411
  %v2187 = vunpack.c.l.b16 %v412
  %v2188 = vunpack.c.l.b16 %v413
  %v2189 = vunpack.c.l.b16 %v414
  %v2190 = vunpack.c.l.b16 %v415
  %v2191 = vunpack.c.l.b16 %v416
  %v2192 = vunpack.c.l.b16 %v417
  %v2193 = vunpack.c.l.b16 %v418
  %v2194 = vunpack.c.l.b16 %v419
  %v2195 = vunpack.c.l.b16 %v420
  %v2196 = vunpack.c.l.b16 %v421
  %v2197 = vunpack.c.l.b16 %v422
  %v2198 = vunpack.c.l.b16 %v423
  %v2199 = vunpack.c.l.b16 %v424
  %v2200 = vunpack.c.l.b16 %v425
  %v2201 = vunpack.c.l.b16 %v426
  %v2202 = vunpack.c.l.b16 %v427
  %v2203 = vunpack.c.l.b16 %v428
  %v2204 = vunpack.c.l.b16 %v429
  %v2205 = vunpack.c.l.b16 %v430
  %v2206 = vunpack.c.l.b16 %v431
  %v2207 = vunpack.c.l.b16 %v432
  %v2208 = vunpack.c.l.b16 %v433
  %v2209 = vunpack.c.l.b16 %v434
  %v2210 = vunpack.c.l.b16 %v435
  %v2211 = vunpack.c.l.b16 %v436
  %v2212 = vunpack.c.l.b16 %v437
  %v2213 = vunpack.c.l.b16 %v438
  %v2214 = vunpack.c.l.b16 %v439
  %v2215 = vunpack.c.l.b16 %v440
  %v2216 = vunpack.c.l.b16 %v441
  %v2217 = vunpack.c.l.b16 %v442
  %v2218 = vunpack.c.l.b16 %v443
  %v2219 = vunpack.c.l.b16 %v444
  %v2220 = vunpack.c.l.b16 %v445
  %v2221 = vunpack.c.l.b16 %v446
  %v2222 = vunpack.c.l.b16 %v447
  %v2223 = vunpack.c.l.b16 %v448
  %v2224 = vunpack.c.l.b16 %v449
  %v2225 = vunpack.c.l.b16 %v450
  %v2226 = vunpack.c.l.b16 %v451
  %v2227 = vunpack.c.l.b16 %v452
  %v2228 = vunpack.c.l.b16 %v453
  %v2229 = vunpack.c.l.b16 %v454
  %v2230 = vunpack.c.l.b16 %v455
  %v2231 = vunpack.c.l.b16 %v456
  %v2232 = vunpack.c.l.b16 %v457
  %v2233 = vunpack.c.l.b16 %v458
  %v2234 = vunpack.c.l.b16 %v459
  %v2235 = vunpack.c.l.b16 %v460
  %v2236 = vunpack.c.l.b16 %v461
  %v2237 = vunpack.c.l.b16 %v462
  %v2238 = vunpack.c.l.b16 %v463
  %v2239 = vunpack.c.l.b16 %v464
  %v2240 = vunpack.c.l.b16 %v465
  %v2241 = vunpack.c.l.b16 %v466
  %v2242 = vunpack.c.l.b16 %v467
  %v2243 = vunpack.c.l.b16 %v468
  %v2244 = vunpack.c.l.b16 %v469
  %v2245 = vunpack.c.l.b16 %v470
  %v2246 = vunpack.c.l.b16 %v471
  %v2247 = vunpack.c.l.b16 %v472
  %v2248 = vunpack.c.l.b16 %v473
  %v2249 = vunpack.c.l.b16 %v474
  %v2250 = vunpack.c.l.b16 %v475
  %v2251 = vunpack.c.l.b16 %v476
  %v2252 = vunpack.c.l.b16 %v477
  %v2253 = vunpack.c.l.b16 %v478
  %v2254 = vunpack.c.l.b16 %v479
  %v2255 = vunpack.c.l.b16 %v480
  %v2256 = vunpack.c.l.b16 %v481
  %v2257 = vunpack.c.l.b16 %v482
  %v2258 = vunpack.c.l.b16 %v483
  %v2259 = vunpack.c.l.b16 %v484
  %v2260 = vunpack.c.l.b16 %v485
  %v2261 = vunpack.c.l.b16 %v486
  %v2262 = vunpack.c.l.b16 %v487
  %v2263 = vunpack.c.l.b16 %v488
  %v2264 = vunpack.c.l.b16 %v489
  %v2265 = vunpack.c.l.b16 %v490
  %v2266 = vunpack.c.l.b16 %v491
  %v2267 = vunpack.c.l.b16 %v492
  %v2268 = vunpack.c.l.b16 %v493
  %v2269 = vunpack.c.l.b16 %v494
  %v2270 = vunpack.c.l.b16 %v495
  %v2271 = vunpack.c.l.b16 %v496
  %v2272 = vunpack.c.l.b16 %v497
  %v2273 = vunpack.c.l.b16 %v498
  %v2274 = vunpack.c.l.b16 %v499
  %v2275 = vunpack.c.l.b16 %v500
  %v2276 = vunpack.c.l.b16 %v501
  %v2277 = vunpack.c.l.b16 %v502
  %v2278 = vunpack.c.l.b16 %v503
  %v2279 = vunpack.c.l.b16 %v504
  %v2280 = vunpack.c.l.b16 %v505
  %v2281 = vunpack.c.l.b16 %v506
  %v2282 = vunpack.c.l.b16 %v507
  %v2283 = vunpack.c.l.b16 %v508
  %v2284 = vunpack.c.l.b16 %v509
  %v2285 = vunpack.c.l.b16 %v510
  %v2286 = vunpack.c.l.b16 %v511
  %v2287 = vunpack.c.l.b16 %v512
  %v2288 = vunpack.c.l.b16 %v513
  %v2289 = vunpack.c.l.b16 %v514
  %v2290 = vunpack.c.l.b16 %v515
  %v2291 = vunpack.c.l.b16 %v516
  %v2292 = vunpack.c.l.b16 %v517
  %v2293 = vunpack.c.l.b16 %v518
  %v2294 = vpack.c.b16 %v2039, %v2038
  %v2295 = vpack.c.b16 %v2041, %v2040
  %v2296 = vpack.c.b16 %v2043, %v2042
  %v2297 = vpack.c.b16 %v2045, %v2044
  %v2298 = vpack.c.b16 %v2047, %v2046
  %v2299 = vpack.c.b16 %v2049, %v2048
  %v2300 = vpack.c.b16 %v2051, %v2050
  %v2301 = vpack.c.b16 %v2053, %v2052
  %v2302 = vpack.c.b16 %v2055, %v2054
  %v2303 = vpack.c.b16 %v2057, %v2056
  %v2304 = vpack.c.b16 %v2059, %v2058
  %v2305 = vpack.c.b16 %v2061, %v2060
  %v2306 = vpack.c.b16 %v2063, %v2062
  %v2307 = vpack.c.b16 %v2065, %v2064
  %v2308 = vpack.c.b16 %v2067, %v2066
  %v2309 = vpack.c.b16 %v2069, %v2068
  %v2310 = vpack.c.b16 %v2071, %v2070
  %v2311 = vpack.c.b16 %v2073, %v2072
  %v2312 = vpack.c.b16 %v2075, %v2074
  %v2313 = vpack.c.b16 %v2077, %v2076
  %v2314 = vpack.c.b16 %v2079, %v2078
  %v2315 = vpack.c.b16 %v2081, %v2080
  %v2316 = vpack.c.b16 %v2083, %v2082
  %v2317 = vpack.c.b16 %v2085, %v2084
  %v2318 = vpack.c.b16 %v2087, %v2086
  %v2319 = vpack.c.b16 %v2089, %v2088
  %v2320 = vpack.c.b16 %v2091, %v2090
  %v2321 = vpack.c.b16 %v2093, %v2092
  %v2322 = vpack.c.b16 %v2095, %v2094
  %v2323 = vpack.c.b16 %v2097, %v2096
  %v2324 = vpack.c.b16 %v2099, %v2098
  %v2325 = vpack.c.b16 %v2101, %v2100
  %v2326 = vpack.c.b16 %v2103, %v2102
  %v2327 = vpack.c.b16 %v2105, %v2104
  %v2328 = vpack.c.b16 %v2107, %v2106
  %v2329 = vpack.c.b16 %v2109, %v2108
  %v2330 = vpack.c.b16 %v2111, %v2110
  %v2331 = vpack.c.b16 %v2113, %v2112
  %v2332 = vpack.c.b16 %v2115, %v2114
  %v2333 = vpack.c.b16 %v2117, %v2116
  %v2334 = vpack.c.b16 %v2119, %v2118
  %v2335 = vpack.c.b16 %v2121, %v2120
  %v2336 = vpack.c.b16 %v2123, %v2122
  %v2337 = vpack.c.b16 %v2125, %v2124
  %v2338 = vpack.c.b16 %v2127, %v2126
  %v2339 = vpack.c.b16 %v2129, %v2128
  %v2340 = vpack.c.b16 %v2131, %v2130
  %v2341 = vpack.c.b16 %v2133, %v2132
  %v2342 = vpack.c.b16 %v2135, %v2134
  %v2343 = vpack.c.b16 %v2137, %v2136
  %v2344 = vpack.c.b16 %v2139, %v2138
  %v2345 = vpack.c.b16 %v2141, %v2140
  %v2346 = vpack.c.b16 %v2143, %v2142
  %v2347 = vpack.c.b16 %v2145, %v2144
  %v2348 = vpack.c.b16 %v2147, %v2146
  %v2349 = vpack.c.b16 %v2149, %v2148
  %v2350 = vpack.c.b16 %v2151, %v2150
  %v2351 = vpack.c.b16 %v2153, %v2152
  %v2352 = vpack.c.b16 %v2155, %v2154
  %v2353 = vpack.c.b16 %v2157, %v2156
  %v2354 = vpack.c.b16 %v2159, %v2158
  %v2355 = vpack.c.b16 %v2161, %v2160
  %v2356 = vpack.c.b16 %v2163, %v2162
  %v2357 = vpack.c.b16 %v2165, %v2164
  %v2358 = vpack.c.b16 %v2167, %v2166
  %v2359 = vpack.c.b16 %v2169, %v2168
  %v2360 = vpack.c.b16 %v2171, %v2170
  %v2361 = vpack.c.b16 %v2173, %v2172
  %v2362 = vpack.c.b16 %v2175, %v2174
  %v2363 = vpack.c.b16 %v2177, %v2176
  %v2364 = vpack.c.b16 %v2179, %v2178
  %v2365 = vpack.c.b16 %v2181, %v2180
  %v2366 = vpack.c.b16 %v2183, %v2182
  %v2367 = vpack.c.b16 %v2185, %v2184
  %v2368 = vpack.c.b16 %v2187, %v2186
  %v2369 = vpack.c.b16 %v2189, %v2188
  %v2370 = vpack.c.b16 %v2191, %v2190
  %v2371 = vpack.c.b16 %v2193, %v2192
  %v2372 = vpack.c.b16 %v2195, %v2194
  %v2373 = vpack.c.b16 %v2197, %v2196
  %v2374 = vpack.c.b16 %v2199, %v2198
  %v2375 = vpack.c.b16 %v2201, %v2200
  %v2376 = vpack.c.b16 %v2203, %v2202
  %v2377 = vpack.c.b16 %v2205, %v2204
  %v2378 = vpack.c.b16 %v2207, %v2206
  %v2379 = vpack.c.b16 %v2209, %v2208
  %v2380 = vpack.c.b16 %v2211, %v2210
  %v2381 = vpack.c.b16 %v2213, %v2212
  %v2382 = vpack.c.b16 %v2215, %v2214
  %v2383 = vpack.c.b16 %v2217, %v2216
  %v2384 = vpack.c.b16 %v2219, %v2218
  %v2385 = vpack.c.b16 %v2221, %v2220
  %v2386 = vpack.c.b16 %v2223, %v2222
  %v2387 = vpack.c.b16 %v2225, %v2224
  %v2388 = vpack.c.b16 %v2227, %v2226
  %v2389 = vpack.c.b16 %v2229, %v2228
  %v2390 = vpack.c.b16 %v2231, %v2230
  %v2391 = vpack.c.b16 %v2233, %v2232
  %v2392 = vpack.c.b16 %v2235, %v2234
  %v2393 = vpack.c.b16 %v2237, %v2236
  %v2394 = vpack.c.b16 %v2239, %v2238
  %v2395 = vpack.c.b16 %v2241, %v2240
  %v2396 = vpack.c.b16 %v2243, %v2242
  %v2397 = vpack.c.b16 %v2245, %v2244
  %v2398 = vpack.c.b16 %v2247, %v2246
  %v2399 = vpack.c.b16 %v2249, %v2248
  %v2400 = vpack.c.b16 %v2251, %v2250
  %v2401 = vpack.c.b16 %v2253, %v2252
  %v2402 = vpack.c.b16 %v2255, %v2254
  %v2403 = vpack.c.b16 %v2257, %v2256
  %v2404 = vpack.c.b16 %v2259, %v2258
  %v2405 = vpack.c.b16 %v2261, %v2260
  %v2406 = vpack.c.b16 %v2263, %v2262
  %v2407 = vpack.c.b16 %v2265, %v2264
  %v2408 = vpack.c.b16 %v2267, %v2266
  %v2409 = vpack.c.b16 %v2269, %v2268
  %v2410 = vpack.c.b16 %v2271, %v2270
  %v2411 = vpack.c.b16 %v2273, %v2272
  %v2412 = vpack.c.b16 %v2275, %v2274
  %v2413 = vpack.c.b16 %v2277, %v2276
  %v2414 = vpack.c.b16 %v2279, %v2278
  %v2415 = vpack.c.b16 %v2281, %v2280
  %v2416 = vpack.c.b16 %v2283, %v2282
  %v2417 = vpack.c.b16 %v2285, %v2284
  %v2418 = vpack.c.b16 %v2287, %v2286
  %v2419 = vpack.c.b16 %v2289, %v2288
  %v2420 = vpack.c.b16 %v2291, %v2290
  %v2421 = vpack.c.b16 %v2293, %v2292
  %2550 = vmatprep.subr.bf16.mxu0 0
  %2551 = vmatpush1.bf16.msra.mxu0 %v2294
  %2552 = vmatprep.subr.bf16.mxu0 0
  %2553 = vmatpush1.bf16.msra.mxu0 %v2295
  %2554 = vmatprep.subr.bf16.mxu0 0
  %2555 = vmatpush1.bf16.msra.mxu0 %v2296
  %2556 = vmatprep.subr.bf16.mxu0 0
  %2557 = vmatpush1.bf16.msra.mxu0 %v2297
  %2558 = vmatprep.subr.bf16.mxu0 0
  %2559 = vmatpush1.bf16.msra.mxu0 %v2298
  %2560 = vmatprep.subr.bf16.mxu0 0
  %2561 = vmatpush1.bf16.msra.mxu0 %v2299
  %2562 = vmatprep.subr.bf16.mxu0 0
  %2563 = vmatpush1.bf16.msra.mxu0 %v2300
  %2564 = vmatprep.subr.bf16.mxu0 0
  %2565 = vmatpush1.bf16.msra.mxu0 %v2301
  %2566 = vmatprep.subr.bf16.mxu0 0
  %2567 = vmatpush1.bf16.msra.mxu0 %v2302
  %2568 = vmatprep.subr.bf16.mxu0 0
  %2569 = vmatpush1.bf16.msra.mxu0 %v2303
  %2570 = vmatprep.subr.bf16.mxu0 0
  %2571 = vmatpush1.bf16.msra.mxu0 %v2304
  %2572 = vmatprep.subr.bf16.mxu0 0
  %2573 = vmatpush1.bf16.msra.mxu0 %v2305
  %2574 = vmatprep.subr.bf16.mxu0 0
  %2575 = vmatpush1.bf16.msra.mxu0 %v2306
  %2576 = vmatprep.subr.bf16.mxu0 0
  %2577 = vmatpush1.bf16.msra.mxu0 %v2307
  %2578 = vmatprep.subr.bf16.mxu0 0
  %2579 = vmatpush1.bf16.msra.mxu0 %v2308
  %2580 = vmatprep.subr.bf16.mxu0 0
  %2581 = vmatpush1.bf16.msra.mxu0 %v2309
  %2582 = vmatprep.mubr.bf16.mxu0 %v1271
  %2583 = vmatmul.mubr.bf16.gmra.mrb[0].mxu0 %v1270
  %v2584 = vpop.f32.mrb[0].mxu0
  %v2585 = vadd.f32 %v524, %v2584
  %v2586 = vpop.f32.mrb[0].mxu0
  %v2587 = vpop.f32.mrb[0].mxu0
  %v2588 = vadd.f32 %v524, %v2587
  %v2589 = vpop.f32.mrb[0].mxu0
  %2590 = vmatprep.mubr.bf16.mxu0 %v1287
  %2591 = vmatmul.mubr.bf16.gmra.mrb[0].mxu0 %v1286
  %v2592 = vpop.f32.mrb[0].mxu0
  %v2593 = vadd.f32 %v524, %v2592
  %v2594 = vpop.f32.mrb[0].mxu0
  %v2595 = vpop.f32.mrb[0].mxu0
  %v2596 = vadd.f32 %v524, %v2595
  %v2597 = vpop.f32.mrb[0].mxu0
  %2598 = vmatprep.mubr.bf16.mxu0 %v1303
  %2599 = vmatmul.mubr.bf16.gmra.mrb[0].mxu0 %v1302
  %v2600 = vpop.f32.mrb[0].mxu0
  %v2601 = vadd.f32 %v524, %v2600
  %v2602 = vpop.f32.mrb[0].mxu0
  %v2603 = vpop.f32.mrb[0].mxu0
  %v2604 = vadd.f32 %v524, %v2603
  %v2605 = vpop.f32.mrb[0].mxu0
  %2606 = vmatprep.mubr.bf16.mxu0 %v1319
  %2607 = vmatmul.mubr.bf16.gmra.mrb[0].mxu0 %v1318
  %v2608 = vpop.f32.mrb[0].mxu0
  %v2609 = vadd.f32 %v524, %v2608
  %v2610 = vpop.f32.mrb[0].mxu0
  %v2611 = vpop.f32.mrb[0].mxu0
  %v2612 = vadd.f32 %v524, %v2611
  %v2613 = vpop.f32.mrb[0].mxu0
  %2614 = vmatprep.mubr.bf16.mxu0 %v1335
  %2615 = vmatmul.mubr.bf16.gmra.mrb[0].mxu0 %v1334
  %v2616 = vpop.f32.mrb[0].mxu0
  %v2617 = vadd.f32 %v524, %v2616
  %v2618 = vpop.f32.mrb[0].mxu0
  %v2619 = vpop.f32.mrb[0].mxu0
  %v2620 = vadd.f32 %v524, %v2619
  %v2621 = vpop.f32.mrb[0].mxu0
  %2622 = vmatprep.mubr.bf16.mxu0 %v1351
  %2623 = vmatmul.mubr.bf16.gmra.mrb[0].mxu0 %v1350
  %v2624 = vpop.f32.mrb[0].mxu0
  %v2625 = vadd.f32 %v524, %v2624
  %v2626 = vpop.f32.mrb[0].mxu0
  %v2627 = vpop.f32.mrb[0].mxu0
  %v2628 = vadd.f32 %v524, %v2627
  %v2629 = vpop.f32.mrb[0].mxu0
  %2630 = vmatprep.mubr.bf16.mxu0 %v1367
  %2631 = vmatmul.mubr.bf16.gmra.mrb[0].mxu0 %v1366
  %v2632 = vpop.f32.mrb[0].mxu0
  %v2633 = vadd.f32 %v524, %v2632
  %v2634 = vpop.f32.mrb[0].mxu0
  %v2635 = vpop.f32.mrb[0].mxu0
  %v2636 = vadd.f32 %v524, %v2635
  %v2637 = vpop.f32.mrb[0].mxu0
  %2638 = vmatprep.mubr.bf16.mxu0 %v1383
  %2639 = vmatmul.mubr.bf16.gmra.mrb[0].mxu0 %v1382
  %v2640 = vpop.f32.mrb[0].mxu0
  %v2641 = vadd.f32 %v524, %v2640
  %v2642 = vpop.f32.mrb[0].mxu0
  %v2643 = vpop.f32.mrb[0].mxu0
  %v2644 = vadd.f32 %v524, %v2643
  %v2645 = vpop.f32.mrb[0].mxu0
  %2646 = vmatprep.mubr.bf16.mxu0 %v1399
  %2647 = vmatmul.mubr.bf16.gmra.mrb[0].mxu0 %v1398
  %v2648 = vpop.f32.mrb[0].mxu0
  %v2649 = vadd.f32 %v524, %v2648
  %v2650 = vpop.f32.mrb[0].mxu0
  %v2651 = vpop.f32.mrb[0].mxu0
  %v2652 = vadd.f32 %v524, %v2651
  %v2653 = vpop.f32.mrb[0].mxu0
  %2654 = vmatprep.mubr.bf16.mxu0 %v1415
  %2655 = vmatmul.mubr.bf16.gmra.mrb[0].mxu0 %v1414
  %v2656 = vpop.f32.mrb[0].mxu0
  %v2657 = vadd.f32 %v524, %v2656
  %v2658 = vpop.f32.mrb[0].mxu0
  %v2659 = vpop.f32.mrb[0].mxu0
  %v2660 = vadd.f32 %v524, %v2659
  %v2661 = vpop.f32.mrb[0].mxu0
  %2662 = vmatprep.mubr.bf16.mxu0 %v1431
  %2663 = vmatmul.mubr.bf16.gmra.mrb[0].mxu0 %v1430
  %v2664 = vpop.f32.mrb[0].mxu0
  %v2665 = vadd.f32 %v524, %v2664
  %v2666 = vpop.f32.mrb[0].mxu0
  %v2667 = vpop.f32.mrb[0].mxu0
  %v2668 = vadd.f32 %v524, %v2667
  %v2669 = vpop.f32.mrb[0].mxu0
  %2670 = vmatprep.mubr.bf16.mxu0 %v1447
  %2671 = vmatmul.mubr.bf16.gmra.mrb[0].mxu0 %v1446
  %v2672 = vpop.f32.mrb[0].mxu0
  %v2673 = vadd.f32 %v524, %v2672
  %v2674 = vpop.f32.mrb[0].mxu0
  %v2675 = vpop.f32.mrb[0].mxu0
  %v2676 = vadd.f32 %v524, %v2675
  %v2677 = vpop.f32.mrb[0].mxu0
  %2678 = vmatprep.mubr.bf16.mxu0 %v1463
  %2679 = vmatmul.mubr.bf16.gmra.mrb[0].mxu0 %v1462
  %v2680 = vpop.f32.mrb[0].mxu0
  %v2681 = vadd.f32 %v524, %v2680
  %v2682 = vpop.f32.mrb[0].mxu0
  %v2683 = vpop.f32.mrb[0].mxu0
  %v2684 = vadd.f32 %v524, %v2683
  %v2685 = vpop.f32.mrb[0].mxu0
  %2686 = vmatprep.mubr.bf16.mxu0 %v1479
  %2687 = vmatmul.mubr.bf16.gmra.mrb[0].mxu0 %v1478
  %v2688 = vpop.f32.mrb[0].mxu0
  %v2689 = vadd.f32 %v524, %v2688
  %v2690 = vpop.f32.mrb[0].mxu0
  %v2691 = vpop.f32.mrb[0].mxu0
  %v2692 = vadd.f32 %v524, %v2691
  %v2693 = vpop.f32.mrb[0].mxu0
  %2694 = vmatprep.mubr.bf16.mxu0 %v1495
  %2695 = vmatmul.mubr.bf16.gmra.mrb[0].mxu0 %v1494
  %v2696 = vpop.f32.mrb[0].mxu0
  %v2697 = vadd.f32 %v524, %v2696
  %v2698 = vpop.f32.mrb[0].mxu0
  %v2699 = vpop.f32.mrb[0].mxu0
  %v2700 = vadd.f32 %v524, %v2699
  %v2701 = vpop.f32.mrb[0].mxu0
  %2702 = vmatprep.mubr.bf16.mxu0 %v1511
  %2703 = vmatmul.mubr.bf16.gmra.mrb[0].mxu0 %v1510
  %v2704 = vpop.f32.mrb[0].mxu0
  %v2705 = vadd.f32 %v524, %v2704
  %v2706 = vpop.f32.mrb[0].mxu0
  %v2707 = vpop.f32.mrb[0].mxu0
  %v2708 = vpop.f32.mrb[0].mxu0
  %2709 = vdwg.mxu0
  %2710 = vmatprep.subr.bf16.mxu0 0
  %2711 = vmatpush1.bf16.msra.mxu0 %v2310
  %2712 = vmatprep.subr.bf16.mxu0 0
  %2713 = vmatpush1.bf16.msra.mxu0 %v2311
  %2714 = vmatprep.subr.bf16.mxu0 0
  %2715 = vmatpush1.bf16.msra.mxu0 %v2312
  %2716 = vmatprep.subr.bf16.mxu0 0
  %2717 = vmatpush1.bf16.msra.mxu0 %v2313
  %2718 = vmatprep.subr.bf16.mxu0 0
  %2719 = vmatpush1.bf16.msra.mxu0 %v2314
  %2720 = vmatprep.subr.bf16.mxu0 0
  %2721 = vmatpush1.bf16.msra.mxu0 %v2315
  %2722 = vmatprep.subr.bf16.mxu0 0
  %2723 = vmatpush1.bf16.msra.mxu0 %v2316
  %2724 = vmatprep.subr.bf16.mxu0 0
  %2725 = vmatpush1.bf16.msra.mxu0 %v2317
  %2726 = vmatprep.subr.bf16.mxu0 0
  %2727 = vmatpush1.bf16.msra.mxu0 %v2318
  %2728 = vmatprep.subr.bf16.mxu0 0
  %2729 = vmatpush1.bf16.msra.mxu0 %v2319
  %2730 = vmatprep.subr.bf16.mxu0 0
  %2731 = vmatpush1.bf16.msra.mxu0 %v2320
  %2732 = vmatprep.subr.bf16.mxu0 0
  %2733 = vmatpush1.bf16.msra.mxu0 %v2321
  %2734 = vmatprep.subr.bf16.mxu0 0
  %2735 = vmatpush1.bf16.msra.mxu0 %v2322
  %2736 = vmatprep.subr.bf16.mxu0 0
  %2737 = vmatpush1.bf16.msra.mxu0 %v2323
  %2738 = vmatprep.subr.bf16.mxu0 0
  %2739 = vmatpush1.bf16.msra.mxu0 %v2324
  %2740 = vmatprep.subr.bf16.mxu0 0
  %2741 = vmatpush1.bf16.msra.mxu0 %v2325
  %2742 = vmatprep.mubr.bf16.mxu0 %v1273
  %2743 = vmatmul.mubr.bf16.gmra.mrb[0].mxu0 %v1272
  %v2744 = vpop.f32.mrb[0].mxu0
  %v2745 = vadd.f32 %v2585, %v2744
  %v2746 = vpop.f32.mrb[0].mxu0
  %v2747 = vpop.f32.mrb[0].mxu0
  %v2748 = vadd.f32 %v2588, %v2747
  %v2749 = vpop.f32.mrb[0].mxu0
  %2750 = vmatprep.mubr.bf16.mxu0 %v1289
  %2751 = vmatmul.mubr.bf16.gmra.mrb[0].mxu0 %v1288
  %v2752 = vpop.f32.mrb[0].mxu0
  %v2753 = vadd.f32 %v2593, %v2752
  %v2754 = vpop.f32.mrb[0].mxu0
  %v2755 = vpop.f32.mrb[0].mxu0
  %v2756 = vadd.f32 %v2596, %v2755
  %v2757 = vpop.f32.mrb[0].mxu0
  %2758 = vmatprep.mubr.bf16.mxu0 %v1305
  %2759 = vmatmul.mubr.bf16.gmra.mrb[0].mxu0 %v1304
  %v2760 = vpop.f32.mrb[0].mxu0
  %v2761 = vadd.f32 %v2601, %v2760
  %v2762 = vpop.f32.mrb[0].mxu0
  %v2763 = vpop.f32.mrb[0].mxu0
  %v2764 = vadd.f32 %v2604, %v2763
  %v2765 = vpop.f32.mrb[0].mxu0
  %2766 = vmatprep.mubr.bf16.mxu0 %v1321
  %2767 = vmatmul.mubr.bf16.gmra.mrb[0].mxu0 %v1320
  %v2768 = vpop.f32.mrb[0].mxu0
  %v2769 = vadd.f32 %v2609, %v2768
  %v2770 = vpop.f32.mrb[0].mxu0
  %v2771 = vpop.f32.mrb[0].mxu0
  %v2772 = vadd.f32 %v2612, %v2771
  %v2773 = vpop.f32.mrb[0].mxu0
  %2774 = vmatprep.mubr.bf16.mxu0 %v1337
  %2775 = vmatmul.mubr.bf16.gmra.mrb[0].mxu0 %v1336
  %v2776 = vpop.f32.mrb[0].mxu0
  %v2777 = vadd.f32 %v2617, %v2776
  %v2778 = vpop.f32.mrb[0].mxu0
  %v2779 = vpop.f32.mrb[0].mxu0
  %v2780 = vadd.f32 %v2620, %v2779
  %v2781 = vpop.f32.mrb[0].mxu0
  %2782 = vmatprep.mubr.bf16.mxu0 %v1353
  %2783 = vmatmul.mubr.bf16.gmra.mrb[0].mxu0 %v1352
  %v2784 = vpop.f32.mrb[0].mxu0
  %v2785 = vadd.f32 %v2625, %v2784
  %v2786 = vpop.f32.mrb[0].mxu0
  %v2787 = vpop.f32.mrb[0].mxu0
  %v2788 = vadd.f32 %v2628, %v2787
  %v2789 = vpop.f32.mrb[0].mxu0
  %2790 = vmatprep.mubr.bf16.mxu0 %v1369
  %2791 = vmatmul.mubr.bf16.gmra.mrb[0].mxu0 %v1368
  %v2792 = vpop.f32.mrb[0].mxu0
  %v2793 = vadd.f32 %v2633, %v2792
  %v2794 = vpop.f32.mrb[0].mxu0
  %v2795 = vpop.f32.mrb[0].mxu0
  %v2796 = vadd.f32 %v2636, %v2795
  %v2797 = vpop.f32.mrb[0].mxu0
  %2798 = vmatprep.mubr.bf16.mxu0 %v1385
  %2799 = vmatmul.mubr.bf16.gmra.mrb[0].mxu0 %v1384
  %v2800 = vpop.f32.mrb[0].mxu0
  %v2801 = vadd.f32 %v2641, %v2800
  %v2802 = vpop.f32.mrb[0].mxu0
  %v2803 = vpop.f32.mrb[0].mxu0
  %v2804 = vadd.f32 %v2644, %v2803
  %v2805 = vpop.f32.mrb[0].mxu0
  %2806 = vmatprep.mubr.bf16.mxu0 %v1401
  %2807 = vmatmul.mubr.bf16.gmra.mrb[0].mxu0 %v1400
  %v2808 = vpop.f32.mrb[0].mxu0
  %v2809 = vadd.f32 %v2649, %v2808
  %v2810 = vpop.f32.mrb[0].mxu0
  %v2811 = vpop.f32.mrb[0].mxu0
  %v2812 = vadd.f32 %v2652, %v2811
  %v2813 = vpop.f32.mrb[0].mxu0
  %2814 = vmatprep.mubr.bf16.mxu0 %v1417
  %2815 = vmatmul.mubr.bf16.gmra.mrb[0].mxu0 %v1416
  %v2816 = vpop.f32.mrb[0].mxu0
  %v2817 = vadd.f32 %v2657, %v2816
  %v2818 = vpop.f32.mrb[0].mxu0
  %v2819 = vpop.f32.mrb[0].mxu0
  %v2820 = vadd.f32 %v2660, %v2819
  %v2821 = vpop.f32.mrb[0].mxu0
  %2822 = vmatprep.mubr.bf16.mxu0 %v1433
  %2823 = vmatmul.mubr.bf16.gmra.mrb[0].mxu0 %v1432
  %v2824 = vpop.f32.mrb[0].mxu0
  %v2825 = vadd.f32 %v2665, %v2824
  %v2826 = vpop.f32.mrb[0].mxu0
  %v2827 = vpop.f32.mrb[0].mxu0
  %v2828 = vadd.f32 %v2668, %v2827
  %v2829 = vpop.f32.mrb[0].mxu0
  %2830 = vmatprep.mubr.bf16.mxu0 %v1449
  %2831 = vmatmul.mubr.bf16.gmra.mrb[0].mxu0 %v1448
  %v2832 = vpop.f32.mrb[0].mxu0
  %v2833 = vadd.f32 %v2673, %v2832
  %v2834 = vpop.f32.mrb[0].mxu0
  %v2835 = vpop.f32.mrb[0].mxu0
  %v2836 = vadd.f32 %v2676, %v2835
  %v2837 = vpop.f32.mrb[0].mxu0
  %2838 = vmatprep.mubr.bf16.mxu0 %v1465
  %2839 = vmatmul.mubr.bf16.gmra.mrb[0].mxu0 %v1464
  %v2840 = vpop.f32.mrb[0].mxu0
  %v2841 = vadd.f32 %v2681, %v2840
  %v2842 = vpop.f32.mrb[0].mxu0
  %v2843 = vpop.f32.mrb[0].mxu0
  %v2844 = vadd.f32 %v2684, %v2843
  %v2845 = vpop.f32.mrb[0].mxu0
  %2846 = vmatprep.mubr.bf16.mxu0 %v1481
  %2847 = vmatmul.mubr.bf16.gmra.mrb[0].mxu0 %v1480
  %v2848 = vpop.f32.mrb[0].mxu0
  %v2849 = vadd.f32 %v2689, %v2848
  %v2850 = vpop.f32.mrb[0].mxu0
  %v2851 = vpop.f32.mrb[0].mxu0
  %v2852 = vadd.f32 %v2692, %v2851
  %v2853 = vpop.f32.mrb[0].mxu0
  %2854 = vmatprep.mubr.bf16.mxu0 %v1497
  %2855 = vmatmul.mubr.bf16.gmra.mrb[0].mxu0 %v1496
  %v2856 = vpop.f32.mrb[0].mxu0
  %v2857 = vadd.f32 %v2697, %v2856
  %v2858 = vpop.f32.mrb[0].mxu0
  %v2859 = vpop.f32.mrb[0].mxu0
  %v2860 = vadd.f32 %v2700, %v2859
  %v2861 = vpop.f32.mrb[0].mxu0
  %2862 = vmatprep.mubr.bf16.mxu0 %v1513
  %2863 = vmatmul.mubr.bf16.gmra.mrb[0].mxu0 %v1512
  %v2864 = vpop.f32.mrb[0].mxu0
  %v2865 = vadd.f32 %v2705, %v2864
  %v2866 = vpop.f32.mrb[0].mxu0
  %v2867 = vpop.f32.mrb[0].mxu0
  %v2868 = vpop.f32.mrb[0].mxu0
  %2869 = vdwg.mxu0
  %2870 = vmatprep.subr.bf16.mxu0 0
  %2871 = vmatpush1.bf16.msra.mxu0 %v2326
  %2872 = vmatprep.subr.bf16.mxu0 0
  %2873 = vmatpush1.bf16.msra.mxu0 %v2327
  %2874 = vmatprep.subr.bf16.mxu0 0
  %2875 = vmatpush1.bf16.msra.mxu0 %v2328
  %2876 = vmatprep.subr.bf16.mxu0 0
  %2877 = vmatpush1.bf16.msra.mxu0 %v2329
  %2878 = vmatprep.subr.bf16.mxu0 0
  %2879 = vmatpush1.bf16.msra.mxu0 %v2330
  %2880 = vmatprep.subr.bf16.mxu0 0
  %2881 = vmatpush1.bf16.msra.mxu0 %v2331
  %2882 = vmatprep.subr.bf16.mxu0 0
  %2883 = vmatpush1.bf16.msra.mxu0 %v2332
  %2884 = vmatprep.subr.bf16.mxu0 0
  %2885 = vmatpush1.bf16.msra.mxu0 %v2333
  %2886 = vmatprep.subr.bf16.mxu0 0
  %2887 = vmatpush1.bf16.msra.mxu0 %v2334
  %2888 = vmatprep.subr.bf16.mxu0 0
  %2889 = vmatpush1.bf16.msra.mxu0 %v2335
  %2890 = vmatprep.subr.bf16.mxu0 0
  %2891 = vmatpush1.bf16.msra.mxu0 %v2336
  %2892 = vmatprep.subr.bf16.mxu0 0
  %2893 = vmatpush1.bf16.msra.mxu0 %v2337
  %2894 = vmatprep.subr.bf16.mxu0 0
  %2895 = vmatpush1.bf16.msra.mxu0 %v2338
  %2896 = vmatprep.subr.bf16.mxu0 0
  %2897 = vmatpush1.bf16.msra.mxu0 %v2339
  %2898 = vmatprep.subr.bf16.mxu0 0
  %2899 = vmatpush1.bf16.msra.mxu0 %v2340
  %2900 = vmatprep.subr.bf16.mxu0 0
  %2901 = vmatpush1.bf16.msra.mxu0 %v2341
  %2902 = vmatprep.mubr.bf16.mxu0 %v1275
  %2903 = vmatmul.mubr.bf16.gmra.mrb[0].mxu0 %v1274
  %v2904 = vpop.f32.mrb[0].mxu0
  %v2905 = vadd.f32 %v2745, %v2904
  %v2906 = vpop.f32.mrb[0].mxu0
  %v2907 = vpop.f32.mrb[0].mxu0
  %v2908 = vadd.f32 %v2748, %v2907
  %v2909 = vpop.f32.mrb[0].mxu0
  %2910 = vmatprep.mubr.bf16.mxu0 %v1291
  %2911 = vmatmul.mubr.bf16.gmra.mrb[0].mxu0 %v1290
  %v2912 = vpop.f32.mrb[0].mxu0
  %v2913 = vadd.f32 %v2753, %v2912
  %v2914 = vpop.f32.mrb[0].mxu0
  %v2915 = vpop.f32.mrb[0].mxu0
  %v2916 = vadd.f32 %v2756, %v2915
  %v2917 = vpop.f32.mrb[0].mxu0
  %2918 = vmatprep.mubr.bf16.mxu0 %v1307
  %2919 = vmatmul.mubr.bf16.gmra.mrb[0].mxu0 %v1306
  %v2920 = vpop.f32.mrb[0].mxu0
  %v2921 = vadd.f32 %v2761, %v2920
  %v2922 = vpop.f32.mrb[0].mxu0
  %v2923 = vpop.f32.mrb[0].mxu0
  %v2924 = vadd.f32 %v2764, %v2923
  %v2925 = vpop.f32.mrb[0].mxu0
  %2926 = vmatprep.mubr.bf16.mxu0 %v1323
  %2927 = vmatmul.mubr.bf16.gmra.mrb[0].mxu0 %v1322
  %v2928 = vpop.f32.mrb[0].mxu0
  %v2929 = vadd.f32 %v2769, %v2928
  %v2930 = vpop.f32.mrb[0].mxu0
  %v2931 = vpop.f32.mrb[0].mxu0
  %v2932 = vadd.f32 %v2772, %v2931
  %v2933 = vpop.f32.mrb[0].mxu0
  %2934 = vmatprep.mubr.bf16.mxu0 %v1339
  %2935 = vmatmul.mubr.bf16.gmra.mrb[0].mxu0 %v1338
  %v2936 = vpop.f32.mrb[0].mxu0
  %v2937 = vadd.f32 %v2777, %v2936
  %v2938 = vpop.f32.mrb[0].mxu0
  %v2939 = vpop.f32.mrb[0].mxu0
  %v2940 = vadd.f32 %v2780, %v2939
  %v2941 = vpop.f32.mrb[0].mxu0
  %2942 = vmatprep.mubr.bf16.mxu0 %v1355
  %2943 = vmatmul.mubr.bf16.gmra.mrb[0].mxu0 %v1354
  %v2944 = vpop.f32.mrb[0].mxu0
  %v2945 = vadd.f32 %v2785, %v2944
  %v2946 = vpop.f32.mrb[0].mxu0
  %v2947 = vpop.f32.mrb[0].mxu0
  %v2948 = vadd.f32 %v2788, %v2947
  %v2949 = vpop.f32.mrb[0].mxu0
  %2950 = vmatprep.mubr.bf16.mxu0 %v1371
  %2951 = vmatmul.mubr.bf16.gmra.mrb[0].mxu0 %v1370
  %v2952 = vpop.f32.mrb[0].mxu0
  %v2953 = vadd.f32 %v2793, %v2952
  %v2954 = vpop.f32.mrb[0].mxu0
  %v2955 = vpop.f32.mrb[0].mxu0
  %v2956 = vadd.f32 %v2796, %v2955
  %v2957 = vpop.f32.mrb[0].mxu0
  %2958 = vmatprep.mubr.bf16.mxu0 %v1387
  %2959 = vmatmul.mubr.bf16.gmra.mrb[0].mxu0 %v1386
  %v2960 = vpop.f32.mrb[0].mxu0
  %v2961 = vadd.f32 %v2801, %v2960
  %v2962 = vpop.f32.mrb[0].mxu0
  %v2963 = vpop.f32.mrb[0].mxu0
  %v2964 = vadd.f32 %v2804, %v2963
  %v2965 = vpop.f32.mrb[0].mxu0
  %2966 = vmatprep.mubr.bf16.mxu0 %v1403
  %2967 = vmatmul.mubr.bf16.gmra.mrb[0].mxu0 %v1402
  %v2968 = vpop.f32.mrb[0].mxu0
  %v2969 = vadd.f32 %v2809, %v2968
  %v2970 = vpop.f32.mrb[0].mxu0
  %v2971 = vpop.f32.mrb[0].mxu0
  %v2972 = vadd.f32 %v2812, %v2971
  %v2973 = vpop.f32.mrb[0].mxu0
  %2974 = vmatprep.mubr.bf16.mxu0 %v1419
  %2975 = vmatmul.mubr.bf16.gmra.mrb[0].mxu0 %v1418
  %v2976 = vpop.f32.mrb[0].mxu0
  %v2977 = vadd.f32 %v2817, %v2976
  %v2978 = vpop.f32.mrb[0].mxu0
  %v2979 = vpop.f32.mrb[0].mxu0
  %v2980 = vadd.f32 %v2820, %v2979
  %v2981 = vpop.f32.mrb[0].mxu0
  %2982 = vmatprep.mubr.bf16.mxu0 %v1435
  %2983 = vmatmul.mubr.bf16.gmra.mrb[0].mxu0 %v1434
  %v2984 = vpop.f32.mrb[0].mxu0
  %v2985 = vadd.f32 %v2825, %v2984
  %v2986 = vpop.f32.mrb[0].mxu0
  %v2987 = vpop.f32.mrb[0].mxu0
  %v2988 = vadd.f32 %v2828, %v2987
  %v2989 = vpop.f32.mrb[0].mxu0
  %2990 = vmatprep.mubr.bf16.mxu0 %v1451
  %2991 = vmatmul.mubr.bf16.gmra.mrb[0].mxu0 %v1450
  %v2992 = vpop.f32.mrb[0].mxu0
  %v2993 = vadd.f32 %v2833, %v2992
  %v2994 = vpop.f32.mrb[0].mxu0
  %v2995 = vpop.f32.mrb[0].mxu0
  %v2996 = vadd.f32 %v2836, %v2995
  %v2997 = vpop.f32.mrb[0].mxu0
  %2998 = vmatprep.mubr.bf16.mxu0 %v1467
  %2999 = vmatmul.mubr.bf16.gmra.mrb[0].mxu0 %v1466
  %v3000 = vpop.f32.mrb[0].mxu0
  %v3001 = vadd.f32 %v2841, %v3000
  %v3002 = vpop.f32.mrb[0].mxu0
  %v3003 = vpop.f32.mrb[0].mxu0
  %v3004 = vadd.f32 %v2844, %v3003
  %v3005 = vpop.f32.mrb[0].mxu0
  %3006 = vmatprep.mubr.bf16.mxu0 %v1483
  %3007 = vmatmul.mubr.bf16.gmra.mrb[0].mxu0 %v1482
  %v3008 = vpop.f32.mrb[0].mxu0
  %v3009 = vadd.f32 %v2849, %v3008
  %v3010 = vpop.f32.mrb[0].mxu0
  %v3011 = vpop.f32.mrb[0].mxu0
  %v3012 = vadd.f32 %v2852, %v3011
  %v3013 = vpop.f32.mrb[0].mxu0
  %3014 = vmatprep.mubr.bf16.mxu0 %v1499
  %3015 = vmatmul.mubr.bf16.gmra.mrb[0].mxu0 %v1498
  %v3016 = vpop.f32.mrb[0].mxu0
  %v3017 = vadd.f32 %v2857, %v3016
  %v3018 = vpop.f32.mrb[0].mxu0
  %v3019 = vpop.f32.mrb[0].mxu0
  %v3020 = vadd.f32 %v2860, %v3019
  %v3021 = vpop.f32.mrb[0].mxu0
  %3022 = vmatprep.mubr.bf16.mxu0 %v1515
  %3023 = vmatmul.mubr.bf16.gmra.mrb[0].mxu0 %v1514
  %v3024 = vpop.f32.mrb[0].mxu0
  %v3025 = vadd.f32 %v2865, %v3024
  %v3026 = vpop.f32.mrb[0].mxu0
  %v3027 = vpop.f32.mrb[0].mxu0
  %v3028 = vpop.f32.mrb[0].mxu0
  %3029 = vdwg.mxu0
  %3030 = vmatprep.subr.bf16.mxu0 0
  %3031 = vmatpush1.bf16.msra.mxu0 %v2342
  %3032 = vmatprep.subr.bf16.mxu0 0
  %3033 = vmatpush1.bf16.msra.mxu0 %v2343
  %3034 = vmatprep.subr.bf16.mxu0 0
  %3035 = vmatpush1.bf16.msra.mxu0 %v2344
  %3036 = vmatprep.subr.bf16.mxu0 0
  %3037 = vmatpush1.bf16.msra.mxu0 %v2345
  %3038 = vmatprep.subr.bf16.mxu0 0
  %3039 = vmatpush1.bf16.msra.mxu0 %v2346
  %3040 = vmatprep.subr.bf16.mxu0 0
  %3041 = vmatpush1.bf16.msra.mxu0 %v2347
  %3042 = vmatprep.subr.bf16.mxu0 0
  %3043 = vmatpush1.bf16.msra.mxu0 %v2348
  %3044 = vmatprep.subr.bf16.mxu0 0
  %3045 = vmatpush1.bf16.msra.mxu0 %v2349
  %3046 = vmatprep.subr.bf16.mxu0 0
  %3047 = vmatpush1.bf16.msra.mxu0 %v2350
  %3048 = vmatprep.subr.bf16.mxu0 0
  %3049 = vmatpush1.bf16.msra.mxu0 %v2351
  %3050 = vmatprep.subr.bf16.mxu0 0
  %3051 = vmatpush1.bf16.msra.mxu0 %v2352
  %3052 = vmatprep.subr.bf16.mxu0 0
  %3053 = vmatpush1.bf16.msra.mxu0 %v2353
  %3054 = vmatprep.subr.bf16.mxu0 0
  %3055 = vmatpush1.bf16.msra.mxu0 %v2354
  %3056 = vmatprep.subr.bf16.mxu0 0
  %3057 = vmatpush1.bf16.msra.mxu0 %v2355
  %3058 = vmatprep.subr.bf16.mxu0 0
  %3059 = vmatpush1.bf16.msra.mxu0 %v2356
  %3060 = vmatprep.subr.bf16.mxu0 0
  %3061 = vmatpush1.bf16.msra.mxu0 %v2357
  %3062 = vmatprep.mubr.bf16.mxu0 %v1277
  %3063 = vmatmul.mubr.bf16.gmra.mrb[0].mxu0 %v1276
  %v3064 = vpop.f32.mrb[0].mxu0
  %v3065 = vadd.f32 %v2905, %v3064
  %v3066 = vpop.f32.mrb[0].mxu0
  %v3067 = vpop.f32.mrb[0].mxu0
  %v3068 = vadd.f32 %v2908, %v3067
  %v3069 = vpop.f32.mrb[0].mxu0
  %3070 = vmatprep.mubr.bf16.mxu0 %v1293
  %3071 = vmatmul.mubr.bf16.gmra.mrb[0].mxu0 %v1292
  %v3072 = vpop.f32.mrb[0].mxu0
  %v3073 = vadd.f32 %v2913, %v3072
  %v3074 = vpop.f32.mrb[0].mxu0
  %v3075 = vpop.f32.mrb[0].mxu0
  %v3076 = vadd.f32 %v2916, %v3075
  %v3077 = vpop.f32.mrb[0].mxu0
  %3078 = vmatprep.mubr.bf16.mxu0 %v1309
  %3079 = vmatmul.mubr.bf16.gmra.mrb[0].mxu0 %v1308
  %v3080 = vpop.f32.mrb[0].mxu0
  %v3081 = vadd.f32 %v2921, %v3080
  %v3082 = vpop.f32.mrb[0].mxu0
  %v3083 = vpop.f32.mrb[0].mxu0
  %v3084 = vadd.f32 %v2924, %v3083
  %v3085 = vpop.f32.mrb[0].mxu0
  %3086 = vmatprep.mubr.bf16.mxu0 %v1325
  %3087 = vmatmul.mubr.bf16.gmra.mrb[0].mxu0 %v1324
  %v3088 = vpop.f32.mrb[0].mxu0
  %v3089 = vadd.f32 %v2929, %v3088
  %v3090 = vpop.f32.mrb[0].mxu0
  %v3091 = vpop.f32.mrb[0].mxu0
  %v3092 = vadd.f32 %v2932, %v3091
  %v3093 = vpop.f32.mrb[0].mxu0
  %3094 = vmatprep.mubr.bf16.mxu0 %v1341
  %3095 = vmatmul.mubr.bf16.gmra.mrb[0].mxu0 %v1340
  %v3096 = vpop.f32.mrb[0].mxu0
  %v3097 = vadd.f32 %v2937, %v3096
  %v3098 = vpop.f32.mrb[0].mxu0
  %v3099 = vpop.f32.mrb[0].mxu0
  %v3100 = vadd.f32 %v2940, %v3099
  %v3101 = vpop.f32.mrb[0].mxu0
  %3102 = vmatprep.mubr.bf16.mxu0 %v1357
  %3103 = vmatmul.mubr.bf16.gmra.mrb[0].mxu0 %v1356
  %v3104 = vpop.f32.mrb[0].mxu0
  %v3105 = vadd.f32 %v2945, %v3104
  %v3106 = vpop.f32.mrb[0].mxu0
  %v3107 = vpop.f32.mrb[0].mxu0
  %v3108 = vadd.f32 %v2948, %v3107
  %v3109 = vpop.f32.mrb[0].mxu0
  %3110 = vmatprep.mubr.bf16.mxu0 %v1373
  %3111 = vmatmul.mubr.bf16.gmra.mrb[0].mxu0 %v1372
  %v3112 = vpop.f32.mrb[0].mxu0
  %v3113 = vadd.f32 %v2953, %v3112
  %v3114 = vpop.f32.mrb[0].mxu0
  %v3115 = vpop.f32.mrb[0].mxu0
  %v3116 = vadd.f32 %v2956, %v3115
  %v3117 = vpop.f32.mrb[0].mxu0
  %3118 = vmatprep.mubr.bf16.mxu0 %v1389
  %3119 = vmatmul.mubr.bf16.gmra.mrb[0].mxu0 %v1388
  %v3120 = vpop.f32.mrb[0].mxu0
  %v3121 = vadd.f32 %v2961, %v3120
  %v3122 = vpop.f32.mrb[0].mxu0
  %v3123 = vpop.f32.mrb[0].mxu0
  %v3124 = vadd.f32 %v2964, %v3123
  %v3125 = vpop.f32.mrb[0].mxu0
  %3126 = vmatprep.mubr.bf16.mxu0 %v1405
  %3127 = vmatmul.mubr.bf16.gmra.mrb[0].mxu0 %v1404
  %v3128 = vpop.f32.mrb[0].mxu0
  %v3129 = vadd.f32 %v2969, %v3128
  %v3130 = vpop.f32.mrb[0].mxu0
  %v3131 = vpop.f32.mrb[0].mxu0
  %v3132 = vadd.f32 %v2972, %v3131
  %v3133 = vpop.f32.mrb[0].mxu0
  %3134 = vmatprep.mubr.bf16.mxu0 %v1421
  %3135 = vmatmul.mubr.bf16.gmra.mrb[0].mxu0 %v1420
  %v3136 = vpop.f32.mrb[0].mxu0
  %v3137 = vadd.f32 %v2977, %v3136
  %v3138 = vpop.f32.mrb[0].mxu0
  %v3139 = vpop.f32.mrb[0].mxu0
  %v3140 = vadd.f32 %v2980, %v3139
  %v3141 = vpop.f32.mrb[0].mxu0
  %3142 = vmatprep.mubr.bf16.mxu0 %v1437
  %3143 = vmatmul.mubr.bf16.gmra.mrb[0].mxu0 %v1436
  %v3144 = vpop.f32.mrb[0].mxu0
  %v3145 = vadd.f32 %v2985, %v3144
  %v3146 = vpop.f32.mrb[0].mxu0
  %v3147 = vpop.f32.mrb[0].mxu0
  %v3148 = vadd.f32 %v2988, %v3147
  %v3149 = vpop.f32.mrb[0].mxu0
  %3150 = vmatprep.mubr.bf16.mxu0 %v1453
  %3151 = vmatmul.mubr.bf16.gmra.mrb[0].mxu0 %v1452
  %v3152 = vpop.f32.mrb[0].mxu0
  %v3153 = vadd.f32 %v2993, %v3152
  %v3154 = vpop.f32.mrb[0].mxu0
  %v3155 = vpop.f32.mrb[0].mxu0
  %v3156 = vadd.f32 %v2996, %v3155
  %v3157 = vpop.f32.mrb[0].mxu0
  %3158 = vmatprep.mubr.bf16.mxu0 %v1469
  %3159 = vmatmul.mubr.bf16.gmra.mrb[0].mxu0 %v1468
  %v3160 = vpop.f32.mrb[0].mxu0
  %v3161 = vadd.f32 %v3001, %v3160
  %v3162 = vpop.f32.mrb[0].mxu0
  %v3163 = vpop.f32.mrb[0].mxu0
  %v3164 = vadd.f32 %v3004, %v3163
  %v3165 = vpop.f32.mrb[0].mxu0
  %3166 = vmatprep.mubr.bf16.mxu0 %v1485
  %3167 = vmatmul.mubr.bf16.gmra.mrb[0].mxu0 %v1484
  %v3168 = vpop.f32.mrb[0].mxu0
  %v3169 = vadd.f32 %v3009, %v3168
  %v3170 = vpop.f32.mrb[0].mxu0
  %v3171 = vpop.f32.mrb[0].mxu0
  %v3172 = vadd.f32 %v3012, %v3171
  %v3173 = vpop.f32.mrb[0].mxu0
  %3174 = vmatprep.mubr.bf16.mxu0 %v1501
  %3175 = vmatmul.mubr.bf16.gmra.mrb[0].mxu0 %v1500
  %v3176 = vpop.f32.mrb[0].mxu0
  %v3177 = vadd.f32 %v3017, %v3176
  %v3178 = vpop.f32.mrb[0].mxu0
  %v3179 = vpop.f32.mrb[0].mxu0
  %v3180 = vadd.f32 %v3020, %v3179
  %v3181 = vpop.f32.mrb[0].mxu0
  %3182 = vmatprep.mubr.bf16.mxu0 %v1517
  %3183 = vmatmul.mubr.bf16.gmra.mrb[0].mxu0 %v1516
  %v3184 = vpop.f32.mrb[0].mxu0
  %v3185 = vadd.f32 %v3025, %v3184
  %v3186 = vpop.f32.mrb[0].mxu0
  %v3187 = vpop.f32.mrb[0].mxu0
  %v3188 = vpop.f32.mrb[0].mxu0
  %3189 = vdwg.mxu0
  %3190 = vmatprep.subr.bf16.mxu0 0
  %3191 = vmatpush1.bf16.msra.mxu0 %v2358
  %3192 = vmatprep.subr.bf16.mxu0 0
  %3193 = vmatpush1.bf16.msra.mxu0 %v2359
  %3194 = vmatprep.subr.bf16.mxu0 0
  %3195 = vmatpush1.bf16.msra.mxu0 %v2360
  %3196 = vmatprep.subr.bf16.mxu0 0
  %3197 = vmatpush1.bf16.msra.mxu0 %v2361
  %3198 = vmatprep.subr.bf16.mxu0 0
  %3199 = vmatpush1.bf16.msra.mxu0 %v2362
  %3200 = vmatprep.subr.bf16.mxu0 0
  %3201 = vmatpush1.bf16.msra.mxu0 %v2363
  %3202 = vmatprep.subr.bf16.mxu0 0
  %3203 = vmatpush1.bf16.msra.mxu0 %v2364
  %3204 = vmatprep.subr.bf16.mxu0 0
  %3205 = vmatpush1.bf16.msra.mxu0 %v2365
  %3206 = vmatprep.subr.bf16.mxu0 0
  %3207 = vmatpush1.bf16.msra.mxu0 %v2366
  %3208 = vmatprep.subr.bf16.mxu0 0
  %3209 = vmatpush1.bf16.msra.mxu0 %v2367
  %3210 = vmatprep.subr.bf16.mxu0 0
  %3211 = vmatpush1.bf16.msra.mxu0 %v2368
  %3212 = vmatprep.subr.bf16.mxu0 0
  %3213 = vmatpush1.bf16.msra.mxu0 %v2369
  %3214 = vmatprep.subr.bf16.mxu0 0
  %3215 = vmatpush1.bf16.msra.mxu0 %v2370
  %3216 = vmatprep.subr.bf16.mxu0 0
  %3217 = vmatpush1.bf16.msra.mxu0 %v2371
  %3218 = vmatprep.subr.bf16.mxu0 0
  %3219 = vmatpush1.bf16.msra.mxu0 %v2372
  %3220 = vmatprep.subr.bf16.mxu0 0
  %3221 = vmatpush1.bf16.msra.mxu0 %v2373
  %3222 = vmatprep.mubr.bf16.mxu0 %v1279
  %3223 = vmatmul.mubr.bf16.gmra.mrb[0].mxu0 %v1278
  %v3224 = vpop.f32.mrb[0].mxu0
  %v3225 = vadd.f32 %v3065, %v3224
  %v3226 = vpop.f32.mrb[0].mxu0
  %v3227 = vpop.f32.mrb[0].mxu0
  %v3228 = vadd.f32 %v3068, %v3227
  %v3229 = vpop.f32.mrb[0].mxu0
  %3230 = vmatprep.mubr.bf16.mxu0 %v1295
  %3231 = vmatmul.mubr.bf16.gmra.mrb[0].mxu0 %v1294
  %v3232 = vpop.f32.mrb[0].mxu0
  %v3233 = vadd.f32 %v3073, %v3232
  %v3234 = vpop.f32.mrb[0].mxu0
  %v3235 = vpop.f32.mrb[0].mxu0
  %v3236 = vadd.f32 %v3076, %v3235
  %v3237 = vpop.f32.mrb[0].mxu0
  %3238 = vmatprep.mubr.bf16.mxu0 %v1311
  %3239 = vmatmul.mubr.bf16.gmra.mrb[0].mxu0 %v1310
  %v3240 = vpop.f32.mrb[0].mxu0
  %v3241 = vadd.f32 %v3081, %v3240
  %v3242 = vpop.f32.mrb[0].mxu0
  %v3243 = vpop.f32.mrb[0].mxu0
  %v3244 = vadd.f32 %v3084, %v3243
  %v3245 = vpop.f32.mrb[0].mxu0
  %3246 = vmatprep.mubr.bf16.mxu0 %v1327
  %3247 = vmatmul.mubr.bf16.gmra.mrb[0].mxu0 %v1326
  %v3248 = vpop.f32.mrb[0].mxu0
  %v3249 = vadd.f32 %v3089, %v3248
  %v3250 = vpop.f32.mrb[0].mxu0
  %v3251 = vpop.f32.mrb[0].mxu0
  %v3252 = vadd.f32 %v3092, %v3251
  %v3253 = vpop.f32.mrb[0].mxu0
  %3254 = vmatprep.mubr.bf16.mxu0 %v1343
  %3255 = vmatmul.mubr.bf16.gmra.mrb[0].mxu0 %v1342
  %v3256 = vpop.f32.mrb[0].mxu0
  %v3257 = vadd.f32 %v3097, %v3256
  %v3258 = vpop.f32.mrb[0].mxu0
  %v3259 = vpop.f32.mrb[0].mxu0
  %v3260 = vadd.f32 %v3100, %v3259
  %v3261 = vpop.f32.mrb[0].mxu0
  %3262 = vmatprep.mubr.bf16.mxu0 %v1359
  %3263 = vmatmul.mubr.bf16.gmra.mrb[0].mxu0 %v1358
  %v3264 = vpop.f32.mrb[0].mxu0
  %v3265 = vadd.f32 %v3105, %v3264
  %v3266 = vpop.f32.mrb[0].mxu0
  %v3267 = vpop.f32.mrb[0].mxu0
  %v3268 = vadd.f32 %v3108, %v3267
  %v3269 = vpop.f32.mrb[0].mxu0
  %3270 = vmatprep.mubr.bf16.mxu0 %v1375
  %3271 = vmatmul.mubr.bf16.gmra.mrb[0].mxu0 %v1374
  %v3272 = vpop.f32.mrb[0].mxu0
  %v3273 = vadd.f32 %v3113, %v3272
  %v3274 = vpop.f32.mrb[0].mxu0
  %v3275 = vpop.f32.mrb[0].mxu0
  %v3276 = vadd.f32 %v3116, %v3275
  %v3277 = vpop.f32.mrb[0].mxu0
  %3278 = vmatprep.mubr.bf16.mxu0 %v1391
  %3279 = vmatmul.mubr.bf16.gmra.mrb[0].mxu0 %v1390
  %v3280 = vpop.f32.mrb[0].mxu0
  %v3281 = vadd.f32 %v3121, %v3280
  %v3282 = vpop.f32.mrb[0].mxu0
  %v3283 = vpop.f32.mrb[0].mxu0
  %v3284 = vadd.f32 %v3124, %v3283
  %v3285 = vpop.f32.mrb[0].mxu0
  %3286 = vmatprep.mubr.bf16.mxu0 %v1407
  %3287 = vmatmul.mubr.bf16.gmra.mrb[0].mxu0 %v1406
  %v3288 = vpop.f32.mrb[0].mxu0
  %v3289 = vadd.f32 %v3129, %v3288
  %v3290 = vpop.f32.mrb[0].mxu0
  %v3291 = vpop.f32.mrb[0].mxu0
  %v3292 = vadd.f32 %v3132, %v3291
  %v3293 = vpop.f32.mrb[0].mxu0
  %3294 = vmatprep.mubr.bf16.mxu0 %v1423
  %3295 = vmatmul.mubr.bf16.gmra.mrb[0].mxu0 %v1422
  %v3296 = vpop.f32.mrb[0].mxu0
  %v3297 = vadd.f32 %v3137, %v3296
  %v3298 = vpop.f32.mrb[0].mxu0
  %v3299 = vpop.f32.mrb[0].mxu0
  %v3300 = vadd.f32 %v3140, %v3299
  %v3301 = vpop.f32.mrb[0].mxu0
  %3302 = vmatprep.mubr.bf16.mxu0 %v1439
  %3303 = vmatmul.mubr.bf16.gmra.mrb[0].mxu0 %v1438
  %v3304 = vpop.f32.mrb[0].mxu0
  %v3305 = vadd.f32 %v3145, %v3304
  %v3306 = vpop.f32.mrb[0].mxu0
  %v3307 = vpop.f32.mrb[0].mxu0
  %v3308 = vadd.f32 %v3148, %v3307
  %v3309 = vpop.f32.mrb[0].mxu0
  %3310 = vmatprep.mubr.bf16.mxu0 %v1455
  %3311 = vmatmul.mubr.bf16.gmra.mrb[0].mxu0 %v1454
  %v3312 = vpop.f32.mrb[0].mxu0
  %v3313 = vadd.f32 %v3153, %v3312
  %v3314 = vpop.f32.mrb[0].mxu0
  %v3315 = vpop.f32.mrb[0].mxu0
  %v3316 = vadd.f32 %v3156, %v3315
  %v3317 = vpop.f32.mrb[0].mxu0
  %3318 = vmatprep.mubr.bf16.mxu0 %v1471
  %3319 = vmatmul.mubr.bf16.gmra.mrb[0].mxu0 %v1470
  %v3320 = vpop.f32.mrb[0].mxu0
  %v3321 = vadd.f32 %v3161, %v3320
  %v3322 = vpop.f32.mrb[0].mxu0
  %v3323 = vpop.f32.mrb[0].mxu0
  %v3324 = vadd.f32 %v3164, %v3323
  %v3325 = vpop.f32.mrb[0].mxu0
  %3326 = vmatprep.mubr.bf16.mxu0 %v1487
  %3327 = vmatmul.mubr.bf16.gmra.mrb[0].mxu0 %v1486
  %v3328 = vpop.f32.mrb[0].mxu0
  %v3329 = vadd.f32 %v3169, %v3328
  %v3330 = vpop.f32.mrb[0].mxu0
  %v3331 = vpop.f32.mrb[0].mxu0
  %v3332 = vadd.f32 %v3172, %v3331
  %v3333 = vpop.f32.mrb[0].mxu0
  %3334 = vmatprep.mubr.bf16.mxu0 %v1503
  %3335 = vmatmul.mubr.bf16.gmra.mrb[0].mxu0 %v1502
  %v3336 = vpop.f32.mrb[0].mxu0
  %v3337 = vadd.f32 %v3177, %v3336
  %v3338 = vpop.f32.mrb[0].mxu0
  %v3339 = vpop.f32.mrb[0].mxu0
  %v3340 = vadd.f32 %v3180, %v3339
  %v3341 = vpop.f32.mrb[0].mxu0
  %3342 = vmatprep.mubr.bf16.mxu0 %v1519
  %3343 = vmatmul.mubr.bf16.gmra.mrb[0].mxu0 %v1518
  %v3344 = vpop.f32.mrb[0].mxu0
  %v3345 = vadd.f32 %v3185, %v3344
  %v3346 = vpop.f32.mrb[0].mxu0
  %v3347 = vpop.f32.mrb[0].mxu0
  %v3348 = vpop.f32.mrb[0].mxu0
  %3349 = vdwg.mxu0
  %3350 = vmatprep.subr.bf16.mxu0 0
  %3351 = vmatpush1.bf16.msra.mxu0 %v2374
  %3352 = vmatprep.subr.bf16.mxu0 0
  %3353 = vmatpush1.bf16.msra.mxu0 %v2375
  %3354 = vmatprep.subr.bf16.mxu0 0
  %3355 = vmatpush1.bf16.msra.mxu0 %v2376
  %3356 = vmatprep.subr.bf16.mxu0 0
  %3357 = vmatpush1.bf16.msra.mxu0 %v2377
  %3358 = vmatprep.subr.bf16.mxu0 0
  %3359 = vmatpush1.bf16.msra.mxu0 %v2378
  %3360 = vmatprep.subr.bf16.mxu0 0
  %3361 = vmatpush1.bf16.msra.mxu0 %v2379
  %3362 = vmatprep.subr.bf16.mxu0 0
  %3363 = vmatpush1.bf16.msra.mxu0 %v2380
  %3364 = vmatprep.subr.bf16.mxu0 0
  %3365 = vmatpush1.bf16.msra.mxu0 %v2381
  %3366 = vmatprep.subr.bf16.mxu0 0
  %3367 = vmatpush1.bf16.msra.mxu0 %v2382
  %3368 = vmatprep.subr.bf16.mxu0 0
  %3369 = vmatpush1.bf16.msra.mxu0 %v2383
  %3370 = vmatprep.subr.bf16.mxu0 0
  %3371 = vmatpush1.bf16.msra.mxu0 %v2384
  %3372 = vmatprep.subr.bf16.mxu0 0
  %3373 = vmatpush1.bf16.msra.mxu0 %v2385
  %3374 = vmatprep.subr.bf16.mxu0 0
  %3375 = vmatpush1.bf16.msra.mxu0 %v2386
  %3376 = vmatprep.subr.bf16.mxu0 0
  %3377 = vmatpush1.bf16.msra.mxu0 %v2387
  %3378 = vmatprep.subr.bf16.mxu0 0
  %3379 = vmatpush1.bf16.msra.mxu0 %v2388
  %3380 = vmatprep.subr.bf16.mxu0 0
  %3381 = vmatpush1.bf16.msra.mxu0 %v2389
  %3382 = vmatprep.mubr.bf16.mxu0 %v1281
  %3383 = vmatmul.mubr.bf16.gmra.mrb[0].mxu0 %v1280
  %v3384 = vpop.f32.mrb[0].mxu0
  %v3385 = vadd.f32 %v3225, %v3384
  %v3386 = vpop.f32.mrb[0].mxu0
  %v3387 = vpop.f32.mrb[0].mxu0
  %v3388 = vadd.f32 %v3228, %v3387
  %v3389 = vpop.f32.mrb[0].mxu0
  %3390 = vmatprep.mubr.bf16.mxu0 %v1297
  %3391 = vmatmul.mubr.bf16.gmra.mrb[0].mxu0 %v1296
  %v3392 = vpop.f32.mrb[0].mxu0
  %v3393 = vadd.f32 %v3233, %v3392
  %v3394 = vpop.f32.mrb[0].mxu0
  %v3395 = vpop.f32.mrb[0].mxu0
  %v3396 = vadd.f32 %v3236, %v3395
  %v3397 = vpop.f32.mrb[0].mxu0
  %3398 = vmatprep.mubr.bf16.mxu0 %v1313
  %3399 = vmatmul.mubr.bf16.gmra.mrb[0].mxu0 %v1312
  %v3400 = vpop.f32.mrb[0].mxu0
  %v3401 = vadd.f32 %v3241, %v3400
  %v3402 = vpop.f32.mrb[0].mxu0
  %v3403 = vpop.f32.mrb[0].mxu0
  %v3404 = vadd.f32 %v3244, %v3403
  %v3405 = vpop.f32.mrb[0].mxu0
  %3406 = vmatprep.mubr.bf16.mxu0 %v1329
  %3407 = vmatmul.mubr.bf16.gmra.mrb[0].mxu0 %v1328
  %v3408 = vpop.f32.mrb[0].mxu0
  %v3409 = vadd.f32 %v3249, %v3408
  %v3410 = vpop.f32.mrb[0].mxu0
  %v3411 = vpop.f32.mrb[0].mxu0
  %v3412 = vadd.f32 %v3252, %v3411
  %v3413 = vpop.f32.mrb[0].mxu0
  %3414 = vmatprep.mubr.bf16.mxu0 %v1345
  %3415 = vmatmul.mubr.bf16.gmra.mrb[0].mxu0 %v1344
  %v3416 = vpop.f32.mrb[0].mxu0
  %v3417 = vadd.f32 %v3257, %v3416
  %v3418 = vpop.f32.mrb[0].mxu0
  %v3419 = vpop.f32.mrb[0].mxu0
  %v3420 = vadd.f32 %v3260, %v3419
  %v3421 = vpop.f32.mrb[0].mxu0
  %3422 = vmatprep.mubr.bf16.mxu0 %v1361
  %3423 = vmatmul.mubr.bf16.gmra.mrb[0].mxu0 %v1360
  %v3424 = vpop.f32.mrb[0].mxu0
  %v3425 = vadd.f32 %v3265, %v3424
  %v3426 = vpop.f32.mrb[0].mxu0
  %v3427 = vpop.f32.mrb[0].mxu0
  %v3428 = vadd.f32 %v3268, %v3427
  %v3429 = vpop.f32.mrb[0].mxu0
  %3430 = vmatprep.mubr.bf16.mxu0 %v1377
  %3431 = vmatmul.mubr.bf16.gmra.mrb[0].mxu0 %v1376
  %v3432 = vpop.f32.mrb[0].mxu0
  %v3433 = vadd.f32 %v3273, %v3432
  %v3434 = vpop.f32.mrb[0].mxu0
  %v3435 = vpop.f32.mrb[0].mxu0
  %v3436 = vadd.f32 %v3276, %v3435
  %v3437 = vpop.f32.mrb[0].mxu0
  %3438 = vmatprep.mubr.bf16.mxu0 %v1393
  %3439 = vmatmul.mubr.bf16.gmra.mrb[0].mxu0 %v1392
  %v3440 = vpop.f32.mrb[0].mxu0
  %v3441 = vadd.f32 %v3281, %v3440
  %v3442 = vpop.f32.mrb[0].mxu0
  %v3443 = vpop.f32.mrb[0].mxu0
  %v3444 = vadd.f32 %v3284, %v3443
  %v3445 = vpop.f32.mrb[0].mxu0
  %3446 = vmatprep.mubr.bf16.mxu0 %v1409
  %3447 = vmatmul.mubr.bf16.gmra.mrb[0].mxu0 %v1408
  %v3448 = vpop.f32.mrb[0].mxu0
  %v3449 = vadd.f32 %v3289, %v3448
  %v3450 = vpop.f32.mrb[0].mxu0
  %v3451 = vpop.f32.mrb[0].mxu0
  %v3452 = vadd.f32 %v3292, %v3451
  %v3453 = vpop.f32.mrb[0].mxu0
  %3454 = vmatprep.mubr.bf16.mxu0 %v1425
  %3455 = vmatmul.mubr.bf16.gmra.mrb[0].mxu0 %v1424
  %v3456 = vpop.f32.mrb[0].mxu0
  %v3457 = vadd.f32 %v3297, %v3456
  %v3458 = vpop.f32.mrb[0].mxu0
  %v3459 = vpop.f32.mrb[0].mxu0
  %v3460 = vadd.f32 %v3300, %v3459
  %v3461 = vpop.f32.mrb[0].mxu0
  %3462 = vmatprep.mubr.bf16.mxu0 %v1441
  %3463 = vmatmul.mubr.bf16.gmra.mrb[0].mxu0 %v1440
  %v3464 = vpop.f32.mrb[0].mxu0
  %v3465 = vadd.f32 %v3305, %v3464
  %v3466 = vpop.f32.mrb[0].mxu0
  %v3467 = vpop.f32.mrb[0].mxu0
  %v3468 = vadd.f32 %v3308, %v3467
  %v3469 = vpop.f32.mrb[0].mxu0
  %3470 = vmatprep.mubr.bf16.mxu0 %v1457
  %3471 = vmatmul.mubr.bf16.gmra.mrb[0].mxu0 %v1456
  %v3472 = vpop.f32.mrb[0].mxu0
  %v3473 = vadd.f32 %v3313, %v3472
  %v3474 = vpop.f32.mrb[0].mxu0
  %v3475 = vpop.f32.mrb[0].mxu0
  %v3476 = vadd.f32 %v3316, %v3475
  %v3477 = vpop.f32.mrb[0].mxu0
  %3478 = vmatprep.mubr.bf16.mxu0 %v1473
  %3479 = vmatmul.mubr.bf16.gmra.mrb[0].mxu0 %v1472
  %v3480 = vpop.f32.mrb[0].mxu0
  %v3481 = vadd.f32 %v3321, %v3480
  %v3482 = vpop.f32.mrb[0].mxu0
  %v3483 = vpop.f32.mrb[0].mxu0
  %v3484 = vadd.f32 %v3324, %v3483
  %v3485 = vpop.f32.mrb[0].mxu0
  %3486 = vmatprep.mubr.bf16.mxu0 %v1489
  %3487 = vmatmul.mubr.bf16.gmra.mrb[0].mxu0 %v1488
  %v3488 = vpop.f32.mrb[0].mxu0
  %v3489 = vadd.f32 %v3329, %v3488
  %v3490 = vpop.f32.mrb[0].mxu0
  %v3491 = vpop.f32.mrb[0].mxu0
  %v3492 = vadd.f32 %v3332, %v3491
  %v3493 = vpop.f32.mrb[0].mxu0
  %3494 = vmatprep.mubr.bf16.mxu0 %v1505
  %3495 = vmatmul.mubr.bf16.gmra.mrb[0].mxu0 %v1504
  %v3496 = vpop.f32.mrb[0].mxu0
  %v3497 = vadd.f32 %v3337, %v3496
  %v3498 = vpop.f32.mrb[0].mxu0
  %v3499 = vpop.f32.mrb[0].mxu0
  %v3500 = vadd.f32 %v3340, %v3499
  %v3501 = vpop.f32.mrb[0].mxu0
  %3502 = vmatprep.mubr.bf16.mxu0 %v1521
  %3503 = vmatmul.mubr.bf16.gmra.mrb[0].mxu0 %v1520
  %v3504 = vpop.f32.mrb[0].mxu0
  %v3505 = vadd.f32 %v3345, %v3504
  %v3506 = vpop.f32.mrb[0].mxu0
  %v3507 = vpop.f32.mrb[0].mxu0
  %v3508 = vpop.f32.mrb[0].mxu0
  %3509 = vdwg.mxu0
  %3510 = vmatprep.subr.bf16.mxu0 0
  %3511 = vmatpush1.bf16.msra.mxu0 %v2390
  %3512 = vmatprep.subr.bf16.mxu0 0
  %3513 = vmatpush1.bf16.msra.mxu0 %v2391
  %3514 = vmatprep.subr.bf16.mxu0 0
  %3515 = vmatpush1.bf16.msra.mxu0 %v2392
  %3516 = vmatprep.subr.bf16.mxu0 0
  %3517 = vmatpush1.bf16.msra.mxu0 %v2393
  %3518 = vmatprep.subr.bf16.mxu0 0
  %3519 = vmatpush1.bf16.msra.mxu0 %v2394
  %3520 = vmatprep.subr.bf16.mxu0 0
  %3521 = vmatpush1.bf16.msra.mxu0 %v2395
  %3522 = vmatprep.subr.bf16.mxu0 0
  %3523 = vmatpush1.bf16.msra.mxu0 %v2396
  %3524 = vmatprep.subr.bf16.mxu0 0
  %3525 = vmatpush1.bf16.msra.mxu0 %v2397
  %3526 = vmatprep.subr.bf16.mxu0 0
  %3527 = vmatpush1.bf16.msra.mxu0 %v2398
  %3528 = vmatprep.subr.bf16.mxu0 0
  %3529 = vmatpush1.bf16.msra.mxu0 %v2399
  %3530 = vmatprep.subr.bf16.mxu0 0
  %3531 = vmatpush1.bf16.msra.mxu0 %v2400
  %3532 = vmatprep.subr.bf16.mxu0 0
  %3533 = vmatpush1.bf16.msra.mxu0 %v2401
  %3534 = vmatprep.subr.bf16.mxu0 0
  %3535 = vmatpush1.bf16.msra.mxu0 %v2402
  %3536 = vmatprep.subr.bf16.mxu0 0
  %3537 = vmatpush1.bf16.msra.mxu0 %v2403
  %3538 = vmatprep.subr.bf16.mxu0 0
  %3539 = vmatpush1.bf16.msra.mxu0 %v2404
  %3540 = vmatprep.subr.bf16.mxu0 0
  %3541 = vmatpush1.bf16.msra.mxu0 %v2405
  %3542 = vmatprep.mubr.bf16.mxu0 %v1283
  %3543 = vmatmul.mubr.bf16.gmra.mrb[0].mxu0 %v1282
  %v3544 = vpop.f32.mrb[0].mxu0
  %v3545 = vadd.f32 %v3385, %v3544
  %v3546 = vpop.f32.mrb[0].mxu0
  %v3547 = vpop.f32.mrb[0].mxu0
  %v3548 = vadd.f32 %v3388, %v3547
  %v3549 = vpop.f32.mrb[0].mxu0
  %3550 = vmatprep.mubr.bf16.mxu0 %v1299
  %3551 = vmatmul.mubr.bf16.gmra.mrb[0].mxu0 %v1298
  %v3552 = vpop.f32.mrb[0].mxu0
  %v3553 = vadd.f32 %v3393, %v3552
  %v3554 = vpop.f32.mrb[0].mxu0
  %v3555 = vpop.f32.mrb[0].mxu0
  %v3556 = vadd.f32 %v3396, %v3555
  %v3557 = vpop.f32.mrb[0].mxu0
  %3558 = vmatprep.mubr.bf16.mxu0 %v1315
  %3559 = vmatmul.mubr.bf16.gmra.mrb[0].mxu0 %v1314
  %v3560 = vpop.f32.mrb[0].mxu0
  %v3561 = vadd.f32 %v3401, %v3560
  %v3562 = vpop.f32.mrb[0].mxu0
  %v3563 = vpop.f32.mrb[0].mxu0
  %v3564 = vadd.f32 %v3404, %v3563
  %v3565 = vpop.f32.mrb[0].mxu0
  %3566 = vmatprep.mubr.bf16.mxu0 %v1331
  %3567 = vmatmul.mubr.bf16.gmra.mrb[0].mxu0 %v1330
  %v3568 = vpop.f32.mrb[0].mxu0
  %v3569 = vadd.f32 %v3409, %v3568
  %v3570 = vpop.f32.mrb[0].mxu0
  %v3571 = vpop.f32.mrb[0].mxu0
  %v3572 = vadd.f32 %v3412, %v3571
  %v3573 = vpop.f32.mrb[0].mxu0
  %3574 = vmatprep.mubr.bf16.mxu0 %v1347
  %3575 = vmatmul.mubr.bf16.gmra.mrb[0].mxu0 %v1346
  %v3576 = vpop.f32.mrb[0].mxu0
  %v3577 = vadd.f32 %v3417, %v3576
  %v3578 = vpop.f32.mrb[0].mxu0
  %v3579 = vpop.f32.mrb[0].mxu0
  %v3580 = vadd.f32 %v3420, %v3579
  %v3581 = vpop.f32.mrb[0].mxu0
  %3582 = vmatprep.mubr.bf16.mxu0 %v1363
  %3583 = vmatmul.mubr.bf16.gmra.mrb[0].mxu0 %v1362
  %v3584 = vpop.f32.mrb[0].mxu0
  %v3585 = vadd.f32 %v3425, %v3584
  %v3586 = vpop.f32.mrb[0].mxu0
  %v3587 = vpop.f32.mrb[0].mxu0
  %v3588 = vadd.f32 %v3428, %v3587
  %v3589 = vpop.f32.mrb[0].mxu0
  %3590 = vmatprep.mubr.bf16.mxu0 %v1379
  %3591 = vmatmul.mubr.bf16.gmra.mrb[0].mxu0 %v1378
  %v3592 = vpop.f32.mrb[0].mxu0
  %v3593 = vadd.f32 %v3433, %v3592
  %v3594 = vpop.f32.mrb[0].mxu0
  %v3595 = vpop.f32.mrb[0].mxu0
  %v3596 = vadd.f32 %v3436, %v3595
  %v3597 = vpop.f32.mrb[0].mxu0
  %3598 = vmatprep.mubr.bf16.mxu0 %v1395
  %3599 = vmatmul.mubr.bf16.gmra.mrb[0].mxu0 %v1394
  %v3600 = vpop.f32.mrb[0].mxu0
  %v3601 = vadd.f32 %v3441, %v3600
  %v3602 = vpop.f32.mrb[0].mxu0
  %v3603 = vpop.f32.mrb[0].mxu0
  %v3604 = vadd.f32 %v3444, %v3603
  %v3605 = vpop.f32.mrb[0].mxu0
  %3606 = vmatprep.mubr.bf16.mxu0 %v1411
  %3607 = vmatmul.mubr.bf16.gmra.mrb[0].mxu0 %v1410
  %v3608 = vpop.f32.mrb[0].mxu0
  %v3609 = vadd.f32 %v3449, %v3608
  %v3610 = vpop.f32.mrb[0].mxu0
  %v3611 = vpop.f32.mrb[0].mxu0
  %v3612 = vadd.f32 %v3452, %v3611
  %v3613 = vpop.f32.mrb[0].mxu0
  %3614 = vmatprep.mubr.bf16.mxu0 %v1427
  %3615 = vmatmul.mubr.bf16.gmra.mrb[0].mxu0 %v1426
  %v3616 = vpop.f32.mrb[0].mxu0
  %v3617 = vadd.f32 %v3457, %v3616
  %v3618 = vpop.f32.mrb[0].mxu0
  %v3619 = vpop.f32.mrb[0].mxu0
  %v3620 = vadd.f32 %v3460, %v3619
  %v3621 = vpop.f32.mrb[0].mxu0
  %3622 = vmatprep.mubr.bf16.mxu0 %v1443
  %3623 = vmatmul.mubr.bf16.gmra.mrb[0].mxu0 %v1442
  %v3624 = vpop.f32.mrb[0].mxu0
  %v3625 = vadd.f32 %v3465, %v3624
  %v3626 = vpop.f32.mrb[0].mxu0
  %v3627 = vpop.f32.mrb[0].mxu0
  %v3628 = vadd.f32 %v3468, %v3627
  %v3629 = vpop.f32.mrb[0].mxu0
  %3630 = vmatprep.mubr.bf16.mxu0 %v1459
  %3631 = vmatmul.mubr.bf16.gmra.mrb[0].mxu0 %v1458
  %v3632 = vpop.f32.mrb[0].mxu0
  %v3633 = vadd.f32 %v3473, %v3632
  %v3634 = vpop.f32.mrb[0].mxu0
  %v3635 = vpop.f32.mrb[0].mxu0
  %v3636 = vadd.f32 %v3476, %v3635
  %v3637 = vpop.f32.mrb[0].mxu0
  %3638 = vmatprep.mubr.bf16.mxu0 %v1475
  %3639 = vmatmul.mubr.bf16.gmra.mrb[0].mxu0 %v1474
  %v3640 = vpop.f32.mrb[0].mxu0
  %v3641 = vadd.f32 %v3481, %v3640
  %v3642 = vpop.f32.mrb[0].mxu0
  %v3643 = vpop.f32.mrb[0].mxu0
  %v3644 = vadd.f32 %v3484, %v3643
  %v3645 = vpop.f32.mrb[0].mxu0
  %3646 = vmatprep.mubr.bf16.mxu0 %v1491
  %3647 = vmatmul.mubr.bf16.gmra.mrb[0].mxu0 %v1490
  %v3648 = vpop.f32.mrb[0].mxu0
  %v3649 = vadd.f32 %v3489, %v3648
  %v3650 = vpop.f32.mrb[0].mxu0
  %v3651 = vpop.f32.mrb[0].mxu0
  %v3652 = vadd.f32 %v3492, %v3651
  %v3653 = vpop.f32.mrb[0].mxu0
  %3654 = vmatprep.mubr.bf16.mxu0 %v1507
  %3655 = vmatmul.mubr.bf16.gmra.mrb[0].mxu0 %v1506
  %v3656 = vpop.f32.mrb[0].mxu0
  %v3657 = vadd.f32 %v3497, %v3656
  %v3658 = vpop.f32.mrb[0].mxu0
  %v3659 = vpop.f32.mrb[0].mxu0
  %v3660 = vadd.f32 %v3500, %v3659
  %v3661 = vpop.f32.mrb[0].mxu0
  %3662 = vmatprep.mubr.bf16.mxu0 %v1523
  %3663 = vmatmul.mubr.bf16.gmra.mrb[0].mxu0 %v1522
  %v3664 = vpop.f32.mrb[0].mxu0
  %v3665 = vadd.f32 %v3505, %v3664
  %v3666 = vpop.f32.mrb[0].mxu0
  %v3667 = vpop.f32.mrb[0].mxu0
  %v3668 = vpop.f32.mrb[0].mxu0
  %3669 = vdwg.mxu0
  %3670 = vmatprep.subr.bf16.mxu0 0
  %3671 = vmatpush1.bf16.msra.mxu0 %v2406
  %3672 = vmatprep.subr.bf16.mxu0 0
  %3673 = vmatpush1.bf16.msra.mxu0 %v2407
  %3674 = vmatprep.subr.bf16.mxu0 0
  %3675 = vmatpush1.bf16.msra.mxu0 %v2408
  %3676 = vmatprep.subr.bf16.mxu0 0
  %3677 = vmatpush1.bf16.msra.mxu0 %v2409
  %3678 = vmatprep.subr.bf16.mxu0 0
  %3679 = vmatpush1.bf16.msra.mxu0 %v2410
  %3680 = vmatprep.subr.bf16.mxu0 0
  %3681 = vmatpush1.bf16.msra.mxu0 %v2411
  %3682 = vmatprep.subr.bf16.mxu0 0
  %3683 = vmatpush1.bf16.msra.mxu0 %v2412
  %3684 = vmatprep.subr.bf16.mxu0 0
  %3685 = vmatpush1.bf16.msra.mxu0 %v2413
  %3686 = vmatprep.subr.bf16.mxu0 0
  %3687 = vmatpush1.bf16.msra.mxu0 %v2414
  %3688 = vmatprep.subr.bf16.mxu0 0
  %3689 = vmatpush1.bf16.msra.mxu0 %v2415
  %3690 = vmatprep.subr.bf16.mxu0 0
  %3691 = vmatpush1.bf16.msra.mxu0 %v2416
  %3692 = vmatprep.subr.bf16.mxu0 0
  %3693 = vmatpush1.bf16.msra.mxu0 %v2417
  %3694 = vmatprep.subr.bf16.mxu0 0
  %3695 = vmatpush1.bf16.msra.mxu0 %v2418
  %3696 = vmatprep.subr.bf16.mxu0 0
  %3697 = vmatpush1.bf16.msra.mxu0 %v2419
  %3698 = vmatprep.subr.bf16.mxu0 0
  %3699 = vmatpush1.bf16.msra.mxu0 %v2420
  %3700 = vmatprep.subr.bf16.mxu0 0
  %3701 = vmatpush1.bf16.msra.mxu0 %v2421
  %3702 = vmatprep.mubr.bf16.mxu0 %v1285
  %3703 = vmatmul.mubr.bf16.gmra.mrb[0].mxu0 %v1284
  %v3704 = vpop.f32.mrb[0].mxu0
  %v3705 = vadd.f32 %v3545, %v3704
  %v3706 = vpop.f32.mrb[0].mxu0
  %v3707 = vpop.f32.mrb[0].mxu0
  %v3708 = vadd.f32 %v3548, %v3707
  %v3709 = vpop.f32.mrb[0].mxu0
  %3710 = vmatprep.mubr.bf16.mxu0 %v1301
  %3711 = vmatmul.mubr.bf16.gmra.mrb[0].mxu0 %v1300
  %v3712 = vpop.f32.mrb[0].mxu0
  %v3713 = vadd.f32 %v3553, %v3712
  %v3714 = vpop.f32.mrb[0].mxu0
  %v3715 = vpop.f32.mrb[0].mxu0
  %v3716 = vadd.f32 %v3556, %v3715
  %v3717 = vpop.f32.mrb[0].mxu0
  %3718 = vmatprep.mubr.bf16.mxu0 %v1317
  %3719 = vmatmul.mubr.bf16.gmra.mrb[0].mxu0 %v1316
  %v3720 = vpop.f32.mrb[0].mxu0
  %v3721 = vadd.f32 %v3561, %v3720
  %v3722 = vpop.f32.mrb[0].mxu0
  %v3723 = vpop.f32.mrb[0].mxu0
  %v3724 = vadd.f32 %v3564, %v3723
  %v3725 = vpop.f32.mrb[0].mxu0
  %3726 = vmatprep.mubr.bf16.mxu0 %v1333
  %3727 = vmatmul.mubr.bf16.gmra.mrb[0].mxu0 %v1332
  %v3728 = vpop.f32.mrb[0].mxu0
  %v3729 = vadd.f32 %v3569, %v3728
  %v3730 = vpop.f32.mrb[0].mxu0
  %v3731 = vpop.f32.mrb[0].mxu0
  %v3732 = vadd.f32 %v3572, %v3731
  %v3733 = vpop.f32.mrb[0].mxu0
  %3734 = vmatprep.mubr.bf16.mxu0 %v1349
  %3735 = vmatmul.mubr.bf16.gmra.mrb[0].mxu0 %v1348
  %v3736 = vpop.f32.mrb[0].mxu0
  %v3737 = vadd.f32 %v3577, %v3736
  %v3738 = vpop.f32.mrb[0].mxu0
  %v3739 = vpop.f32.mrb[0].mxu0
  %v3740 = vadd.f32 %v3580, %v3739
  %v3741 = vpop.f32.mrb[0].mxu0
  %3742 = vmatprep.mubr.bf16.mxu0 %v1365
  %3743 = vmatmul.mubr.bf16.gmra.mrb[0].mxu0 %v1364
  %v3744 = vpop.f32.mrb[0].mxu0
  %v3745 = vadd.f32 %v3585, %v3744
  %v3746 = vpop.f32.mrb[0].mxu0
  %v3747 = vpop.f32.mrb[0].mxu0
  %v3748 = vadd.f32 %v3588, %v3747
  %v3749 = vpop.f32.mrb[0].mxu0
  %3750 = vmatprep.mubr.bf16.mxu0 %v1381
  %3751 = vmatmul.mubr.bf16.gmra.mrb[0].mxu0 %v1380
  %v3752 = vpop.f32.mrb[0].mxu0
  %v3753 = vadd.f32 %v3593, %v3752
  %v3754 = vpop.f32.mrb[0].mxu0
  %v3755 = vpop.f32.mrb[0].mxu0
  %v3756 = vadd.f32 %v3596, %v3755
  %v3757 = vpop.f32.mrb[0].mxu0
  %3758 = vmatprep.mubr.bf16.mxu0 %v1397
  %3759 = vmatmul.mubr.bf16.gmra.mrb[0].mxu0 %v1396
  %v3760 = vpop.f32.mrb[0].mxu0
  %v3761 = vadd.f32 %v3601, %v3760
  %v3762 = vpop.f32.mrb[0].mxu0
  %v3763 = vpop.f32.mrb[0].mxu0
  %v3764 = vadd.f32 %v3604, %v3763
  %v3765 = vpop.f32.mrb[0].mxu0
  %3766 = vmatprep.mubr.bf16.mxu0 %v1413
  %3767 = vmatmul.mubr.bf16.gmra.mrb[0].mxu0 %v1412
  %v3768 = vpop.f32.mrb[0].mxu0
  %v3769 = vadd.f32 %v3609, %v3768
  %v3770 = vpop.f32.mrb[0].mxu0
  %v3771 = vpop.f32.mrb[0].mxu0
  %v3772 = vadd.f32 %v3612, %v3771
  %v3773 = vpop.f32.mrb[0].mxu0
  %3774 = vmatprep.mubr.bf16.mxu0 %v1429
  %3775 = vmatmul.mubr.bf16.gmra.mrb[0].mxu0 %v1428
  %v3776 = vpop.f32.mrb[0].mxu0
  %v3777 = vadd.f32 %v3617, %v3776
  %v3778 = vpop.f32.mrb[0].mxu0
  %v3779 = vpop.f32.mrb[0].mxu0
  %v3780 = vadd.f32 %v3620, %v3779
  %v3781 = vpop.f32.mrb[0].mxu0
  %3782 = vmatprep.mubr.bf16.mxu0 %v1445
  %3783 = vmatmul.mubr.bf16.gmra.mrb[0].mxu0 %v1444
  %v3784 = vpop.f32.mrb[0].mxu0
  %v3785 = vadd.f32 %v3625, %v3784
  %v3786 = vpop.f32.mrb[0].mxu0
  %v3787 = vpop.f32.mrb[0].mxu0
  %v3788 = vadd.f32 %v3628, %v3787
  %v3789 = vpop.f32.mrb[0].mxu0
  %3790 = vmatprep.mubr.bf16.mxu0 %v1461
  %3791 = vmatmul.mubr.bf16.gmra.mrb[0].mxu0 %v1460
  %v3792 = vpop.f32.mrb[0].mxu0
  %v3793 = vadd.f32 %v3633, %v3792
  %v3794 = vpop.f32.mrb[0].mxu0
  %v3795 = vpop.f32.mrb[0].mxu0
  %v3796 = vadd.f32 %v3636, %v3795
  %v3797 = vpop.f32.mrb[0].mxu0
  %3798 = vmatprep.mubr.bf16.mxu0 %v1477
  %3799 = vmatmul.mubr.bf16.gmra.mrb[0].mxu0 %v1476
  %v3800 = vpop.f32.mrb[0].mxu0
  %v3801 = vadd.f32 %v3641, %v3800
  %v3802 = vpop.f32.mrb[0].mxu0
  %v3803 = vpop.f32.mrb[0].mxu0
  %v3804 = vadd.f32 %v3644, %v3803
  %v3805 = vpop.f32.mrb[0].mxu0
  %3806 = vmatprep.mubr.bf16.mxu0 %v1493
  %3807 = vmatmul.mubr.bf16.gmra.mrb[0].mxu0 %v1492
  %v3808 = vpop.f32.mrb[0].mxu0
  %v3809 = vadd.f32 %v3649, %v3808
  %v3810 = vpop.f32.mrb[0].mxu0
  %v3811 = vpop.f32.mrb[0].mxu0
  %v3812 = vadd.f32 %v3652, %v3811
  %v3813 = vpop.f32.mrb[0].mxu0
  %3814 = vmatprep.mubr.bf16.mxu0 %v1509
  %3815 = vmatmul.mubr.bf16.gmra.mrb[0].mxu0 %v1508
  %v3816 = vpop.f32.mrb[0].mxu0
  %v3817 = vadd.f32 %v3657, %v3816
  %v3818 = vpop.f32.mrb[0].mxu0
  %v3819 = vpop.f32.mrb[0].mxu0
  %v3820 = vadd.f32 %v3660, %v3819
  %v3821 = vpop.f32.mrb[0].mxu0
  %3822 = vmatprep.mubr.bf16.mxu0 %v1525
  %3823 = vmatmul.mubr.bf16.gmra.mrb[0].mxu0 %v1524
  %v3824 = vpop.f32.mrb[0].mxu0
  %v3825 = vadd.f32 %v3665, %v3824
  %v3826 = vpop.f32.mrb[0].mxu0
  %v3827 = vpop.f32.mrb[0].mxu0
  %v3828 = vpop.f32.mrb[0].mxu0
  %3829 = vdwg.mxu0
  %v3830 = vmax.f32 %v3705, 0.0
  %v3831 = vmax.f32 %v3708, 0.0
  %v3832 = vmax.f32 %v3713, 0.0
  %v3833 = vmax.f32 %v3716, 0.0
  %v3834 = vmax.f32 %v3721, 0.0
  %v3835 = vmax.f32 %v3724, 0.0
  %v3836 = vmax.f32 %v3729, 0.0
  %v3837 = vmax.f32 %v3732, 0.0
  %v3838 = vmax.f32 %v3737, 0.0
  %v3839 = vmax.f32 %v3740, 0.0
  %v3840 = vmax.f32 %v3745, 0.0
  %v3841 = vmax.f32 %v3748, 0.0
  %v3842 = vmax.f32 %v3753, 0.0
  %v3843 = vmax.f32 %v3756, 0.0
  %v3844 = vmax.f32 %v3761, 0.0
  %v3845 = vmax.f32 %v3764, 0.0
  %v3846 = vmax.f32 %v3769, 0.0
  %v3847 = vmax.f32 %v3772, 0.0
  %v3848 = vmax.f32 %v3777, 0.0
  %v3849 = vmax.f32 %v3780, 0.0
  %v3850 = vmax.f32 %v3785, 0.0
  %v3851 = vmax.f32 %v3788, 0.0
  %v3852 = vmax.f32 %v3793, 0.0
  %v3853 = vmax.f32 %v3796, 0.0
  %v3854 = vmax.f32 %v3801, 0.0
  %v3855 = vmax.f32 %v3804, 0.0
  %v3856 = vmax.f32 %v3809, 0.0
  %v3857 = vmax.f32 %v3812, 0.0
  %v3858 = vmax.f32 %v3817, 0.0
  %v3859 = vmax.f32 %v3820, 0.0
  %v3860 = vmax.f32 %v3825, 0.0
  %v3861 = vpack.c.bf16 %v3831, %v3830
  %v3862 = vpack.c.bf16 %v3833, %v3832
  %v3863 = vpack.c.bf16 %v3835, %v3834
  %v3864 = vpack.c.bf16 %v3837, %v3836
  %v3865 = vpack.c.bf16 %v3839, %v3838
  %v3866 = vpack.c.bf16 %v3841, %v3840
  %v3867 = vpack.c.bf16 %v3843, %v3842
  %v3868 = vpack.c.bf16 %v3845, %v3844
  %v3869 = vpack.c.bf16 %v3847, %v3846
  %v3870 = vpack.c.bf16 %v3849, %v3848
  %v3871 = vpack.c.bf16 %v3851, %v3850
  %v3872 = vpack.c.bf16 %v3853, %v3852
  %v3873 = vpack.c.bf16 %v3855, %v3854
  %v3874 = vpack.c.bf16 %v3857, %v3856
  %v3875 = vpack.c.bf16 %v3859, %v3858
  %v3876 = vpack.c.bf16 %v3860, %v3860
  %v3893 = vunpack.c.l.b16 %v3861
  %v3894 = vunpack.c.h.b16 %v3861
  %v3895 = vunpack.c.l.b16 %v3862
  %v3896 = vunpack.c.h.b16 %v3862
  %v3897 = vunpack.c.l.b16 %v3863
  %v3898 = vunpack.c.h.b16 %v3863
  %v3899 = vunpack.c.l.b16 %v3864
  %v3900 = vunpack.c.h.b16 %v3864
  %v3901 = vunpack.c.l.b16 %v3865
  %v3902 = vunpack.c.h.b16 %v3865
  %v3903 = vunpack.c.l.b16 %v3866
  %v3904 = vunpack.c.h.b16 %v3866
  %v3905 = vunpack.c.l.b16 %v3867
  %v3906 = vunpack.c.h.b16 %v3867
  %v3907 = vunpack.c.l.b16 %v3868
  %v3908 = vunpack.c.h.b16 %v3868
  %v3909 = vunpack.c.l.b16 %v3869
  %v3910 = vunpack.c.h.b16 %v3869
  %v3911 = vunpack.c.l.b16 %v3870
  %v3912 = vunpack.c.h.b16 %v3870
  %v3913 = vunpack.c.l.b16 %v3871
  %v3914 = vunpack.c.h.b16 %v3871
  %v3915 = vunpack.c.l.b16 %v3872
  %v3916 = vunpack.c.h.b16 %v3872
  %v3917 = vunpack.c.l.b16 %v3873
  %v3918 = vunpack.c.h.b16 %v3873
  %v3919 = vunpack.c.l.b16 %v3874
  %v3920 = vunpack.c.h.b16 %v3874
  %v3921 = vunpack.c.l.b16 %v3875
  %v3922 = vunpack.c.h.b16 %v3875
  %v3923 = vunpack.c.l.b16 %v3876
  %v3924 = vpack.c.b16 %v3893, %v3893
  %v3925 = vpack.c.b16 %v3894, %v3894
  %v3926 = vpack.c.b16 %v3895, %v3895
  %v3927 = vpack.c.b16 %v3896, %v3896
  %v3928 = vpack.c.b16 %v3897, %v3897
  %v3929 = vpack.c.b16 %v3898, %v3898
  %v3930 = vpack.c.b16 %v3899, %v3899
  %v3931 = vpack.c.b16 %v3900, %v3900
  %v3932 = vpack.c.b16 %v3901, %v3901
  %v3933 = vpack.c.b16 %v3902, %v3902
  %v3934 = vpack.c.b16 %v3903, %v3903
  %v3935 = vpack.c.b16 %v3904, %v3904
  %v3936 = vpack.c.b16 %v3905, %v3905
  %v3937 = vpack.c.b16 %v3906, %v3906
  %v3938 = vpack.c.b16 %v3907, %v3907
  %v3939 = vpack.c.b16 %v3908, %v3908
  %v3940 = vpack.c.b16 %v3909, %v3909
  %v3941 = vpack.c.b16 %v3910, %v3910
  %v3942 = vpack.c.b16 %v3911, %v3911
  %v3943 = vpack.c.b16 %v3912, %v3912
  %v3944 = vpack.c.b16 %v3913, %v3913
  %v3945 = vpack.c.b16 %v3914, %v3914
  %v3946 = vpack.c.b16 %v3915, %v3915
  %v3947 = vpack.c.b16 %v3916, %v3916
  %v3948 = vpack.c.b16 %v3917, %v3917
  %v3949 = vpack.c.b16 %v3918, %v3918
  %v3950 = vpack.c.b16 %v3919, %v3919
  %v3951 = vpack.c.b16 %v3920, %v3920
  %v3952 = vpack.c.b16 %v3921, %v3921
  %v3953 = vpack.c.b16 %v3922, %v3922
  %v3954 = vpack.c.b16 %v3923, %v3923
  %vm3986 = vcmask 519168
  %3987 = vst.msk [vmem:[%s3] sm:$0xf] %vm3986, %v3924
  %3988 = vst.msk [vmem:[%s3 + $0x4] sm:$0xf] %vm3986, %v3925
  %3989 = vst.msk [vmem:[%s3 + $0x8] sm:$0xf] %vm3986, %v3926
  %3990 = vst.msk [vmem:[%s3 + $0xc] sm:$0xf] %vm3986, %v3927
  %3991 = vst.msk [vmem:[%s3 + $0x10] sm:$0xf] %vm3986, %v3928
  %3992 = vst.msk [vmem:[%s3 + $0x14] sm:$0xf] %vm3986, %v3929
  %3993 = vst.msk [vmem:[%s3 + $0x18] sm:$0xf] %vm3986, %v3930
  %3994 = vst.msk [vmem:[%s3 + $0x1c] sm:$0xf] %vm3986, %v3931
  %3995 = vst.msk [vmem:[%s3 + $0x20] sm:$0xf] %vm3986, %v3932
  %3996 = vst.msk [vmem:[%s3 + $0x24] sm:$0xf] %vm3986, %v3933
  %3997 = vst.msk [vmem:[%s3 + $0x28] sm:$0xf] %vm3986, %v3934
  %3998 = vst.msk [vmem:[%s3 + $0x2c] sm:$0xf] %vm3986, %v3935
  %3999 = vst.msk [vmem:[%s3 + $0x30] sm:$0xf] %vm3986, %v3936
  %4000 = vst.msk [vmem:[%s3 + $0x34] sm:$0xf] %vm3986, %v3937
  %4001 = vst.msk [vmem:[%s3 + $0x38] sm:$0xf] %vm3986, %v3938
  %4002 = vst.msk [vmem:[%s3 + $0x3c] sm:$0xf] %vm3986, %v3939
  %4003 = vst.msk [vmem:[%s3 + $0x40] sm:$0xf] %vm3986, %v3940
  %4004 = vst.msk [vmem:[%s3 + $0x44] sm:$0xf] %vm3986, %v3941
  %4005 = vst.msk [vmem:[%s3 + $0x48] sm:$0xf] %vm3986, %v3942
  %4006 = vst.msk [vmem:[%s3 + $0x4c] sm:$0xf] %vm3986, %v3943
  %4007 = vst.msk [vmem:[%s3 + $0x50] sm:$0xf] %vm3986, %v3944
  %4008 = vst.msk [vmem:[%s3 + $0x54] sm:$0xf] %vm3986, %v3945
  %4009 = vst.msk [vmem:[%s3 + $0x58] sm:$0xf] %vm3986, %v3946
  %4010 = vst.msk [vmem:[%s3 + $0x5c] sm:$0xf] %vm3986, %v3947
  %4011 = vst.msk [vmem:[%s3 + $0x60] sm:$0xf] %vm3986, %v3948
  %4012 = vst.msk [vmem:[%s3 + $0x64] sm:$0xf] %vm3986, %v3949
  %4013 = vst.msk [vmem:[%s3 + $0x68] sm:$0xf] %vm3986, %v3950
  %4014 = vst.msk [vmem:[%s3 + $0x6c] sm:$0xf] %vm3986, %v3951
  %4015 = vst.msk [vmem:[%s3 + $0x70] sm:$0xf] %vm3986, %v3952
  %4016 = vst.msk [vmem:[%s3 + $0x74] sm:$0xf] %vm3986, %v3953
  %vm4017 = vcmask 516096
  %4018 = vst.msk [vmem:[%s3 + $0x78] sm:$0x1] %vm4017, %v3954
  // Predicated region
  $region14: #{ga_forward.4} parent=0 // pred_check
    _
  $region15: #{ga_forward.4} parent=0 // pred_check_branch
    %4020 = sbr.rel (0) target = $region17
  $region16: #{ga_forward.4} parent=0 // pred_region
    _
  $region17: #{ga_forward.4} parent=0 // pred_fallthru
    _
  // Predicated region
  $region18: #{ga_forward.4} parent=0 // pred_check
    _
  $region19: #{ga_forward.4} parent=0 // pred_check_branch
    %4022 = sbr.rel (0) target = $region21
  $region20: #{ga_forward.4} parent=0 // pred_region
    _
  $region21: #{ga_forward.4} parent=0 // pred_fallthru
    _

// kernel: ga_forward.5
$region0: #{ga_forward.5}
  #allocation0 [shape = 'u32[]', space=smem, size = 0x4, offset = 0x4, fixed_abs, tag = 'smem constant byte address 0x4 - core index']
  #allocation1 [shape = 'u32[144,128]{1,0:T(1,128)}', space=vmem, size = 0x12000, scoped, tag = 'internal scratch']
  %s0 = inlined_call_operand.vmem [shape: bf16[2,7744], index: 0, kind: input, shape index: {}]
  %s1 = inlined_call_operand.vmem [shape: bf16[7744,64], index: 1, kind: input, shape index: {}]
  %s2 = inlined_call_operand.vmem [shape: f32[1,64], index: 2, kind: input, shape index: {}]
  %s3 = inlined_call_operand.vmem [shape: f32[2,256], index: 3, kind: input, shape index: {}]
  %s4 = inlined_call_operand.vmem [shape: bf16[256,64], index: 4, kind: input, shape index: {}]
  %s5 = inlined_call_operand.vmem [shape: f32[1,64], index: 5, kind: input, shape index: {}]
  %s6 = inlined_call_operand.vmem [shape: bf16[64,256], index: 6, kind: input, shape index: {}]
  %s7 = inlined_call_operand.vmem [shape: f32[1,256], index: 7, kind: input, shape index: {}]
  %s8 = inlined_call_operand.vmem [shape: f32[2,256], index: 8, kind: input, shape index: {}]
  %s9 = inlined_call_operand.vmem [shape: f32[2,256], index: 9, kind: input, shape index: {}]
  %s10 = inlined_call_operand.vmem [shape: bf16[256,1024], index: 10, kind: input, shape index: {}]
  %s11 = inlined_call_operand.vmem [shape: bf16[256,1024], index: 11, kind: input, shape index: {}]
  %s12 = inlined_call_operand.vmem [shape: f32[1,1024], index: 12, kind: input, shape index: {}]
  %s13 = inlined_call_operand.vmem [shape: f32[2,32], index: 13, kind: input, shape index: {}]
  %s14 = inlined_call_operand.vmem [shape: bf16[256,128], index: 14, kind: input, shape index: {}]
  %s15 = inlined_call_operand.vmem [shape: bf16[32,128], index: 15, kind: input, shape index: {}]
  %s16 = inlined_call_operand.vmem [shape: f32[1,128], index: 16, kind: input, shape index: {}]
  %s17 = inlined_call_operand.hbm [shape: f32[2,128], index: 17, kind: output, shape index: {0}]
  %s18 = inlined_call_operand.hbm [shape: f32[2,256], index: 18, kind: output, shape index: {1}]
  %s19 = inlined_call_operand.hbm [shape: f32[2,256], index: 19, kind: output, shape index: {2}]
  %20 = xla_tuple %s17, %s18, %s19
  %s21 = sld [smem:[#allocation0]]
  $region94: #{ga_forward.5} parent=0
    _
  %s23 = ssub.s32 1, %s21
  %s24 = scalar_select 0, %s23, %s21
  $region1: #{ga_forward.5} parent=0
    #allocation2 [shape = 'u8[1024]{0}', space=vmem, size = 0x400, scoped, tag = 'output window, operand 0, single buffered']
    #allocation3 [shape = 's32[1]{0}', space=sflag, size = 0x4, scoped, tag = 'scoped memory for ga_forward.5']
    #allocation4 [shape = 'u8[2048]{0}', space=vmem, size = 0x800, scoped, tag = 'output window, operand 1, single buffered']
    #allocation5 [shape = 's32[1]{0}', space=sflag, size = 0x4, scoped, tag = 'scoped memory for ga_forward.5']
    #allocation6 [shape = 'u8[2048]{0}', space=vmem, size = 0x800, scoped, tag = 'output window, operand 2, single buffered']
    %25 = vsyncpa [#allocation3], 0
    %26 = vsyncpa [#allocation5], 0
    // Predicated region
    $region2: #{ga_forward.5} parent=1 // pred_check
      _
    $region3: #{ga_forward.5} parent=1 // pred_check_branch
      %28 = sbr.rel (0) target = $region5
    $region4: #{ga_forward.5} parent=1 // pred_region
      _
    $region5: #{ga_forward.5} parent=1 // pred_fallthru
      _
    // Predicated region
    $region6: #{ga_forward.5} parent=1 // pred_check
      _
    $region7: #{ga_forward.5} parent=1 // pred_check_branch
      %30 = sbr.rel (0) target = $region9
    $region8: #{ga_forward.5} parent=1 // pred_region
      _
    $region9: #{ga_forward.5} parent=1 // pred_fallthru
      _
    // Predicated region
    $region10: #{ga_forward.5} parent=1 // pred_check
      _
    $region11: #{ga_forward.5} parent=1 // pred_check_branch
      %32 = sbr.rel (0) target = $region13
    $region12: #{ga_forward.5} parent=1 // pred_region
      _
    $region13: #{ga_forward.5} parent=1 // pred_fallthru
      _
    // Predicated region
    $region14: #{ga_forward.5} parent=1 // pred_check
      _
    $region15: #{ga_forward.5} parent=1 // pred_check_branch
      %34 = sbr.rel (0) target = $region17
    $region16: #{ga_forward.5} parent=1 // pred_region
      _
    $region17: #{ga_forward.5} parent=1 // pred_fallthru
      _
    // Predicated region
    $region18: #{ga_forward.5} parent=1 // pred_check
      _
    $region19: #{ga_forward.5} parent=1 // pred_check_branch
      %36 = sbr.rel (0) target = $region21
    $region20: #{ga_forward.5} parent=1 // pred_region
      _
    $region21: #{ga_forward.5} parent=1 // pred_fallthru
      _
    // Predicated region
    $region22: #{ga_forward.5} parent=1 // pred_check
      _
    $region23: #{ga_forward.5} parent=1 // pred_check_branch
      %38 = sbr.rel (0) target = $region25
    $region24: #{ga_forward.5} parent=1 // pred_region
      _
    $region25: #{ga_forward.5} parent=1 // pred_fallthru
      _
    // Predicated region
    $region26: #{ga_forward.5} parent=1 // pred_check
      _
    $region27: #{ga_forward.5} parent=1 // pred_check_branch
      %40 = sbr.rel (0) target = $region29
    $region28: #{ga_forward.5} parent=1 // pred_region
      _
    $region29: #{ga_forward.5} parent=1 // pred_fallthru
      _
    // Predicated region
    $region30: #{ga_forward.5} parent=1 // pred_check
      _
    $region31: #{ga_forward.5} parent=1 // pred_check_branch
      %42 = sbr.rel (0) target = $region33
    $region32: #{ga_forward.5} parent=1 // pred_region
      _
    $region33: #{ga_forward.5} parent=1 // pred_fallthru
      _
    // Predicated region
    $region34: #{ga_forward.5} parent=1 // pred_check
      _
    $region35: #{ga_forward.5} parent=1 // pred_check_branch
      %44 = sbr.rel (0) target = $region37
    $region36: #{ga_forward.5} parent=1 // pred_region
      _
    $region37: #{ga_forward.5} parent=1 // pred_fallthru
      _
    // Predicated region
    $region38: #{ga_forward.5} parent=1 // pred_check
      _
    $region39: #{ga_forward.5} parent=1 // pred_check_branch
      %46 = sbr.rel (0) target = $region41
    $region40: #{ga_forward.5} parent=1 // pred_region
      _
    $region41: #{ga_forward.5} parent=1 // pred_fallthru
      _
    // Predicated region
    $region42: #{ga_forward.5} parent=1 // pred_check
      _
    $region43: #{ga_forward.5} parent=1 // pred_check_branch
      %48 = sbr.rel (0) target = $region45
    $region44: #{ga_forward.5} parent=1 // pred_region
      _
    $region45: #{ga_forward.5} parent=1 // pred_fallthru
      _
    // Predicated region
    $region46: #{ga_forward.5} parent=1 // pred_check
      _
    $region47: #{ga_forward.5} parent=1 // pred_check_branch
      %50 = sbr.rel (0) target = $region49
    $region48: #{ga_forward.5} parent=1 // pred_region
      _
    $region49: #{ga_forward.5} parent=1 // pred_fallthru
      _
    // Predicated region
    $region50: #{ga_forward.5} parent=1 // pred_check
      _
    $region51: #{ga_forward.5} parent=1 // pred_check_branch
      %52 = sbr.rel (0) target = $region53
    $region52: #{ga_forward.5} parent=1 // pred_region
      _
    $region53: #{ga_forward.5} parent=1 // pred_fallthru
      _
    // Predicated region
    $region54: #{ga_forward.5} parent=1 // pred_check
      _
    $region55: #{ga_forward.5} parent=1 // pred_check_branch
      %54 = sbr.rel (0) target = $region57
    $region56: #{ga_forward.5} parent=1 // pred_region
      _
    $region57: #{ga_forward.5} parent=1 // pred_fallthru
      _
    // Predicated region
    $region58: #{ga_forward.5} parent=1 // pred_check
      _
    $region59: #{ga_forward.5} parent=1 // pred_check_branch
      %56 = sbr.rel (0) target = $region61
    $region60: #{ga_forward.5} parent=1 // pred_region
      _
    $region61: #{ga_forward.5} parent=1 // pred_fallthru
      _
    // Predicated region
    $region62: #{ga_forward.5} parent=1 // pred_check
      _
    $region63: #{ga_forward.5} parent=1 // pred_check_branch
      %58 = sbr.rel (0) target = $region65
    $region64: #{ga_forward.5} parent=1 // pred_region
      _
    $region65: #{ga_forward.5} parent=1 // pred_fallthru
      _
    // Predicated region
    $region66: #{ga_forward.5} parent=1 // pred_check
      _
    $region67: #{ga_forward.5} parent=1 // pred_check_branch
      %60 = sbr.rel (0) target = $region69
    $region68: #{ga_forward.5} parent=1 // pred_region
      _
    $region69: #{ga_forward.5} parent=1 // pred_fallthru
      _
    %v62 = vld [vmem:[%s0] sm:$0xff]
    %v63 = vld [vmem:[%s0 + $0x8] sm:$0xff]
    %v64 = vld [vmem:[%s0 + $0x10] sm:$0xff]
    %v65 = vld [vmem:[%s0 + $0x18] sm:$0xff]
    %v66 = vld [vmem:[%s0 + $0x20] sm:$0xff]
    %v67 = vld [vmem:[%s0 + $0x28] sm:$0xff]
    %v68 = vld [vmem:[%s0 + $0x30] sm:$0xff]
    %v69 = vld [vmem:[%s0 + $0x38] sm:$0x1f]
    %v70 = vld [vmem:[%s1] sm:$0xf]
    %v71 = vld [vmem:[%s1 + $0x4] sm:$0xf]
    %v72 = vld [vmem:[%s1 + $0x8] sm:$0xf]
    %v73 = vld [vmem:[%s1 + $0xc] sm:$0xf]
    %v74 = vld [vmem:[%s1 + $0x10] sm:$0xf]
    %v75 = vld [vmem:[%s1 + $0x14] sm:$0xf]
    %v76 = vld [vmem:[%s1 + $0x18] sm:$0xf]
    %v77 = vld [vmem:[%s1 + $0x1c] sm:$0xf]
    %v78 = vld [vmem:[%s1 + $0x20] sm:$0xf]
    %v79 = vld [vmem:[%s1 + $0x24] sm:$0xf]
    %v80 = vld [vmem:[%s1 + $0x28] sm:$0xf]
    %v81 = vld [vmem:[%s1 + $0x2c] sm:$0xf]
    %v82 = vld [vmem:[%s1 + $0x30] sm:$0xf]
    %v83 = vld [vmem:[%s1 + $0x34] sm:$0xf]
    %v84 = vld [vmem:[%s1 + $0x38] sm:$0xf]
    %v85 = vld [vmem:[%s1 + $0x3c] sm:$0xf]
    %v86 = vld [vmem:[%s1 + $0x40] sm:$0xf]
    %v87 = vld [vmem:[%s1 + $0x44] sm:$0xf]
    %v88 = vld [vmem:[%s1 + $0x48] sm:$0xf]
    %v89 = vld [vmem:[%s1 + $0x4c] sm:$0xf]
    %v90 = vld [vmem:[%s1 + $0x50] sm:$0xf]
    %v91 = vld [vmem:[%s1 + $0x54] sm:$0xf]
    %v92 = vld [vmem:[%s1 + $0x58] sm:$0xf]
    %v93 = vld [vmem:[%s1 + $0x5c] sm:$0xf]
    %v94 = vld [vmem:[%s1 + $0x60] sm:$0xf]
    %v95 = vld [vmem:[%s1 + $0x64] sm:$0xf]
    %v96 = vld [vmem:[%s1 + $0x68] sm:$0xf]
    %v97 = vld [vmem:[%s1 + $0x6c] sm:$0xf]
    %v98 = vld [vmem:[%s1 + $0x70] sm:$0xf]
    %v99 = vld [vmem:[%s1 + $0x74] sm:$0xf]
    %v100 = vld [vmem:[%s1 + $0x78] sm:$0xf]
    %v101 = vld [vmem:[%s1 + $0x7c] sm:$0xf]
    %v102 = vld [vmem:[%s1 + $0x80] sm:$0xf]
    %v103 = vld [vmem:[%s1 + $0x84] sm:$0xf]
    %v104 = vld [vmem:[%s1 + $0x88] sm:$0xf]
    %v105 = vld [vmem:[%s1 + $0x8c] sm:$0xf]
    %v106 = vld [vmem:[%s1 + $0x90] sm:$0xf]
    %v107 = vld [vmem:[%s1 + $0x94] sm:$0xf]
    %v108 = vld [vmem:[%s1 + $0x98] sm:$0xf]
    %v109 = vld [vmem:[%s1 + $0x9c] sm:$0xf]
    %v110 = vld [vmem:[%s1 + $0xa0] sm:$0xf]
    %v111 = vld [vmem:[%s1 + $0xa4] sm:$0xf]
    %v112 = vld [vmem:[%s1 + $0xa8] sm:$0xf]
    %v113 = vld [vmem:[%s1 + $0xac] sm:$0xf]
    %v114 = vld [vmem:[%s1 + $0xb0] sm:$0xf]
    %v115 = vld [vmem:[%s1 + $0xb4] sm:$0xf]
    %v116 = vld [vmem:[%s1 + $0xb8] sm:$0xf]
    %v117 = vld [vmem:[%s1 + $0xbc] sm:$0xf]
    %v118 = vld [vmem:[%s1 + $0xc0] sm:$0xf]
    %v119 = vld [vmem:[%s1 + $0xc4] sm:$0xf]
    %v120 = vld [vmem:[%s1 + $0xc8] sm:$0xf]
    %v121 = vld [vmem:[%s1 + $0xcc] sm:$0xf]
    %v122 = vld [vmem:[%s1 + $0xd0] sm:$0xf]
    %v123 = vld [vmem:[%s1 + $0xd4] sm:$0xf]
    %v124 = vld [vmem:[%s1 + $0xd8] sm:$0xf]
    %v125 = vld [vmem:[%s1 + $0xdc] sm:$0xf]
    %v126 = vld [vmem:[%s1 + $0xe0] sm:$0xf]
    %v127 = vld [vmem:[%s1 + $0xe4] sm:$0xf]
    %v128 = vld [vmem:[%s1 + $0xe8] sm:$0xf]
    %v129 = vld [vmem:[%s1 + $0xec] sm:$0xf]
    %v130 = vld [vmem:[%s1 + $0xf0] sm:$0xf]
    %v131 = vld [vmem:[%s1 + $0xf4] sm:$0xf]
    %v132 = vld [vmem:[%s1 + $0xf8] sm:$0xf]
    %v133 = vld [vmem:[%s1 + $0xfc] sm:$0xf]
    %v134 = vld [vmem:[%s1 + $0x100] sm:$0xf]
    %v135 = vld [vmem:[%s1 + $0x104] sm:$0xf]
    %v136 = vld [vmem:[%s1 + $0x108] sm:$0xf]
    %v137 = vld [vmem:[%s1 + $0x10c] sm:$0xf]
    %v138 = vld [vmem:[%s1 + $0x110] sm:$0xf]
    %v139 = vld [vmem:[%s1 + $0x114] sm:$0xf]
    %v140 = vld [vmem:[%s1 + $0x118] sm:$0xf]
    %v141 = vld [vmem:[%s1 + $0x11c] sm:$0xf]
    %v142 = vld [vmem:[%s1 + $0x120] sm:$0xf]
    %v143 = vld [vmem:[%s1 + $0x124] sm:$0xf]
    %v144 = vld [vmem:[%s1 + $0x128] sm:$0xf]
    %v145 = vld [vmem:[%s1 + $0x12c] sm:$0xf]
    %v146 = vld [vmem:[%s1 + $0x130] sm:$0xf]
    %v147 = vld [vmem:[%s1 + $0x134] sm:$0xf]
    %v148 = vld [vmem:[%s1 + $0x138] sm:$0xf]
    %v149 = vld [vmem:[%s1 + $0x13c] sm:$0xf]
    %v150 = vld [vmem:[%s1 + $0x140] sm:$0xf]
    %v151 = vld [vmem:[%s1 + $0x144] sm:$0xf]
    %v152 = vld [vmem:[%s1 + $0x148] sm:$0xf]
    %v153 = vld [vmem:[%s1 + $0x14c] sm:$0xf]
    %v154 = vld [vmem:[%s1 + $0x150] sm:$0xf]
    %v155 = vld [vmem:[%s1 + $0x154] sm:$0xf]
    %v156 = vld [vmem:[%s1 + $0x158] sm:$0xf]
    %v157 = vld [vmem:[%s1 + $0x15c] sm:$0xf]
    %v158 = vld [vmem:[%s1 + $0x160] sm:$0xf]
    %v159 = vld [vmem:[%s1 + $0x164] sm:$0xf]
    %v160 = vld [vmem:[%s1 + $0x168] sm:$0xf]
    %v161 = vld [vmem:[%s1 + $0x16c] sm:$0xf]
    %v162 = vld [vmem:[%s1 + $0x170] sm:$0xf]
    %v163 = vld [vmem:[%s1 + $0x174] sm:$0xf]
    %v164 = vld [vmem:[%s1 + $0x178] sm:$0xf]
    %v165 = vld [vmem:[%s1 + $0x17c] sm:$0xf]
    %v166 = vld [vmem:[%s1 + $0x180] sm:$0xf]
    %v167 = vld [vmem:[%s1 + $0x184] sm:$0xf]
    %v168 = vld [vmem:[%s1 + $0x188] sm:$0xf]
    %v169 = vld [vmem:[%s1 + $0x18c] sm:$0xf]
    %v170 = vld [vmem:[%s1 + $0x190] sm:$0xf]
    %v171 = vld [vmem:[%s1 + $0x194] sm:$0xf]
    %v172 = vld [vmem:[%s1 + $0x198] sm:$0xf]
    %v173 = vld [vmem:[%s1 + $0x19c] sm:$0xf]
    %v174 = vld [vmem:[%s1 + $0x1a0] sm:$0xf]
    %v175 = vld [vmem:[%s1 + $0x1a4] sm:$0xf]
    %v176 = vld [vmem:[%s1 + $0x1a8] sm:$0xf]
    %v177 = vld [vmem:[%s1 + $0x1ac] sm:$0xf]
    %v178 = vld [vmem:[%s1 + $0x1b0] sm:$0xf]
    %v179 = vld [vmem:[%s1 + $0x1b4] sm:$0xf]
    %v180 = vld [vmem:[%s1 + $0x1b8] sm:$0xf]
    %v181 = vld [vmem:[%s1 + $0x1bc] sm:$0xf]
    %v182 = vld [vmem:[%s1 + $0x1c0] sm:$0xf]
    %v183 = vld [vmem:[%s1 + $0x1c4] sm:$0xf]
    %v184 = vld [vmem:[%s1 + $0x1c8] sm:$0xf]
    %v185 = vld [vmem:[%s1 + $0x1cc] sm:$0xf]
    %v186 = vld [vmem:[%s1 + $0x1d0] sm:$0xf]
    %v187 = vld [vmem:[%s1 + $0x1d4] sm:$0xf]
    %v188 = vld [vmem:[%s1 + $0x1d8] sm:$0xf]
    %v189 = vld [vmem:[%s1 + $0x1dc] sm:$0xf]
    %v190 = vld [vmem:[%s1 + $0x1e0] sm:$0xf]
    %v191 = vld [vmem:[%s1 + $0x1e4] sm:$0xf]
    %v192 = vld [vmem:[%s1 + $0x1e8] sm:$0xf]
    %v193 = vld [vmem:[%s1 + $0x1ec] sm:$0xf]
    %v194 = vld [vmem:[%s1 + $0x1f0] sm:$0xf]
    %v195 = vld [vmem:[%s1 + $0x1f4] sm:$0xf]
    %v196 = vld [vmem:[%s1 + $0x1f8] sm:$0xf]
    %v197 = vld [vmem:[%s1 + $0x1fc] sm:$0xf]
    %v198 = vld [vmem:[%s1 + $0x200] sm:$0xf]
    %v199 = vld [vmem:[%s1 + $0x204] sm:$0xf]
    %v200 = vld [vmem:[%s1 + $0x208] sm:$0xf]
    %v201 = vld [vmem:[%s1 + $0x20c] sm:$0xf]
    %v202 = vld [vmem:[%s1 + $0x210] sm:$0xf]
    %v203 = vld [vmem:[%s1 + $0x214] sm:$0xf]
    %v204 = vld [vmem:[%s1 + $0x218] sm:$0xf]
    %v205 = vld [vmem:[%s1 + $0x21c] sm:$0xf]
    %v206 = vld [vmem:[%s1 + $0x220] sm:$0xf]
    %v207 = vld [vmem:[%s1 + $0x224] sm:$0xf]
    %v208 = vld [vmem:[%s1 + $0x228] sm:$0xf]
    %v209 = vld [vmem:[%s1 + $0x22c] sm:$0xf]
    %v210 = vld [vmem:[%s1 + $0x230] sm:$0xf]
    %v211 = vld [vmem:[%s1 + $0x234] sm:$0xf]
    %v212 = vld [vmem:[%s1 + $0x238] sm:$0xf]
    %v213 = vld [vmem:[%s1 + $0x23c] sm:$0xf]
    %v214 = vld [vmem:[%s1 + $0x240] sm:$0xf]
    %v215 = vld [vmem:[%s1 + $0x244] sm:$0xf]
    %v216 = vld [vmem:[%s1 + $0x248] sm:$0xf]
    %v217 = vld [vmem:[%s1 + $0x24c] sm:$0xf]
    %v218 = vld [vmem:[%s1 + $0x250] sm:$0xf]
    %v219 = vld [vmem:[%s1 + $0x254] sm:$0xf]
    %v220 = vld [vmem:[%s1 + $0x258] sm:$0xf]
    %v221 = vld [vmem:[%s1 + $0x25c] sm:$0xf]
    %v222 = vld [vmem:[%s1 + $0x260] sm:$0xf]
    %v223 = vld [vmem:[%s1 + $0x264] sm:$0xf]
    %v224 = vld [vmem:[%s1 + $0x268] sm:$0xf]
    %v225 = vld [vmem:[%s1 + $0x26c] sm:$0xf]
    %v226 = vld [vmem:[%s1 + $0x270] sm:$0xf]
    %v227 = vld [vmem:[%s1 + $0x274] sm:$0xf]
    %v228 = vld [vmem:[%s1 + $0x278] sm:$0xf]
    %v229 = vld [vmem:[%s1 + $0x27c] sm:$0xf]
    %v230 = vld [vmem:[%s1 + $0x280] sm:$0xf]
    %v231 = vld [vmem:[%s1 + $0x284] sm:$0xf]
    %v232 = vld [vmem:[%s1 + $0x288] sm:$0xf]
    %v233 = vld [vmem:[%s1 + $0x28c] sm:$0xf]
    %v234 = vld [vmem:[%s1 + $0x290] sm:$0xf]
    %v235 = vld [vmem:[%s1 + $0x294] sm:$0xf]
    %v236 = vld [vmem:[%s1 + $0x298] sm:$0xf]
    %v237 = vld [vmem:[%s1 + $0x29c] sm:$0xf]
    %v238 = vld [vmem:[%s1 + $0x2a0] sm:$0xf]
    %v239 = vld [vmem:[%s1 + $0x2a4] sm:$0xf]
    %v240 = vld [vmem:[%s1 + $0x2a8] sm:$0xf]
    %v241 = vld [vmem:[%s1 + $0x2ac] sm:$0xf]
    %v242 = vld [vmem:[%s1 + $0x2b0] sm:$0xf]
    %v243 = vld [vmem:[%s1 + $0x2b4] sm:$0xf]
    %v244 = vld [vmem:[%s1 + $0x2b8] sm:$0xf]
    %v245 = vld [vmem:[%s1 + $0x2bc] sm:$0xf]
    %v246 = vld [vmem:[%s1 + $0x2c0] sm:$0xf]
    %v247 = vld [vmem:[%s1 + $0x2c4] sm:$0xf]
    %v248 = vld [vmem:[%s1 + $0x2c8] sm:$0xf]
    %v249 = vld [vmem:[%s1 + $0x2cc] sm:$0xf]
    %v250 = vld [vmem:[%s1 + $0x2d0] sm:$0xf]
    %v251 = vld [vmem:[%s1 + $0x2d4] sm:$0xf]
    %v252 = vld [vmem:[%s1 + $0x2d8] sm:$0xf]
    %v253 = vld [vmem:[%s1 + $0x2dc] sm:$0xf]
    %v254 = vld [vmem:[%s1 + $0x2e0] sm:$0xf]
    %v255 = vld [vmem:[%s1 + $0x2e4] sm:$0xf]
    %v256 = vld [vmem:[%s1 + $0x2e8] sm:$0xf]
    %v257 = vld [vmem:[%s1 + $0x2ec] sm:$0xf]
    %v258 = vld [vmem:[%s1 + $0x2f0] sm:$0xf]
    %v259 = vld [vmem:[%s1 + $0x2f4] sm:$0xf]
    %v260 = vld [vmem:[%s1 + $0x2f8] sm:$0xf]
    %v261 = vld [vmem:[%s1 + $0x2fc] sm:$0xf]
    %v262 = vld [vmem:[%s1 + $0x300] sm:$0xf]
    %v263 = vld [vmem:[%s1 + $0x304] sm:$0xf]
    %v264 = vld [vmem:[%s1 + $0x308] sm:$0xf]
    %v265 = vld [vmem:[%s1 + $0x30c] sm:$0xf]
    %v266 = vld [vmem:[%s1 + $0x310] sm:$0xf]
    %v267 = vld [vmem:[%s1 + $0x314] sm:$0xf]
    %v268 = vld [vmem:[%s1 + $0x318] sm:$0xf]
    %v269 = vld [vmem:[%s1 + $0x31c] sm:$0xf]
    %v270 = vld [vmem:[%s1 + $0x320] sm:$0xf]
    %v271 = vld [vmem:[%s1 + $0x324] sm:$0xf]
    %v272 = vld [vmem:[%s1 + $0x328] sm:$0xf]
    %v273 = vld [vmem:[%s1 + $0x32c] sm:$0xf]
    %v274 = vld [vmem:[%s1 + $0x330] sm:$0xf]
    %v275 = vld [vmem:[%s1 + $0x334] sm:$0xf]
    %v276 = vld [vmem:[%s1 + $0x338] sm:$0xf]
    %v277 = vld [vmem:[%s1 + $0x33c] sm:$0xf]
    %v278 = vld [vmem:[%s1 + $0x340] sm:$0xf]
    %v279 = vld [vmem:[%s1 + $0x344] sm:$0xf]
    %v280 = vld [vmem:[%s1 + $0x348] sm:$0xf]
    %v281 = vld [vmem:[%s1 + $0x34c] sm:$0xf]
    %v282 = vld [vmem:[%s1 + $0x350] sm:$0xf]
    %v283 = vld [vmem:[%s1 + $0x354] sm:$0xf]
    %v284 = vld [vmem:[%s1 + $0x358] sm:$0xf]
    %v285 = vld [vmem:[%s1 + $0x35c] sm:$0xf]
    %v286 = vld [vmem:[%s1 + $0x360] sm:$0xf]
    %v287 = vld [vmem:[%s1 + $0x364] sm:$0xf]
    %v288 = vld [vmem:[%s1 + $0x368] sm:$0xf]
    %v289 = vld [vmem:[%s1 + $0x36c] sm:$0xf]
    %v290 = vld [vmem:[%s1 + $0x370] sm:$0xf]
    %v291 = vld [vmem:[%s1 + $0x374] sm:$0xf]
    %v292 = vld [vmem:[%s1 + $0x378] sm:$0xf]
    %v293 = vld [vmem:[%s1 + $0x37c] sm:$0xf]
    %v294 = vld [vmem:[%s1 + $0x380] sm:$0xf]
    %v295 = vld [vmem:[%s1 + $0x384] sm:$0xf]
    %v296 = vld [vmem:[%s1 + $0x388] sm:$0xf]
    %v297 = vld [vmem:[%s1 + $0x38c] sm:$0xf]
    %v298 = vld [vmem:[%s1 + $0x390] sm:$0xf]
    %v299 = vld [vmem:[%s1 + $0x394] sm:$0xf]
    %v300 = vld [vmem:[%s1 + $0x398] sm:$0xf]
    %v301 = vld [vmem:[%s1 + $0x39c] sm:$0xf]
    %v302 = vld [vmem:[%s1 + $0x3a0] sm:$0xf]
    %v303 = vld [vmem:[%s1 + $0x3a4] sm:$0xf]
    %v304 = vld [vmem:[%s1 + $0x3a8] sm:$0xf]
    %v305 = vld [vmem:[%s1 + $0x3ac] sm:$0xf]
    %v306 = vld [vmem:[%s1 + $0x3b0] sm:$0xf]
    %v307 = vld [vmem:[%s1 + $0x3b4] sm:$0xf]
    %v308 = vld [vmem:[%s1 + $0x3b8] sm:$0xf]
    %v309 = vld [vmem:[%s1 + $0x3bc] sm:$0xf]
    %v310 = vld [vmem:[%s1 + $0x3c0] sm:$0xf]
    %v311 = vld [vmem:[%s1 + $0x3c4] sm:$0xf]
    %v312 = vld [vmem:[%s1 + $0x3c8] sm:$0xf]
    %v313 = vld [vmem:[%s1 + $0x3cc] sm:$0xf]
    %v314 = vld [vmem:[%s1 + $0x3d0] sm:$0xf]
    %v315 = vld [vmem:[%s1 + $0x3d4] sm:$0xf]
    %v316 = vld [vmem:[%s1 + $0x3d8] sm:$0xf]
    %v317 = vld [vmem:[%s1 + $0x3dc] sm:$0xf]
    %v318 = vld [vmem:[%s1 + $0x3e0] sm:$0xf]
    %v319 = vld [vmem:[%s1 + $0x3e4] sm:$0xf]
    %v320 = vld [vmem:[%s1 + $0x3e8] sm:$0xf]
    %v321 = vld [vmem:[%s1 + $0x3ec] sm:$0xf]
    %v322 = vld [vmem:[%s1 + $0x3f0] sm:$0xf]
    %v323 = vld [vmem:[%s1 + $0x3f4] sm:$0xf]
    %v324 = vld [vmem:[%s1 + $0x3f8] sm:$0xf]
    %v325 = vld [vmem:[%s1 + $0x3fc] sm:$0xf]
    %v326 = vld [vmem:[%s1 + $0x400] sm:$0xf]
    %v327 = vld [vmem:[%s1 + $0x404] sm:$0xf]
    %v328 = vld [vmem:[%s1 + $0x408] sm:$0xf]
    %v329 = vld [vmem:[%s1 + $0x40c] sm:$0xf]
    %v330 = vld [vmem:[%s1 + $0x410] sm:$0xf]
    %v331 = vld [vmem:[%s1 + $0x414] sm:$0xf]
    %v332 = vld [vmem:[%s1 + $0x418] sm:$0xf]
    %v333 = vld [vmem:[%s1 + $0x41c] sm:$0xf]
    %v334 = vld [vmem:[%s1 + $0x420] sm:$0xf]
    %v335 = vld [vmem:[%s1 + $0x424] sm:$0xf]
    %v336 = vld [vmem:[%s1 + $0x428] sm:$0xf]
    %v337 = vld [vmem:[%s1 + $0x42c] sm:$0xf]
    %v338 = vld [vmem:[%s1 + $0x430] sm:$0xf]
    %v339 = vld [vmem:[%s1 + $0x434] sm:$0xf]
    %v340 = vld [vmem:[%s1 + $0x438] sm:$0xf]
    %v341 = vld [vmem:[%s1 + $0x43c] sm:$0xf]
    %v342 = vld [vmem:[%s1 + $0x440] sm:$0xf]
    %v343 = vld [vmem:[%s1 + $0x444] sm:$0xf]
    %v344 = vld [vmem:[%s1 + $0x448] sm:$0xf]
    %v345 = vld [vmem:[%s1 + $0x44c] sm:$0xf]
    %v346 = vld [vmem:[%s1 + $0x450] sm:$0xf]
    %v347 = vld [vmem:[%s1 + $0x454] sm:$0xf]
    %v348 = vld [vmem:[%s1 + $0x458] sm:$0xf]
    %v349 = vld [vmem:[%s1 + $0x45c] sm:$0xf]
    %v350 = vld [vmem:[%s1 + $0x460] sm:$0xf]
    %v351 = vld [vmem:[%s1 + $0x464] sm:$0xf]
    %v352 = vld [vmem:[%s1 + $0x468] sm:$0xf]
    %v353 = vld [vmem:[%s1 + $0x46c] sm:$0xf]
    %v354 = vld [vmem:[%s1 + $0x470] sm:$0xf]
    %v355 = vld [vmem:[%s1 + $0x474] sm:$0xf]
    %v356 = vld [vmem:[%s1 + $0x478] sm:$0xf]
    %v357 = vld [vmem:[%s1 + $0x47c] sm:$0xf]
    %v358 = vld [vmem:[%s1 + $0x480] sm:$0xf]
    %v359 = vld [vmem:[%s1 + $0x484] sm:$0xf]
    %v360 = vld [vmem:[%s1 + $0x488] sm:$0xf]
    %v361 = vld [vmem:[%s1 + $0x48c] sm:$0xf]
    %v362 = vld [vmem:[%s1 + $0x490] sm:$0xf]
    %v363 = vld [vmem:[%s1 + $0x494] sm:$0xf]
    %v364 = vld [vmem:[%s1 + $0x498] sm:$0xf]
    %v365 = vld [vmem:[%s1 + $0x49c] sm:$0xf]
    %v366 = vld [vmem:[%s1 + $0x4a0] sm:$0xf]
    %v367 = vld [vmem:[%s1 + $0x4a4] sm:$0xf]
    %v368 = vld [vmem:[%s1 + $0x4a8] sm:$0xf]
    %v369 = vld [vmem:[%s1 + $0x4ac] sm:$0xf]
    %v370 = vld [vmem:[%s1 + $0x4b0] sm:$0xf]
    %v371 = vld [vmem:[%s1 + $0x4b4] sm:$0xf]
    %v372 = vld [vmem:[%s1 + $0x4b8] sm:$0xf]
    %v373 = vld [vmem:[%s1 + $0x4bc] sm:$0xf]
    %v374 = vld [vmem:[%s1 + $0x4c0] sm:$0xf]
    %v375 = vld [vmem:[%s1 + $0x4c4] sm:$0xf]
    %v376 = vld [vmem:[%s1 + $0x4c8] sm:$0xf]
    %v377 = vld [vmem:[%s1 + $0x4cc] sm:$0xf]
    %v378 = vld [vmem:[%s1 + $0x4d0] sm:$0xf]
    %v379 = vld [vmem:[%s1 + $0x4d4] sm:$0xf]
    %v380 = vld [vmem:[%s1 + $0x4d8] sm:$0xf]
    %v381 = vld [vmem:[%s1 + $0x4dc] sm:$0xf]
    %v382 = vld [vmem:[%s1 + $0x4e0] sm:$0xf]
    %v383 = vld [vmem:[%s1 + $0x4e4] sm:$0xf]
    %v384 = vld [vmem:[%s1 + $0x4e8] sm:$0xf]
    %v385 = vld [vmem:[%s1 + $0x4ec] sm:$0xf]
    %v386 = vld [vmem:[%s1 + $0x4f0] sm:$0xf]
    %v387 = vld [vmem:[%s1 + $0x4f4] sm:$0xf]
    %v388 = vld [vmem:[%s1 + $0x4f8] sm:$0xf]
    %v389 = vld [vmem:[%s1 + $0x4fc] sm:$0xf]
    %v390 = vld [vmem:[%s1 + $0x500] sm:$0xf]
    %v391 = vld [vmem:[%s1 + $0x504] sm:$0xf]
    %v392 = vld [vmem:[%s1 + $0x508] sm:$0xf]
    %v393 = vld [vmem:[%s1 + $0x50c] sm:$0xf]
    %v394 = vld [vmem:[%s1 + $0x510] sm:$0xf]
    %v395 = vld [vmem:[%s1 + $0x514] sm:$0xf]
    %v396 = vld [vmem:[%s1 + $0x518] sm:$0xf]
    %v397 = vld [vmem:[%s1 + $0x51c] sm:$0xf]
    %v398 = vld [vmem:[%s1 + $0x520] sm:$0xf]
    %v399 = vld [vmem:[%s1 + $0x524] sm:$0xf]
    %v400 = vld [vmem:[%s1 + $0x528] sm:$0xf]
    %v401 = vld [vmem:[%s1 + $0x52c] sm:$0xf]
    %v402 = vld [vmem:[%s1 + $0x530] sm:$0xf]
    %v403 = vld [vmem:[%s1 + $0x534] sm:$0xf]
    %v404 = vld [vmem:[%s1 + $0x538] sm:$0xf]
    %v405 = vld [vmem:[%s1 + $0x53c] sm:$0xf]
    %v406 = vld [vmem:[%s1 + $0x540] sm:$0xf]
    %v407 = vld [vmem:[%s1 + $0x544] sm:$0xf]
    %v408 = vld [vmem:[%s1 + $0x548] sm:$0xf]
    %v409 = vld [vmem:[%s1 + $0x54c] sm:$0xf]
    %v410 = vld [vmem:[%s1 + $0x550] sm:$0xf]
    %v411 = vld [vmem:[%s1 + $0x554] sm:$0xf]
    %v412 = vld [vmem:[%s1 + $0x558] sm:$0xf]
    %v413 = vld [vmem:[%s1 + $0x55c] sm:$0xf]
    %v414 = vld [vmem:[%s1 + $0x560] sm:$0xf]
    %v415 = vld [vmem:[%s1 + $0x564] sm:$0xf]
    %v416 = vld [vmem:[%s1 + $0x568] sm:$0xf]
    %v417 = vld [vmem:[%s1 + $0x56c] sm:$0xf]
    %v418 = vld [vmem:[%s1 + $0x570] sm:$0xf]
    %v419 = vld [vmem:[%s1 + $0x574] sm:$0xf]
    %v420 = vld [vmem:[%s1 + $0x578] sm:$0xf]
    %v421 = vld [vmem:[%s1 + $0x57c] sm:$0xf]
    %v422 = vld [vmem:[%s1 + $0x580] sm:$0xf]
    %v423 = vld [vmem:[%s1 + $0x584] sm:$0xf]
    %v424 = vld [vmem:[%s1 + $0x588] sm:$0xf]
    %v425 = vld [vmem:[%s1 + $0x58c] sm:$0xf]
    %v426 = vld [vmem:[%s1 + $0x590] sm:$0xf]
    %v427 = vld [vmem:[%s1 + $0x594] sm:$0xf]
    %v428 = vld [vmem:[%s1 + $0x598] sm:$0xf]
    %v429 = vld [vmem:[%s1 + $0x59c] sm:$0xf]
    %v430 = vld [vmem:[%s1 + $0x5a0] sm:$0xf]
    %v431 = vld [vmem:[%s1 + $0x5a4] sm:$0xf]
    %v432 = vld [vmem:[%s1 + $0x5a8] sm:$0xf]
    %v433 = vld [vmem:[%s1 + $0x5ac] sm:$0xf]
    %v434 = vld [vmem:[%s1 + $0x5b0] sm:$0xf]
    %v435 = vld [vmem:[%s1 + $0x5b4] sm:$0xf]
    %v436 = vld [vmem:[%s1 + $0x5b8] sm:$0xf]
    %v437 = vld [vmem:[%s1 + $0x5bc] sm:$0xf]
    %v438 = vld [vmem:[%s1 + $0x5c0] sm:$0xf]
    %v439 = vld [vmem:[%s1 + $0x5c4] sm:$0xf]
    %v440 = vld [vmem:[%s1 + $0x5c8] sm:$0xf]
    %v441 = vld [vmem:[%s1 + $0x5cc] sm:$0xf]
    %v442 = vld [vmem:[%s1 + $0x5d0] sm:$0xf]
    %v443 = vld [vmem:[%s1 + $0x5d4] sm:$0xf]
    %v444 = vld [vmem:[%s1 + $0x5d8] sm:$0xf]
    %v445 = vld [vmem:[%s1 + $0x5dc] sm:$0xf]
    %v446 = vld [vmem:[%s1 + $0x5e0] sm:$0xf]
    %v447 = vld [vmem:[%s1 + $0x5e4] sm:$0xf]
    %v448 = vld [vmem:[%s1 + $0x5e8] sm:$0xf]
    %v449 = vld [vmem:[%s1 + $0x5ec] sm:$0xf]
    %v450 = vld [vmem:[%s1 + $0x5f0] sm:$0xf]
    %v451 = vld [vmem:[%s1 + $0x5f4] sm:$0xf]
    %v452 = vld [vmem:[%s1 + $0x5f8] sm:$0xf]
    %v453 = vld [vmem:[%s1 + $0x5fc] sm:$0xf]
    %v454 = vld [vmem:[%s1 + $0x600] sm:$0xf]
    %v455 = vld [vmem:[%s1 + $0x604] sm:$0xf]
    %v456 = vld [vmem:[%s1 + $0x608] sm:$0xf]
    %v457 = vld [vmem:[%s1 + $0x60c] sm:$0xf]
    %v458 = vld [vmem:[%s1 + $0x610] sm:$0xf]
    %v459 = vld [vmem:[%s1 + $0x614] sm:$0xf]
    %v460 = vld [vmem:[%s1 + $0x618] sm:$0xf]
    %v461 = vld [vmem:[%s1 + $0x61c] sm:$0xf]
    %v462 = vld [vmem:[%s1 + $0x620] sm:$0xf]
    %v463 = vld [vmem:[%s1 + $0x624] sm:$0xf]
    %v464 = vld [vmem:[%s1 + $0x628] sm:$0xf]
    %v465 = vld [vmem:[%s1 + $0x62c] sm:$0xf]
    %v466 = vld [vmem:[%s1 + $0x630] sm:$0xf]
    %v467 = vld [vmem:[%s1 + $0x634] sm:$0xf]
    %v468 = vld [vmem:[%s1 + $0x638] sm:$0xf]
    %v469 = vld [vmem:[%s1 + $0x63c] sm:$0xf]
    %v470 = vld [vmem:[%s1 + $0x640] sm:$0xf]
    %v471 = vld [vmem:[%s1 + $0x644] sm:$0xf]
    %v472 = vld [vmem:[%s1 + $0x648] sm:$0xf]
    %v473 = vld [vmem:[%s1 + $0x64c] sm:$0xf]
    %v474 = vld [vmem:[%s1 + $0x650] sm:$0xf]
    %v475 = vld [vmem:[%s1 + $0x654] sm:$0xf]
    %v476 = vld [vmem:[%s1 + $0x658] sm:$0xf]
    %v477 = vld [vmem:[%s1 + $0x65c] sm:$0xf]
    %v478 = vld [vmem:[%s1 + $0x660] sm:$0xf]
    %v479 = vld [vmem:[%s1 + $0x664] sm:$0xf]
    %v480 = vld [vmem:[%s1 + $0x668] sm:$0xf]
    %v481 = vld [vmem:[%s1 + $0x66c] sm:$0xf]
    %v482 = vld [vmem:[%s1 + $0x670] sm:$0xf]
    %v483 = vld [vmem:[%s1 + $0x674] sm:$0xf]
    %v484 = vld [vmem:[%s1 + $0x678] sm:$0xf]
    %v485 = vld [vmem:[%s1 + $0x67c] sm:$0xf]
    %v486 = vld [vmem:[%s1 + $0x680] sm:$0xf]
    %v487 = vld [vmem:[%s1 + $0x684] sm:$0xf]
    %v488 = vld [vmem:[%s1 + $0x688] sm:$0xf]
    %v489 = vld [vmem:[%s1 + $0x68c] sm:$0xf]
    %v490 = vld [vmem:[%s1 + $0x690] sm:$0xf]
    %v491 = vld [vmem:[%s1 + $0x694] sm:$0xf]
    %v492 = vld [vmem:[%s1 + $0x698] sm:$0xf]
    %v493 = vld [vmem:[%s1 + $0x69c] sm:$0xf]
    %v494 = vld [vmem:[%s1 + $0x6a0] sm:$0xf]
    %v495 = vld [vmem:[%s1 + $0x6a4] sm:$0xf]
    %v496 = vld [vmem:[%s1 + $0x6a8] sm:$0xf]
    %v497 = vld [vmem:[%s1 + $0x6ac] sm:$0xf]
    %v498 = vld [vmem:[%s1 + $0x6b0] sm:$0xf]
    %v499 = vld [vmem:[%s1 + $0x6b4] sm:$0xf]
    %v500 = vld [vmem:[%s1 + $0x6b8] sm:$0xf]
    %v501 = vld [vmem:[%s1 + $0x6bc] sm:$0xf]
    %v502 = vld [vmem:[%s1 + $0x6c0] sm:$0xf]
    %v503 = vld [vmem:[%s1 + $0x6c4] sm:$0xf]
    %v504 = vld [vmem:[%s1 + $0x6c8] sm:$0xf]
    %v505 = vld [vmem:[%s1 + $0x6cc] sm:$0xf]
    %v506 = vld [vmem:[%s1 + $0x6d0] sm:$0xf]
    %v507 = vld [vmem:[%s1 + $0x6d4] sm:$0xf]
    %v508 = vld [vmem:[%s1 + $0x6d8] sm:$0xf]
    %v509 = vld [vmem:[%s1 + $0x6dc] sm:$0xf]
    %v510 = vld [vmem:[%s1 + $0x6e0] sm:$0xf]
    %v511 = vld [vmem:[%s1 + $0x6e4] sm:$0xf]
    %v512 = vld [vmem:[%s1 + $0x6e8] sm:$0xf]
    %v513 = vld [vmem:[%s1 + $0x6ec] sm:$0xf]
    %v514 = vld [vmem:[%s1 + $0x6f0] sm:$0xf]
    %v515 = vld [vmem:[%s1 + $0x6f4] sm:$0xf]
    %v516 = vld [vmem:[%s1 + $0x6f8] sm:$0xf]
    %v517 = vld [vmem:[%s1 + $0x6fc] sm:$0xf]
    %v518 = vld [vmem:[%s1 + $0x700] sm:$0xf]
    %v519 = vld [vmem:[%s1 + $0x704] sm:$0xf]
    %v520 = vld [vmem:[%s1 + $0x708] sm:$0xf]
    %v521 = vld [vmem:[%s1 + $0x70c] sm:$0xf]
    %v522 = vld [vmem:[%s1 + $0x710] sm:$0xf]
    %v523 = vld [vmem:[%s1 + $0x714] sm:$0xf]
    %v524 = vld [vmem:[%s1 + $0x718] sm:$0xf]
    %v525 = vld [vmem:[%s1 + $0x71c] sm:$0xf]
    %v526 = vld [vmem:[%s1 + $0x720] sm:$0xf]
    %v527 = vld [vmem:[%s1 + $0x724] sm:$0xf]
    %v528 = vld [vmem:[%s1 + $0x728] sm:$0xf]
    %v529 = vld [vmem:[%s1 + $0x72c] sm:$0xf]
    %v530 = vld [vmem:[%s1 + $0x730] sm:$0xf]
    %v531 = vld [vmem:[%s1 + $0x734] sm:$0xf]
    %v532 = vld [vmem:[%s1 + $0x738] sm:$0xf]
    %v533 = vld [vmem:[%s1 + $0x73c] sm:$0xf]
    %v534 = vld [vmem:[%s1 + $0x740] sm:$0xf]
    %v535 = vld [vmem:[%s1 + $0x744] sm:$0xf]
    %v536 = vld [vmem:[%s1 + $0x748] sm:$0xf]
    %v537 = vld [vmem:[%s1 + $0x74c] sm:$0xf]
    %v538 = vld [vmem:[%s1 + $0x750] sm:$0xf]
    %v539 = vld [vmem:[%s1 + $0x754] sm:$0xf]
    %v540 = vld [vmem:[%s1 + $0x758] sm:$0xf]
    %v541 = vld [vmem:[%s1 + $0x75c] sm:$0xf]
    %v542 = vld [vmem:[%s1 + $0x760] sm:$0xf]
    %v543 = vld [vmem:[%s1 + $0x764] sm:$0xf]
    %v544 = vld [vmem:[%s1 + $0x768] sm:$0xf]
    %v545 = vld [vmem:[%s1 + $0x76c] sm:$0xf]
    %v546 = vld [vmem:[%s1 + $0x770] sm:$0xf]
    %v547 = vld [vmem:[%s1 + $0x774] sm:$0xf]
    %v548 = vld [vmem:[%s1 + $0x778] sm:$0xf]
    %v549 = vld [vmem:[%s1 + $0x77c] sm:$0xf]
    %v550 = vld [vmem:[%s1 + $0x780] sm:$0xf]
    %v551 = vld [vmem:[%s1 + $0x784] sm:$0xf]
    %v552 = vld [vmem:[%s1 + $0x788] sm:$0xf]
    %v553 = vld [vmem:[%s1 + $0x78c] sm:$0xf]
    %v554 = vld [vmem:[%s1 + $0x790] sm:$0xf]
    %v555 = vld [vmem:[%s1 + $0x794] sm:$0xf]
    %v556 = vld [vmem:[%s1 + $0x798] sm:$0xf]
    %v557 = vld [vmem:[%s1 + $0x79c] sm:$0xf]
    %v558 = vld [vmem:[%s1 + $0x7a0] sm:$0xf]
    %v559 = vld [vmem:[%s1 + $0x7a4] sm:$0xf]
    %v560 = vld [vmem:[%s1 + $0x7a8] sm:$0xf]
    %v561 = vld [vmem:[%s1 + $0x7ac] sm:$0xf]
    %v562 = vld [vmem:[%s1 + $0x7b0] sm:$0xf]
    %v563 = vld [vmem:[%s1 + $0x7b4] sm:$0xf]
    %v564 = vld [vmem:[%s1 + $0x7b8] sm:$0xf]
    %v565 = vld [vmem:[%s1 + $0x7bc] sm:$0xf]
    %v566 = vld [vmem:[%s1 + $0x7c0] sm:$0xf]
    %v567 = vld [vmem:[%s1 + $0x7c4] sm:$0xf]
    %v568 = vld [vmem:[%s1 + $0x7c8] sm:$0xf]
    %v569 = vld [vmem:[%s1 + $0x7cc] sm:$0xf]
    %v570 = vld [vmem:[%s1 + $0x7d0] sm:$0xf]
    %v571 = vld [vmem:[%s1 + $0x7d4] sm:$0xf]
    %v572 = vld [vmem:[%s1 + $0x7d8] sm:$0xf]
    %v573 = vld [vmem:[%s1 + $0x7dc] sm:$0xf]
    %v574 = vld [vmem:[%s1 + $0x7e0] sm:$0xf]
    %v575 = vld [vmem:[%s1 + $0x7e4] sm:$0xf]
    %v576 = vld [vmem:[%s1 + $0x7e8] sm:$0xf]
    %v577 = vld [vmem:[%s1 + $0x7ec] sm:$0xf]
    %v578 = vld [vmem:[%s1 + $0x7f0] sm:$0xf]
    %v579 = vld [vmem:[%s1 + $0x7f4] sm:$0xf]
    %v580 = vld [vmem:[%s1 + $0x7f8] sm:$0xf]
    %v581 = vld [vmem:[%s1 + $0x7fc] sm:$0xf]
    %v582 = vld [vmem:[%s1 + $0x800] sm:$0xf]
    %v583 = vld [vmem:[%s1 + $0x804] sm:$0xf]
    %v584 = vld [vmem:[%s1 + $0x808] sm:$0xf]
    %v585 = vld [vmem:[%s1 + $0x80c] sm:$0xf]
    %v586 = vld [vmem:[%s1 + $0x810] sm:$0xf]
    %v587 = vld [vmem:[%s1 + $0x814] sm:$0xf]
    %v588 = vld [vmem:[%s1 + $0x818] sm:$0xf]
    %v589 = vld [vmem:[%s1 + $0x81c] sm:$0xf]
    %v590 = vld [vmem:[%s1 + $0x820] sm:$0xf]
    %v591 = vld [vmem:[%s1 + $0x824] sm:$0xf]
    %v592 = vld [vmem:[%s1 + $0x828] sm:$0xf]
    %v593 = vld [vmem:[%s1 + $0x82c] sm:$0xf]
    %v594 = vld [vmem:[%s1 + $0x830] sm:$0xf]
    %v595 = vld [vmem:[%s1 + $0x834] sm:$0xf]
    %v596 = vld [vmem:[%s1 + $0x838] sm:$0xf]
    %v597 = vld [vmem:[%s1 + $0x83c] sm:$0xf]
    %v598 = vld [vmem:[%s1 + $0x840] sm:$0xf]
    %v599 = vld [vmem:[%s1 + $0x844] sm:$0xf]
    %v600 = vld [vmem:[%s1 + $0x848] sm:$0xf]
    %v601 = vld [vmem:[%s1 + $0x84c] sm:$0xf]
    %v602 = vld [vmem:[%s1 + $0x850] sm:$0xf]
    %v603 = vld [vmem:[%s1 + $0x854] sm:$0xf]
    %v604 = vld [vmem:[%s1 + $0x858] sm:$0xf]
    %v605 = vld [vmem:[%s1 + $0x85c] sm:$0xf]
    %v606 = vld [vmem:[%s1 + $0x860] sm:$0xf]
    %v607 = vld [vmem:[%s1 + $0x864] sm:$0xf]
    %v608 = vld [vmem:[%s1 + $0x868] sm:$0xf]
    %v609 = vld [vmem:[%s1 + $0x86c] sm:$0xf]
    %v610 = vld [vmem:[%s1 + $0x870] sm:$0xf]
    %v611 = vld [vmem:[%s1 + $0x874] sm:$0xf]
    %v612 = vld [vmem:[%s1 + $0x878] sm:$0xf]
    %v613 = vld [vmem:[%s1 + $0x87c] sm:$0xf]
    %v614 = vld [vmem:[%s1 + $0x880] sm:$0xf]
    %v615 = vld [vmem:[%s1 + $0x884] sm:$0xf]
    %v616 = vld [vmem:[%s1 + $0x888] sm:$0xf]
    %v617 = vld [vmem:[%s1 + $0x88c] sm:$0xf]
    %v618 = vld [vmem:[%s1 + $0x890] sm:$0xf]
    %v619 = vld [vmem:[%s1 + $0x894] sm:$0xf]
    %v620 = vld [vmem:[%s1 + $0x898] sm:$0xf]
    %v621 = vld [vmem:[%s1 + $0x89c] sm:$0xf]
    %v622 = vld [vmem:[%s1 + $0x8a0] sm:$0xf]
    %v623 = vld [vmem:[%s1 + $0x8a4] sm:$0xf]
    %v624 = vld [vmem:[%s1 + $0x8a8] sm:$0xf]
    %v625 = vld [vmem:[%s1 + $0x8ac] sm:$0xf]
    %v626 = vld [vmem:[%s1 + $0x8b0] sm:$0xf]
    %v627 = vld [vmem:[%s1 + $0x8b4] sm:$0xf]
    %v628 = vld [vmem:[%s1 + $0x8b8] sm:$0xf]
    %v629 = vld [vmem:[%s1 + $0x8bc] sm:$0xf]
    %v630 = vld [vmem:[%s1 + $0x8c0] sm:$0xf]
    %v631 = vld [vmem:[%s1 + $0x8c4] sm:$0xf]
    %v632 = vld [vmem:[%s1 + $0x8c8] sm:$0xf]
    %v633 = vld [vmem:[%s1 + $0x8cc] sm:$0xf]
    %v634 = vld [vmem:[%s1 + $0x8d0] sm:$0xf]
    %v635 = vld [vmem:[%s1 + $0x8d4] sm:$0xf]
    %v636 = vld [vmem:[%s1 + $0x8d8] sm:$0xf]
    %v637 = vld [vmem:[%s1 + $0x8dc] sm:$0xf]
    %v638 = vld [vmem:[%s1 + $0x8e0] sm:$0xf]
    %v639 = vld [vmem:[%s1 + $0x8e4] sm:$0xf]
    %v640 = vld [vmem:[%s1 + $0x8e8] sm:$0xf]
    %v641 = vld [vmem:[%s1 + $0x8ec] sm:$0xf]
    %v642 = vld [vmem:[%s1 + $0x8f0] sm:$0xf]
    %v643 = vld [vmem:[%s1 + $0x8f4] sm:$0xf]
    %v644 = vld [vmem:[%s1 + $0x8f8] sm:$0xf]
    %v645 = vld [vmem:[%s1 + $0x8fc] sm:$0xf]
    %v646 = vld [vmem:[%s1 + $0x900] sm:$0xf]
    %v647 = vld [vmem:[%s1 + $0x904] sm:$0xf]
    %v648 = vld [vmem:[%s1 + $0x908] sm:$0xf]
    %v649 = vld [vmem:[%s1 + $0x90c] sm:$0xf]
    %v650 = vld [vmem:[%s1 + $0x910] sm:$0xf]
    %v651 = vld [vmem:[%s1 + $0x914] sm:$0xf]
    %v652 = vld [vmem:[%s1 + $0x918] sm:$0xf]
    %v653 = vld [vmem:[%s1 + $0x91c] sm:$0xf]
    %v654 = vld [vmem:[%s1 + $0x920] sm:$0xf]
    %v655 = vld [vmem:[%s1 + $0x924] sm:$0xf]
    %v656 = vld [vmem:[%s1 + $0x928] sm:$0xf]
    %v657 = vld [vmem:[%s1 + $0x92c] sm:$0xf]
    %v658 = vld [vmem:[%s1 + $0x930] sm:$0xf]
    %v659 = vld [vmem:[%s1 + $0x934] sm:$0xf]
    %v660 = vld [vmem:[%s1 + $0x938] sm:$0xf]
    %v661 = vld [vmem:[%s1 + $0x93c] sm:$0xf]
    %v662 = vld [vmem:[%s1 + $0x940] sm:$0xf]
    %v663 = vld [vmem:[%s1 + $0x944] sm:$0xf]
    %v664 = vld [vmem:[%s1 + $0x948] sm:$0xf]
    %v665 = vld [vmem:[%s1 + $0x94c] sm:$0xf]
    %v666 = vld [vmem:[%s1 + $0x950] sm:$0xf]
    %v667 = vld [vmem:[%s1 + $0x954] sm:$0xf]
    %v668 = vld [vmem:[%s1 + $0x958] sm:$0xf]
    %v669 = vld [vmem:[%s1 + $0x95c] sm:$0xf]
    %v670 = vld [vmem:[%s1 + $0x960] sm:$0xf]
    %v671 = vld [vmem:[%s1 + $0x964] sm:$0xf]
    %v672 = vld [vmem:[%s1 + $0x968] sm:$0xf]
    %v673 = vld [vmem:[%s1 + $0x96c] sm:$0xf]
    %v674 = vld [vmem:[%s1 + $0x970] sm:$0xf]
    %v675 = vld [vmem:[%s1 + $0x974] sm:$0xf]
    %v676 = vld [vmem:[%s1 + $0x978] sm:$0xf]
    %v677 = vld [vmem:[%s1 + $0x97c] sm:$0xf]
    %v678 = vld [vmem:[%s1 + $0x980] sm:$0xf]
    %v679 = vld [vmem:[%s1 + $0x984] sm:$0xf]
    %v680 = vld [vmem:[%s1 + $0x988] sm:$0xf]
    %v681 = vld [vmem:[%s1 + $0x98c] sm:$0xf]
    %v682 = vld [vmem:[%s1 + $0x990] sm:$0xf]
    %v683 = vld [vmem:[%s1 + $0x994] sm:$0xf]
    %v684 = vld [vmem:[%s1 + $0x998] sm:$0xf]
    %v685 = vld [vmem:[%s1 + $0x99c] sm:$0xf]
    %v686 = vld [vmem:[%s1 + $0x9a0] sm:$0xf]
    %v687 = vld [vmem:[%s1 + $0x9a4] sm:$0xf]
    %v688 = vld [vmem:[%s1 + $0x9a8] sm:$0xf]
    %v689 = vld [vmem:[%s1 + $0x9ac] sm:$0xf]
    %v690 = vld [vmem:[%s1 + $0x9b0] sm:$0xf]
    %v691 = vld [vmem:[%s1 + $0x9b4] sm:$0xf]
    %v692 = vld [vmem:[%s1 + $0x9b8] sm:$0xf]
    %v693 = vld [vmem:[%s1 + $0x9bc] sm:$0xf]
    %v694 = vld [vmem:[%s1 + $0x9c0] sm:$0xf]
    %v695 = vld [vmem:[%s1 + $0x9c4] sm:$0xf]
    %v696 = vld [vmem:[%s1 + $0x9c8] sm:$0xf]
    %v697 = vld [vmem:[%s1 + $0x9cc] sm:$0xf]
    %v698 = vld [vmem:[%s1 + $0x9d0] sm:$0xf]
    %v699 = vld [vmem:[%s1 + $0x9d4] sm:$0xf]
    %v700 = vld [vmem:[%s1 + $0x9d8] sm:$0xf]
    %v701 = vld [vmem:[%s1 + $0x9dc] sm:$0xf]
    %v702 = vld [vmem:[%s1 + $0x9e0] sm:$0xf]
    %v703 = vld [vmem:[%s1 + $0x9e4] sm:$0xf]
    %v704 = vld [vmem:[%s1 + $0x9e8] sm:$0xf]
    %v705 = vld [vmem:[%s1 + $0x9ec] sm:$0xf]
    %v706 = vld [vmem:[%s1 + $0x9f0] sm:$0xf]
    %v707 = vld [vmem:[%s1 + $0x9f4] sm:$0xf]
    %v708 = vld [vmem:[%s1 + $0x9f8] sm:$0xf]
    %v709 = vld [vmem:[%s1 + $0x9fc] sm:$0xf]
    %v710 = vld [vmem:[%s1 + $0xa00] sm:$0xf]
    %v711 = vld [vmem:[%s1 + $0xa04] sm:$0xf]
    %v712 = vld [vmem:[%s1 + $0xa08] sm:$0xf]
    %v713 = vld [vmem:[%s1 + $0xa0c] sm:$0xf]
    %v714 = vld [vmem:[%s1 + $0xa10] sm:$0xf]
    %v715 = vld [vmem:[%s1 + $0xa14] sm:$0xf]
    %v716 = vld [vmem:[%s1 + $0xa18] sm:$0xf]
    %v717 = vld [vmem:[%s1 + $0xa1c] sm:$0xf]
    %v718 = vld [vmem:[%s1 + $0xa20] sm:$0xf]
    %v719 = vld [vmem:[%s1 + $0xa24] sm:$0xf]
    %v720 = vld [vmem:[%s1 + $0xa28] sm:$0xf]
    %v721 = vld [vmem:[%s1 + $0xa2c] sm:$0xf]
    %v722 = vld [vmem:[%s1 + $0xa30] sm:$0xf]
    %v723 = vld [vmem:[%s1 + $0xa34] sm:$0xf]
    %v724 = vld [vmem:[%s1 + $0xa38] sm:$0xf]
    %v725 = vld [vmem:[%s1 + $0xa3c] sm:$0xf]
    %v726 = vld [vmem:[%s1 + $0xa40] sm:$0xf]
    %v727 = vld [vmem:[%s1 + $0xa44] sm:$0xf]
    %v728 = vld [vmem:[%s1 + $0xa48] sm:$0xf]
    %v729 = vld [vmem:[%s1 + $0xa4c] sm:$0xf]
    %v730 = vld [vmem:[%s1 + $0xa50] sm:$0xf]
    %v731 = vld [vmem:[%s1 + $0xa54] sm:$0xf]
    %v732 = vld [vmem:[%s1 + $0xa58] sm:$0xf]
    %v733 = vld [vmem:[%s1 + $0xa5c] sm:$0xf]
    %v734 = vld [vmem:[%s1 + $0xa60] sm:$0xf]
    %v735 = vld [vmem:[%s1 + $0xa64] sm:$0xf]
    %v736 = vld [vmem:[%s1 + $0xa68] sm:$0xf]
    %v737 = vld [vmem:[%s1 + $0xa6c] sm:$0xf]
    %v738 = vld [vmem:[%s1 + $0xa70] sm:$0xf]
    %v739 = vld [vmem:[%s1 + $0xa74] sm:$0xf]
    %v740 = vld [vmem:[%s1 + $0xa78] sm:$0xf]
    %v741 = vld [vmem:[%s1 + $0xa7c] sm:$0xf]
    %v742 = vld [vmem:[%s1 + $0xa80] sm:$0xf]
    %v743 = vld [vmem:[%s1 + $0xa84] sm:$0xf]
    %v744 = vld [vmem:[%s1 + $0xa88] sm:$0xf]
    %v745 = vld [vmem:[%s1 + $0xa8c] sm:$0xf]
    %v746 = vld [vmem:[%s1 + $0xa90] sm:$0xf]
    %v747 = vld [vmem:[%s1 + $0xa94] sm:$0xf]
    %v748 = vld [vmem:[%s1 + $0xa98] sm:$0xf]
    %v749 = vld [vmem:[%s1 + $0xa9c] sm:$0xf]
    %v750 = vld [vmem:[%s1 + $0xaa0] sm:$0xf]
    %v751 = vld [vmem:[%s1 + $0xaa4] sm:$0xf]
    %v752 = vld [vmem:[%s1 + $0xaa8] sm:$0xf]
    %v753 = vld [vmem:[%s1 + $0xaac] sm:$0xf]
    %v754 = vld [vmem:[%s1 + $0xab0] sm:$0xf]
    %v755 = vld [vmem:[%s1 + $0xab4] sm:$0xf]
    %v756 = vld [vmem:[%s1 + $0xab8] sm:$0xf]
    %v757 = vld [vmem:[%s1 + $0xabc] sm:$0xf]
    %v758 = vld [vmem:[%s1 + $0xac0] sm:$0xf]
    %v759 = vld [vmem:[%s1 + $0xac4] sm:$0xf]
    %v760 = vld [vmem:[%s1 + $0xac8] sm:$0xf]
    %v761 = vld [vmem:[%s1 + $0xacc] sm:$0xf]
    %v762 = vld [vmem:[%s1 + $0xad0] sm:$0xf]
    %v763 = vld [vmem:[%s1 + $0xad4] sm:$0xf]
    %v764 = vld [vmem:[%s1 + $0xad8] sm:$0xf]
    %v765 = vld [vmem:[%s1 + $0xadc] sm:$0xf]
    %v766 = vld [vmem:[%s1 + $0xae0] sm:$0xf]
    %v767 = vld [vmem:[%s1 + $0xae4] sm:$0xf]
    %v768 = vld [vmem:[%s1 + $0xae8] sm:$0xf]
    %v769 = vld [vmem:[%s1 + $0xaec] sm:$0xf]
    %v770 = vld [vmem:[%s1 + $0xaf0] sm:$0xf]
    %v771 = vld [vmem:[%s1 + $0xaf4] sm:$0xf]
    %v772 = vld [vmem:[%s1 + $0xaf8] sm:$0xf]
    %v773 = vld [vmem:[%s1 + $0xafc] sm:$0xf]
    %v774 = vld [vmem:[%s1 + $0xb00] sm:$0xf]
    %v775 = vld [vmem:[%s1 + $0xb04] sm:$0xf]
    %v776 = vld [vmem:[%s1 + $0xb08] sm:$0xf]
    %v777 = vld [vmem:[%s1 + $0xb0c] sm:$0xf]
    %v778 = vld [vmem:[%s1 + $0xb10] sm:$0xf]
    %v779 = vld [vmem:[%s1 + $0xb14] sm:$0xf]
    %v780 = vld [vmem:[%s1 + $0xb18] sm:$0xf]
    %v781 = vld [vmem:[%s1 + $0xb1c] sm:$0xf]
    %v782 = vld [vmem:[%s1 + $0xb20] sm:$0xf]
    %v783 = vld [vmem:[%s1 + $0xb24] sm:$0xf]
    %v784 = vld [vmem:[%s1 + $0xb28] sm:$0xf]
    %v785 = vld [vmem:[%s1 + $0xb2c] sm:$0xf]
    %v786 = vld [vmem:[%s1 + $0xb30] sm:$0xf]
    %v787 = vld [vmem:[%s1 + $0xb34] sm:$0xf]
    %v788 = vld [vmem:[%s1 + $0xb38] sm:$0xf]
    %v789 = vld [vmem:[%s1 + $0xb3c] sm:$0xf]
    %v790 = vld [vmem:[%s1 + $0xb40] sm:$0xf]
    %v791 = vld [vmem:[%s1 + $0xb44] sm:$0xf]
    %v792 = vld [vmem:[%s1 + $0xb48] sm:$0xf]
    %v793 = vld [vmem:[%s1 + $0xb4c] sm:$0xf]
    %v794 = vld [vmem:[%s1 + $0xb50] sm:$0xf]
    %v795 = vld [vmem:[%s1 + $0xb54] sm:$0xf]
    %v796 = vld [vmem:[%s1 + $0xb58] sm:$0xf]
    %v797 = vld [vmem:[%s1 + $0xb5c] sm:$0xf]
    %v798 = vld [vmem:[%s1 + $0xb60] sm:$0xf]
    %v799 = vld [vmem:[%s1 + $0xb64] sm:$0xf]
    %v800 = vld [vmem:[%s1 + $0xb68] sm:$0xf]
    %v801 = vld [vmem:[%s1 + $0xb6c] sm:$0xf]
    %v802 = vld [vmem:[%s1 + $0xb70] sm:$0xf]
    %v803 = vld [vmem:[%s1 + $0xb74] sm:$0xf]
    %v804 = vld [vmem:[%s1 + $0xb78] sm:$0xf]
    %v805 = vld [vmem:[%s1 + $0xb7c] sm:$0xf]
    %v806 = vld [vmem:[%s1 + $0xb80] sm:$0xf]
    %v807 = vld [vmem:[%s1 + $0xb84] sm:$0xf]
    %v808 = vld [vmem:[%s1 + $0xb88] sm:$0xf]
    %v809 = vld [vmem:[%s1 + $0xb8c] sm:$0xf]
    %v810 = vld [vmem:[%s1 + $0xb90] sm:$0xf]
    %v811 = vld [vmem:[%s1 + $0xb94] sm:$0xf]
    %v812 = vld [vmem:[%s1 + $0xb98] sm:$0xf]
    %v813 = vld [vmem:[%s1 + $0xb9c] sm:$0xf]
    %v814 = vld [vmem:[%s1 + $0xba0] sm:$0xf]
    %v815 = vld [vmem:[%s1 + $0xba4] sm:$0xf]
    %v816 = vld [vmem:[%s1 + $0xba8] sm:$0xf]
    %v817 = vld [vmem:[%s1 + $0xbac] sm:$0xf]
    %v818 = vld [vmem:[%s1 + $0xbb0] sm:$0xf]
    %v819 = vld [vmem:[%s1 + $0xbb4] sm:$0xf]
    %v820 = vld [vmem:[%s1 + $0xbb8] sm:$0xf]
    %v821 = vld [vmem:[%s1 + $0xbbc] sm:$0xf]
    %v822 = vld [vmem:[%s1 + $0xbc0] sm:$0xf]
    %v823 = vld [vmem:[%s1 + $0xbc4] sm:$0xf]
    %v824 = vld [vmem:[%s1 + $0xbc8] sm:$0xf]
    %v825 = vld [vmem:[%s1 + $0xbcc] sm:$0xf]
    %v826 = vld [vmem:[%s1 + $0xbd0] sm:$0xf]
    %v827 = vld [vmem:[%s1 + $0xbd4] sm:$0xf]
    %v828 = vld [vmem:[%s1 + $0xbd8] sm:$0xf]
    %v829 = vld [vmem:[%s1 + $0xbdc] sm:$0xf]
    %v830 = vld [vmem:[%s1 + $0xbe0] sm:$0xf]
    %v831 = vld [vmem:[%s1 + $0xbe4] sm:$0xf]
    %v832 = vld [vmem:[%s1 + $0xbe8] sm:$0xf]
    %v833 = vld [vmem:[%s1 + $0xbec] sm:$0xf]
    %v834 = vld [vmem:[%s1 + $0xbf0] sm:$0xf]
    %v835 = vld [vmem:[%s1 + $0xbf4] sm:$0xf]
    %v836 = vld [vmem:[%s1 + $0xbf8] sm:$0xf]
    %v837 = vld [vmem:[%s1 + $0xbfc] sm:$0xf]
    %v838 = vld [vmem:[%s1 + $0xc00] sm:$0xf]
    %v839 = vld [vmem:[%s1 + $0xc04] sm:$0xf]
    %v840 = vld [vmem:[%s1 + $0xc08] sm:$0xf]
    %v841 = vld [vmem:[%s1 + $0xc0c] sm:$0xf]
    %v842 = vld [vmem:[%s1 + $0xc10] sm:$0xf]
    %v843 = vld [vmem:[%s1 + $0xc14] sm:$0xf]
    %v844 = vld [vmem:[%s1 + $0xc18] sm:$0xf]
    %v845 = vld [vmem:[%s1 + $0xc1c] sm:$0xf]
    %v846 = vld [vmem:[%s1 + $0xc20] sm:$0xf]
    %v847 = vld [vmem:[%s1 + $0xc24] sm:$0xf]
    %v848 = vld [vmem:[%s1 + $0xc28] sm:$0xf]
    %v849 = vld [vmem:[%s1 + $0xc2c] sm:$0xf]
    %v850 = vld [vmem:[%s1 + $0xc30] sm:$0xf]
    %v851 = vld [vmem:[%s1 + $0xc34] sm:$0xf]
    %v852 = vld [vmem:[%s1 + $0xc38] sm:$0xf]
    %v853 = vld [vmem:[%s1 + $0xc3c] sm:$0xf]
    %v854 = vld [vmem:[%s1 + $0xc40] sm:$0xf]
    %v855 = vld [vmem:[%s1 + $0xc44] sm:$0xf]
    %v856 = vld [vmem:[%s1 + $0xc48] sm:$0xf]
    %v857 = vld [vmem:[%s1 + $0xc4c] sm:$0xf]
    %v858 = vld [vmem:[%s1 + $0xc50] sm:$0xf]
    %v859 = vld [vmem:[%s1 + $0xc54] sm:$0xf]
    %v860 = vld [vmem:[%s1 + $0xc58] sm:$0xf]
    %v861 = vld [vmem:[%s1 + $0xc5c] sm:$0xf]
    %v862 = vld [vmem:[%s1 + $0xc60] sm:$0xf]
    %v863 = vld [vmem:[%s1 + $0xc64] sm:$0xf]
    %v864 = vld [vmem:[%s1 + $0xc68] sm:$0xf]
    %v865 = vld [vmem:[%s1 + $0xc6c] sm:$0xf]
    %v866 = vld [vmem:[%s1 + $0xc70] sm:$0xf]
    %v867 = vld [vmem:[%s1 + $0xc74] sm:$0xf]
    %v868 = vld [vmem:[%s1 + $0xc78] sm:$0xf]
    %v869 = vld [vmem:[%s1 + $0xc7c] sm:$0xf]
    %v870 = vld [vmem:[%s1 + $0xc80] sm:$0xf]
    %v871 = vld [vmem:[%s1 + $0xc84] sm:$0xf]
    %v872 = vld [vmem:[%s1 + $0xc88] sm:$0xf]
    %v873 = vld [vmem:[%s1 + $0xc8c] sm:$0xf]
    %v874 = vld [vmem:[%s1 + $0xc90] sm:$0xf]
    %v875 = vld [vmem:[%s1 + $0xc94] sm:$0xf]
    %v876 = vld [vmem:[%s1 + $0xc98] sm:$0xf]
    %v877 = vld [vmem:[%s1 + $0xc9c] sm:$0xf]
    %v878 = vld [vmem:[%s1 + $0xca0] sm:$0xf]
    %v879 = vld [vmem:[%s1 + $0xca4] sm:$0xf]
    %v880 = vld [vmem:[%s1 + $0xca8] sm:$0xf]
    %v881 = vld [vmem:[%s1 + $0xcac] sm:$0xf]
    %v882 = vld [vmem:[%s1 + $0xcb0] sm:$0xf]
    %v883 = vld [vmem:[%s1 + $0xcb4] sm:$0xf]
    %v884 = vld [vmem:[%s1 + $0xcb8] sm:$0xf]
    %v885 = vld [vmem:[%s1 + $0xcbc] sm:$0xf]
    %v886 = vld [vmem:[%s1 + $0xcc0] sm:$0xf]
    %v887 = vld [vmem:[%s1 + $0xcc4] sm:$0xf]
    %v888 = vld [vmem:[%s1 + $0xcc8] sm:$0xf]
    %v889 = vld [vmem:[%s1 + $0xccc] sm:$0xf]
    %v890 = vld [vmem:[%s1 + $0xcd0] sm:$0xf]
    %v891 = vld [vmem:[%s1 + $0xcd4] sm:$0xf]
    %v892 = vld [vmem:[%s1 + $0xcd8] sm:$0xf]
    %v893 = vld [vmem:[%s1 + $0xcdc] sm:$0xf]
    %v894 = vld [vmem:[%s1 + $0xce0] sm:$0xf]
    %v895 = vld [vmem:[%s1 + $0xce4] sm:$0xf]
    %v896 = vld [vmem:[%s1 + $0xce8] sm:$0xf]
    %v897 = vld [vmem:[%s1 + $0xcec] sm:$0xf]
    %v898 = vld [vmem:[%s1 + $0xcf0] sm:$0xf]
    %v899 = vld [vmem:[%s1 + $0xcf4] sm:$0xf]
    %v900 = vld [vmem:[%s1 + $0xcf8] sm:$0xf]
    %v901 = vld [vmem:[%s1 + $0xcfc] sm:$0xf]
    %v902 = vld [vmem:[%s1 + $0xd00] sm:$0xf]
    %v903 = vld [vmem:[%s1 + $0xd04] sm:$0xf]
    %v904 = vld [vmem:[%s1 + $0xd08] sm:$0xf]
    %v905 = vld [vmem:[%s1 + $0xd0c] sm:$0xf]
    %v906 = vld [vmem:[%s1 + $0xd10] sm:$0xf]
    %v907 = vld [vmem:[%s1 + $0xd14] sm:$0xf]
    %v908 = vld [vmem:[%s1 + $0xd18] sm:$0xf]
    %v909 = vld [vmem:[%s1 + $0xd1c] sm:$0xf]
    %v910 = vld [vmem:[%s1 + $0xd20] sm:$0xf]
    %v911 = vld [vmem:[%s1 + $0xd24] sm:$0xf]
    %v912 = vld [vmem:[%s1 + $0xd28] sm:$0xf]
    %v913 = vld [vmem:[%s1 + $0xd2c] sm:$0xf]
    %v914 = vld [vmem:[%s1 + $0xd30] sm:$0xf]
    %v915 = vld [vmem:[%s1 + $0xd34] sm:$0xf]
    %v916 = vld [vmem:[%s1 + $0xd38] sm:$0xf]
    %v917 = vld [vmem:[%s1 + $0xd3c] sm:$0xf]
    %v918 = vld [vmem:[%s1 + $0xd40] sm:$0xf]
    %v919 = vld [vmem:[%s1 + $0xd44] sm:$0xf]
    %v920 = vld [vmem:[%s1 + $0xd48] sm:$0xf]
    %v921 = vld [vmem:[%s1 + $0xd4c] sm:$0xf]
    %v922 = vld [vmem:[%s1 + $0xd50] sm:$0xf]
    %v923 = vld [vmem:[%s1 + $0xd54] sm:$0xf]
    %v924 = vld [vmem:[%s1 + $0xd58] sm:$0xf]
    %v925 = vld [vmem:[%s1 + $0xd5c] sm:$0xf]
    %v926 = vld [vmem:[%s1 + $0xd60] sm:$0xf]
    %v927 = vld [vmem:[%s1 + $0xd64] sm:$0xf]
    %v928 = vld [vmem:[%s1 + $0xd68] sm:$0xf]
    %v929 = vld [vmem:[%s1 + $0xd6c] sm:$0xf]
    %v930 = vld [vmem:[%s1 + $0xd70] sm:$0xf]
    %v931 = vld [vmem:[%s1 + $0xd74] sm:$0xf]
    %v932 = vld [vmem:[%s1 + $0xd78] sm:$0xf]
    %v933 = vld [vmem:[%s1 + $0xd7c] sm:$0xf]
    %v934 = vld [vmem:[%s1 + $0xd80] sm:$0xf]
    %v935 = vld [vmem:[%s1 + $0xd84] sm:$0xf]
    %v936 = vld [vmem:[%s1 + $0xd88] sm:$0xf]
    %v937 = vld [vmem:[%s1 + $0xd8c] sm:$0xf]
    %v938 = vld [vmem:[%s1 + $0xd90] sm:$0xf]
    %v939 = vld [vmem:[%s1 + $0xd94] sm:$0xf]
    %v940 = vld [vmem:[%s1 + $0xd98] sm:$0xf]
    %v941 = vld [vmem:[%s1 + $0xd9c] sm:$0xf]
    %v942 = vld [vmem:[%s1 + $0xda0] sm:$0xf]
    %v943 = vld [vmem:[%s1 + $0xda4] sm:$0xf]
    %v944 = vld [vmem:[%s1 + $0xda8] sm:$0xf]
    %v945 = vld [vmem:[%s1 + $0xdac] sm:$0xf]
    %v946 = vld [vmem:[%s1 + $0xdb0] sm:$0xf]
    %v947 = vld [vmem:[%s1 + $0xdb4] sm:$0xf]
    %v948 = vld [vmem:[%s1 + $0xdb8] sm:$0xf]
    %v949 = vld [vmem:[%s1 + $0xdbc] sm:$0xf]
    %v950 = vld [vmem:[%s1 + $0xdc0] sm:$0xf]
    %v951 = vld [vmem:[%s1 + $0xdc4] sm:$0xf]
    %v952 = vld [vmem:[%s1 + $0xdc8] sm:$0xf]
    %v953 = vld [vmem:[%s1 + $0xdcc] sm:$0xf]
    %v954 = vld [vmem:[%s1 + $0xdd0] sm:$0xf]
    %v955 = vld [vmem:[%s1 + $0xdd4] sm:$0xf]
    %v956 = vld [vmem:[%s1 + $0xdd8] sm:$0xf]
    %v957 = vld [vmem:[%s1 + $0xddc] sm:$0xf]
    %v958 = vld [vmem:[%s1 + $0xde0] sm:$0xf]
    %v959 = vld [vmem:[%s1 + $0xde4] sm:$0xf]
    %v960 = vld [vmem:[%s1 + $0xde8] sm:$0xf]
    %v961 = vld [vmem:[%s1 + $0xdec] sm:$0xf]
    %v962 = vld [vmem:[%s1 + $0xdf0] sm:$0xf]
    %v963 = vld [vmem:[%s1 + $0xdf4] sm:$0xf]
    %v964 = vld [vmem:[%s1 + $0xdf8] sm:$0xf]
    %v965 = vld [vmem:[%s1 + $0xdfc] sm:$0xf]
    %v966 = vld [vmem:[%s1 + $0xe00] sm:$0xf]
    %v967 = vld [vmem:[%s1 + $0xe04] sm:$0xf]
    %v968 = vld [vmem:[%s1 + $0xe08] sm:$0xf]
    %v969 = vld [vmem:[%s1 + $0xe0c] sm:$0xf]
    %v970 = vld [vmem:[%s1 + $0xe10] sm:$0xf]
    %v971 = vld [vmem:[%s1 + $0xe14] sm:$0xf]
    %v972 = vld [vmem:[%s1 + $0xe18] sm:$0xf]
    %v973 = vld [vmem:[%s1 + $0xe1c] sm:$0xf]
    %v974 = vld [vmem:[%s1 + $0xe20] sm:$0xf]
    %v975 = vld [vmem:[%s1 + $0xe24] sm:$0xf]
    %v976 = vld [vmem:[%s1 + $0xe28] sm:$0xf]
    %v977 = vld [vmem:[%s1 + $0xe2c] sm:$0xf]
    %v978 = vld [vmem:[%s1 + $0xe30] sm:$0xf]
    %v979 = vld [vmem:[%s1 + $0xe34] sm:$0xf]
    %v980 = vld [vmem:[%s1 + $0xe38] sm:$0xf]
    %v981 = vld [vmem:[%s1 + $0xe3c] sm:$0xf]
    %v982 = vld [vmem:[%s1 + $0xe40] sm:$0xf]
    %v983 = vld [vmem:[%s1 + $0xe44] sm:$0xf]
    %v984 = vld [vmem:[%s1 + $0xe48] sm:$0xf]
    %v985 = vld [vmem:[%s1 + $0xe4c] sm:$0xf]
    %v986 = vld [vmem:[%s1 + $0xe50] sm:$0xf]
    %v987 = vld [vmem:[%s1 + $0xe54] sm:$0xf]
    %v988 = vld [vmem:[%s1 + $0xe58] sm:$0xf]
    %v989 = vld [vmem:[%s1 + $0xe5c] sm:$0xf]
    %v990 = vld [vmem:[%s1 + $0xe60] sm:$0xf]
    %v991 = vld [vmem:[%s1 + $0xe64] sm:$0xf]
    %v992 = vld [vmem:[%s1 + $0xe68] sm:$0xf]
    %v993 = vld [vmem:[%s1 + $0xe6c] sm:$0xf]
    %v994 = vld [vmem:[%s1 + $0xe70] sm:$0xf]
    %v995 = vld [vmem:[%s1 + $0xe74] sm:$0xf]
    %v996 = vld [vmem:[%s1 + $0xe78] sm:$0xf]
    %v997 = vld [vmem:[%s1 + $0xe7c] sm:$0xf]
    %v998 = vld [vmem:[%s1 + $0xe80] sm:$0xf]
    %v999 = vld [vmem:[%s1 + $0xe84] sm:$0xf]
    %v1000 = vld [vmem:[%s1 + $0xe88] sm:$0xf]
    %v1001 = vld [vmem:[%s1 + $0xe8c] sm:$0xf]
    %v1002 = vld [vmem:[%s1 + $0xe90] sm:$0xf]
    %v1003 = vld [vmem:[%s1 + $0xe94] sm:$0xf]
    %v1004 = vld [vmem:[%s1 + $0xe98] sm:$0xf]
    %v1005 = vld [vmem:[%s1 + $0xe9c] sm:$0xf]
    %v1006 = vld [vmem:[%s1 + $0xea0] sm:$0xf]
    %v1007 = vld [vmem:[%s1 + $0xea4] sm:$0xf]
    %v1008 = vld [vmem:[%s1 + $0xea8] sm:$0xf]
    %v1009 = vld [vmem:[%s1 + $0xeac] sm:$0xf]
    %v1010 = vld [vmem:[%s1 + $0xeb0] sm:$0xf]
    %v1011 = vld [vmem:[%s1 + $0xeb4] sm:$0xf]
    %v1012 = vld [vmem:[%s1 + $0xeb8] sm:$0xf]
    %v1013 = vld [vmem:[%s1 + $0xebc] sm:$0xf]
    %v1014 = vld [vmem:[%s1 + $0xec0] sm:$0xf]
    %v1015 = vld [vmem:[%s1 + $0xec4] sm:$0xf]
    %v1016 = vld [vmem:[%s1 + $0xec8] sm:$0xf]
    %v1017 = vld [vmem:[%s1 + $0xecc] sm:$0xf]
    %v1018 = vld [vmem:[%s1 + $0xed0] sm:$0xf]
    %v1019 = vld [vmem:[%s1 + $0xed4] sm:$0xf]
    %v1020 = vld [vmem:[%s1 + $0xed8] sm:$0xf]
    %v1021 = vld [vmem:[%s1 + $0xedc] sm:$0xf]
    %v1022 = vld [vmem:[%s1 + $0xee0] sm:$0xf]
    %v1023 = vld [vmem:[%s1 + $0xee4] sm:$0xf]
    %v1024 = vld [vmem:[%s1 + $0xee8] sm:$0xf]
    %v1025 = vld [vmem:[%s1 + $0xeec] sm:$0xf]
    %v1026 = vld [vmem:[%s1 + $0xef0] sm:$0xf]
    %v1027 = vld [vmem:[%s1 + $0xef4] sm:$0xf]
    %v1028 = vld [vmem:[%s1 + $0xef8] sm:$0xf]
    %v1029 = vld [vmem:[%s1 + $0xefc] sm:$0xf]
    %v1030 = vld [vmem:[%s1 + $0xf00] sm:$0xf]
    %v1031 = vld [vmem:[%s1 + $0xf04] sm:$0xf]
    %v1032 = vld [vmem:[%s1 + $0xf08] sm:$0xf]
    %v1033 = vld [vmem:[%s1 + $0xf0c] sm:$0xf]
    %v1034 = vld [vmem:[%s1 + $0xf10] sm:$0xf]
    %v1035 = vld [vmem:[%s1 + $0xf14] sm:$0xf]
    %v1036 = vld [vmem:[%s1 + $0xf18] sm:$0xf]
    %v1037 = vld [vmem:[%s1 + $0xf1c] sm:$0xf]
    %v1038 = vld [vmem:[%s2] sm:$0x1]
    %v1040 = vlaneseq
    %v1041 = vshrl.u32 %v1040, 7
    %v1042 = vsub.s32 0, %v1041
    %v1043 = vrot.slane %v1038, %v1042
    %v1053 = vcombine.high %v62, %v62
    %v1055 = vunpack.c.l.s4 1966171168
    %v1056 = vunpack.c.0.s8 %v1055
    %v1057 = vlaneseq
    %v1058 = vshrl.u32 %v1057, 7
    %v1059 = vsub.s32 %v1056, %v1058
    %v1060 = vrot.slane %v62, %v1059
    %v1062 = vunpack.c.l.s4 1966171168
    %v1063 = vunpack.c.0.s8 %v1062
    %v1064 = vlaneseq
    %v1065 = vshrl.u32 %v1064, 7
    %v1066 = vsub.s32 %v1063, %v1065
    %v1067 = vrot.slane %v1053, %v1066
    %v1068 = vcombine.high %v1060, %v1060
    %v1069 = vcombine.high %v1067, %v1067
    %v1071 = vunpack.c.l.s4 1966171168
    %v1072 = vunpack.c.0.s8 %v1071
    %v1073 = vlaneseq
    %v1074 = vshrl.u32 %v1073, 7
    %v1075 = vsub.s32 %v1072, %v1074
    %v1076 = vrot.slane %v1060, %v1075
    %v1078 = vunpack.c.l.s4 1966171168
    %v1079 = vunpack.c.0.s8 %v1078
    %v1080 = vlaneseq
    %v1081 = vshrl.u32 %v1080, 7
    %v1082 = vsub.s32 %v1079, %v1081
    %v1083 = vrot.slane %v1067, %v1082
    %v1085 = vunpack.c.l.s4 1966171168
    %v1086 = vunpack.c.0.s8 %v1085
    %v1087 = vlaneseq
    %v1088 = vshrl.u32 %v1087, 7
    %v1089 = vsub.s32 %v1086, %v1088
    %v1090 = vrot.slane %v1068, %v1089
    %v1092 = vunpack.c.l.s4 1966171168
    %v1093 = vunpack.c.0.s8 %v1092
    %v1094 = vlaneseq
    %v1095 = vshrl.u32 %v1094, 7
    %v1096 = vsub.s32 %v1093, %v1095
    %v1097 = vrot.slane %v1069, %v1096
    %v1098 = vcombine.high %v1076, %v1076
    %v1099 = vcombine.high %v1083, %v1083
    %v1100 = vcombine.high %v1090, %v1090
    %v1101 = vcombine.high %v1097, %v1097
    %v1102 = vcombine.high %v63, %v63
    %v1104 = vunpack.c.l.s4 1966171168
    %v1105 = vunpack.c.0.s8 %v1104
    %v1106 = vlaneseq
    %v1107 = vshrl.u32 %v1106, 7
    %v1108 = vsub.s32 %v1105, %v1107
    %v1109 = vrot.slane %v63, %v1108
    %v1111 = vunpack.c.l.s4 1966171168
    %v1112 = vunpack.c.0.s8 %v1111
    %v1113 = vlaneseq
    %v1114 = vshrl.u32 %v1113, 7
    %v1115 = vsub.s32 %v1112, %v1114
    %v1116 = vrot.slane %v1102, %v1115
    %v1117 = vcombine.high %v1109, %v1109
    %v1118 = vcombine.high %v1116, %v1116
    %v1120 = vunpack.c.l.s4 1966171168
    %v1121 = vunpack.c.0.s8 %v1120
    %v1122 = vlaneseq
    %v1123 = vshrl.u32 %v1122, 7
    %v1124 = vsub.s32 %v1121, %v1123
    %v1125 = vrot.slane %v1109, %v1124
    %v1127 = vunpack.c.l.s4 1966171168
    %v1128 = vunpack.c.0.s8 %v1127
    %v1129 = vlaneseq
    %v1130 = vshrl.u32 %v1129, 7
    %v1131 = vsub.s32 %v1128, %v1130
    %v1132 = vrot.slane %v1116, %v1131
    %v1134 = vunpack.c.l.s4 1966171168
    %v1135 = vunpack.c.0.s8 %v1134
    %v1136 = vlaneseq
    %v1137 = vshrl.u32 %v1136, 7
    %v1138 = vsub.s32 %v1135, %v1137
    %v1139 = vrot.slane %v1117, %v1138
    %v1141 = vunpack.c.l.s4 1966171168
    %v1142 = vunpack.c.0.s8 %v1141
    %v1143 = vlaneseq
    %v1144 = vshrl.u32 %v1143, 7
    %v1145 = vsub.s32 %v1142, %v1144
    %v1146 = vrot.slane %v1118, %v1145
    %v1147 = vcombine.high %v1125, %v1125
    %v1148 = vcombine.high %v1132, %v1132
    %v1149 = vcombine.high %v1139, %v1139
    %v1150 = vcombine.high %v1146, %v1146
    %v1151 = vcombine.high %v64, %v64
    %v1153 = vunpack.c.l.s4 1966171168
    %v1154 = vunpack.c.0.s8 %v1153
    %v1155 = vlaneseq
    %v1156 = vshrl.u32 %v1155, 7
    %v1157 = vsub.s32 %v1154, %v1156
    %v1158 = vrot.slane %v64, %v1157
    %v1160 = vunpack.c.l.s4 1966171168
    %v1161 = vunpack.c.0.s8 %v1160
    %v1162 = vlaneseq
    %v1163 = vshrl.u32 %v1162, 7
    %v1164 = vsub.s32 %v1161, %v1163
    %v1165 = vrot.slane %v1151, %v1164
    %v1166 = vcombine.high %v1158, %v1158
    %v1167 = vcombine.high %v1165, %v1165
    %v1169 = vunpack.c.l.s4 1966171168
    %v1170 = vunpack.c.0.s8 %v1169
    %v1171 = vlaneseq
    %v1172 = vshrl.u32 %v1171, 7
    %v1173 = vsub.s32 %v1170, %v1172
    %v1174 = vrot.slane %v1158, %v1173
    %v1176 = vunpack.c.l.s4 1966171168
    %v1177 = vunpack.c.0.s8 %v1176
    %v1178 = vlaneseq
    %v1179 = vshrl.u32 %v1178, 7
    %v1180 = vsub.s32 %v1177, %v1179
    %v1181 = vrot.slane %v1165, %v1180
    %v1183 = vunpack.c.l.s4 1966171168
    %v1184 = vunpack.c.0.s8 %v1183
    %v1185 = vlaneseq
    %v1186 = vshrl.u32 %v1185, 7
    %v1187 = vsub.s32 %v1184, %v1186
    %v1188 = vrot.slane %v1166, %v1187
    %v1190 = vunpack.c.l.s4 1966171168
    %v1191 = vunpack.c.0.s8 %v1190
    %v1192 = vlaneseq
    %v1193 = vshrl.u32 %v1192, 7
    %v1194 = vsub.s32 %v1191, %v1193
    %v1195 = vrot.slane %v1167, %v1194
    %v1196 = vcombine.high %v1174, %v1174
    %v1197 = vcombine.high %v1181, %v1181
    %v1198 = vcombine.high %v1188, %v1188
    %v1199 = vcombine.high %v1195, %v1195
    %v1200 = vcombine.high %v65, %v65
    %v1202 = vunpack.c.l.s4 1966171168
    %v1203 = vunpack.c.0.s8 %v1202
    %v1204 = vlaneseq
    %v1205 = vshrl.u32 %v1204, 7
    %v1206 = vsub.s32 %v1203, %v1205
    %v1207 = vrot.slane %v65, %v1206
    %v1209 = vunpack.c.l.s4 1966171168
    %v1210 = vunpack.c.0.s8 %v1209
    %v1211 = vlaneseq
    %v1212 = vshrl.u32 %v1211, 7
    %v1213 = vsub.s32 %v1210, %v1212
    %v1214 = vrot.slane %v1200, %v1213
    %v1215 = vcombine.high %v1207, %v1207
    %v1216 = vcombine.high %v1214, %v1214
    %v1218 = vunpack.c.l.s4 1966171168
    %v1219 = vunpack.c.0.s8 %v1218
    %v1220 = vlaneseq
    %v1221 = vshrl.u32 %v1220, 7
    %v1222 = vsub.s32 %v1219, %v1221
    %v1223 = vrot.slane %v1207, %v1222
    %v1225 = vunpack.c.l.s4 1966171168
    %v1226 = vunpack.c.0.s8 %v1225
    %v1227 = vlaneseq
    %v1228 = vshrl.u32 %v1227, 7
    %v1229 = vsub.s32 %v1226, %v1228
    %v1230 = vrot.slane %v1214, %v1229
    %v1232 = vunpack.c.l.s4 1966171168
    %v1233 = vunpack.c.0.s8 %v1232
    %v1234 = vlaneseq
    %v1235 = vshrl.u32 %v1234, 7
    %v1236 = vsub.s32 %v1233, %v1235
    %v1237 = vrot.slane %v1215, %v1236
    %v1239 = vunpack.c.l.s4 1966171168
    %v1240 = vunpack.c.0.s8 %v1239
    %v1241 = vlaneseq
    %v1242 = vshrl.u32 %v1241, 7
    %v1243 = vsub.s32 %v1240, %v1242
    %v1244 = vrot.slane %v1216, %v1243
    %v1245 = vcombine.high %v1223, %v1223
    %v1246 = vcombine.high %v1230, %v1230
    %v1247 = vcombine.high %v1237, %v1237
    %v1248 = vcombine.high %v1244, %v1244
    %v1249 = vcombine.high %v66, %v66
    %v1251 = vunpack.c.l.s4 1966171168
    %v1252 = vunpack.c.0.s8 %v1251
    %v1253 = vlaneseq
    %v1254 = vshrl.u32 %v1253, 7
    %v1255 = vsub.s32 %v1252, %v1254
    %v1256 = vrot.slane %v66, %v1255
    %v1258 = vunpack.c.l.s4 1966171168
    %v1259 = vunpack.c.0.s8 %v1258
    %v1260 = vlaneseq
    %v1261 = vshrl.u32 %v1260, 7
    %v1262 = vsub.s32 %v1259, %v1261
    %v1263 = vrot.slane %v1249, %v1262
    %v1264 = vcombine.high %v1256, %v1256
    %v1265 = vcombine.high %v1263, %v1263
    %v1267 = vunpack.c.l.s4 1966171168
    %v1268 = vunpack.c.0.s8 %v1267
    %v1269 = vlaneseq
    %v1270 = vshrl.u32 %v1269, 7
    %v1271 = vsub.s32 %v1268, %v1270
    %v1272 = vrot.slane %v1256, %v1271
    %v1274 = vunpack.c.l.s4 1966171168
    %v1275 = vunpack.c.0.s8 %v1274
    %v1276 = vlaneseq
    %v1277 = vshrl.u32 %v1276, 7
    %v1278 = vsub.s32 %v1275, %v1277
    %v1279 = vrot.slane %v1263, %v1278
    %v1281 = vunpack.c.l.s4 1966171168
    %v1282 = vunpack.c.0.s8 %v1281
    %v1283 = vlaneseq
    %v1284 = vshrl.u32 %v1283, 7
    %v1285 = vsub.s32 %v1282, %v1284
    %v1286 = vrot.slane %v1264, %v1285
    %v1288 = vunpack.c.l.s4 1966171168
    %v1289 = vunpack.c.0.s8 %v1288
    %v1290 = vlaneseq
    %v1291 = vshrl.u32 %v1290, 7
    %v1292 = vsub.s32 %v1289, %v1291
    %v1293 = vrot.slane %v1265, %v1292
    %v1294 = vcombine.high %v1272, %v1272
    %v1295 = vcombine.high %v1279, %v1279
    %v1296 = vcombine.high %v1286, %v1286
    %v1297 = vcombine.high %v1293, %v1293
    %v1298 = vcombine.high %v67, %v67
    %v1300 = vunpack.c.l.s4 1966171168
    %v1301 = vunpack.c.0.s8 %v1300
    %v1302 = vlaneseq
    %v1303 = vshrl.u32 %v1302, 7
    %v1304 = vsub.s32 %v1301, %v1303
    %v1305 = vrot.slane %v67, %v1304
    %v1307 = vunpack.c.l.s4 1966171168
    %v1308 = vunpack.c.0.s8 %v1307
    %v1309 = vlaneseq
    %v1310 = vshrl.u32 %v1309, 7
    %v1311 = vsub.s32 %v1308, %v1310
    %v1312 = vrot.slane %v1298, %v1311
    %v1313 = vcombine.high %v1305, %v1305
    %v1314 = vcombine.high %v1312, %v1312
    %v1316 = vunpack.c.l.s4 1966171168
    %v1317 = vunpack.c.0.s8 %v1316
    %v1318 = vlaneseq
    %v1319 = vshrl.u32 %v1318, 7
    %v1320 = vsub.s32 %v1317, %v1319
    %v1321 = vrot.slane %v1305, %v1320
    %v1323 = vunpack.c.l.s4 1966171168
    %v1324 = vunpack.c.0.s8 %v1323
    %v1325 = vlaneseq
    %v1326 = vshrl.u32 %v1325, 7
    %v1327 = vsub.s32 %v1324, %v1326
    %v1328 = vrot.slane %v1312, %v1327
    %v1330 = vunpack.c.l.s4 1966171168
    %v1331 = vunpack.c.0.s8 %v1330
    %v1332 = vlaneseq
    %v1333 = vshrl.u32 %v1332, 7
    %v1334 = vsub.s32 %v1331, %v1333
    %v1335 = vrot.slane %v1313, %v1334
    %v1337 = vunpack.c.l.s4 1966171168
    %v1338 = vunpack.c.0.s8 %v1337
    %v1339 = vlaneseq
    %v1340 = vshrl.u32 %v1339, 7
    %v1341 = vsub.s32 %v1338, %v1340
    %v1342 = vrot.slane %v1314, %v1341
    %v1343 = vcombine.high %v1321, %v1321
    %v1344 = vcombine.high %v1328, %v1328
    %v1345 = vcombine.high %v1335, %v1335
    %v1346 = vcombine.high %v1342, %v1342
    %v1347 = vcombine.high %v68, %v68
    %v1349 = vunpack.c.l.s4 1966171168
    %v1350 = vunpack.c.0.s8 %v1349
    %v1351 = vlaneseq
    %v1352 = vshrl.u32 %v1351, 7
    %v1353 = vsub.s32 %v1350, %v1352
    %v1354 = vrot.slane %v68, %v1353
    %v1356 = vunpack.c.l.s4 1966171168
    %v1357 = vunpack.c.0.s8 %v1356
    %v1358 = vlaneseq
    %v1359 = vshrl.u32 %v1358, 7
    %v1360 = vsub.s32 %v1357, %v1359
    %v1361 = vrot.slane %v1347, %v1360
    %v1362 = vcombine.high %v1354, %v1354
    %v1363 = vcombine.high %v1361, %v1361
    %v1365 = vunpack.c.l.s4 1966171168
    %v1366 = vunpack.c.0.s8 %v1365
    %v1367 = vlaneseq
    %v1368 = vshrl.u32 %v1367, 7
    %v1369 = vsub.s32 %v1366, %v1368
    %v1370 = vrot.slane %v1354, %v1369
    %v1372 = vunpack.c.l.s4 1966171168
    %v1373 = vunpack.c.0.s8 %v1372
    %v1374 = vlaneseq
    %v1375 = vshrl.u32 %v1374, 7
    %v1376 = vsub.s32 %v1373, %v1375
    %v1377 = vrot.slane %v1361, %v1376
    %v1379 = vunpack.c.l.s4 1966171168
    %v1380 = vunpack.c.0.s8 %v1379
    %v1381 = vlaneseq
    %v1382 = vshrl.u32 %v1381, 7
    %v1383 = vsub.s32 %v1380, %v1382
    %v1384 = vrot.slane %v1362, %v1383
    %v1386 = vunpack.c.l.s4 1966171168
    %v1387 = vunpack.c.0.s8 %v1386
    %v1388 = vlaneseq
    %v1389 = vshrl.u32 %v1388, 7
    %v1390 = vsub.s32 %v1387, %v1389
    %v1391 = vrot.slane %v1363, %v1390
    %v1392 = vcombine.high %v1370, %v1370
    %v1393 = vcombine.high %v1377, %v1377
    %v1394 = vcombine.high %v1384, %v1384
    %v1395 = vcombine.high %v1391, %v1391
    %v1396 = vcombine.high %v69, %v69
    %v1398 = vunpack.c.l.s4 1966171168
    %v1399 = vunpack.c.0.s8 %v1398
    %v1400 = vlaneseq
    %v1401 = vshrl.u32 %v1400, 7
    %v1402 = vsub.s32 %v1399, %v1401
    %v1403 = vrot.slane %v69, %v1402
    %v1405 = vunpack.c.l.s4 1966171168
    %v1406 = vunpack.c.0.s8 %v1405
    %v1407 = vlaneseq
    %v1408 = vshrl.u32 %v1407, 7
    %v1409 = vsub.s32 %v1406, %v1408
    %v1410 = vrot.slane %v1396, %v1409
    %v1411 = vcombine.high %v1403, %v1403
    %v1413 = vunpack.c.l.s4 1966171168
    %v1414 = vunpack.c.0.s8 %v1413
    %v1415 = vlaneseq
    %v1416 = vshrl.u32 %v1415, 7
    %v1417 = vsub.s32 %v1414, %v1416
    %v1418 = vrot.slane %v1403, %v1417
    %v1420 = vunpack.c.l.s4 1966171168
    %v1421 = vunpack.c.0.s8 %v1420
    %v1422 = vlaneseq
    %v1423 = vshrl.u32 %v1422, 7
    %v1424 = vsub.s32 %v1421, %v1423
    %v1425 = vrot.slane %v1410, %v1424
    %v1427 = vunpack.c.l.s4 1966171168
    %v1428 = vunpack.c.0.s8 %v1427
    %v1429 = vlaneseq
    %v1430 = vshrl.u32 %v1429, 7
    %v1431 = vsub.s32 %v1428, %v1430
    %v1432 = vrot.slane %v1411, %v1431
    %v1433 = vcombine.high %v1418, %v1418
    %v1434 = vcombine.high %v1432, %v1432
    %v2463 = vunpack.c.l.b16 %v70
    %v2464 = vunpack.c.l.b16 %v71
    %v2465 = vunpack.c.l.b16 %v72
    %v2466 = vunpack.c.l.b16 %v73
    %v2467 = vunpack.c.l.b16 %v74
    %v2468 = vunpack.c.l.b16 %v75
    %v2469 = vunpack.c.l.b16 %v76
    %v2470 = vunpack.c.l.b16 %v77
    %v2471 = vunpack.c.l.b16 %v78
    %v2472 = vunpack.c.l.b16 %v79
    %v2473 = vunpack.c.l.b16 %v80
    %v2474 = vunpack.c.l.b16 %v81
    %v2475 = vunpack.c.l.b16 %v82
    %v2476 = vunpack.c.l.b16 %v83
    %v2477 = vunpack.c.l.b16 %v84
    %v2478 = vunpack.c.l.b16 %v85
    %v2479 = vunpack.c.l.b16 %v86
    %v2480 = vunpack.c.l.b16 %v87
    %v2481 = vunpack.c.l.b16 %v88
    %v2482 = vunpack.c.l.b16 %v89
    %v2483 = vunpack.c.l.b16 %v90
    %v2484 = vunpack.c.l.b16 %v91
    %v2485 = vunpack.c.l.b16 %v92
    %v2486 = vunpack.c.l.b16 %v93
    %v2487 = vunpack.c.l.b16 %v94
    %v2488 = vunpack.c.l.b16 %v95
    %v2489 = vunpack.c.l.b16 %v96
    %v2490 = vunpack.c.l.b16 %v97
    %v2491 = vunpack.c.l.b16 %v98
    %v2492 = vunpack.c.l.b16 %v99
    %v2493 = vunpack.c.l.b16 %v100
    %v2494 = vunpack.c.l.b16 %v101
    %v2495 = vunpack.c.l.b16 %v102
    %v2496 = vunpack.c.l.b16 %v103
    %v2497 = vunpack.c.l.b16 %v104
    %v2498 = vunpack.c.l.b16 %v105
    %v2499 = vunpack.c.l.b16 %v106
    %v2500 = vunpack.c.l.b16 %v107
    %v2501 = vunpack.c.l.b16 %v108
    %v2502 = vunpack.c.l.b16 %v109
    %v2503 = vunpack.c.l.b16 %v110
    %v2504 = vunpack.c.l.b16 %v111
    %v2505 = vunpack.c.l.b16 %v112
    %v2506 = vunpack.c.l.b16 %v113
    %v2507 = vunpack.c.l.b16 %v114
    %v2508 = vunpack.c.l.b16 %v115
    %v2509 = vunpack.c.l.b16 %v116
    %v2510 = vunpack.c.l.b16 %v117
    %v2511 = vunpack.c.l.b16 %v118
    %v2512 = vunpack.c.l.b16 %v119
    %v2513 = vunpack.c.l.b16 %v120
    %v2514 = vunpack.c.l.b16 %v121
    %v2515 = vunpack.c.l.b16 %v122
    %v2516 = vunpack.c.l.b16 %v123
    %v2517 = vunpack.c.l.b16 %v124
    %v2518 = vunpack.c.l.b16 %v125
    %v2519 = vunpack.c.l.b16 %v126
    %v2520 = vunpack.c.l.b16 %v127
    %v2521 = vunpack.c.l.b16 %v128
    %v2522 = vunpack.c.l.b16 %v129
    %v2523 = vunpack.c.l.b16 %v130
    %v2524 = vunpack.c.l.b16 %v131
    %v2525 = vunpack.c.l.b16 %v132
    %v2526 = vunpack.c.l.b16 %v133
    %v2527 = vunpack.c.l.b16 %v134
    %v2528 = vunpack.c.l.b16 %v135
    %v2529 = vunpack.c.l.b16 %v136
    %v2530 = vunpack.c.l.b16 %v137
    %v2531 = vunpack.c.l.b16 %v138
    %v2532 = vunpack.c.l.b16 %v139
    %v2533 = vunpack.c.l.b16 %v140
    %v2534 = vunpack.c.l.b16 %v141
    %v2535 = vunpack.c.l.b16 %v142
    %v2536 = vunpack.c.l.b16 %v143
    %v2537 = vunpack.c.l.b16 %v144
    %v2538 = vunpack.c.l.b16 %v145
    %v2539 = vunpack.c.l.b16 %v146
    %v2540 = vunpack.c.l.b16 %v147
    %v2541 = vunpack.c.l.b16 %v148
    %v2542 = vunpack.c.l.b16 %v149
    %v2543 = vunpack.c.l.b16 %v150
    %v2544 = vunpack.c.l.b16 %v151
    %v2545 = vunpack.c.l.b16 %v152
    %v2546 = vunpack.c.l.b16 %v153
    %v2547 = vunpack.c.l.b16 %v154
    %v2548 = vunpack.c.l.b16 %v155
    %v2549 = vunpack.c.l.b16 %v156
    %v2550 = vunpack.c.l.b16 %v157
    %v2551 = vunpack.c.l.b16 %v158
    %v2552 = vunpack.c.l.b16 %v159
    %v2553 = vunpack.c.l.b16 %v160
    %v2554 = vunpack.c.l.b16 %v161
    %v2555 = vunpack.c.l.b16 %v162
    %v2556 = vunpack.c.l.b16 %v163
    %v2557 = vunpack.c.l.b16 %v164
    %v2558 = vunpack.c.l.b16 %v165
    %v2559 = vunpack.c.l.b16 %v166
    %v2560 = vunpack.c.l.b16 %v167
    %v2561 = vunpack.c.l.b16 %v168
    %v2562 = vunpack.c.l.b16 %v169
    %v2563 = vunpack.c.l.b16 %v170
    %v2564 = vunpack.c.l.b16 %v171
    %v2565 = vunpack.c.l.b16 %v172
    %v2566 = vunpack.c.l.b16 %v173
    %v2567 = vunpack.c.l.b16 %v174
    %v2568 = vunpack.c.l.b16 %v175
    %v2569 = vunpack.c.l.b16 %v176
    %v2570 = vunpack.c.l.b16 %v177
    %v2571 = vunpack.c.l.b16 %v178
    %v2572 = vunpack.c.l.b16 %v179
    %v2573 = vunpack.c.l.b16 %v180
    %v2574 = vunpack.c.l.b16 %v181
    %v2575 = vunpack.c.l.b16 %v182
    %v2576 = vunpack.c.l.b16 %v183
    %v2577 = vunpack.c.l.b16 %v184
    %v2578 = vunpack.c.l.b16 %v185
    %v2579 = vunpack.c.l.b16 %v186
    %v2580 = vunpack.c.l.b16 %v187
    %v2581 = vunpack.c.l.b16 %v188
    %v2582 = vunpack.c.l.b16 %v189
    %v2583 = vunpack.c.l.b16 %v190
    %v2584 = vunpack.c.l.b16 %v191
    %v2585 = vunpack.c.l.b16 %v192
    %v2586 = vunpack.c.l.b16 %v193
    %v2587 = vunpack.c.l.b16 %v194
    %v2588 = vunpack.c.l.b16 %v195
    %v2589 = vunpack.c.l.b16 %v196
    %v2590 = vunpack.c.l.b16 %v197
    %v2591 = vunpack.c.l.b16 %v198
    %v2592 = vunpack.c.l.b16 %v199
    %v2593 = vunpack.c.l.b16 %v200
    %v2594 = vunpack.c.l.b16 %v201
    %v2595 = vunpack.c.l.b16 %v202
    %v2596 = vunpack.c.l.b16 %v203
    %v2597 = vunpack.c.l.b16 %v204
    %v2598 = vunpack.c.l.b16 %v205
    %v2599 = vunpack.c.l.b16 %v206
    %v2600 = vunpack.c.l.b16 %v207
    %v2601 = vunpack.c.l.b16 %v208
    %v2602 = vunpack.c.l.b16 %v209
    %v2603 = vunpack.c.l.b16 %v210
    %v2604 = vunpack.c.l.b16 %v211
    %v2605 = vunpack.c.l.b16 %v212
    %v2606 = vunpack.c.l.b16 %v213
    %v2607 = vunpack.c.l.b16 %v214
    %v2608 = vunpack.c.l.b16 %v215
    %v2609 = vunpack.c.l.b16 %v216
    %v2610 = vunpack.c.l.b16 %v217
    %v2611 = vunpack.c.l.b16 %v218
    %v2612 = vunpack.c.l.b16 %v219
    %v2613 = vunpack.c.l.b16 %v220
    %v2614 = vunpack.c.l.b16 %v221
    %v2615 = vunpack.c.l.b16 %v222
    %v2616 = vunpack.c.l.b16 %v223
    %v2617 = vunpack.c.l.b16 %v224
    %v2618 = vunpack.c.l.b16 %v225
    %v2619 = vunpack.c.l.b16 %v226
    %v2620 = vunpack.c.l.b16 %v227
    %v2621 = vunpack.c.l.b16 %v228
    %v2622 = vunpack.c.l.b16 %v229
    %v2623 = vunpack.c.l.b16 %v230
    %v2624 = vunpack.c.l.b16 %v231
    %v2625 = vunpack.c.l.b16 %v232
    %v2626 = vunpack.c.l.b16 %v233
    %v2627 = vunpack.c.l.b16 %v234
    %v2628 = vunpack.c.l.b16 %v235
    %v2629 = vunpack.c.l.b16 %v236
    %v2630 = vunpack.c.l.b16 %v237
    %v2631 = vunpack.c.l.b16 %v238
    %v2632 = vunpack.c.l.b16 %v239
    %v2633 = vunpack.c.l.b16 %v240
    %v2634 = vunpack.c.l.b16 %v241
    %v2635 = vunpack.c.l.b16 %v242
    %v2636 = vunpack.c.l.b16 %v243
    %v2637 = vunpack.c.l.b16 %v244
    %v2638 = vunpack.c.l.b16 %v245
    %v2639 = vunpack.c.l.b16 %v246
    %v2640 = vunpack.c.l.b16 %v247
    %v2641 = vunpack.c.l.b16 %v248
    %v2642 = vunpack.c.l.b16 %v249
    %v2643 = vunpack.c.l.b16 %v250
    %v2644 = vunpack.c.l.b16 %v251
    %v2645 = vunpack.c.l.b16 %v252
    %v2646 = vunpack.c.l.b16 %v253
    %v2647 = vunpack.c.l.b16 %v254
    %v2648 = vunpack.c.l.b16 %v255
    %v2649 = vunpack.c.l.b16 %v256
    %v2650 = vunpack.c.l.b16 %v257
    %v2651 = vunpack.c.l.b16 %v258
    %v2652 = vunpack.c.l.b16 %v259
    %v2653 = vunpack.c.l.b16 %v260
    %v2654 = vunpack.c.l.b16 %v261
    %v2655 = vunpack.c.l.b16 %v262
    %v2656 = vunpack.c.l.b16 %v263
    %v2657 = vunpack.c.l.b16 %v264
    %v2658 = vunpack.c.l.b16 %v265
    %v2659 = vunpack.c.l.b16 %v266
    %v2660 = vunpack.c.l.b16 %v267
    %v2661 = vunpack.c.l.b16 %v268
    %v2662 = vunpack.c.l.b16 %v269
    %v2663 = vunpack.c.l.b16 %v270
    %v2664 = vunpack.c.l.b16 %v271
    %v2665 = vunpack.c.l.b16 %v272
    %v2666 = vunpack.c.l.b16 %v273
    %v2667 = vunpack.c.l.b16 %v274
    %v2668 = vunpack.c.l.b16 %v275
    %v2669 = vunpack.c.l.b16 %v276
    %v2670 = vunpack.c.l.b16 %v277
    %v2671 = vunpack.c.l.b16 %v278
    %v2672 = vunpack.c.l.b16 %v279
    %v2673 = vunpack.c.l.b16 %v280
    %v2674 = vunpack.c.l.b16 %v281
    %v2675 = vunpack.c.l.b16 %v282
    %v2676 = vunpack.c.l.b16 %v283
    %v2677 = vunpack.c.l.b16 %v284
    %v2678 = vunpack.c.l.b16 %v285
    %v2679 = vunpack.c.l.b16 %v286
    %v2680 = vunpack.c.l.b16 %v287
    %v2681 = vunpack.c.l.b16 %v288
    %v2682 = vunpack.c.l.b16 %v289
    %v2683 = vunpack.c.l.b16 %v290
    %v2684 = vunpack.c.l.b16 %v291
    %v2685 = vunpack.c.l.b16 %v292
    %v2686 = vunpack.c.l.b16 %v293
    %v2687 = vunpack.c.l.b16 %v294
    %v2688 = vunpack.c.l.b16 %v295
    %v2689 = vunpack.c.l.b16 %v296
    %v2690 = vunpack.c.l.b16 %v297
    %v2691 = vunpack.c.l.b16 %v298
    %v2692 = vunpack.c.l.b16 %v299
    %v2693 = vunpack.c.l.b16 %v300
    %v2694 = vunpack.c.l.b16 %v301
    %v2695 = vunpack.c.l.b16 %v302
    %v2696 = vunpack.c.l.b16 %v303
    %v2697 = vunpack.c.l.b16 %v304
    %v2698 = vunpack.c.l.b16 %v305
    %v2699 = vunpack.c.l.b16 %v306
    %v2700 = vunpack.c.l.b16 %v307
    %v2701 = vunpack.c.l.b16 %v308
    %v2702 = vunpack.c.l.b16 %v309
    %v2703 = vunpack.c.l.b16 %v310
    %v2704 = vunpack.c.l.b16 %v311
    %v2705 = vunpack.c.l.b16 %v312
    %v2706 = vunpack.c.l.b16 %v313
    %v2707 = vunpack.c.l.b16 %v314
    %v2708 = vunpack.c.l.b16 %v315
    %v2709 = vunpack.c.l.b16 %v316
    %v2710 = vunpack.c.l.b16 %v317
    %v2711 = vunpack.c.l.b16 %v318
    %v2712 = vunpack.c.l.b16 %v319
    %v2713 = vunpack.c.l.b16 %v320
    %v2714 = vunpack.c.l.b16 %v321
    %v2715 = vunpack.c.l.b16 %v322
    %v2716 = vunpack.c.l.b16 %v323
    %v2717 = vunpack.c.l.b16 %v324
    %v2718 = vunpack.c.l.b16 %v325
    %v2719 = vunpack.c.l.b16 %v326
    %v2720 = vunpack.c.l.b16 %v327
    %v2721 = vunpack.c.l.b16 %v328
    %v2722 = vunpack.c.l.b16 %v329
    %v2723 = vunpack.c.l.b16 %v330
    %v2724 = vunpack.c.l.b16 %v331
    %v2725 = vunpack.c.l.b16 %v332
    %v2726 = vunpack.c.l.b16 %v333
    %v2727 = vunpack.c.l.b16 %v334
    %v2728 = vunpack.c.l.b16 %v335
    %v2729 = vunpack.c.l.b16 %v336
    %v2730 = vunpack.c.l.b16 %v337
    %v2731 = vunpack.c.l.b16 %v338
    %v2732 = vunpack.c.l.b16 %v339
    %v2733 = vunpack.c.l.b16 %v340
    %v2734 = vunpack.c.l.b16 %v341
    %v2735 = vunpack.c.l.b16 %v342
    %v2736 = vunpack.c.l.b16 %v343
    %v2737 = vunpack.c.l.b16 %v344
    %v2738 = vunpack.c.l.b16 %v345
    %v2739 = vunpack.c.l.b16 %v346
    %v2740 = vunpack.c.l.b16 %v347
    %v2741 = vunpack.c.l.b16 %v348
    %v2742 = vunpack.c.l.b16 %v349
    %v2743 = vunpack.c.l.b16 %v350
    %v2744 = vunpack.c.l.b16 %v351
    %v2745 = vunpack.c.l.b16 %v352
    %v2746 = vunpack.c.l.b16 %v353
    %v2747 = vunpack.c.l.b16 %v354
    %v2748 = vunpack.c.l.b16 %v355
    %v2749 = vunpack.c.l.b16 %v356
    %v2750 = vunpack.c.l.b16 %v357
    %v2751 = vunpack.c.l.b16 %v358
    %v2752 = vunpack.c.l.b16 %v359
    %v2753 = vunpack.c.l.b16 %v360
    %v2754 = vunpack.c.l.b16 %v361
    %v2755 = vunpack.c.l.b16 %v362
    %v2756 = vunpack.c.l.b16 %v363
    %v2757 = vunpack.c.l.b16 %v364
    %v2758 = vunpack.c.l.b16 %v365
    %v2759 = vunpack.c.l.b16 %v366
    %v2760 = vunpack.c.l.b16 %v367
    %v2761 = vunpack.c.l.b16 %v368
    %v2762 = vunpack.c.l.b16 %v369
    %v2763 = vunpack.c.l.b16 %v370
    %v2764 = vunpack.c.l.b16 %v371
    %v2765 = vunpack.c.l.b16 %v372
    %v2766 = vunpack.c.l.b16 %v373
    %v2767 = vunpack.c.l.b16 %v374
    %v2768 = vunpack.c.l.b16 %v375
    %v2769 = vunpack.c.l.b16 %v376
    %v2770 = vunpack.c.l.b16 %v377
    %v2771 = vunpack.c.l.b16 %v378
    %v2772 = vunpack.c.l.b16 %v379
    %v2773 = vunpack.c.l.b16 %v380
    %v2774 = vunpack.c.l.b16 %v381
    %v2775 = vunpack.c.l.b16 %v382
    %v2776 = vunpack.c.l.b16 %v383
    %v2777 = vunpack.c.l.b16 %v384
    %v2778 = vunpack.c.l.b16 %v385
    %v2779 = vunpack.c.l.b16 %v386
    %v2780 = vunpack.c.l.b16 %v387
    %v2781 = vunpack.c.l.b16 %v388
    %v2782 = vunpack.c.l.b16 %v389
    %v2783 = vunpack.c.l.b16 %v390
    %v2784 = vunpack.c.l.b16 %v391
    %v2785 = vunpack.c.l.b16 %v392
    %v2786 = vunpack.c.l.b16 %v393
    %v2787 = vunpack.c.l.b16 %v394
    %v2788 = vunpack.c.l.b16 %v395
    %v2789 = vunpack.c.l.b16 %v396
    %v2790 = vunpack.c.l.b16 %v397
    %v2791 = vunpack.c.l.b16 %v398
    %v2792 = vunpack.c.l.b16 %v399
    %v2793 = vunpack.c.l.b16 %v400
    %v2794 = vunpack.c.l.b16 %v401
    %v2795 = vunpack.c.l.b16 %v402
    %v2796 = vunpack.c.l.b16 %v403
    %v2797 = vunpack.c.l.b16 %v404
    %v2798 = vunpack.c.l.b16 %v405
    %v2799 = vunpack.c.l.b16 %v406
    %v2800 = vunpack.c.l.b16 %v407
    %v2801 = vunpack.c.l.b16 %v408
    %v2802 = vunpack.c.l.b16 %v409
    %v2803 = vunpack.c.l.b16 %v410
    %v2804 = vunpack.c.l.b16 %v411
    %v2805 = vunpack.c.l.b16 %v412
    %v2806 = vunpack.c.l.b16 %v413
    %v2807 = vunpack.c.l.b16 %v414
    %v2808 = vunpack.c.l.b16 %v415
    %v2809 = vunpack.c.l.b16 %v416
    %v2810 = vunpack.c.l.b16 %v417
    %v2811 = vunpack.c.l.b16 %v418
    %v2812 = vunpack.c.l.b16 %v419
    %v2813 = vunpack.c.l.b16 %v420
    %v2814 = vunpack.c.l.b16 %v421
    %v2815 = vunpack.c.l.b16 %v422
    %v2816 = vunpack.c.l.b16 %v423
    %v2817 = vunpack.c.l.b16 %v424
    %v2818 = vunpack.c.l.b16 %v425
    %v2819 = vunpack.c.l.b16 %v426
    %v2820 = vunpack.c.l.b16 %v427
    %v2821 = vunpack.c.l.b16 %v428
    %v2822 = vunpack.c.l.b16 %v429
    %v2823 = vunpack.c.l.b16 %v430
    %v2824 = vunpack.c.l.b16 %v431
    %v2825 = vunpack.c.l.b16 %v432
    %v2826 = vunpack.c.l.b16 %v433
    %v2827 = vunpack.c.l.b16 %v434
    %v2828 = vunpack.c.l.b16 %v435
    %v2829 = vunpack.c.l.b16 %v436
    %v2830 = vunpack.c.l.b16 %v437
    %v2831 = vunpack.c.l.b16 %v438
    %v2832 = vunpack.c.l.b16 %v439
    %v2833 = vunpack.c.l.b16 %v440
    %v2834 = vunpack.c.l.b16 %v441
    %v2835 = vunpack.c.l.b16 %v442
    %v2836 = vunpack.c.l.b16 %v443
    %v2837 = vunpack.c.l.b16 %v444
    %v2838 = vunpack.c.l.b16 %v445
    %v2839 = vunpack.c.l.b16 %v446
    %v2840 = vunpack.c.l.b16 %v447
    %v2841 = vunpack.c.l.b16 %v448
    %v2842 = vunpack.c.l.b16 %v449
    %v2843 = vunpack.c.l.b16 %v450
    %v2844 = vunpack.c.l.b16 %v451
    %v2845 = vunpack.c.l.b16 %v452
    %v2846 = vunpack.c.l.b16 %v453
    %v2847 = vunpack.c.l.b16 %v454
    %v2848 = vunpack.c.l.b16 %v455
    %v2849 = vunpack.c.l.b16 %v456
    %v2850 = vunpack.c.l.b16 %v457
    %v2851 = vunpack.c.l.b16 %v458
    %v2852 = vunpack.c.l.b16 %v459
    %v2853 = vunpack.c.l.b16 %v460
    %v2854 = vunpack.c.l.b16 %v461
    %v2855 = vunpack.c.l.b16 %v462
    %v2856 = vunpack.c.l.b16 %v463
    %v2857 = vunpack.c.l.b16 %v464
    %v2858 = vunpack.c.l.b16 %v465
    %v2859 = vunpack.c.l.b16 %v466
    %v2860 = vunpack.c.l.b16 %v467
    %v2861 = vunpack.c.l.b16 %v468
    %v2862 = vunpack.c.l.b16 %v469
    %v2863 = vunpack.c.l.b16 %v470
    %v2864 = vunpack.c.l.b16 %v471
    %v2865 = vunpack.c.l.b16 %v472
    %v2866 = vunpack.c.l.b16 %v473
    %v2867 = vunpack.c.l.b16 %v474
    %v2868 = vunpack.c.l.b16 %v475
    %v2869 = vunpack.c.l.b16 %v476
    %v2870 = vunpack.c.l.b16 %v477
    %v2871 = vunpack.c.l.b16 %v478
    %v2872 = vunpack.c.l.b16 %v479
    %v2873 = vunpack.c.l.b16 %v480
    %v2874 = vunpack.c.l.b16 %v481
    %v2875 = vunpack.c.l.b16 %v482
    %v2876 = vunpack.c.l.b16 %v483
    %v2877 = vunpack.c.l.b16 %v484
    %v2878 = vunpack.c.l.b16 %v485
    %v2879 = vunpack.c.l.b16 %v486
    %v2880 = vunpack.c.l.b16 %v487
    %v2881 = vunpack.c.l.b16 %v488
    %v2882 = vunpack.c.l.b16 %v489
    %v2883 = vunpack.c.l.b16 %v490
    %v2884 = vunpack.c.l.b16 %v491
    %v2885 = vunpack.c.l.b16 %v492
    %v2886 = vunpack.c.l.b16 %v493
    %v2887 = vunpack.c.l.b16 %v494
    %v2888 = vunpack.c.l.b16 %v495
    %v2889 = vunpack.c.l.b16 %v496
    %v2890 = vunpack.c.l.b16 %v497
    %v2891 = vunpack.c.l.b16 %v498
    %v2892 = vunpack.c.l.b16 %v499
    %v2893 = vunpack.c.l.b16 %v500
    %v2894 = vunpack.c.l.b16 %v501
    %v2895 = vunpack.c.l.b16 %v502
    %v2896 = vunpack.c.l.b16 %v503
    %v2897 = vunpack.c.l.b16 %v504
    %v2898 = vunpack.c.l.b16 %v505
    %v2899 = vunpack.c.l.b16 %v506
    %v2900 = vunpack.c.l.b16 %v507
    %v2901 = vunpack.c.l.b16 %v508
    %v2902 = vunpack.c.l.b16 %v509
    %v2903 = vunpack.c.l.b16 %v510
    %v2904 = vunpack.c.l.b16 %v511
    %v2905 = vunpack.c.l.b16 %v512
    %v2906 = vunpack.c.l.b16 %v513
    %v2907 = vunpack.c.l.b16 %v514
    %v2908 = vunpack.c.l.b16 %v515
    %v2909 = vunpack.c.l.b16 %v516
    %v2910 = vunpack.c.l.b16 %v517
    %v2911 = vunpack.c.l.b16 %v518
    %v2912 = vunpack.c.l.b16 %v519
    %v2913 = vunpack.c.l.b16 %v520
    %v2914 = vunpack.c.l.b16 %v521
    %v2915 = vunpack.c.l.b16 %v522
    %v2916 = vunpack.c.l.b16 %v523
    %v2917 = vunpack.c.l.b16 %v524
    %v2918 = vunpack.c.l.b16 %v525
    %v2919 = vunpack.c.l.b16 %v526
    %v2920 = vunpack.c.l.b16 %v527
    %v2921 = vunpack.c.l.b16 %v528
    %v2922 = vunpack.c.l.b16 %v529
    %v2923 = vunpack.c.l.b16 %v530
    %v2924 = vunpack.c.l.b16 %v531
    %v2925 = vunpack.c.l.b16 %v532
    %v2926 = vunpack.c.l.b16 %v533
    %v2927 = vunpack.c.l.b16 %v534
    %v2928 = vunpack.c.l.b16 %v535
    %v2929 = vunpack.c.l.b16 %v536
    %v2930 = vunpack.c.l.b16 %v537
    %v2931 = vunpack.c.l.b16 %v538
    %v2932 = vunpack.c.l.b16 %v539
    %v2933 = vunpack.c.l.b16 %v540
    %v2934 = vunpack.c.l.b16 %v541
    %v2935 = vunpack.c.l.b16 %v542
    %v2936 = vunpack.c.l.b16 %v543
    %v2937 = vunpack.c.l.b16 %v544
    %v2938 = vunpack.c.l.b16 %v545
    %v2939 = vunpack.c.l.b16 %v546
    %v2940 = vunpack.c.l.b16 %v547
    %v2941 = vunpack.c.l.b16 %v548
    %v2942 = vunpack.c.l.b16 %v549
    %v2943 = vunpack.c.l.b16 %v550
    %v2944 = vunpack.c.l.b16 %v551
    %v2945 = vunpack.c.l.b16 %v552
    %v2946 = vunpack.c.l.b16 %v553
    %v2947 = vunpack.c.l.b16 %v554
    %v2948 = vunpack.c.l.b16 %v555
    %v2949 = vunpack.c.l.b16 %v556
    %v2950 = vunpack.c.l.b16 %v557
    %v2951 = vunpack.c.l.b16 %v558
    %v2952 = vunpack.c.l.b16 %v559
    %v2953 = vunpack.c.l.b16 %v560
    %v2954 = vunpack.c.l.b16 %v561
    %v2955 = vunpack.c.l.b16 %v562
    %v2956 = vunpack.c.l.b16 %v563
    %v2957 = vunpack.c.l.b16 %v564
    %v2958 = vunpack.c.l.b16 %v565
    %v2959 = vunpack.c.l.b16 %v566
    %v2960 = vunpack.c.l.b16 %v567
    %v2961 = vunpack.c.l.b16 %v568
    %v2962 = vunpack.c.l.b16 %v569
    %v2963 = vunpack.c.l.b16 %v570
    %v2964 = vunpack.c.l.b16 %v571
    %v2965 = vunpack.c.l.b16 %v572
    %v2966 = vunpack.c.l.b16 %v573
    %v2967 = vunpack.c.l.b16 %v574
    %v2968 = vunpack.c.l.b16 %v575
    %v2969 = vunpack.c.l.b16 %v576
    %v2970 = vunpack.c.l.b16 %v577
    %v2971 = vunpack.c.l.b16 %v578
    %v2972 = vunpack.c.l.b16 %v579
    %v2973 = vunpack.c.l.b16 %v580
    %v2974 = vunpack.c.l.b16 %v581
    %v2975 = vunpack.c.l.b16 %v582
    %v2976 = vunpack.c.l.b16 %v583
    %v2977 = vunpack.c.l.b16 %v584
    %v2978 = vunpack.c.l.b16 %v585
    %v2979 = vunpack.c.l.b16 %v586
    %v2980 = vunpack.c.l.b16 %v587
    %v2981 = vunpack.c.l.b16 %v588
    %v2982 = vunpack.c.l.b16 %v589
    %v2983 = vunpack.c.l.b16 %v590
    %v2984 = vunpack.c.l.b16 %v591
    %v2985 = vunpack.c.l.b16 %v592
    %v2986 = vunpack.c.l.b16 %v593
    %v2987 = vunpack.c.l.b16 %v594
    %v2988 = vunpack.c.l.b16 %v595
    %v2989 = vunpack.c.l.b16 %v596
    %v2990 = vunpack.c.l.b16 %v597
    %v2991 = vunpack.c.l.b16 %v598
    %v2992 = vunpack.c.l.b16 %v599
    %v2993 = vunpack.c.l.b16 %v600
    %v2994 = vunpack.c.l.b16 %v601
    %v2995 = vunpack.c.l.b16 %v602
    %v2996 = vunpack.c.l.b16 %v603
    %v2997 = vunpack.c.l.b16 %v604
    %v2998 = vunpack.c.l.b16 %v605
    %v2999 = vunpack.c.l.b16 %v606
    %v3000 = vunpack.c.l.b16 %v607
    %v3001 = vunpack.c.l.b16 %v608
    %v3002 = vunpack.c.l.b16 %v609
    %v3003 = vunpack.c.l.b16 %v610
    %v3004 = vunpack.c.l.b16 %v611
    %v3005 = vunpack.c.l.b16 %v612
    %v3006 = vunpack.c.l.b16 %v613
    %v3007 = vunpack.c.l.b16 %v614
    %v3008 = vunpack.c.l.b16 %v615
    %v3009 = vunpack.c.l.b16 %v616
    %v3010 = vunpack.c.l.b16 %v617
    %v3011 = vunpack.c.l.b16 %v618
    %v3012 = vunpack.c.l.b16 %v619
    %v3013 = vunpack.c.l.b16 %v620
    %v3014 = vunpack.c.l.b16 %v621
    %v3015 = vunpack.c.l.b16 %v622
    %v3016 = vunpack.c.l.b16 %v623
    %v3017 = vunpack.c.l.b16 %v624
    %v3018 = vunpack.c.l.b16 %v625
    %v3019 = vunpack.c.l.b16 %v626
    %v3020 = vunpack.c.l.b16 %v627
    %v3021 = vunpack.c.l.b16 %v628
    %v3022 = vunpack.c.l.b16 %v629
    %v3023 = vunpack.c.l.b16 %v630
    %v3024 = vunpack.c.l.b16 %v631
    %v3025 = vunpack.c.l.b16 %v632
    %v3026 = vunpack.c.l.b16 %v633
    %v3027 = vunpack.c.l.b16 %v634
    %v3028 = vunpack.c.l.b16 %v635
    %v3029 = vunpack.c.l.b16 %v636
    %v3030 = vunpack.c.l.b16 %v637
    %v3031 = vunpack.c.l.b16 %v638
    %v3032 = vunpack.c.l.b16 %v639
    %v3033 = vunpack.c.l.b16 %v640
    %v3034 = vunpack.c.l.b16 %v641
    %v3035 = vunpack.c.l.b16 %v642
    %v3036 = vunpack.c.l.b16 %v643
    %v3037 = vunpack.c.l.b16 %v644
    %v3038 = vunpack.c.l.b16 %v645
    %v3039 = vunpack.c.l.b16 %v646
    %v3040 = vunpack.c.l.b16 %v647
    %v3041 = vunpack.c.l.b16 %v648
    %v3042 = vunpack.c.l.b16 %v649
    %v3043 = vunpack.c.l.b16 %v650
    %v3044 = vunpack.c.l.b16 %v651
    %v3045 = vunpack.c.l.b16 %v652
    %v3046 = vunpack.c.l.b16 %v653
    %v3047 = vunpack.c.l.b16 %v654
    %v3048 = vunpack.c.l.b16 %v655
    %v3049 = vunpack.c.l.b16 %v656
    %v3050 = vunpack.c.l.b16 %v657
    %v3051 = vunpack.c.l.b16 %v658
    %v3052 = vunpack.c.l.b16 %v659
    %v3053 = vunpack.c.l.b16 %v660
    %v3054 = vunpack.c.l.b16 %v661
    %v3055 = vunpack.c.l.b16 %v662
    %v3056 = vunpack.c.l.b16 %v663
    %v3057 = vunpack.c.l.b16 %v664
    %v3058 = vunpack.c.l.b16 %v665
    %v3059 = vunpack.c.l.b16 %v666
    %v3060 = vunpack.c.l.b16 %v667
    %v3061 = vunpack.c.l.b16 %v668
    %v3062 = vunpack.c.l.b16 %v669
    %v3063 = vunpack.c.l.b16 %v670
    %v3064 = vunpack.c.l.b16 %v671
    %v3065 = vunpack.c.l.b16 %v672
    %v3066 = vunpack.c.l.b16 %v673
    %v3067 = vunpack.c.l.b16 %v674
    %v3068 = vunpack.c.l.b16 %v675
    %v3069 = vunpack.c.l.b16 %v676
    %v3070 = vunpack.c.l.b16 %v677
    %v3071 = vunpack.c.l.b16 %v678
    %v3072 = vunpack.c.l.b16 %v679
    %v3073 = vunpack.c.l.b16 %v680
    %v3074 = vunpack.c.l.b16 %v681
    %v3075 = vunpack.c.l.b16 %v682
    %v3076 = vunpack.c.l.b16 %v683
    %v3077 = vunpack.c.l.b16 %v684
    %v3078 = vunpack.c.l.b16 %v685
    %v3079 = vunpack.c.l.b16 %v686
    %v3080 = vunpack.c.l.b16 %v687
    %v3081 = vunpack.c.l.b16 %v688
    %v3082 = vunpack.c.l.b16 %v689
    %v3083 = vunpack.c.l.b16 %v690
    %v3084 = vunpack.c.l.b16 %v691
    %v3085 = vunpack.c.l.b16 %v692
    %v3086 = vunpack.c.l.b16 %v693
    %v3087 = vunpack.c.l.b16 %v694
    %v3088 = vunpack.c.l.b16 %v695
    %v3089 = vunpack.c.l.b16 %v696
    %v3090 = vunpack.c.l.b16 %v697
    %v3091 = vunpack.c.l.b16 %v698
    %v3092 = vunpack.c.l.b16 %v699
    %v3093 = vunpack.c.l.b16 %v700
    %v3094 = vunpack.c.l.b16 %v701
    %v3095 = vunpack.c.l.b16 %v702
    %v3096 = vunpack.c.l.b16 %v703
    %v3097 = vunpack.c.l.b16 %v704
    %v3098 = vunpack.c.l.b16 %v705
    %v3099 = vunpack.c.l.b16 %v706
    %v3100 = vunpack.c.l.b16 %v707
    %v3101 = vunpack.c.l.b16 %v708
    %v3102 = vunpack.c.l.b16 %v709
    %v3103 = vunpack.c.l.b16 %v710
    %v3104 = vunpack.c.l.b16 %v711
    %v3105 = vunpack.c.l.b16 %v712
    %v3106 = vunpack.c.l.b16 %v713
    %v3107 = vunpack.c.l.b16 %v714
    %v3108 = vunpack.c.l.b16 %v715
    %v3109 = vunpack.c.l.b16 %v716
    %v3110 = vunpack.c.l.b16 %v717
    %v3111 = vunpack.c.l.b16 %v718
    %v3112 = vunpack.c.l.b16 %v719
    %v3113 = vunpack.c.l.b16 %v720
    %v3114 = vunpack.c.l.b16 %v721
    %v3115 = vunpack.c.l.b16 %v722
    %v3116 = vunpack.c.l.b16 %v723
    %v3117 = vunpack.c.l.b16 %v724
    %v3118 = vunpack.c.l.b16 %v725
    %v3119 = vunpack.c.l.b16 %v726
    %v3120 = vunpack.c.l.b16 %v727
    %v3121 = vunpack.c.l.b16 %v728
    %v3122 = vunpack.c.l.b16 %v729
    %v3123 = vunpack.c.l.b16 %v730
    %v3124 = vunpack.c.l.b16 %v731
    %v3125 = vunpack.c.l.b16 %v732
    %v3126 = vunpack.c.l.b16 %v733
    %v3127 = vunpack.c.l.b16 %v734
    %v3128 = vunpack.c.l.b16 %v735
    %v3129 = vunpack.c.l.b16 %v736
    %v3130 = vunpack.c.l.b16 %v737
    %v3131 = vunpack.c.l.b16 %v738
    %v3132 = vunpack.c.l.b16 %v739
    %v3133 = vunpack.c.l.b16 %v740
    %v3134 = vunpack.c.l.b16 %v741
    %v3135 = vunpack.c.l.b16 %v742
    %v3136 = vunpack.c.l.b16 %v743
    %v3137 = vunpack.c.l.b16 %v744
    %v3138 = vunpack.c.l.b16 %v745
    %v3139 = vunpack.c.l.b16 %v746
    %v3140 = vunpack.c.l.b16 %v747
    %v3141 = vunpack.c.l.b16 %v748
    %v3142 = vunpack.c.l.b16 %v749
    %v3143 = vunpack.c.l.b16 %v750
    %v3144 = vunpack.c.l.b16 %v751
    %v3145 = vunpack.c.l.b16 %v752
    %v3146 = vunpack.c.l.b16 %v753
    %v3147 = vunpack.c.l.b16 %v754
    %v3148 = vunpack.c.l.b16 %v755
    %v3149 = vunpack.c.l.b16 %v756
    %v3150 = vunpack.c.l.b16 %v757
    %v3151 = vunpack.c.l.b16 %v758
    %v3152 = vunpack.c.l.b16 %v759
    %v3153 = vunpack.c.l.b16 %v760
    %v3154 = vunpack.c.l.b16 %v761
    %v3155 = vunpack.c.l.b16 %v762
    %v3156 = vunpack.c.l.b16 %v763
    %v3157 = vunpack.c.l.b16 %v764
    %v3158 = vunpack.c.l.b16 %v765
    %v3159 = vunpack.c.l.b16 %v766
    %v3160 = vunpack.c.l.b16 %v767
    %v3161 = vunpack.c.l.b16 %v768
    %v3162 = vunpack.c.l.b16 %v769
    %v3163 = vunpack.c.l.b16 %v770
    %v3164 = vunpack.c.l.b16 %v771
    %v3165 = vunpack.c.l.b16 %v772
    %v3166 = vunpack.c.l.b16 %v773
    %v3167 = vunpack.c.l.b16 %v774
    %v3168 = vunpack.c.l.b16 %v775
    %v3169 = vunpack.c.l.b16 %v776
    %v3170 = vunpack.c.l.b16 %v777
    %v3171 = vunpack.c.l.b16 %v778
    %v3172 = vunpack.c.l.b16 %v779
    %v3173 = vunpack.c.l.b16 %v780
    %v3174 = vunpack.c.l.b16 %v781
    %v3175 = vunpack.c.l.b16 %v782
    %v3176 = vunpack.c.l.b16 %v783
    %v3177 = vunpack.c.l.b16 %v784
    %v3178 = vunpack.c.l.b16 %v785
    %v3179 = vunpack.c.l.b16 %v786
    %v3180 = vunpack.c.l.b16 %v787
    %v3181 = vunpack.c.l.b16 %v788
    %v3182 = vunpack.c.l.b16 %v789
    %v3183 = vunpack.c.l.b16 %v790
    %v3184 = vunpack.c.l.b16 %v791
    %v3185 = vunpack.c.l.b16 %v792
    %v3186 = vunpack.c.l.b16 %v793
    %v3187 = vunpack.c.l.b16 %v794
    %v3188 = vunpack.c.l.b16 %v795
    %v3189 = vunpack.c.l.b16 %v796
    %v3190 = vunpack.c.l.b16 %v797
    %v3191 = vunpack.c.l.b16 %v798
    %v3192 = vunpack.c.l.b16 %v799
    %v3193 = vunpack.c.l.b16 %v800
    %v3194 = vunpack.c.l.b16 %v801
    %v3195 = vunpack.c.l.b16 %v802
    %v3196 = vunpack.c.l.b16 %v803
    %v3197 = vunpack.c.l.b16 %v804
    %v3198 = vunpack.c.l.b16 %v805
    %v3199 = vunpack.c.l.b16 %v806
    %v3200 = vunpack.c.l.b16 %v807
    %v3201 = vunpack.c.l.b16 %v808
    %v3202 = vunpack.c.l.b16 %v809
    %v3203 = vunpack.c.l.b16 %v810
    %v3204 = vunpack.c.l.b16 %v811
    %v3205 = vunpack.c.l.b16 %v812
    %v3206 = vunpack.c.l.b16 %v813
    %v3207 = vunpack.c.l.b16 %v814
    %v3208 = vunpack.c.l.b16 %v815
    %v3209 = vunpack.c.l.b16 %v816
    %v3210 = vunpack.c.l.b16 %v817
    %v3211 = vunpack.c.l.b16 %v818
    %v3212 = vunpack.c.l.b16 %v819
    %v3213 = vunpack.c.l.b16 %v820
    %v3214 = vunpack.c.l.b16 %v821
    %v3215 = vunpack.c.l.b16 %v822
    %v3216 = vunpack.c.l.b16 %v823
    %v3217 = vunpack.c.l.b16 %v824
    %v3218 = vunpack.c.l.b16 %v825
    %v3219 = vunpack.c.l.b16 %v826
    %v3220 = vunpack.c.l.b16 %v827
    %v3221 = vunpack.c.l.b16 %v828
    %v3222 = vunpack.c.l.b16 %v829
    %v3223 = vunpack.c.l.b16 %v830
    %v3224 = vunpack.c.l.b16 %v831
    %v3225 = vunpack.c.l.b16 %v832
    %v3226 = vunpack.c.l.b16 %v833
    %v3227 = vunpack.c.l.b16 %v834
    %v3228 = vunpack.c.l.b16 %v835
    %v3229 = vunpack.c.l.b16 %v836
    %v3230 = vunpack.c.l.b16 %v837
    %v3231 = vunpack.c.l.b16 %v838
    %v3232 = vunpack.c.l.b16 %v839
    %v3233 = vunpack.c.l.b16 %v840
    %v3234 = vunpack.c.l.b16 %v841
    %v3235 = vunpack.c.l.b16 %v842
    %v3236 = vunpack.c.l.b16 %v843
    %v3237 = vunpack.c.l.b16 %v844
    %v3238 = vunpack.c.l.b16 %v845
    %v3239 = vunpack.c.l.b16 %v846
    %v3240 = vunpack.c.l.b16 %v847
    %v3241 = vunpack.c.l.b16 %v848
    %v3242 = vunpack.c.l.b16 %v849
    %v3243 = vunpack.c.l.b16 %v850
    %v3244 = vunpack.c.l.b16 %v851
    %v3245 = vunpack.c.l.b16 %v852
    %v3246 = vunpack.c.l.b16 %v853
    %v3247 = vunpack.c.l.b16 %v854
    %v3248 = vunpack.c.l.b16 %v855
    %v3249 = vunpack.c.l.b16 %v856
    %v3250 = vunpack.c.l.b16 %v857
    %v3251 = vunpack.c.l.b16 %v858
    %v3252 = vunpack.c.l.b16 %v859
    %v3253 = vunpack.c.l.b16 %v860
    %v3254 = vunpack.c.l.b16 %v861
    %v3255 = vunpack.c.l.b16 %v862
    %v3256 = vunpack.c.l.b16 %v863
    %v3257 = vunpack.c.l.b16 %v864
    %v3258 = vunpack.c.l.b16 %v865
    %v3259 = vunpack.c.l.b16 %v866
    %v3260 = vunpack.c.l.b16 %v867
    %v3261 = vunpack.c.l.b16 %v868
    %v3262 = vunpack.c.l.b16 %v869
    %v3263 = vunpack.c.l.b16 %v870
    %v3264 = vunpack.c.l.b16 %v871
    %v3265 = vunpack.c.l.b16 %v872
    %v3266 = vunpack.c.l.b16 %v873
    %v3267 = vunpack.c.l.b16 %v874
    %v3268 = vunpack.c.l.b16 %v875
    %v3269 = vunpack.c.l.b16 %v876
    %v3270 = vunpack.c.l.b16 %v877
    %v3271 = vunpack.c.l.b16 %v878
    %v3272 = vunpack.c.l.b16 %v879
    %v3273 = vunpack.c.l.b16 %v880
    %v3274 = vunpack.c.l.b16 %v881
    %v3275 = vunpack.c.l.b16 %v882
    %v3276 = vunpack.c.l.b16 %v883
    %v3277 = vunpack.c.l.b16 %v884
    %v3278 = vunpack.c.l.b16 %v885
    %v3279 = vunpack.c.l.b16 %v886
    %v3280 = vunpack.c.l.b16 %v887
    %v3281 = vunpack.c.l.b16 %v888
    %v3282 = vunpack.c.l.b16 %v889
    %v3283 = vunpack.c.l.b16 %v890
    %v3284 = vunpack.c.l.b16 %v891
    %v3285 = vunpack.c.l.b16 %v892
    %v3286 = vunpack.c.l.b16 %v893
    %v3287 = vunpack.c.l.b16 %v894
    %v3288 = vunpack.c.l.b16 %v895
    %v3289 = vunpack.c.l.b16 %v896
    %v3290 = vunpack.c.l.b16 %v897
    %v3291 = vunpack.c.l.b16 %v898
    %v3292 = vunpack.c.l.b16 %v899
    %v3293 = vunpack.c.l.b16 %v900
    %v3294 = vunpack.c.l.b16 %v901
    %v3295 = vunpack.c.l.b16 %v902
    %v3296 = vunpack.c.l.b16 %v903
    %v3297 = vunpack.c.l.b16 %v904
    %v3298 = vunpack.c.l.b16 %v905
    %v3299 = vunpack.c.l.b16 %v906
    %v3300 = vunpack.c.l.b16 %v907
    %v3301 = vunpack.c.l.b16 %v908
    %v3302 = vunpack.c.l.b16 %v909
    %v3303 = vunpack.c.l.b16 %v910
    %v3304 = vunpack.c.l.b16 %v911
    %v3305 = vunpack.c.l.b16 %v912
    %v3306 = vunpack.c.l.b16 %v913
    %v3307 = vunpack.c.l.b16 %v914
    %v3308 = vunpack.c.l.b16 %v915
    %v3309 = vunpack.c.l.b16 %v916
    %v3310 = vunpack.c.l.b16 %v917
    %v3311 = vunpack.c.l.b16 %v918
    %v3312 = vunpack.c.l.b16 %v919
    %v3313 = vunpack.c.l.b16 %v920
    %v3314 = vunpack.c.l.b16 %v921
    %v3315 = vunpack.c.l.b16 %v922
    %v3316 = vunpack.c.l.b16 %v923
    %v3317 = vunpack.c.l.b16 %v924
    %v3318 = vunpack.c.l.b16 %v925
    %v3319 = vunpack.c.l.b16 %v926
    %v3320 = vunpack.c.l.b16 %v927
    %v3321 = vunpack.c.l.b16 %v928
    %v3322 = vunpack.c.l.b16 %v929
    %v3323 = vunpack.c.l.b16 %v930
    %v3324 = vunpack.c.l.b16 %v931
    %v3325 = vunpack.c.l.b16 %v932
    %v3326 = vunpack.c.l.b16 %v933
    %v3327 = vunpack.c.l.b16 %v934
    %v3328 = vunpack.c.l.b16 %v935
    %v3329 = vunpack.c.l.b16 %v936
    %v3330 = vunpack.c.l.b16 %v937
    %v3331 = vunpack.c.l.b16 %v938
    %v3332 = vunpack.c.l.b16 %v939
    %v3333 = vunpack.c.l.b16 %v940
    %v3334 = vunpack.c.l.b16 %v941
    %v3335 = vunpack.c.l.b16 %v942
    %v3336 = vunpack.c.l.b16 %v943
    %v3337 = vunpack.c.l.b16 %v944
    %v3338 = vunpack.c.l.b16 %v945
    %v3339 = vunpack.c.l.b16 %v946
    %v3340 = vunpack.c.l.b16 %v947
    %v3341 = vunpack.c.l.b16 %v948
    %v3342 = vunpack.c.l.b16 %v949
    %v3343 = vunpack.c.l.b16 %v950
    %v3344 = vunpack.c.l.b16 %v951
    %v3345 = vunpack.c.l.b16 %v952
    %v3346 = vunpack.c.l.b16 %v953
    %v3347 = vunpack.c.l.b16 %v954
    %v3348 = vunpack.c.l.b16 %v955
    %v3349 = vunpack.c.l.b16 %v956
    %v3350 = vunpack.c.l.b16 %v957
    %v3351 = vunpack.c.l.b16 %v958
    %v3352 = vunpack.c.l.b16 %v959
    %v3353 = vunpack.c.l.b16 %v960
    %v3354 = vunpack.c.l.b16 %v961
    %v3355 = vunpack.c.l.b16 %v962
    %v3356 = vunpack.c.l.b16 %v963
    %v3357 = vunpack.c.l.b16 %v964
    %v3358 = vunpack.c.l.b16 %v965
    %v3359 = vunpack.c.l.b16 %v966
    %v3360 = vunpack.c.l.b16 %v967
    %v3361 = vunpack.c.l.b16 %v968
    %v3362 = vunpack.c.l.b16 %v969
    %v3363 = vunpack.c.l.b16 %v970
    %v3364 = vunpack.c.l.b16 %v971
    %v3365 = vunpack.c.l.b16 %v972
    %v3366 = vunpack.c.l.b16 %v973
    %v3367 = vunpack.c.l.b16 %v974
    %v3368 = vunpack.c.l.b16 %v975
    %v3369 = vunpack.c.l.b16 %v976
    %v3370 = vunpack.c.l.b16 %v977
    %v3371 = vunpack.c.l.b16 %v978
    %v3372 = vunpack.c.l.b16 %v979
    %v3373 = vunpack.c.l.b16 %v980
    %v3374 = vunpack.c.l.b16 %v981
    %v3375 = vunpack.c.l.b16 %v982
    %v3376 = vunpack.c.l.b16 %v983
    %v3377 = vunpack.c.l.b16 %v984
    %v3378 = vunpack.c.l.b16 %v985
    %v3379 = vunpack.c.l.b16 %v986
    %v3380 = vunpack.c.l.b16 %v987
    %v3381 = vunpack.c.l.b16 %v988
    %v3382 = vunpack.c.l.b16 %v989
    %v3383 = vunpack.c.l.b16 %v990
    %v3384 = vunpack.c.l.b16 %v991
    %v3385 = vunpack.c.l.b16 %v992
    %v3386 = vunpack.c.l.b16 %v993
    %v3387 = vunpack.c.l.b16 %v994
    %v3388 = vunpack.c.l.b16 %v995
    %v3389 = vunpack.c.l.b16 %v996
    %v3390 = vunpack.c.l.b16 %v997
    %v3391 = vunpack.c.l.b16 %v998
    %v3392 = vunpack.c.l.b16 %v999
    %v3393 = vunpack.c.l.b16 %v1000
    %v3394 = vunpack.c.l.b16 %v1001
    %v3395 = vunpack.c.l.b16 %v1002
    %v3396 = vunpack.c.l.b16 %v1003
    %v3397 = vunpack.c.l.b16 %v1004
    %v3398 = vunpack.c.l.b16 %v1005
    %v3399 = vunpack.c.l.b16 %v1006
    %v3400 = vunpack.c.l.b16 %v1007
    %v3401 = vunpack.c.l.b16 %v1008
    %v3402 = vunpack.c.l.b16 %v1009
    %v3403 = vunpack.c.l.b16 %v1010
    %v3404 = vunpack.c.l.b16 %v1011
    %v3405 = vunpack.c.l.b16 %v1012
    %v3406 = vunpack.c.l.b16 %v1013
    %v3407 = vunpack.c.l.b16 %v1014
    %v3408 = vunpack.c.l.b16 %v1015
    %v3409 = vunpack.c.l.b16 %v1016
    %v3410 = vunpack.c.l.b16 %v1017
    %v3411 = vunpack.c.l.b16 %v1018
    %v3412 = vunpack.c.l.b16 %v1019
    %v3413 = vunpack.c.l.b16 %v1020
    %v3414 = vunpack.c.l.b16 %v1021
    %v3415 = vunpack.c.l.b16 %v1022
    %v3416 = vunpack.c.l.b16 %v1023
    %v3417 = vunpack.c.l.b16 %v1024
    %v3418 = vunpack.c.l.b16 %v1025
    %v3419 = vunpack.c.l.b16 %v1026
    %v3420 = vunpack.c.l.b16 %v1027
    %v3421 = vunpack.c.l.b16 %v1028
    %v3422 = vunpack.c.l.b16 %v1029
    %v3423 = vunpack.c.l.b16 %v1030
    %v3424 = vunpack.c.l.b16 %v1031
    %v3425 = vunpack.c.l.b16 %v1032
    %v3426 = vunpack.c.l.b16 %v1033
    %v3427 = vunpack.c.l.b16 %v1034
    %v3428 = vunpack.c.l.b16 %v1035
    %v3429 = vunpack.c.l.b16 %v1036
    %v3430 = vunpack.c.l.b16 %v1037
    %v3431 = vpack.c.b16 %v2464, %v2463
    %v3432 = vpack.c.b16 %v2466, %v2465
    %v3433 = vpack.c.b16 %v2468, %v2467
    %v3434 = vpack.c.b16 %v2470, %v2469
    %v3435 = vpack.c.b16 %v2472, %v2471
    %v3436 = vpack.c.b16 %v2474, %v2473
    %v3437 = vpack.c.b16 %v2476, %v2475
    %v3438 = vpack.c.b16 %v2478, %v2477
    %v3439 = vpack.c.b16 %v2480, %v2479
    %v3440 = vpack.c.b16 %v2482, %v2481
    %v3441 = vpack.c.b16 %v2484, %v2483
    %v3442 = vpack.c.b16 %v2486, %v2485
    %v3443 = vpack.c.b16 %v2488, %v2487
    %v3444 = vpack.c.b16 %v2490, %v2489
    %v3445 = vpack.c.b16 %v2492, %v2491
    %v3446 = vpack.c.b16 %v2494, %v2493
    %v3447 = vpack.c.b16 %v2496, %v2495
    %v3448 = vpack.c.b16 %v2498, %v2497
    %v3449 = vpack.c.b16 %v2500, %v2499
    %v3450 = vpack.c.b16 %v2502, %v2501
    %v3451 = vpack.c.b16 %v2504, %v2503
    %v3452 = vpack.c.b16 %v2506, %v2505
    %v3453 = vpack.c.b16 %v2508, %v2507
    %v3454 = vpack.c.b16 %v2510, %v2509
    %v3455 = vpack.c.b16 %v2512, %v2511
    %v3456 = vpack.c.b16 %v2514, %v2513
    %v3457 = vpack.c.b16 %v2516, %v2515
    %v3458 = vpack.c.b16 %v2518, %v2517
    %v3459 = vpack.c.b16 %v2520, %v2519
    %v3460 = vpack.c.b16 %v2522, %v2521
    %v3461 = vpack.c.b16 %v2524, %v2523
    %v3462 = vpack.c.b16 %v2526, %v2525
    %v3463 = vpack.c.b16 %v2528, %v2527
    %v3464 = vpack.c.b16 %v2530, %v2529
    %v3465 = vpack.c.b16 %v2532, %v2531
    %v3466 = vpack.c.b16 %v2534, %v2533
    %v3467 = vpack.c.b16 %v2536, %v2535
    %v3468 = vpack.c.b16 %v2538, %v2537
    %v3469 = vpack.c.b16 %v2540, %v2539
    %v3470 = vpack.c.b16 %v2542, %v2541
    %v3471 = vpack.c.b16 %v2544, %v2543
    %v3472 = vpack.c.b16 %v2546, %v2545
    %v3473 = vpack.c.b16 %v2548, %v2547
    %v3474 = vpack.c.b16 %v2550, %v2549
    %v3475 = vpack.c.b16 %v2552, %v2551
    %v3476 = vpack.c.b16 %v2554, %v2553
    %v3477 = vpack.c.b16 %v2556, %v2555
    %v3478 = vpack.c.b16 %v2558, %v2557
    %v3479 = vpack.c.b16 %v2560, %v2559
    %v3480 = vpack.c.b16 %v2562, %v2561
    %v3481 = vpack.c.b16 %v2564, %v2563
    %v3482 = vpack.c.b16 %v2566, %v2565
    %v3483 = vpack.c.b16 %v2568, %v2567
    %v3484 = vpack.c.b16 %v2570, %v2569
    %v3485 = vpack.c.b16 %v2572, %v2571
    %v3486 = vpack.c.b16 %v2574, %v2573
    %v3487 = vpack.c.b16 %v2576, %v2575
    %v3488 = vpack.c.b16 %v2578, %v2577
    %v3489 = vpack.c.b16 %v2580, %v2579
    %v3490 = vpack.c.b16 %v2582, %v2581
    %v3491 = vpack.c.b16 %v2584, %v2583
    %v3492 = vpack.c.b16 %v2586, %v2585
    %v3493 = vpack.c.b16 %v2588, %v2587
    %v3494 = vpack.c.b16 %v2590, %v2589
    %v3495 = vpack.c.b16 %v2592, %v2591
    %v3496 = vpack.c.b16 %v2594, %v2593
    %v3497 = vpack.c.b16 %v2596, %v2595
    %v3498 = vpack.c.b16 %v2598, %v2597
    %v3499 = vpack.c.b16 %v2600, %v2599
    %v3500 = vpack.c.b16 %v2602, %v2601
    %v3501 = vpack.c.b16 %v2604, %v2603
    %v3502 = vpack.c.b16 %v2606, %v2605
    %v3503 = vpack.c.b16 %v2608, %v2607
    %v3504 = vpack.c.b16 %v2610, %v2609
    %v3505 = vpack.c.b16 %v2612, %v2611
    %v3506 = vpack.c.b16 %v2614, %v2613
    %v3507 = vpack.c.b16 %v2616, %v2615
    %v3508 = vpack.c.b16 %v2618, %v2617
    %v3509 = vpack.c.b16 %v2620, %v2619
    %v3510 = vpack.c.b16 %v2622, %v2621
    %v3511 = vpack.c.b16 %v2624, %v2623
    %v3512 = vpack.c.b16 %v2626, %v2625
    %v3513 = vpack.c.b16 %v2628, %v2627
    %v3514 = vpack.c.b16 %v2630, %v2629
    %v3515 = vpack.c.b16 %v2632, %v2631
    %v3516 = vpack.c.b16 %v2634, %v2633
    %v3517 = vpack.c.b16 %v2636, %v2635
    %v3518 = vpack.c.b16 %v2638, %v2637
    %v3519 = vpack.c.b16 %v2640, %v2639
    %v3520 = vpack.c.b16 %v2642, %v2641
    %v3521 = vpack.c.b16 %v2644, %v2643
    %v3522 = vpack.c.b16 %v2646, %v2645
    %v3523 = vpack.c.b16 %v2648, %v2647
    %v3524 = vpack.c.b16 %v2650, %v2649
    %v3525 = vpack.c.b16 %v2652, %v2651
    %v3526 = vpack.c.b16 %v2654, %v2653
    %v3527 = vpack.c.b16 %v2656, %v2655
    %v3528 = vpack.c.b16 %v2658, %v2657
    %v3529 = vpack.c.b16 %v2660, %v2659
    %v3530 = vpack.c.b16 %v2662, %v2661
    %v3531 = vpack.c.b16 %v2664, %v2663
    %v3532 = vpack.c.b16 %v2666, %v2665
    %v3533 = vpack.c.b16 %v2668, %v2667
    %v3534 = vpack.c.b16 %v2670, %v2669
    %v3535 = vpack.c.b16 %v2672, %v2671
    %v3536 = vpack.c.b16 %v2674, %v2673
    %v3537 = vpack.c.b16 %v2676, %v2675
    %v3538 = vpack.c.b16 %v2678, %v2677
    %v3539 = vpack.c.b16 %v2680, %v2679
    %v3540 = vpack.c.b16 %v2682, %v2681
    %v3541 = vpack.c.b16 %v2684, %v2683
    %v3542 = vpack.c.b16 %v2686, %v2685
    %v3543 = vpack.c.b16 %v2688, %v2687
    %v3544 = vpack.c.b16 %v2690, %v2689
    %v3545 = vpack.c.b16 %v2692, %v2691
    %v3546 = vpack.c.b16 %v2694, %v2693
    %v3547 = vpack.c.b16 %v2696, %v2695
    %v3548 = vpack.c.b16 %v2698, %v2697
    %v3549 = vpack.c.b16 %v2700, %v2699
    %v3550 = vpack.c.b16 %v2702, %v2701
    %v3551 = vpack.c.b16 %v2704, %v2703
    %v3552 = vpack.c.b16 %v2706, %v2705
    %v3553 = vpack.c.b16 %v2708, %v2707
    %v3554 = vpack.c.b16 %v2710, %v2709
    %v3555 = vpack.c.b16 %v2712, %v2711
    %v3556 = vpack.c.b16 %v2714, %v2713
    %v3557 = vpack.c.b16 %v2716, %v2715
    %v3558 = vpack.c.b16 %v2718, %v2717
    %v3559 = vpack.c.b16 %v2720, %v2719
    %v3560 = vpack.c.b16 %v2722, %v2721
    %v3561 = vpack.c.b16 %v2724, %v2723
    %v3562 = vpack.c.b16 %v2726, %v2725
    %v3563 = vpack.c.b16 %v2728, %v2727
    %v3564 = vpack.c.b16 %v2730, %v2729
    %v3565 = vpack.c.b16 %v2732, %v2731
    %v3566 = vpack.c.b16 %v2734, %v2733
    %v3567 = vpack.c.b16 %v2736, %v2735
    %v3568 = vpack.c.b16 %v2738, %v2737
    %v3569 = vpack.c.b16 %v2740, %v2739
    %v3570 = vpack.c.b16 %v2742, %v2741
    %v3571 = vpack.c.b16 %v2744, %v2743
    %v3572 = vpack.c.b16 %v2746, %v2745
    %v3573 = vpack.c.b16 %v2748, %v2747
    %v3574 = vpack.c.b16 %v2750, %v2749
    %v3575 = vpack.c.b16 %v2752, %v2751
    %v3576 = vpack.c.b16 %v2754, %v2753
    %v3577 = vpack.c.b16 %v2756, %v2755
    %v3578 = vpack.c.b16 %v2758, %v2757
    %v3579 = vpack.c.b16 %v2760, %v2759
    %v3580 = vpack.c.b16 %v2762, %v2761
    %v3581 = vpack.c.b16 %v2764, %v2763
    %v3582 = vpack.c.b16 %v2766, %v2765
    %v3583 = vpack.c.b16 %v2768, %v2767
    %v3584 = vpack.c.b16 %v2770, %v2769
    %v3585 = vpack.c.b16 %v2772, %v2771
    %v3586 = vpack.c.b16 %v2774, %v2773
    %v3587 = vpack.c.b16 %v2776, %v2775
    %v3588 = vpack.c.b16 %v2778, %v2777
    %v3589 = vpack.c.b16 %v2780, %v2779
    %v3590 = vpack.c.b16 %v2782, %v2781
    %v3591 = vpack.c.b16 %v2784, %v2783
    %v3592 = vpack.c.b16 %v2786, %v2785
    %v3593 = vpack.c.b16 %v2788, %v2787
    %v3594 = vpack.c.b16 %v2790, %v2789
    %v3595 = vpack.c.b16 %v2792, %v2791
    %v3596 = vpack.c.b16 %v2794, %v2793
    %v3597 = vpack.c.b16 %v2796, %v2795
    %v3598 = vpack.c.b16 %v2798, %v2797
    %v3599 = vpack.c.b16 %v2800, %v2799
    %v3600 = vpack.c.b16 %v2802, %v2801
    %v3601 = vpack.c.b16 %v2804, %v2803
    %v3602 = vpack.c.b16 %v2806, %v2805
    %v3603 = vpack.c.b16 %v2808, %v2807
    %v3604 = vpack.c.b16 %v2810, %v2809
    %v3605 = vpack.c.b16 %v2812, %v2811
    %v3606 = vpack.c.b16 %v2814, %v2813
    %v3607 = vpack.c.b16 %v2816, %v2815
    %v3608 = vpack.c.b16 %v2818, %v2817
    %v3609 = vpack.c.b16 %v2820, %v2819
    %v3610 = vpack.c.b16 %v2822, %v2821
    %v3611 = vpack.c.b16 %v2824, %v2823
    %v3612 = vpack.c.b16 %v2826, %v2825
    %v3613 = vpack.c.b16 %v2828, %v2827
    %v3614 = vpack.c.b16 %v2830, %v2829
    %v3615 = vpack.c.b16 %v2832, %v2831
    %v3616 = vpack.c.b16 %v2834, %v2833
    %v3617 = vpack.c.b16 %v2836, %v2835
    %v3618 = vpack.c.b16 %v2838, %v2837
    %v3619 = vpack.c.b16 %v2840, %v2839
    %v3620 = vpack.c.b16 %v2842, %v2841
    %v3621 = vpack.c.b16 %v2844, %v2843
    %v3622 = vpack.c.b16 %v2846, %v2845
    %v3623 = vpack.c.b16 %v2848, %v2847
    %v3624 = vpack.c.b16 %v2850, %v2849
    %v3625 = vpack.c.b16 %v2852, %v2851
    %v3626 = vpack.c.b16 %v2854, %v2853
    %v3627 = vpack.c.b16 %v2856, %v2855
    %v3628 = vpack.c.b16 %v2858, %v2857
    %v3629 = vpack.c.b16 %v2860, %v2859
    %v3630 = vpack.c.b16 %v2862, %v2861
    %v3631 = vpack.c.b16 %v2864, %v2863
    %v3632 = vpack.c.b16 %v2866, %v2865
    %v3633 = vpack.c.b16 %v2868, %v2867
    %v3634 = vpack.c.b16 %v2870, %v2869
    %v3635 = vpack.c.b16 %v2872, %v2871
    %v3636 = vpack.c.b16 %v2874, %v2873
    %v3637 = vpack.c.b16 %v2876, %v2875
    %v3638 = vpack.c.b16 %v2878, %v2877
    %v3639 = vpack.c.b16 %v2880, %v2879
    %v3640 = vpack.c.b16 %v2882, %v2881
    %v3641 = vpack.c.b16 %v2884, %v2883
    %v3642 = vpack.c.b16 %v2886, %v2885
    %v3643 = vpack.c.b16 %v2888, %v2887
    %v3644 = vpack.c.b16 %v2890, %v2889
    %v3645 = vpack.c.b16 %v2892, %v2891
    %v3646 = vpack.c.b16 %v2894, %v2893
    %v3647 = vpack.c.b16 %v2896, %v2895
    %v3648 = vpack.c.b16 %v2898, %v2897
    %v3649 = vpack.c.b16 %v2900, %v2899
    %v3650 = vpack.c.b16 %v2902, %v2901
    %v3651 = vpack.c.b16 %v2904, %v2903
    %v3652 = vpack.c.b16 %v2906, %v2905
    %v3653 = vpack.c.b16 %v2908, %v2907
    %v3654 = vpack.c.b16 %v2910, %v2909
    %v3655 = vpack.c.b16 %v2912, %v2911
    %v3656 = vpack.c.b16 %v2914, %v2913
    %v3657 = vpack.c.b16 %v2916, %v2915
    %v3658 = vpack.c.b16 %v2918, %v2917
    %v3659 = vpack.c.b16 %v2920, %v2919
    %v3660 = vpack.c.b16 %v2922, %v2921
    %v3661 = vpack.c.b16 %v2924, %v2923
    %v3662 = vpack.c.b16 %v2926, %v2925
    %v3663 = vpack.c.b16 %v2928, %v2927
    %v3664 = vpack.c.b16 %v2930, %v2929
    %v3665 = vpack.c.b16 %v2932, %v2931
    %v3666 = vpack.c.b16 %v2934, %v2933
    %v3667 = vpack.c.b16 %v2936, %v2935
    %v3668 = vpack.c.b16 %v2938, %v2937
    %v3669 = vpack.c.b16 %v2940, %v2939
    %v3670 = vpack.c.b16 %v2942, %v2941
    %v3671 = vpack.c.b16 %v2944, %v2943
    %v3672 = vpack.c.b16 %v2946, %v2945
    %v3673 = vpack.c.b16 %v2948, %v2947
    %v3674 = vpack.c.b16 %v2950, %v2949
    %v3675 = vpack.c.b16 %v2952, %v2951
    %v3676 = vpack.c.b16 %v2954, %v2953
    %v3677 = vpack.c.b16 %v2956, %v2955
    %v3678 = vpack.c.b16 %v2958, %v2957
    %v3679 = vpack.c.b16 %v2960, %v2959
    %v3680 = vpack.c.b16 %v2962, %v2961
    %v3681 = vpack.c.b16 %v2964, %v2963
    %v3682 = vpack.c.b16 %v2966, %v2965
    %v3683 = vpack.c.b16 %v2968, %v2967
    %v3684 = vpack.c.b16 %v2970, %v2969
    %v3685 = vpack.c.b16 %v2972, %v2971
    %v3686 = vpack.c.b16 %v2974, %v2973
    %v3687 = vpack.c.b16 %v2976, %v2975
    %v3688 = vpack.c.b16 %v2978, %v2977
    %v3689 = vpack.c.b16 %v2980, %v2979
    %v3690 = vpack.c.b16 %v2982, %v2981
    %v3691 = vpack.c.b16 %v2984, %v2983
    %v3692 = vpack.c.b16 %v2986, %v2985
    %v3693 = vpack.c.b16 %v2988, %v2987
    %v3694 = vpack.c.b16 %v2990, %v2989
    %v3695 = vpack.c.b16 %v2992, %v2991
    %v3696 = vpack.c.b16 %v2994, %v2993
    %v3697 = vpack.c.b16 %v2996, %v2995
    %v3698 = vpack.c.b16 %v2998, %v2997
    %v3699 = vpack.c.b16 %v3000, %v2999
    %v3700 = vpack.c.b16 %v3002, %v3001
    %v3701 = vpack.c.b16 %v3004, %v3003
    %v3702 = vpack.c.b16 %v3006, %v3005
    %v3703 = vpack.c.b16 %v3008, %v3007
    %v3704 = vpack.c.b16 %v3010, %v3009
    %v3705 = vpack.c.b16 %v3012, %v3011
    %v3706 = vpack.c.b16 %v3014, %v3013
    %v3707 = vpack.c.b16 %v3016, %v3015
    %v3708 = vpack.c.b16 %v3018, %v3017
    %v3709 = vpack.c.b16 %v3020, %v3019
    %v3710 = vpack.c.b16 %v3022, %v3021
    %v3711 = vpack.c.b16 %v3024, %v3023
    %v3712 = vpack.c.b16 %v3026, %v3025
    %v3713 = vpack.c.b16 %v3028, %v3027
    %v3714 = vpack.c.b16 %v3030, %v3029
    %v3715 = vpack.c.b16 %v3032, %v3031
    %v3716 = vpack.c.b16 %v3034, %v3033
    %v3717 = vpack.c.b16 %v3036, %v3035
    %v3718 = vpack.c.b16 %v3038, %v3037
    %v3719 = vpack.c.b16 %v3040, %v3039
    %v3720 = vpack.c.b16 %v3042, %v3041
    %v3721 = vpack.c.b16 %v3044, %v3043
    %v3722 = vpack.c.b16 %v3046, %v3045
    %v3723 = vpack.c.b16 %v3048, %v3047
    %v3724 = vpack.c.b16 %v3050, %v3049
    %v3725 = vpack.c.b16 %v3052, %v3051
    %v3726 = vpack.c.b16 %v3054, %v3053
    %v3727 = vpack.c.b16 %v3056, %v3055
    %v3728 = vpack.c.b16 %v3058, %v3057
    %v3729 = vpack.c.b16 %v3060, %v3059
    %v3730 = vpack.c.b16 %v3062, %v3061
    %v3731 = vpack.c.b16 %v3064, %v3063
    %v3732 = vpack.c.b16 %v3066, %v3065
    %v3733 = vpack.c.b16 %v3068, %v3067
    %v3734 = vpack.c.b16 %v3070, %v3069
    %v3735 = vpack.c.b16 %v3072, %v3071
    %v3736 = vpack.c.b16 %v3074, %v3073
    %v3737 = vpack.c.b16 %v3076, %v3075
    %v3738 = vpack.c.b16 %v3078, %v3077
    %v3739 = vpack.c.b16 %v3080, %v3079
    %v3740 = vpack.c.b16 %v3082, %v3081
    %v3741 = vpack.c.b16 %v3084, %v3083
    %v3742 = vpack.c.b16 %v3086, %v3085
    %v3743 = vpack.c.b16 %v3088, %v3087
    %v3744 = vpack.c.b16 %v3090, %v3089
    %v3745 = vpack.c.b16 %v3092, %v3091
    %v3746 = vpack.c.b16 %v3094, %v3093
    %v3747 = vpack.c.b16 %v3096, %v3095
    %v3748 = vpack.c.b16 %v3098, %v3097
    %v3749 = vpack.c.b16 %v3100, %v3099
    %v3750 = vpack.c.b16 %v3102, %v3101
    %v3751 = vpack.c.b16 %v3104, %v3103
    %v3752 = vpack.c.b16 %v3106, %v3105
    %v3753 = vpack.c.b16 %v3108, %v3107
    %v3754 = vpack.c.b16 %v3110, %v3109
    %v3755 = vpack.c.b16 %v3112, %v3111
    %v3756 = vpack.c.b16 %v3114, %v3113
    %v3757 = vpack.c.b16 %v3116, %v3115
    %v3758 = vpack.c.b16 %v3118, %v3117
    %v3759 = vpack.c.b16 %v3120, %v3119
    %v3760 = vpack.c.b16 %v3122, %v3121
    %v3761 = vpack.c.b16 %v3124, %v3123
    %v3762 = vpack.c.b16 %v3126, %v3125
    %v3763 = vpack.c.b16 %v3128, %v3127
    %v3764 = vpack.c.b16 %v3130, %v3129
    %v3765 = vpack.c.b16 %v3132, %v3131
    %v3766 = vpack.c.b16 %v3134, %v3133
    %v3767 = vpack.c.b16 %v3136, %v3135
    %v3768 = vpack.c.b16 %v3138, %v3137
    %v3769 = vpack.c.b16 %v3140, %v3139
    %v3770 = vpack.c.b16 %v3142, %v3141
    %v3771 = vpack.c.b16 %v3144, %v3143
    %v3772 = vpack.c.b16 %v3146, %v3145
    %v3773 = vpack.c.b16 %v3148, %v3147
    %v3774 = vpack.c.b16 %v3150, %v3149
    %v3775 = vpack.c.b16 %v3152, %v3151
    %v3776 = vpack.c.b16 %v3154, %v3153
    %v3777 = vpack.c.b16 %v3156, %v3155
    %v3778 = vpack.c.b16 %v3158, %v3157
    %v3779 = vpack.c.b16 %v3160, %v3159
    %v3780 = vpack.c.b16 %v3162, %v3161
    %v3781 = vpack.c.b16 %v3164, %v3163
    %v3782 = vpack.c.b16 %v3166, %v3165
    %v3783 = vpack.c.b16 %v3168, %v3167
    %v3784 = vpack.c.b16 %v3170, %v3169
    %v3785 = vpack.c.b16 %v3172, %v3171
    %v3786 = vpack.c.b16 %v3174, %v3173
    %v3787 = vpack.c.b16 %v3176, %v3175
    %v3788 = vpack.c.b16 %v3178, %v3177
    %v3789 = vpack.c.b16 %v3180, %v3179
    %v3790 = vpack.c.b16 %v3182, %v3181
    %v3791 = vpack.c.b16 %v3184, %v3183
    %v3792 = vpack.c.b16 %v3186, %v3185
    %v3793 = vpack.c.b16 %v3188, %v3187
    %v3794 = vpack.c.b16 %v3190, %v3189
    %v3795 = vpack.c.b16 %v3192, %v3191
    %v3796 = vpack.c.b16 %v3194, %v3193
    %v3797 = vpack.c.b16 %v3196, %v3195
    %v3798 = vpack.c.b16 %v3198, %v3197
    %v3799 = vpack.c.b16 %v3200, %v3199
    %v3800 = vpack.c.b16 %v3202, %v3201
    %v3801 = vpack.c.b16 %v3204, %v3203
    %v3802 = vpack.c.b16 %v3206, %v3205
    %v3803 = vpack.c.b16 %v3208, %v3207
    %v3804 = vpack.c.b16 %v3210, %v3209
    %v3805 = vpack.c.b16 %v3212, %v3211
    %v3806 = vpack.c.b16 %v3214, %v3213
    %v3807 = vpack.c.b16 %v3216, %v3215
    %v3808 = vpack.c.b16 %v3218, %v3217
    %v3809 = vpack.c.b16 %v3220, %v3219
    %v3810 = vpack.c.b16 %v3222, %v3221
    %v3811 = vpack.c.b16 %v3224, %v3223
    %v3812 = vpack.c.b16 %v3226, %v3225
    %v3813 = vpack.c.b16 %v3228, %v3227
    %v3814 = vpack.c.b16 %v3230, %v3229
    %v3815 = vpack.c.b16 %v3232, %v3231
    %v3816 = vpack.c.b16 %v3234, %v3233
    %v3817 = vpack.c.b16 %v3236, %v3235
    %v3818 = vpack.c.b16 %v3238, %v3237
    %v3819 = vpack.c.b16 %v3240, %v3239
    %v3820 = vpack.c.b16 %v3242, %v3241
    %v3821 = vpack.c.b16 %v3244, %v3243
    %v3822 = vpack.c.b16 %v3246, %v3245
    %v3823 = vpack.c.b16 %v3248, %v3247
    %v3824 = vpack.c.b16 %v3250, %v3249
    %v3825 = vpack.c.b16 %v3252, %v3251
    %v3826 = vpack.c.b16 %v3254, %v3253
    %v3827 = vpack.c.b16 %v3256, %v3255
    %v3828 = vpack.c.b16 %v3258, %v3257
    %v3829 = vpack.c.b16 %v3260, %v3259
    %v3830 = vpack.c.b16 %v3262, %v3261
    %v3831 = vpack.c.b16 %v3264, %v3263
    %v3832 = vpack.c.b16 %v3266, %v3265
    %v3833 = vpack.c.b16 %v3268, %v3267
    %v3834 = vpack.c.b16 %v3270, %v3269
    %v3835 = vpack.c.b16 %v3272, %v3271
    %v3836 = vpack.c.b16 %v3274, %v3273
    %v3837 = vpack.c.b16 %v3276, %v3275
    %v3838 = vpack.c.b16 %v3278, %v3277
    %v3839 = vpack.c.b16 %v3280, %v3279
    %v3840 = vpack.c.b16 %v3282, %v3281
    %v3841 = vpack.c.b16 %v3284, %v3283
    %v3842 = vpack.c.b16 %v3286, %v3285
    %v3843 = vpack.c.b16 %v3288, %v3287
    %v3844 = vpack.c.b16 %v3290, %v3289
    %v3845 = vpack.c.b16 %v3292, %v3291
    %v3846 = vpack.c.b16 %v3294, %v3293
    %v3847 = vpack.c.b16 %v3296, %v3295
    %v3848 = vpack.c.b16 %v3298, %v3297
    %v3849 = vpack.c.b16 %v3300, %v3299
    %v3850 = vpack.c.b16 %v3302, %v3301
    %v3851 = vpack.c.b16 %v3304, %v3303
    %v3852 = vpack.c.b16 %v3306, %v3305
    %v3853 = vpack.c.b16 %v3308, %v3307
    %v3854 = vpack.c.b16 %v3310, %v3309
    %v3855 = vpack.c.b16 %v3312, %v3311
    %v3856 = vpack.c.b16 %v3314, %v3313
    %v3857 = vpack.c.b16 %v3316, %v3315
    %v3858 = vpack.c.b16 %v3318, %v3317
    %v3859 = vpack.c.b16 %v3320, %v3319
    %v3860 = vpack.c.b16 %v3322, %v3321
    %v3861 = vpack.c.b16 %v3324, %v3323
    %v3862 = vpack.c.b16 %v3326, %v3325
    %v3863 = vpack.c.b16 %v3328, %v3327
    %v3864 = vpack.c.b16 %v3330, %v3329
    %v3865 = vpack.c.b16 %v3332, %v3331
    %v3866 = vpack.c.b16 %v3334, %v3333
    %v3867 = vpack.c.b16 %v3336, %v3335
    %v3868 = vpack.c.b16 %v3338, %v3337
    %v3869 = vpack.c.b16 %v3340, %v3339
    %v3870 = vpack.c.b16 %v3342, %v3341
    %v3871 = vpack.c.b16 %v3344, %v3343
    %v3872 = vpack.c.b16 %v3346, %v3345
    %v3873 = vpack.c.b16 %v3348, %v3347
    %v3874 = vpack.c.b16 %v3350, %v3349
    %v3875 = vpack.c.b16 %v3352, %v3351
    %v3876 = vpack.c.b16 %v3354, %v3353
    %v3877 = vpack.c.b16 %v3356, %v3355
    %v3878 = vpack.c.b16 %v3358, %v3357
    %v3879 = vpack.c.b16 %v3360, %v3359
    %v3880 = vpack.c.b16 %v3362, %v3361
    %v3881 = vpack.c.b16 %v3364, %v3363
    %v3882 = vpack.c.b16 %v3366, %v3365
    %v3883 = vpack.c.b16 %v3368, %v3367
    %v3884 = vpack.c.b16 %v3370, %v3369
    %v3885 = vpack.c.b16 %v3372, %v3371
    %v3886 = vpack.c.b16 %v3374, %v3373
    %v3887 = vpack.c.b16 %v3376, %v3375
    %v3888 = vpack.c.b16 %v3378, %v3377
    %v3889 = vpack.c.b16 %v3380, %v3379
    %v3890 = vpack.c.b16 %v3382, %v3381
    %v3891 = vpack.c.b16 %v3384, %v3383
    %v3892 = vpack.c.b16 %v3386, %v3385
    %v3893 = vpack.c.b16 %v3388, %v3387
    %v3894 = vpack.c.b16 %v3390, %v3389
    %v3895 = vpack.c.b16 %v3392, %v3391
    %v3896 = vpack.c.b16 %v3394, %v3393
    %v3897 = vpack.c.b16 %v3396, %v3395
    %v3898 = vpack.c.b16 %v3398, %v3397
    %v3899 = vpack.c.b16 %v3400, %v3399
    %v3900 = vpack.c.b16 %v3402, %v3401
    %v3901 = vpack.c.b16 %v3404, %v3403
    %v3902 = vpack.c.b16 %v3406, %v3405
    %v3903 = vpack.c.b16 %v3408, %v3407
    %v3904 = vpack.c.b16 %v3410, %v3409
    %v3905 = vpack.c.b16 %v3412, %v3411
    %v3906 = vpack.c.b16 %v3414, %v3413
    %v3907 = vpack.c.b16 %v3416, %v3415
    %v3908 = vpack.c.b16 %v3418, %v3417
    %v3909 = vpack.c.b16 %v3420, %v3419
    %v3910 = vpack.c.b16 %v3422, %v3421
    %v3911 = vpack.c.b16 %v3424, %v3423
    %v3912 = vpack.c.b16 %v3426, %v3425
    %v3913 = vpack.c.b16 %v3428, %v3427
    %v3914 = vpack.c.b16 %v3430, %v3429
    %vm4399 = vcmask 523264
    %v4401 = vsel %vm4399, %v1425, 0
    %4403 = vmatprep.subr.bf16.mxu0 0
    %4404 = vmatpush1.bf16.msra.mxu0 %v3431
    %4405 = vmatprep.subr.bf16.mxu0 0
    %4406 = vmatpush1.bf16.msra.mxu0 %v3432
    %4407 = vmatprep.subr.bf16.mxu0 0
    %4408 = vmatpush1.bf16.msra.mxu0 %v3433
    %4409 = vmatprep.subr.bf16.mxu0 0
    %4410 = vmatpush1.bf16.msra.mxu0 %v3434
    %4411 = vmatprep.subr.bf16.mxu0 0
    %4412 = vmatpush1.bf16.msra.mxu0 %v3435
    %4413 = vmatprep.subr.bf16.mxu0 0
    %4414 = vmatpush1.bf16.msra.mxu0 %v3436
    %4415 = vmatprep.subr.bf16.mxu0 0
    %4416 = vmatpush1.bf16.msra.mxu0 %v3437
    %4417 = vmatprep.subr.bf16.mxu0 0
    %4418 = vmatpush1.bf16.msra.mxu0 %v3438
    %4419 = vmatprep.subr.bf16.mxu0 0
    %4420 = vmatpush1.bf16.msra.mxu0 %v3439
    %4421 = vmatprep.subr.bf16.mxu0 0
    %4422 = vmatpush1.bf16.msra.mxu0 %v3440
    %4423 = vmatprep.subr.bf16.mxu0 0
    %4424 = vmatpush1.bf16.msra.mxu0 %v3441
    %4425 = vmatprep.subr.bf16.mxu0 0
    %4426 = vmatpush1.bf16.msra.mxu0 %v3442
    %4427 = vmatprep.subr.bf16.mxu0 0
    %4428 = vmatpush1.bf16.msra.mxu0 %v3443
    %4429 = vmatprep.subr.bf16.mxu0 0
    %4430 = vmatpush1.bf16.msra.mxu0 %v3444
    %4431 = vmatprep.subr.bf16.mxu0 0
    %4432 = vmatpush1.bf16.msra.mxu0 %v3445
    %4433 = vmatprep.subr.bf16.mxu0 0
    %4434 = vmatpush1.bf16.msra.mxu0 %v3446
    %4435 = vmatprep.mubr.bf16.mxu0 %v1090
    %4436 = vmatmul.mubr.bf16.gmra.mrb[0].mxu0 %v1076
    %v4437 = vpop.f32.mrb[0].mxu0
    %v4438 = vadd.f32 %v1043, %v4437
    %v4439 = vpop.f32.mrb[0].mxu0
    %v4440 = vpop.f32.mrb[0].mxu0
    %v4441 = vpop.f32.mrb[0].mxu0
    %4442 = vdwg.mxu0
    %4443 = vmatprep.subr.bf16.mxu0 0
    %4444 = vmatpush1.bf16.msra.mxu0 %v3447
    %4445 = vmatprep.subr.bf16.mxu0 0
    %4446 = vmatpush1.bf16.msra.mxu0 %v3448
    %4447 = vmatprep.subr.bf16.mxu0 0
    %4448 = vmatpush1.bf16.msra.mxu0 %v3449
    %4449 = vmatprep.subr.bf16.mxu0 0
    %4450 = vmatpush1.bf16.msra.mxu0 %v3450
    %4451 = vmatprep.subr.bf16.mxu0 0
    %4452 = vmatpush1.bf16.msra.mxu0 %v3451
    %4453 = vmatprep.subr.bf16.mxu0 0
    %4454 = vmatpush1.bf16.msra.mxu0 %v3452
    %4455 = vmatprep.subr.bf16.mxu0 0
    %4456 = vmatpush1.bf16.msra.mxu0 %v3453
    %4457 = vmatprep.subr.bf16.mxu0 0
    %4458 = vmatpush1.bf16.msra.mxu0 %v3454
    %4459 = vmatprep.subr.bf16.mxu0 0
    %4460 = vmatpush1.bf16.msra.mxu0 %v3455
    %4461 = vmatprep.subr.bf16.mxu0 0
    %4462 = vmatpush1.bf16.msra.mxu0 %v3456
    %4463 = vmatprep.subr.bf16.mxu0 0
    %4464 = vmatpush1.bf16.msra.mxu0 %v3457
    %4465 = vmatprep.subr.bf16.mxu0 0
    %4466 = vmatpush1.bf16.msra.mxu0 %v3458
    %4467 = vmatprep.subr.bf16.mxu0 0
    %4468 = vmatpush1.bf16.msra.mxu0 %v3459
    %4469 = vmatprep.subr.bf16.mxu0 0
    %4470 = vmatpush1.bf16.msra.mxu0 %v3460
    %4471 = vmatprep.subr.bf16.mxu0 0
    %4472 = vmatpush1.bf16.msra.mxu0 %v3461
    %4473 = vmatprep.subr.bf16.mxu0 0
    %4474 = vmatpush1.bf16.msra.mxu0 %v3462
    %4475 = vmatprep.mubr.bf16.mxu0 %v1100
    %4476 = vmatmul.mubr.bf16.gmra.mrb[0].mxu0 %v1098
    %v4477 = vpop.f32.mrb[0].mxu0
    %v4478 = vadd.f32 %v4438, %v4477
    %v4479 = vpop.f32.mrb[0].mxu0
    %v4480 = vpop.f32.mrb[0].mxu0
    %v4481 = vpop.f32.mrb[0].mxu0
    %4482 = vdwg.mxu0
    %4483 = vmatprep.subr.bf16.mxu0 0
    %4484 = vmatpush1.bf16.msra.mxu0 %v3463
    %4485 = vmatprep.subr.bf16.mxu0 0
    %4486 = vmatpush1.bf16.msra.mxu0 %v3464
    %4487 = vmatprep.subr.bf16.mxu0 0
    %4488 = vmatpush1.bf16.msra.mxu0 %v3465
    %4489 = vmatprep.subr.bf16.mxu0 0
    %4490 = vmatpush1.bf16.msra.mxu0 %v3466
    %4491 = vmatprep.subr.bf16.mxu0 0
    %4492 = vmatpush1.bf16.msra.mxu0 %v3467
    %4493 = vmatprep.subr.bf16.mxu0 0
    %4494 = vmatpush1.bf16.msra.mxu0 %v3468
    %4495 = vmatprep.subr.bf16.mxu0 0
    %4496 = vmatpush1.bf16.msra.mxu0 %v3469
    %4497 = vmatprep.subr.bf16.mxu0 0
    %4498 = vmatpush1.bf16.msra.mxu0 %v3470
    %4499 = vmatprep.subr.bf16.mxu0 0
    %4500 = vmatpush1.bf16.msra.mxu0 %v3471
    %4501 = vmatprep.subr.bf16.mxu0 0
    %4502 = vmatpush1.bf16.msra.mxu0 %v3472
    %4503 = vmatprep.subr.bf16.mxu0 0
    %4504 = vmatpush1.bf16.msra.mxu0 %v3473
    %4505 = vmatprep.subr.bf16.mxu0 0
    %4506 = vmatpush1.bf16.msra.mxu0 %v3474
    %4507 = vmatprep.subr.bf16.mxu0 0
    %4508 = vmatpush1.bf16.msra.mxu0 %v3475
    %4509 = vmatprep.subr.bf16.mxu0 0
    %4510 = vmatpush1.bf16.msra.mxu0 %v3476
    %4511 = vmatprep.subr.bf16.mxu0 0
    %4512 = vmatpush1.bf16.msra.mxu0 %v3477
    %4513 = vmatprep.subr.bf16.mxu0 0
    %4514 = vmatpush1.bf16.msra.mxu0 %v3478
    %4515 = vmatprep.mubr.bf16.mxu0 %v1097
    %4516 = vmatmul.mubr.bf16.gmra.mrb[0].mxu0 %v1083
    %v4517 = vpop.f32.mrb[0].mxu0
    %v4518 = vadd.f32 %v4478, %v4517
    %v4519 = vpop.f32.mrb[0].mxu0
    %v4520 = vpop.f32.mrb[0].mxu0
    %v4521 = vpop.f32.mrb[0].mxu0
    %4522 = vdwg.mxu0
    %4523 = vmatprep.subr.bf16.mxu0 0
    %4524 = vmatpush1.bf16.msra.mxu0 %v3479
    %4525 = vmatprep.subr.bf16.mxu0 0
    %4526 = vmatpush1.bf16.msra.mxu0 %v3480
    %4527 = vmatprep.subr.bf16.mxu0 0
    %4528 = vmatpush1.bf16.msra.mxu0 %v3481
    %4529 = vmatprep.subr.bf16.mxu0 0
    %4530 = vmatpush1.bf16.msra.mxu0 %v3482
    %4531 = vmatprep.subr.bf16.mxu0 0
    %4532 = vmatpush1.bf16.msra.mxu0 %v3483
    %4533 = vmatprep.subr.bf16.mxu0 0
    %4534 = vmatpush1.bf16.msra.mxu0 %v3484
    %4535 = vmatprep.subr.bf16.mxu0 0
    %4536 = vmatpush1.bf16.msra.mxu0 %v3485
    %4537 = vmatprep.subr.bf16.mxu0 0
    %4538 = vmatpush1.bf16.msra.mxu0 %v3486
    %4539 = vmatprep.subr.bf16.mxu0 0
    %4540 = vmatpush1.bf16.msra.mxu0 %v3487
    %4541 = vmatprep.subr.bf16.mxu0 0
    %4542 = vmatpush1.bf16.msra.mxu0 %v3488
    %4543 = vmatprep.subr.bf16.mxu0 0
    %4544 = vmatpush1.bf16.msra.mxu0 %v3489
    %4545 = vmatprep.subr.bf16.mxu0 0
    %4546 = vmatpush1.bf16.msra.mxu0 %v3490
    %4547 = vmatprep.subr.bf16.mxu0 0
    %4548 = vmatpush1.bf16.msra.mxu0 %v3491
    %4549 = vmatprep.subr.bf16.mxu0 0
    %4550 = vmatpush1.bf16.msra.mxu0 %v3492
    %4551 = vmatprep.subr.bf16.mxu0 0
    %4552 = vmatpush1.bf16.msra.mxu0 %v3493
    %4553 = vmatprep.subr.bf16.mxu0 0
    %4554 = vmatpush1.bf16.msra.mxu0 %v3494
    %4555 = vmatprep.mubr.bf16.mxu0 %v1101
    %4556 = vmatmul.mubr.bf16.gmra.mrb[0].mxu0 %v1099
    %v4557 = vpop.f32.mrb[0].mxu0
    %v4558 = vadd.f32 %v4518, %v4557
    %v4559 = vpop.f32.mrb[0].mxu0
    %v4560 = vpop.f32.mrb[0].mxu0
    %v4561 = vpop.f32.mrb[0].mxu0
    %4562 = vdwg.mxu0
    %4563 = vmatprep.subr.bf16.mxu0 0
    %4564 = vmatpush1.bf16.msra.mxu0 %v3495
    %4565 = vmatprep.subr.bf16.mxu0 0
    %4566 = vmatpush1.bf16.msra.mxu0 %v3496
    %4567 = vmatprep.subr.bf16.mxu0 0
    %4568 = vmatpush1.bf16.msra.mxu0 %v3497
    %4569 = vmatprep.subr.bf16.mxu0 0
    %4570 = vmatpush1.bf16.msra.mxu0 %v3498
    %4571 = vmatprep.subr.bf16.mxu0 0
    %4572 = vmatpush1.bf16.msra.mxu0 %v3499
    %4573 = vmatprep.subr.bf16.mxu0 0
    %4574 = vmatpush1.bf16.msra.mxu0 %v3500
    %4575 = vmatprep.subr.bf16.mxu0 0
    %4576 = vmatpush1.bf16.msra.mxu0 %v3501
    %4577 = vmatprep.subr.bf16.mxu0 0
    %4578 = vmatpush1.bf16.msra.mxu0 %v3502
    %4579 = vmatprep.subr.bf16.mxu0 0
    %4580 = vmatpush1.bf16.msra.mxu0 %v3503
    %4581 = vmatprep.subr.bf16.mxu0 0
    %4582 = vmatpush1.bf16.msra.mxu0 %v3504
    %4583 = vmatprep.subr.bf16.mxu0 0
    %4584 = vmatpush1.bf16.msra.mxu0 %v3505
    %4585 = vmatprep.subr.bf16.mxu0 0
    %4586 = vmatpush1.bf16.msra.mxu0 %v3506
    %4587 = vmatprep.subr.bf16.mxu0 0
    %4588 = vmatpush1.bf16.msra.mxu0 %v3507
    %4589 = vmatprep.subr.bf16.mxu0 0
    %4590 = vmatpush1.bf16.msra.mxu0 %v3508
    %4591 = vmatprep.subr.bf16.mxu0 0
    %4592 = vmatpush1.bf16.msra.mxu0 %v3509
    %4593 = vmatprep.subr.bf16.mxu0 0
    %4594 = vmatpush1.bf16.msra.mxu0 %v3510
    %4595 = vmatprep.mubr.bf16.mxu0 %v1139
    %4596 = vmatmul.mubr.bf16.gmra.mrb[0].mxu0 %v1125
    %v4597 = vpop.f32.mrb[0].mxu0
    %v4598 = vadd.f32 %v4558, %v4597
    %v4599 = vpop.f32.mrb[0].mxu0
    %v4600 = vpop.f32.mrb[0].mxu0
    %v4601 = vpop.f32.mrb[0].mxu0
    %4602 = vdwg.mxu0
    %4603 = vmatprep.subr.bf16.mxu0 0
    %4604 = vmatpush1.bf16.msra.mxu0 %v3511
    %4605 = vmatprep.subr.bf16.mxu0 0
    %4606 = vmatpush1.bf16.msra.mxu0 %v3512
    %4607 = vmatprep.subr.bf16.mxu0 0
    %4608 = vmatpush1.bf16.msra.mxu0 %v3513
    %4609 = vmatprep.subr.bf16.mxu0 0
    %4610 = vmatpush1.bf16.msra.mxu0 %v3514
    %4611 = vmatprep.subr.bf16.mxu0 0
    %4612 = vmatpush1.bf16.msra.mxu0 %v3515
    %4613 = vmatprep.subr.bf16.mxu0 0
    %4614 = vmatpush1.bf16.msra.mxu0 %v3516
    %4615 = vmatprep.subr.bf16.mxu0 0
    %4616 = vmatpush1.bf16.msra.mxu0 %v3517
    %4617 = vmatprep.subr.bf16.mxu0 0
    %4618 = vmatpush1.bf16.msra.mxu0 %v3518
    %4619 = vmatprep.subr.bf16.mxu0 0
    %4620 = vmatpush1.bf16.msra.mxu0 %v3519
    %4621 = vmatprep.subr.bf16.mxu0 0
    %4622 = vmatpush1.bf16.msra.mxu0 %v3520
    %4623 = vmatprep.subr.bf16.mxu0 0
    %4624 = vmatpush1.bf16.msra.mxu0 %v3521
    %4625 = vmatprep.subr.bf16.mxu0 0
    %4626 = vmatpush1.bf16.msra.mxu0 %v3522
    %4627 = vmatprep.subr.bf16.mxu0 0
    %4628 = vmatpush1.bf16.msra.mxu0 %v3523
    %4629 = vmatprep.subr.bf16.mxu0 0
    %4630 = vmatpush1.bf16.msra.mxu0 %v3524
    %4631 = vmatprep.subr.bf16.mxu0 0
    %4632 = vmatpush1.bf16.msra.mxu0 %v3525
    %4633 = vmatprep.subr.bf16.mxu0 0
    %4634 = vmatpush1.bf16.msra.mxu0 %v3526
    %4635 = vmatprep.mubr.bf16.mxu0 %v1149
    %4636 = vmatmul.mubr.bf16.gmra.mrb[0].mxu0 %v1147
    %v4637 = vpop.f32.mrb[0].mxu0
    %v4638 = vadd.f32 %v4598, %v4637
    %v4639 = vpop.f32.mrb[0].mxu0
    %v4640 = vpop.f32.mrb[0].mxu0
    %v4641 = vpop.f32.mrb[0].mxu0
    %4642 = vdwg.mxu0
    %4643 = vmatprep.subr.bf16.mxu0 0
    %4644 = vmatpush1.bf16.msra.mxu0 %v3527
    %4645 = vmatprep.subr.bf16.mxu0 0
    %4646 = vmatpush1.bf16.msra.mxu0 %v3528
    %4647 = vmatprep.subr.bf16.mxu0 0
    %4648 = vmatpush1.bf16.msra.mxu0 %v3529
    %4649 = vmatprep.subr.bf16.mxu0 0
    %4650 = vmatpush1.bf16.msra.mxu0 %v3530
    %4651 = vmatprep.subr.bf16.mxu0 0
    %4652 = vmatpush1.bf16.msra.mxu0 %v3531
    %4653 = vmatprep.subr.bf16.mxu0 0
    %4654 = vmatpush1.bf16.msra.mxu0 %v3532
    %4655 = vmatprep.subr.bf16.mxu0 0
    %4656 = vmatpush1.bf16.msra.mxu0 %v3533
    %4657 = vmatprep.subr.bf16.mxu0 0
    %4658 = vmatpush1.bf16.msra.mxu0 %v3534
    %4659 = vmatprep.subr.bf16.mxu0 0
    %4660 = vmatpush1.bf16.msra.mxu0 %v3535
    %4661 = vmatprep.subr.bf16.mxu0 0
    %4662 = vmatpush1.bf16.msra.mxu0 %v3536
    %4663 = vmatprep.subr.bf16.mxu0 0
    %4664 = vmatpush1.bf16.msra.mxu0 %v3537
    %4665 = vmatprep.subr.bf16.mxu0 0
    %4666 = vmatpush1.bf16.msra.mxu0 %v3538
    %4667 = vmatprep.subr.bf16.mxu0 0
    %4668 = vmatpush1.bf16.msra.mxu0 %v3539
    %4669 = vmatprep.subr.bf16.mxu0 0
    %4670 = vmatpush1.bf16.msra.mxu0 %v3540
    %4671 = vmatprep.subr.bf16.mxu0 0
    %4672 = vmatpush1.bf16.msra.mxu0 %v3541
    %4673 = vmatprep.subr.bf16.mxu0 0
    %4674 = vmatpush1.bf16.msra.mxu0 %v3542
    %4675 = vmatprep.mubr.bf16.mxu0 %v1146
    %4676 = vmatmul.mubr.bf16.gmra.mrb[0].mxu0 %v1132
    %v4677 = vpop.f32.mrb[0].mxu0
    %v4678 = vadd.f32 %v4638, %v4677
    %v4679 = vpop.f32.mrb[0].mxu0
    %v4680 = vpop.f32.mrb[0].mxu0
    %v4681 = vpop.f32.mrb[0].mxu0
    %4682 = vdwg.mxu0
    %4683 = vmatprep.subr.bf16.mxu0 0
    %4684 = vmatpush1.bf16.msra.mxu0 %v3543
    %4685 = vmatprep.subr.bf16.mxu0 0
    %4686 = vmatpush1.bf16.msra.mxu0 %v3544
    %4687 = vmatprep.subr.bf16.mxu0 0
    %4688 = vmatpush1.bf16.msra.mxu0 %v3545
    %4689 = vmatprep.subr.bf16.mxu0 0
    %4690 = vmatpush1.bf16.msra.mxu0 %v3546
    %4691 = vmatprep.subr.bf16.mxu0 0
    %4692 = vmatpush1.bf16.msra.mxu0 %v3547
    %4693 = vmatprep.subr.bf16.mxu0 0
    %4694 = vmatpush1.bf16.msra.mxu0 %v3548
    %4695 = vmatprep.subr.bf16.mxu0 0
    %4696 = vmatpush1.bf16.msra.mxu0 %v3549
    %4697 = vmatprep.subr.bf16.mxu0 0
    %4698 = vmatpush1.bf16.msra.mxu0 %v3550
    %4699 = vmatprep.subr.bf16.mxu0 0
    %4700 = vmatpush1.bf16.msra.mxu0 %v3551
    %4701 = vmatprep.subr.bf16.mxu0 0
    %4702 = vmatpush1.bf16.msra.mxu0 %v3552
    %4703 = vmatprep.subr.bf16.mxu0 0
    %4704 = vmatpush1.bf16.msra.mxu0 %v3553
    %4705 = vmatprep.subr.bf16.mxu0 0
    %4706 = vmatpush1.bf16.msra.mxu0 %v3554
    %4707 = vmatprep.subr.bf16.mxu0 0
    %4708 = vmatpush1.bf16.msra.mxu0 %v3555
    %4709 = vmatprep.subr.bf16.mxu0 0
    %4710 = vmatpush1.bf16.msra.mxu0 %v3556
    %4711 = vmatprep.subr.bf16.mxu0 0
    %4712 = vmatpush1.bf16.msra.mxu0 %v3557
    %4713 = vmatprep.subr.bf16.mxu0 0
    %4714 = vmatpush1.bf16.msra.mxu0 %v3558
    %4715 = vmatprep.mubr.bf16.mxu0 %v1150
    %4716 = vmatmul.mubr.bf16.gmra.mrb[0].mxu0 %v1148
    %v4717 = vpop.f32.mrb[0].mxu0
    %v4718 = vadd.f32 %v4678, %v4717
    %v4719 = vpop.f32.mrb[0].mxu0
    %v4720 = vpop.f32.mrb[0].mxu0
    %v4721 = vpop.f32.mrb[0].mxu0
    %4722 = vdwg.mxu0
    %4723 = vmatprep.subr.bf16.mxu0 0
    %4724 = vmatpush1.bf16.msra.mxu0 %v3559
    %4725 = vmatprep.subr.bf16.mxu0 0
    %4726 = vmatpush1.bf16.msra.mxu0 %v3560
    %4727 = vmatprep.subr.bf16.mxu0 0
    %4728 = vmatpush1.bf16.msra.mxu0 %v3561
    %4729 = vmatprep.subr.bf16.mxu0 0
    %4730 = vmatpush1.bf16.msra.mxu0 %v3562
    %4731 = vmatprep.subr.bf16.mxu0 0
    %4732 = vmatpush1.bf16.msra.mxu0 %v3563
    %4733 = vmatprep.subr.bf16.mxu0 0
    %4734 = vmatpush1.bf16.msra.mxu0 %v3564
    %4735 = vmatprep.subr.bf16.mxu0 0
    %4736 = vmatpush1.bf16.msra.mxu0 %v3565
    %4737 = vmatprep.subr.bf16.mxu0 0
    %4738 = vmatpush1.bf16.msra.mxu0 %v3566
    %4739 = vmatprep.subr.bf16.mxu0 0
    %4740 = vmatpush1.bf16.msra.mxu0 %v3567
    %4741 = vmatprep.subr.bf16.mxu0 0
    %4742 = vmatpush1.bf16.msra.mxu0 %v3568
    %4743 = vmatprep.subr.bf16.mxu0 0
    %4744 = vmatpush1.bf16.msra.mxu0 %v3569
    %4745 = vmatprep.subr.bf16.mxu0 0
    %4746 = vmatpush1.bf16.msra.mxu0 %v3570
    %4747 = vmatprep.subr.bf16.mxu0 0
    %4748 = vmatpush1.bf16.msra.mxu0 %v3571
    %4749 = vmatprep.subr.bf16.mxu0 0
    %4750 = vmatpush1.bf16.msra.mxu0 %v3572
    %4751 = vmatprep.subr.bf16.mxu0 0
    %4752 = vmatpush1.bf16.msra.mxu0 %v3573
    %4753 = vmatprep.subr.bf16.mxu0 0
    %4754 = vmatpush1.bf16.msra.mxu0 %v3574
    %4755 = vmatprep.mubr.bf16.mxu0 %v1188
    %4756 = vmatmul.mubr.bf16.gmra.mrb[0].mxu0 %v1174
    %v4757 = vpop.f32.mrb[0].mxu0
    %v4758 = vadd.f32 %v4718, %v4757
    %v4759 = vpop.f32.mrb[0].mxu0
    %v4760 = vpop.f32.mrb[0].mxu0
    %v4761 = vpop.f32.mrb[0].mxu0
    %4762 = vdwg.mxu0
    %4763 = vmatprep.subr.bf16.mxu0 0
    %4764 = vmatpush1.bf16.msra.mxu0 %v3575
    %4765 = vmatprep.subr.bf16.mxu0 0
    %4766 = vmatpush1.bf16.msra.mxu0 %v3576
    %4767 = vmatprep.subr.bf16.mxu0 0
    %4768 = vmatpush1.bf16.msra.mxu0 %v3577
    %4769 = vmatprep.subr.bf16.mxu0 0
    %4770 = vmatpush1.bf16.msra.mxu0 %v3578
    %4771 = vmatprep.subr.bf16.mxu0 0
    %4772 = vmatpush1.bf16.msra.mxu0 %v3579
    %4773 = vmatprep.subr.bf16.mxu0 0
    %4774 = vmatpush1.bf16.msra.mxu0 %v3580
    %4775 = vmatprep.subr.bf16.mxu0 0
    %4776 = vmatpush1.bf16.msra.mxu0 %v3581
    %4777 = vmatprep.subr.bf16.mxu0 0
    %4778 = vmatpush1.bf16.msra.mxu0 %v3582
    %4779 = vmatprep.subr.bf16.mxu0 0
    %4780 = vmatpush1.bf16.msra.mxu0 %v3583
    %4781 = vmatprep.subr.bf16.mxu0 0
    %4782 = vmatpush1.bf16.msra.mxu0 %v3584
    %4783 = vmatprep.subr.bf16.mxu0 0
    %4784 = vmatpush1.bf16.msra.mxu0 %v3585
    %4785 = vmatprep.subr.bf16.mxu0 0
    %4786 = vmatpush1.bf16.msra.mxu0 %v3586
    %4787 = vmatprep.subr.bf16.mxu0 0
    %4788 = vmatpush1.bf16.msra.mxu0 %v3587
    %4789 = vmatprep.subr.bf16.mxu0 0
    %4790 = vmatpush1.bf16.msra.mxu0 %v3588
    %4791 = vmatprep.subr.bf16.mxu0 0
    %4792 = vmatpush1.bf16.msra.mxu0 %v3589
    %4793 = vmatprep.subr.bf16.mxu0 0
    %4794 = vmatpush1.bf16.msra.mxu0 %v3590
    %4795 = vmatprep.mubr.bf16.mxu0 %v1198
    %4796 = vmatmul.mubr.bf16.gmra.mrb[0].mxu0 %v1196
    %v4797 = vpop.f32.mrb[0].mxu0
    %v4798 = vadd.f32 %v4758, %v4797
    %v4799 = vpop.f32.mrb[0].mxu0
    %v4800 = vpop.f32.mrb[0].mxu0
    %v4801 = vpop.f32.mrb[0].mxu0
    %4802 = vdwg.mxu0
    %4803 = vmatprep.subr.bf16.mxu0 0
    %4804 = vmatpush1.bf16.msra.mxu0 %v3591
    %4805 = vmatprep.subr.bf16.mxu0 0
    %4806 = vmatpush1.bf16.msra.mxu0 %v3592
    %4807 = vmatprep.subr.bf16.mxu0 0
    %4808 = vmatpush1.bf16.msra.mxu0 %v3593
    %4809 = vmatprep.subr.bf16.mxu0 0
    %4810 = vmatpush1.bf16.msra.mxu0 %v3594
    %4811 = vmatprep.subr.bf16.mxu0 0
    %4812 = vmatpush1.bf16.msra.mxu0 %v3595
    %4813 = vmatprep.subr.bf16.mxu0 0
    %4814 = vmatpush1.bf16.msra.mxu0 %v3596
    %4815 = vmatprep.subr.bf16.mxu0 0
    %4816 = vmatpush1.bf16.msra.mxu0 %v3597
    %4817 = vmatprep.subr.bf16.mxu0 0
    %4818 = vmatpush1.bf16.msra.mxu0 %v3598
    %4819 = vmatprep.subr.bf16.mxu0 0
    %4820 = vmatpush1.bf16.msra.mxu0 %v3599
    %4821 = vmatprep.subr.bf16.mxu0 0
    %4822 = vmatpush1.bf16.msra.mxu0 %v3600
    %4823 = vmatprep.subr.bf16.mxu0 0
    %4824 = vmatpush1.bf16.msra.mxu0 %v3601
    %4825 = vmatprep.subr.bf16.mxu0 0
    %4826 = vmatpush1.bf16.msra.mxu0 %v3602
    %4827 = vmatprep.subr.bf16.mxu0 0
    %4828 = vmatpush1.bf16.msra.mxu0 %v3603
    %4829 = vmatprep.subr.bf16.mxu0 0
    %4830 = vmatpush1.bf16.msra.mxu0 %v3604
    %4831 = vmatprep.subr.bf16.mxu0 0
    %4832 = vmatpush1.bf16.msra.mxu0 %v3605
    %4833 = vmatprep.subr.bf16.mxu0 0
    %4834 = vmatpush1.bf16.msra.mxu0 %v3606
    %4835 = vmatprep.mubr.bf16.mxu0 %v1195
    %4836 = vmatmul.mubr.bf16.gmra.mrb[0].mxu0 %v1181
    %v4837 = vpop.f32.mrb[0].mxu0
    %v4838 = vadd.f32 %v4798, %v4837
    %v4839 = vpop.f32.mrb[0].mxu0
    %v4840 = vpop.f32.mrb[0].mxu0
    %v4841 = vpop.f32.mrb[0].mxu0
    %4842 = vdwg.mxu0
    %4843 = vmatprep.subr.bf16.mxu0 0
    %4844 = vmatpush1.bf16.msra.mxu0 %v3607
    %4845 = vmatprep.subr.bf16.mxu0 0
    %4846 = vmatpush1.bf16.msra.mxu0 %v3608
    %4847 = vmatprep.subr.bf16.mxu0 0
    %4848 = vmatpush1.bf16.msra.mxu0 %v3609
    %4849 = vmatprep.subr.bf16.mxu0 0
    %4850 = vmatpush1.bf16.msra.mxu0 %v3610
    %4851 = vmatprep.subr.bf16.mxu0 0
    %4852 = vmatpush1.bf16.msra.mxu0 %v3611
    %4853 = vmatprep.subr.bf16.mxu0 0
    %4854 = vmatpush1.bf16.msra.mxu0 %v3612
    %4855 = vmatprep.subr.bf16.mxu0 0
    %4856 = vmatpush1.bf16.msra.mxu0 %v3613
    %4857 = vmatprep.subr.bf16.mxu0 0
    %4858 = vmatpush1.bf16.msra.mxu0 %v3614
    %4859 = vmatprep.subr.bf16.mxu0 0
    %4860 = vmatpush1.bf16.msra.mxu0 %v3615
    %4861 = vmatprep.subr.bf16.mxu0 0
    %4862 = vmatpush1.bf16.msra.mxu0 %v3616
    %4863 = vmatprep.subr.bf16.mxu0 0
    %4864 = vmatpush1.bf16.msra.mxu0 %v3617
    %4865 = vmatprep.subr.bf16.mxu0 0
    %4866 = vmatpush1.bf16.msra.mxu0 %v3618
    %4867 = vmatprep.subr.bf16.mxu0 0
    %4868 = vmatpush1.bf16.msra.mxu0 %v3619
    %4869 = vmatprep.subr.bf16.mxu0 0
    %4870 = vmatpush1.bf16.msra.mxu0 %v3620
    %4871 = vmatprep.subr.bf16.mxu0 0
    %4872 = vmatpush1.bf16.msra.mxu0 %v3621
    %4873 = vmatprep.subr.bf16.mxu0 0
    %4874 = vmatpush1.bf16.msra.mxu0 %v3622
    %4875 = vmatprep.mubr.bf16.mxu0 %v1199
    %4876 = vmatmul.mubr.bf16.gmra.mrb[0].mxu0 %v1197
    %v4877 = vpop.f32.mrb[0].mxu0
    %v4878 = vadd.f32 %v4838, %v4877
    %v4879 = vpop.f32.mrb[0].mxu0
    %v4880 = vpop.f32.mrb[0].mxu0
    %v4881 = vpop.f32.mrb[0].mxu0
    %4882 = vdwg.mxu0
    %4883 = vmatprep.subr.bf16.mxu0 0
    %4884 = vmatpush1.bf16.msra.mxu0 %v3623
    %4885 = vmatprep.subr.bf16.mxu0 0
    %4886 = vmatpush1.bf16.msra.mxu0 %v3624
    %4887 = vmatprep.subr.bf16.mxu0 0
    %4888 = vmatpush1.bf16.msra.mxu0 %v3625
    %4889 = vmatprep.subr.bf16.mxu0 0
    %4890 = vmatpush1.bf16.msra.mxu0 %v3626
    %4891 = vmatprep.subr.bf16.mxu0 0
    %4892 = vmatpush1.bf16.msra.mxu0 %v3627
    %4893 = vmatprep.subr.bf16.mxu0 0
    %4894 = vmatpush1.bf16.msra.mxu0 %v3628
    %4895 = vmatprep.subr.bf16.mxu0 0
    %4896 = vmatpush1.bf16.msra.mxu0 %v3629
    %4897 = vmatprep.subr.bf16.mxu0 0
    %4898 = vmatpush1.bf16.msra.mxu0 %v3630
    %4899 = vmatprep.subr.bf16.mxu0 0
    %4900 = vmatpush1.bf16.msra.mxu0 %v3631
    %4901 = vmatprep.subr.bf16.mxu0 0
    %4902 = vmatpush1.bf16.msra.mxu0 %v3632
    %4903 = vmatprep.subr.bf16.mxu0 0
    %4904 = vmatpush1.bf16.msra.mxu0 %v3633
    %4905 = vmatprep.subr.bf16.mxu0 0
    %4906 = vmatpush1.bf16.msra.mxu0 %v3634
    %4907 = vmatprep.subr.bf16.mxu0 0
    %4908 = vmatpush1.bf16.msra.mxu0 %v3635
    %4909 = vmatprep.subr.bf16.mxu0 0
    %4910 = vmatpush1.bf16.msra.mxu0 %v3636
    %4911 = vmatprep.subr.bf16.mxu0 0
    %4912 = vmatpush1.bf16.msra.mxu0 %v3637
    %4913 = vmatprep.subr.bf16.mxu0 0
    %4914 = vmatpush1.bf16.msra.mxu0 %v3638
    %4915 = vmatprep.mubr.bf16.mxu0 %v1237
    %4916 = vmatmul.mubr.bf16.gmra.mrb[0].mxu0 %v1223
    %v4917 = vpop.f32.mrb[0].mxu0
    %v4918 = vadd.f32 %v4878, %v4917
    %v4919 = vpop.f32.mrb[0].mxu0
    %v4920 = vpop.f32.mrb[0].mxu0
    %v4921 = vpop.f32.mrb[0].mxu0
    %4922 = vdwg.mxu0
    %4923 = vmatprep.subr.bf16.mxu0 0
    %4924 = vmatpush1.bf16.msra.mxu0 %v3639
    %4925 = vmatprep.subr.bf16.mxu0 0
    %4926 = vmatpush1.bf16.msra.mxu0 %v3640
    %4927 = vmatprep.subr.bf16.mxu0 0
    %4928 = vmatpush1.bf16.msra.mxu0 %v3641
    %4929 = vmatprep.subr.bf16.mxu0 0
    %4930 = vmatpush1.bf16.msra.mxu0 %v3642
    %4931 = vmatprep.subr.bf16.mxu0 0
    %4932 = vmatpush1.bf16.msra.mxu0 %v3643
    %4933 = vmatprep.subr.bf16.mxu0 0
    %4934 = vmatpush1.bf16.msra.mxu0 %v3644
    %4935 = vmatprep.subr.bf16.mxu0 0
    %4936 = vmatpush1.bf16.msra.mxu0 %v3645
    %4937 = vmatprep.subr.bf16.mxu0 0
    %4938 = vmatpush1.bf16.msra.mxu0 %v3646
    %4939 = vmatprep.subr.bf16.mxu0 0
    %4940 = vmatpush1.bf16.msra.mxu0 %v3647
    %4941 = vmatprep.subr.bf16.mxu0 0
    %4942 = vmatpush1.bf16.msra.mxu0 %v3648
    %4943 = vmatprep.subr.bf16.mxu0 0
    %4944 = vmatpush1.bf16.msra.mxu0 %v3649
    %4945 = vmatprep.subr.bf16.mxu0 0
    %4946 = vmatpush1.bf16.msra.mxu0 %v3650
    %4947 = vmatprep.subr.bf16.mxu0 0
    %4948 = vmatpush1.bf16.msra.mxu0 %v3651
    %4949 = vmatprep.subr.bf16.mxu0 0
    %4950 = vmatpush1.bf16.msra.mxu0 %v3652
    %4951 = vmatprep.subr.bf16.mxu0 0
    %4952 = vmatpush1.bf16.msra.mxu0 %v3653
    %4953 = vmatprep.subr.bf16.mxu0 0
    %4954 = vmatpush1.bf16.msra.mxu0 %v3654
    %4955 = vmatprep.mubr.bf16.mxu0 %v1247
    %4956 = vmatmul.mubr.bf16.gmra.mrb[0].mxu0 %v1245
    %v4957 = vpop.f32.mrb[0].mxu0
    %v4958 = vadd.f32 %v4918, %v4957
    %v4959 = vpop.f32.mrb[0].mxu0
    %v4960 = vpop.f32.mrb[0].mxu0
    %v4961 = vpop.f32.mrb[0].mxu0
    %4962 = vdwg.mxu0
    %4963 = vmatprep.subr.bf16.mxu0 0
    %4964 = vmatpush1.bf16.msra.mxu0 %v3655
    %4965 = vmatprep.subr.bf16.mxu0 0
    %4966 = vmatpush1.bf16.msra.mxu0 %v3656
    %4967 = vmatprep.subr.bf16.mxu0 0
    %4968 = vmatpush1.bf16.msra.mxu0 %v3657
    %4969 = vmatprep.subr.bf16.mxu0 0
    %4970 = vmatpush1.bf16.msra.mxu0 %v3658
    %4971 = vmatprep.subr.bf16.mxu0 0
    %4972 = vmatpush1.bf16.msra.mxu0 %v3659
    %4973 = vmatprep.subr.bf16.mxu0 0
    %4974 = vmatpush1.bf16.msra.mxu0 %v3660
    %4975 = vmatprep.subr.bf16.mxu0 0
    %4976 = vmatpush1.bf16.msra.mxu0 %v3661
    %4977 = vmatprep.subr.bf16.mxu0 0
    %4978 = vmatpush1.bf16.msra.mxu0 %v3662
    %4979 = vmatprep.subr.bf16.mxu0 0
    %4980 = vmatpush1.bf16.msra.mxu0 %v3663
    %4981 = vmatprep.subr.bf16.mxu0 0
    %4982 = vmatpush1.bf16.msra.mxu0 %v3664
    %4983 = vmatprep.subr.bf16.mxu0 0
    %4984 = vmatpush1.bf16.msra.mxu0 %v3665
    %4985 = vmatprep.subr.bf16.mxu0 0
    %4986 = vmatpush1.bf16.msra.mxu0 %v3666
    %4987 = vmatprep.subr.bf16.mxu0 0
    %4988 = vmatpush1.bf16.msra.mxu0 %v3667
    %4989 = vmatprep.subr.bf16.mxu0 0
    %4990 = vmatpush1.bf16.msra.mxu0 %v3668
    %4991 = vmatprep.subr.bf16.mxu0 0
    %4992 = vmatpush1.bf16.msra.mxu0 %v3669
    %4993 = vmatprep.subr.bf16.mxu0 0
    %4994 = vmatpush1.bf16.msra.mxu0 %v3670
    %4995 = vmatprep.mubr.bf16.mxu0 %v1244
    %4996 = vmatmul.mubr.bf16.gmra.mrb[0].mxu0 %v1230
    %v4997 = vpop.f32.mrb[0].mxu0
    %v4998 = vadd.f32 %v4958, %v4997
    %v4999 = vpop.f32.mrb[0].mxu0
    %v5000 = vpop.f32.mrb[0].mxu0
    %v5001 = vpop.f32.mrb[0].mxu0
    %5002 = vdwg.mxu0
    %5003 = vmatprep.subr.bf16.mxu0 0
    %5004 = vmatpush1.bf16.msra.mxu0 %v3671
    %5005 = vmatprep.subr.bf16.mxu0 0
    %5006 = vmatpush1.bf16.msra.mxu0 %v3672
    %5007 = vmatprep.subr.bf16.mxu0 0
    %5008 = vmatpush1.bf16.msra.mxu0 %v3673
    %5009 = vmatprep.subr.bf16.mxu0 0
    %5010 = vmatpush1.bf16.msra.mxu0 %v3674
    %5011 = vmatprep.subr.bf16.mxu0 0
    %5012 = vmatpush1.bf16.msra.mxu0 %v3675
    %5013 = vmatprep.subr.bf16.mxu0 0
    %5014 = vmatpush1.bf16.msra.mxu0 %v3676
    %5015 = vmatprep.subr.bf16.mxu0 0
    %5016 = vmatpush1.bf16.msra.mxu0 %v3677
    %5017 = vmatprep.subr.bf16.mxu0 0
    %5018 = vmatpush1.bf16.msra.mxu0 %v3678
    %5019 = vmatprep.subr.bf16.mxu0 0
    %5020 = vmatpush1.bf16.msra.mxu0 %v3679
    %5021 = vmatprep.subr.bf16.mxu0 0
    %5022 = vmatpush1.bf16.msra.mxu0 %v3680
    %5023 = vmatprep.subr.bf16.mxu0 0
    %5024 = vmatpush1.bf16.msra.mxu0 %v3681
    %5025 = vmatprep.subr.bf16.mxu0 0
    %5026 = vmatpush1.bf16.msra.mxu0 %v3682
    %5027 = vmatprep.subr.bf16.mxu0 0
    %5028 = vmatpush1.bf16.msra.mxu0 %v3683
    %5029 = vmatprep.subr.bf16.mxu0 0
    %5030 = vmatpush1.bf16.msra.mxu0 %v3684
    %5031 = vmatprep.subr.bf16.mxu0 0
    %5032 = vmatpush1.bf16.msra.mxu0 %v3685
    %5033 = vmatprep.subr.bf16.mxu0 0
    %5034 = vmatpush1.bf16.msra.mxu0 %v3686
    %5035 = vmatprep.mubr.bf16.mxu0 %v1248
    %5036 = vmatmul.mubr.bf16.gmra.mrb[0].mxu0 %v1246
    %v5037 = vpop.f32.mrb[0].mxu0
    %v5038 = vadd.f32 %v4998, %v5037
    %v5039 = vpop.f32.mrb[0].mxu0
    %v5040 = vpop.f32.mrb[0].mxu0
    %v5041 = vpop.f32.mrb[0].mxu0
    %5042 = vdwg.mxu0
    %5043 = vmatprep.subr.bf16.mxu0 0
    %5044 = vmatpush1.bf16.msra.mxu0 %v3687
    %5045 = vmatprep.subr.bf16.mxu0 0
    %5046 = vmatpush1.bf16.msra.mxu0 %v3688
    %5047 = vmatprep.subr.bf16.mxu0 0
    %5048 = vmatpush1.bf16.msra.mxu0 %v3689
    %5049 = vmatprep.subr.bf16.mxu0 0
    %5050 = vmatpush1.bf16.msra.mxu0 %v3690
    %5051 = vmatprep.subr.bf16.mxu0 0
    %5052 = vmatpush1.bf16.msra.mxu0 %v3691
    %5053 = vmatprep.subr.bf16.mxu0 0
    %5054 = vmatpush1.bf16.msra.mxu0 %v3692
    %5055 = vmatprep.subr.bf16.mxu0 0
    %5056 = vmatpush1.bf16.msra.mxu0 %v3693
    %5057 = vmatprep.subr.bf16.mxu0 0
    %5058 = vmatpush1.bf16.msra.mxu0 %v3694
    %5059 = vmatprep.subr.bf16.mxu0 0
    %5060 = vmatpush1.bf16.msra.mxu0 %v3695
    %5061 = vmatprep.subr.bf16.mxu0 0
    %5062 = vmatpush1.bf16.msra.mxu0 %v3696
    %5063 = vmatprep.subr.bf16.mxu0 0
    %5064 = vmatpush1.bf16.msra.mxu0 %v3697
    %5065 = vmatprep.subr.bf16.mxu0 0
    %5066 = vmatpush1.bf16.msra.mxu0 %v3698
    %5067 = vmatprep.subr.bf16.mxu0 0
    %5068 = vmatpush1.bf16.msra.mxu0 %v3699
    %5069 = vmatprep.subr.bf16.mxu0 0
    %5070 = vmatpush1.bf16.msra.mxu0 %v3700
    %5071 = vmatprep.subr.bf16.mxu0 0
    %5072 = vmatpush1.bf16.msra.mxu0 %v3701
    %5073 = vmatprep.subr.bf16.mxu0 0
    %5074 = vmatpush1.bf16.msra.mxu0 %v3702
    %5075 = vmatprep.mubr.bf16.mxu0 %v1286
    %5076 = vmatmul.mubr.bf16.gmra.mrb[0].mxu0 %v1272
    %v5077 = vpop.f32.mrb[0].mxu0
    %v5078 = vadd.f32 %v5038, %v5077
    %v5079 = vpop.f32.mrb[0].mxu0
    %v5080 = vpop.f32.mrb[0].mxu0
    %v5081 = vpop.f32.mrb[0].mxu0
    %5082 = vdwg.mxu0
    %5083 = vmatprep.subr.bf16.mxu0 0
    %5084 = vmatpush1.bf16.msra.mxu0 %v3703
    %5085 = vmatprep.subr.bf16.mxu0 0
    %5086 = vmatpush1.bf16.msra.mxu0 %v3704
    %5087 = vmatprep.subr.bf16.mxu0 0
    %5088 = vmatpush1.bf16.msra.mxu0 %v3705
    %5089 = vmatprep.subr.bf16.mxu0 0
    %5090 = vmatpush1.bf16.msra.mxu0 %v3706
    %5091 = vmatprep.subr.bf16.mxu0 0
    %5092 = vmatpush1.bf16.msra.mxu0 %v3707
    %5093 = vmatprep.subr.bf16.mxu0 0
    %5094 = vmatpush1.bf16.msra.mxu0 %v3708
    %5095 = vmatprep.subr.bf16.mxu0 0
    %5096 = vmatpush1.bf16.msra.mxu0 %v3709
    %5097 = vmatprep.subr.bf16.mxu0 0
    %5098 = vmatpush1.bf16.msra.mxu0 %v3710
    %5099 = vmatprep.subr.bf16.mxu0 0
    %5100 = vmatpush1.bf16.msra.mxu0 %v3711
    %5101 = vmatprep.subr.bf16.mxu0 0
    %5102 = vmatpush1.bf16.msra.mxu0 %v3712
    %5103 = vmatprep.subr.bf16.mxu0 0
    %5104 = vmatpush1.bf16.msra.mxu0 %v3713
    %5105 = vmatprep.subr.bf16.mxu0 0
    %5106 = vmatpush1.bf16.msra.mxu0 %v3714
    %5107 = vmatprep.subr.bf16.mxu0 0
    %5108 = vmatpush1.bf16.msra.mxu0 %v3715
    %5109 = vmatprep.subr.bf16.mxu0 0
    %5110 = vmatpush1.bf16.msra.mxu0 %v3716
    %5111 = vmatprep.subr.bf16.mxu0 0
    %5112 = vmatpush1.bf16.msra.mxu0 %v3717
    %5113 = vmatprep.subr.bf16.mxu0 0
    %5114 = vmatpush1.bf16.msra.mxu0 %v3718
    %5115 = vmatprep.mubr.bf16.mxu0 %v1296
    %5116 = vmatmul.mubr.bf16.gmra.mrb[0].mxu0 %v1294
    %v5117 = vpop.f32.mrb[0].mxu0
    %v5118 = vadd.f32 %v5078, %v5117
    %v5119 = vpop.f32.mrb[0].mxu0
    %v5120 = vpop.f32.mrb[0].mxu0
    %v5121 = vpop.f32.mrb[0].mxu0
    %5122 = vdwg.mxu0
    %5123 = vmatprep.subr.bf16.mxu0 0
    %5124 = vmatpush1.bf16.msra.mxu0 %v3719
    %5125 = vmatprep.subr.bf16.mxu0 0
    %5126 = vmatpush1.bf16.msra.mxu0 %v3720
    %5127 = vmatprep.subr.bf16.mxu0 0
    %5128 = vmatpush1.bf16.msra.mxu0 %v3721
    %5129 = vmatprep.subr.bf16.mxu0 0
    %5130 = vmatpush1.bf16.msra.mxu0 %v3722
    %5131 = vmatprep.subr.bf16.mxu0 0
    %5132 = vmatpush1.bf16.msra.mxu0 %v3723
    %5133 = vmatprep.subr.bf16.mxu0 0
    %5134 = vmatpush1.bf16.msra.mxu0 %v3724
    %5135 = vmatprep.subr.bf16.mxu0 0
    %5136 = vmatpush1.bf16.msra.mxu0 %v3725
    %5137 = vmatprep.subr.bf16.mxu0 0
    %5138 = vmatpush1.bf16.msra.mxu0 %v3726
    %5139 = vmatprep.subr.bf16.mxu0 0
    %5140 = vmatpush1.bf16.msra.mxu0 %v3727
    %5141 = vmatprep.subr.bf16.mxu0 0
    %5142 = vmatpush1.bf16.msra.mxu0 %v3728
    %5143 = vmatprep.subr.bf16.mxu0 0
    %5144 = vmatpush1.bf16.msra.mxu0 %v3729
    %5145 = vmatprep.subr.bf16.mxu0 0
    %5146 = vmatpush1.bf16.msra.mxu0 %v3730
    %5147 = vmatprep.subr.bf16.mxu0 0
    %5148 = vmatpush1.bf16.msra.mxu0 %v3731
    %5149 = vmatprep.subr.bf16.mxu0 0
    %5150 = vmatpush1.bf16.msra.mxu0 %v3732
    %5151 = vmatprep.subr.bf16.mxu0 0
    %5152 = vmatpush1.bf16.msra.mxu0 %v3733
    %5153 = vmatprep.subr.bf16.mxu0 0
    %5154 = vmatpush1.bf16.msra.mxu0 %v3734
    %5155 = vmatprep.mubr.bf16.mxu0 %v1293
    %5156 = vmatmul.mubr.bf16.gmra.mrb[0].mxu0 %v1279
    %v5157 = vpop.f32.mrb[0].mxu0
    %v5158 = vadd.f32 %v5118, %v5157
    %v5159 = vpop.f32.mrb[0].mxu0
    %v5160 = vpop.f32.mrb[0].mxu0
    %v5161 = vpop.f32.mrb[0].mxu0
    %5162 = vdwg.mxu0
    %5163 = vmatprep.subr.bf16.mxu0 0
    %5164 = vmatpush1.bf16.msra.mxu0 %v3735
    %5165 = vmatprep.subr.bf16.mxu0 0
    %5166 = vmatpush1.bf16.msra.mxu0 %v3736
    %5167 = vmatprep.subr.bf16.mxu0 0
    %5168 = vmatpush1.bf16.msra.mxu0 %v3737
    %5169 = vmatprep.subr.bf16.mxu0 0
    %5170 = vmatpush1.bf16.msra.mxu0 %v3738
    %5171 = vmatprep.subr.bf16.mxu0 0
    %5172 = vmatpush1.bf16.msra.mxu0 %v3739
    %5173 = vmatprep.subr.bf16.mxu0 0
    %5174 = vmatpush1.bf16.msra.mxu0 %v3740
    %5175 = vmatprep.subr.bf16.mxu0 0
    %5176 = vmatpush1.bf16.msra.mxu0 %v3741
    %5177 = vmatprep.subr.bf16.mxu0 0
    %5178 = vmatpush1.bf16.msra.mxu0 %v3742
    %5179 = vmatprep.subr.bf16.mxu0 0
    %5180 = vmatpush1.bf16.msra.mxu0 %v3743
    %5181 = vmatprep.subr.bf16.mxu0 0
    %5182 = vmatpush1.bf16.msra.mxu0 %v3744
    %5183 = vmatprep.subr.bf16.mxu0 0
    %5184 = vmatpush1.bf16.msra.mxu0 %v3745
    %5185 = vmatprep.subr.bf16.mxu0 0
    %5186 = vmatpush1.bf16.msra.mxu0 %v3746
    %5187 = vmatprep.subr.bf16.mxu0 0
    %5188 = vmatpush1.bf16.msra.mxu0 %v3747
    %5189 = vmatprep.subr.bf16.mxu0 0
    %5190 = vmatpush1.bf16.msra.mxu0 %v3748
    %5191 = vmatprep.subr.bf16.mxu0 0
    %5192 = vmatpush1.bf16.msra.mxu0 %v3749
    %5193 = vmatprep.subr.bf16.mxu0 0
    %5194 = vmatpush1.bf16.msra.mxu0 %v3750
    %5195 = vmatprep.mubr.bf16.mxu0 %v1297
    %5196 = vmatmul.mubr.bf16.gmra.mrb[0].mxu0 %v1295
    %v5197 = vpop.f32.mrb[0].mxu0
    %v5198 = vadd.f32 %v5158, %v5197
    %v5199 = vpop.f32.mrb[0].mxu0
    %v5200 = vpop.f32.mrb[0].mxu0
    %v5201 = vpop.f32.mrb[0].mxu0
    %5202 = vdwg.mxu0
    %5203 = vmatprep.subr.bf16.mxu0 0
    %5204 = vmatpush1.bf16.msra.mxu0 %v3751
    %5205 = vmatprep.subr.bf16.mxu0 0
    %5206 = vmatpush1.bf16.msra.mxu0 %v3752
    %5207 = vmatprep.subr.bf16.mxu0 0
    %5208 = vmatpush1.bf16.msra.mxu0 %v3753
    %5209 = vmatprep.subr.bf16.mxu0 0
    %5210 = vmatpush1.bf16.msra.mxu0 %v3754
    %5211 = vmatprep.subr.bf16.mxu0 0
    %5212 = vmatpush1.bf16.msra.mxu0 %v3755
    %5213 = vmatprep.subr.bf16.mxu0 0
    %5214 = vmatpush1.bf16.msra.mxu0 %v3756
    %5215 = vmatprep.subr.bf16.mxu0 0
    %5216 = vmatpush1.bf16.msra.mxu0 %v3757
    %5217 = vmatprep.subr.bf16.mxu0 0
    %5218 = vmatpush1.bf16.msra.mxu0 %v3758
    %5219 = vmatprep.subr.bf16.mxu0 0
    %5220 = vmatpush1.bf16.msra.mxu0 %v3759
    %5221 = vmatprep.subr.bf16.mxu0 0
    %5222 = vmatpush1.bf16.msra.mxu0 %v3760
    %5223 = vmatprep.subr.bf16.mxu0 0
    %5224 = vmatpush1.bf16.msra.mxu0 %v3761
    %5225 = vmatprep.subr.bf16.mxu0 0
    %5226 = vmatpush1.bf16.msra.mxu0 %v3762
    %5227 = vmatprep.subr.bf16.mxu0 0
    %5228 = vmatpush1.bf16.msra.mxu0 %v3763
    %5229 = vmatprep.subr.bf16.mxu0 0
    %5230 = vmatpush1.bf16.msra.mxu0 %v3764
    %5231 = vmatprep.subr.bf16.mxu0 0
    %5232 = vmatpush1.bf16.msra.mxu0 %v3765
    %5233 = vmatprep.subr.bf16.mxu0 0
    %5234 = vmatpush1.bf16.msra.mxu0 %v3766
    %5235 = vmatprep.mubr.bf16.mxu0 %v1335
    %5236 = vmatmul.mubr.bf16.gmra.mrb[0].mxu0 %v1321
    %v5237 = vpop.f32.mrb[0].mxu0
    %v5238 = vadd.f32 %v5198, %v5237
    %v5239 = vpop.f32.mrb[0].mxu0
    %v5240 = vpop.f32.mrb[0].mxu0
    %v5241 = vpop.f32.mrb[0].mxu0
    %5242 = vdwg.mxu0
    %5243 = vmatprep.subr.bf16.mxu0 0
    %5244 = vmatpush1.bf16.msra.mxu0 %v3767
    %5245 = vmatprep.subr.bf16.mxu0 0
    %5246 = vmatpush1.bf16.msra.mxu0 %v3768
    %5247 = vmatprep.subr.bf16.mxu0 0
    %5248 = vmatpush1.bf16.msra.mxu0 %v3769
    %5249 = vmatprep.subr.bf16.mxu0 0
    %5250 = vmatpush1.bf16.msra.mxu0 %v3770
    %5251 = vmatprep.subr.bf16.mxu0 0
    %5252 = vmatpush1.bf16.msra.mxu0 %v3771
    %5253 = vmatprep.subr.bf16.mxu0 0
    %5254 = vmatpush1.bf16.msra.mxu0 %v3772
    %5255 = vmatprep.subr.bf16.mxu0 0
    %5256 = vmatpush1.bf16.msra.mxu0 %v3773
    %5257 = vmatprep.subr.bf16.mxu0 0
    %5258 = vmatpush1.bf16.msra.mxu0 %v3774
    %5259 = vmatprep.subr.bf16.mxu0 0
    %5260 = vmatpush1.bf16.msra.mxu0 %v3775
    %5261 = vmatprep.subr.bf16.mxu0 0
    %5262 = vmatpush1.bf16.msra.mxu0 %v3776
    %5263 = vmatprep.subr.bf16.mxu0 0
    %5264 = vmatpush1.bf16.msra.mxu0 %v3777
    %5265 = vmatprep.subr.bf16.mxu0 0
    %5266 = vmatpush1.bf16.msra.mxu0 %v3778
    %5267 = vmatprep.subr.bf16.mxu0 0
    %5268 = vmatpush1.bf16.msra.mxu0 %v3779
    %5269 = vmatprep.subr.bf16.mxu0 0
    %5270 = vmatpush1.bf16.msra.mxu0 %v3780
    %5271 = vmatprep.subr.bf16.mxu0 0
    %5272 = vmatpush1.bf16.msra.mxu0 %v3781
    %5273 = vmatprep.subr.bf16.mxu0 0
    %5274 = vmatpush1.bf16.msra.mxu0 %v3782
    %5275 = vmatprep.mubr.bf16.mxu0 %v1345
    %5276 = vmatmul.mubr.bf16.gmra.mrb[0].mxu0 %v1343
    %v5277 = vpop.f32.mrb[0].mxu0
    %v5278 = vadd.f32 %v5238, %v5277
    %v5279 = vpop.f32.mrb[0].mxu0
    %v5280 = vpop.f32.mrb[0].mxu0
    %v5281 = vpop.f32.mrb[0].mxu0
    %5282 = vdwg.mxu0
    %5283 = vmatprep.subr.bf16.mxu0 0
    %5284 = vmatpush1.bf16.msra.mxu0 %v3783
    %5285 = vmatprep.subr.bf16.mxu0 0
    %5286 = vmatpush1.bf16.msra.mxu0 %v3784
    %5287 = vmatprep.subr.bf16.mxu0 0
    %5288 = vmatpush1.bf16.msra.mxu0 %v3785
    %5289 = vmatprep.subr.bf16.mxu0 0
    %5290 = vmatpush1.bf16.msra.mxu0 %v3786
    %5291 = vmatprep.subr.bf16.mxu0 0
    %5292 = vmatpush1.bf16.msra.mxu0 %v3787
    %5293 = vmatprep.subr.bf16.mxu0 0
    %5294 = vmatpush1.bf16.msra.mxu0 %v3788
    %5295 = vmatprep.subr.bf16.mxu0 0
    %5296 = vmatpush1.bf16.msra.mxu0 %v3789
    %5297 = vmatprep.subr.bf16.mxu0 0
    %5298 = vmatpush1.bf16.msra.mxu0 %v3790
    %5299 = vmatprep.subr.bf16.mxu0 0
    %5300 = vmatpush1.bf16.msra.mxu0 %v3791
    %5301 = vmatprep.subr.bf16.mxu0 0
    %5302 = vmatpush1.bf16.msra.mxu0 %v3792
    %5303 = vmatprep.subr.bf16.mxu0 0
    %5304 = vmatpush1.bf16.msra.mxu0 %v3793
    %5305 = vmatprep.subr.bf16.mxu0 0
    %5306 = vmatpush1.bf16.msra.mxu0 %v3794
    %5307 = vmatprep.subr.bf16.mxu0 0
    %5308 = vmatpush1.bf16.msra.mxu0 %v3795
    %5309 = vmatprep.subr.bf16.mxu0 0
    %5310 = vmatpush1.bf16.msra.mxu0 %v3796
    %5311 = vmatprep.subr.bf16.mxu0 0
    %5312 = vmatpush1.bf16.msra.mxu0 %v3797
    %5313 = vmatprep.subr.bf16.mxu0 0
    %5314 = vmatpush1.bf16.msra.mxu0 %v3798
    %5315 = vmatprep.mubr.bf16.mxu0 %v1342
    %5316 = vmatmul.mubr.bf16.gmra.mrb[0].mxu0 %v1328
    %v5317 = vpop.f32.mrb[0].mxu0
    %v5318 = vadd.f32 %v5278, %v5317
    %v5319 = vpop.f32.mrb[0].mxu0
    %v5320 = vpop.f32.mrb[0].mxu0
    %v5321 = vpop.f32.mrb[0].mxu0
    %5322 = vdwg.mxu0
    %5323 = vmatprep.subr.bf16.mxu0 0
    %5324 = vmatpush1.bf16.msra.mxu0 %v3799
    %5325 = vmatprep.subr.bf16.mxu0 0
    %5326 = vmatpush1.bf16.msra.mxu0 %v3800
    %5327 = vmatprep.subr.bf16.mxu0 0
    %5328 = vmatpush1.bf16.msra.mxu0 %v3801
    %5329 = vmatprep.subr.bf16.mxu0 0
    %5330 = vmatpush1.bf16.msra.mxu0 %v3802
    %5331 = vmatprep.subr.bf16.mxu0 0
    %5332 = vmatpush1.bf16.msra.mxu0 %v3803
    %5333 = vmatprep.subr.bf16.mxu0 0
    %5334 = vmatpush1.bf16.msra.mxu0 %v3804
    %5335 = vmatprep.subr.bf16.mxu0 0
    %5336 = vmatpush1.bf16.msra.mxu0 %v3805
    %5337 = vmatprep.subr.bf16.mxu0 0
    %5338 = vmatpush1.bf16.msra.mxu0 %v3806
    %5339 = vmatprep.subr.bf16.mxu0 0
    %5340 = vmatpush1.bf16.msra.mxu0 %v3807
    %5341 = vmatprep.subr.bf16.mxu0 0
    %5342 = vmatpush1.bf16.msra.mxu0 %v3808
    %5343 = vmatprep.subr.bf16.mxu0 0
    %5344 = vmatpush1.bf16.msra.mxu0 %v3809
    %5345 = vmatprep.subr.bf16.mxu0 0
    %5346 = vmatpush1.bf16.msra.mxu0 %v3810
    %5347 = vmatprep.subr.bf16.mxu0 0
    %5348 = vmatpush1.bf16.msra.mxu0 %v3811
    %5349 = vmatprep.subr.bf16.mxu0 0
    %5350 = vmatpush1.bf16.msra.mxu0 %v3812
    %5351 = vmatprep.subr.bf16.mxu0 0
    %5352 = vmatpush1.bf16.msra.mxu0 %v3813
    %5353 = vmatprep.subr.bf16.mxu0 0
    %5354 = vmatpush1.bf16.msra.mxu0 %v3814
    %5355 = vmatprep.mubr.bf16.mxu0 %v1346
    %5356 = vmatmul.mubr.bf16.gmra.mrb[0].mxu0 %v1344
    %v5357 = vpop.f32.mrb[0].mxu0
    %v5358 = vadd.f32 %v5318, %v5357
    %v5359 = vpop.f32.mrb[0].mxu0
    %v5360 = vpop.f32.mrb[0].mxu0
    %v5361 = vpop.f32.mrb[0].mxu0
    %5362 = vdwg.mxu0
    %5363 = vmatprep.subr.bf16.mxu0 0
    %5364 = vmatpush1.bf16.msra.mxu0 %v3815
    %5365 = vmatprep.subr.bf16.mxu0 0
    %5366 = vmatpush1.bf16.msra.mxu0 %v3816
    %5367 = vmatprep.subr.bf16.mxu0 0
    %5368 = vmatpush1.bf16.msra.mxu0 %v3817
    %5369 = vmatprep.subr.bf16.mxu0 0
    %5370 = vmatpush1.bf16.msra.mxu0 %v3818
    %5371 = vmatprep.subr.bf16.mxu0 0
    %5372 = vmatpush1.bf16.msra.mxu0 %v3819
    %5373 = vmatprep.subr.bf16.mxu0 0
    %5374 = vmatpush1.bf16.msra.mxu0 %v3820
    %5375 = vmatprep.subr.bf16.mxu0 0
    %5376 = vmatpush1.bf16.msra.mxu0 %v3821
    %5377 = vmatprep.subr.bf16.mxu0 0
    %5378 = vmatpush1.bf16.msra.mxu0 %v3822
    %5379 = vmatprep.subr.bf16.mxu0 0
    %5380 = vmatpush1.bf16.msra.mxu0 %v3823
    %5381 = vmatprep.subr.bf16.mxu0 0
    %5382 = vmatpush1.bf16.msra.mxu0 %v3824
    %5383 = vmatprep.subr.bf16.mxu0 0
    %5384 = vmatpush1.bf16.msra.mxu0 %v3825
    %5385 = vmatprep.subr.bf16.mxu0 0
    %5386 = vmatpush1.bf16.msra.mxu0 %v3826
    %5387 = vmatprep.subr.bf16.mxu0 0
    %5388 = vmatpush1.bf16.msra.mxu0 %v3827
    %5389 = vmatprep.subr.bf16.mxu0 0
    %5390 = vmatpush1.bf16.msra.mxu0 %v3828
    %5391 = vmatprep.subr.bf16.mxu0 0
    %5392 = vmatpush1.bf16.msra.mxu0 %v3829
    %5393 = vmatprep.subr.bf16.mxu0 0
    %5394 = vmatpush1.bf16.msra.mxu0 %v3830
    %5395 = vmatprep.mubr.bf16.mxu0 %v1384
    %5396 = vmatmul.mubr.bf16.gmra.mrb[0].mxu0 %v1370
    %v5397 = vpop.f32.mrb[0].mxu0
    %v5398 = vadd.f32 %v5358, %v5397
    %v5399 = vpop.f32.mrb[0].mxu0
    %v5400 = vpop.f32.mrb[0].mxu0
    %v5401 = vpop.f32.mrb[0].mxu0
    %5402 = vdwg.mxu0
    %5403 = vmatprep.subr.bf16.mxu0 0
    %5404 = vmatpush1.bf16.msra.mxu0 %v3831
    %5405 = vmatprep.subr.bf16.mxu0 0
    %5406 = vmatpush1.bf16.msra.mxu0 %v3832
    %5407 = vmatprep.subr.bf16.mxu0 0
    %5408 = vmatpush1.bf16.msra.mxu0 %v3833
    %5409 = vmatprep.subr.bf16.mxu0 0
    %5410 = vmatpush1.bf16.msra.mxu0 %v3834
    %5411 = vmatprep.subr.bf16.mxu0 0
    %5412 = vmatpush1.bf16.msra.mxu0 %v3835
    %5413 = vmatprep.subr.bf16.mxu0 0
    %5414 = vmatpush1.bf16.msra.mxu0 %v3836
    %5415 = vmatprep.subr.bf16.mxu0 0
    %5416 = vmatpush1.bf16.msra.mxu0 %v3837
    %5417 = vmatprep.subr.bf16.mxu0 0
    %5418 = vmatpush1.bf16.msra.mxu0 %v3838
    %5419 = vmatprep.subr.bf16.mxu0 0
    %5420 = vmatpush1.bf16.msra.mxu0 %v3839
    %5421 = vmatprep.subr.bf16.mxu0 0
    %5422 = vmatpush1.bf16.msra.mxu0 %v3840
    %5423 = vmatprep.subr.bf16.mxu0 0
    %5424 = vmatpush1.bf16.msra.mxu0 %v3841
    %5425 = vmatprep.subr.bf16.mxu0 0
    %5426 = vmatpush1.bf16.msra.mxu0 %v3842
    %5427 = vmatprep.subr.bf16.mxu0 0
    %5428 = vmatpush1.bf16.msra.mxu0 %v3843
    %5429 = vmatprep.subr.bf16.mxu0 0
    %5430 = vmatpush1.bf16.msra.mxu0 %v3844
    %5431 = vmatprep.subr.bf16.mxu0 0
    %5432 = vmatpush1.bf16.msra.mxu0 %v3845
    %5433 = vmatprep.subr.bf16.mxu0 0
    %5434 = vmatpush1.bf16.msra.mxu0 %v3846
    %5435 = vmatprep.mubr.bf16.mxu0 %v1394
    %5436 = vmatmul.mubr.bf16.gmra.mrb[0].mxu0 %v1392
    %v5437 = vpop.f32.mrb[0].mxu0
    %v5438 = vadd.f32 %v5398, %v5437
    %v5439 = vpop.f32.mrb[0].mxu0
    %v5440 = vpop.f32.mrb[0].mxu0
    %v5441 = vpop.f32.mrb[0].mxu0
    %5442 = vdwg.mxu0
    %5443 = vmatprep.subr.bf16.mxu0 0
    %5444 = vmatpush1.bf16.msra.mxu0 %v3847
    %5445 = vmatprep.subr.bf16.mxu0 0
    %5446 = vmatpush1.bf16.msra.mxu0 %v3848
    %5447 = vmatprep.subr.bf16.mxu0 0
    %5448 = vmatpush1.bf16.msra.mxu0 %v3849
    %5449 = vmatprep.subr.bf16.mxu0 0
    %5450 = vmatpush1.bf16.msra.mxu0 %v3850
    %5451 = vmatprep.subr.bf16.mxu0 0
    %5452 = vmatpush1.bf16.msra.mxu0 %v3851
    %5453 = vmatprep.subr.bf16.mxu0 0
    %5454 = vmatpush1.bf16.msra.mxu0 %v3852
    %5455 = vmatprep.subr.bf16.mxu0 0
    %5456 = vmatpush1.bf16.msra.mxu0 %v3853
    %5457 = vmatprep.subr.bf16.mxu0 0
    %5458 = vmatpush1.bf16.msra.mxu0 %v3854
    %5459 = vmatprep.subr.bf16.mxu0 0
    %5460 = vmatpush1.bf16.msra.mxu0 %v3855
    %5461 = vmatprep.subr.bf16.mxu0 0
    %5462 = vmatpush1.bf16.msra.mxu0 %v3856
    %5463 = vmatprep.subr.bf16.mxu0 0
    %5464 = vmatpush1.bf16.msra.mxu0 %v3857
    %5465 = vmatprep.subr.bf16.mxu0 0
    %5466 = vmatpush1.bf16.msra.mxu0 %v3858
    %5467 = vmatprep.subr.bf16.mxu0 0
    %5468 = vmatpush1.bf16.msra.mxu0 %v3859
    %5469 = vmatprep.subr.bf16.mxu0 0
    %5470 = vmatpush1.bf16.msra.mxu0 %v3860
    %5471 = vmatprep.subr.bf16.mxu0 0
    %5472 = vmatpush1.bf16.msra.mxu0 %v3861
    %5473 = vmatprep.subr.bf16.mxu0 0
    %5474 = vmatpush1.bf16.msra.mxu0 %v3862
    %5475 = vmatprep.mubr.bf16.mxu0 %v1391
    %5476 = vmatmul.mubr.bf16.gmra.mrb[0].mxu0 %v1377
    %v5477 = vpop.f32.mrb[0].mxu0
    %v5478 = vadd.f32 %v5438, %v5477
    %v5479 = vpop.f32.mrb[0].mxu0
    %v5480 = vpop.f32.mrb[0].mxu0
    %v5481 = vpop.f32.mrb[0].mxu0
    %5482 = vdwg.mxu0
    %5483 = vmatprep.subr.bf16.mxu0 0
    %5484 = vmatpush1.bf16.msra.mxu0 %v3863
    %5485 = vmatprep.subr.bf16.mxu0 0
    %5486 = vmatpush1.bf16.msra.mxu0 %v3864
    %5487 = vmatprep.subr.bf16.mxu0 0
    %5488 = vmatpush1.bf16.msra.mxu0 %v3865
    %5489 = vmatprep.subr.bf16.mxu0 0
    %5490 = vmatpush1.bf16.msra.mxu0 %v3866
    %5491 = vmatprep.subr.bf16.mxu0 0
    %5492 = vmatpush1.bf16.msra.mxu0 %v3867
    %5493 = vmatprep.subr.bf16.mxu0 0
    %5494 = vmatpush1.bf16.msra.mxu0 %v3868
    %5495 = vmatprep.subr.bf16.mxu0 0
    %5496 = vmatpush1.bf16.msra.mxu0 %v3869
    %5497 = vmatprep.subr.bf16.mxu0 0
    %5498 = vmatpush1.bf16.msra.mxu0 %v3870
    %5499 = vmatprep.subr.bf16.mxu0 0
    %5500 = vmatpush1.bf16.msra.mxu0 %v3871
    %5501 = vmatprep.subr.bf16.mxu0 0
    %5502 = vmatpush1.bf16.msra.mxu0 %v3872
    %5503 = vmatprep.subr.bf16.mxu0 0
    %5504 = vmatpush1.bf16.msra.mxu0 %v3873
    %5505 = vmatprep.subr.bf16.mxu0 0
    %5506 = vmatpush1.bf16.msra.mxu0 %v3874
    %5507 = vmatprep.subr.bf16.mxu0 0
    %5508 = vmatpush1.bf16.msra.mxu0 %v3875
    %5509 = vmatprep.subr.bf16.mxu0 0
    %5510 = vmatpush1.bf16.msra.mxu0 %v3876
    %5511 = vmatprep.subr.bf16.mxu0 0
    %5512 = vmatpush1.bf16.msra.mxu0 %v3877
    %5513 = vmatprep.subr.bf16.mxu0 0
    %5514 = vmatpush1.bf16.msra.mxu0 %v3878
    %5515 = vmatprep.mubr.bf16.mxu0 %v1395
    %5516 = vmatmul.mubr.bf16.gmra.mrb[0].mxu0 %v1393
    %v5517 = vpop.f32.mrb[0].mxu0
    %v5518 = vadd.f32 %v5478, %v5517
    %v5519 = vpop.f32.mrb[0].mxu0
    %v5520 = vpop.f32.mrb[0].mxu0
    %v5521 = vpop.f32.mrb[0].mxu0
    %5522 = vdwg.mxu0
    %5523 = vmatprep.subr.bf16.mxu0 0
    %5524 = vmatpush1.bf16.msra.mxu0 %v3879
    %5525 = vmatprep.subr.bf16.mxu0 0
    %5526 = vmatpush1.bf16.msra.mxu0 %v3880
    %5527 = vmatprep.subr.bf16.mxu0 0
    %5528 = vmatpush1.bf16.msra.mxu0 %v3881
    %5529 = vmatprep.subr.bf16.mxu0 0
    %5530 = vmatpush1.bf16.msra.mxu0 %v3882
    %5531 = vmatprep.subr.bf16.mxu0 0
    %5532 = vmatpush1.bf16.msra.mxu0 %v3883
    %5533 = vmatprep.subr.bf16.mxu0 0
    %5534 = vmatpush1.bf16.msra.mxu0 %v3884
    %5535 = vmatprep.subr.bf16.mxu0 0
    %5536 = vmatpush1.bf16.msra.mxu0 %v3885
    %5537 = vmatprep.subr.bf16.mxu0 0
    %5538 = vmatpush1.bf16.msra.mxu0 %v3886
    %5539 = vmatprep.subr.bf16.mxu0 0
    %5540 = vmatpush1.bf16.msra.mxu0 %v3887
    %5541 = vmatprep.subr.bf16.mxu0 0
    %5542 = vmatpush1.bf16.msra.mxu0 %v3888
    %5543 = vmatprep.subr.bf16.mxu0 0
    %5544 = vmatpush1.bf16.msra.mxu0 %v3889
    %5545 = vmatprep.subr.bf16.mxu0 0
    %5546 = vmatpush1.bf16.msra.mxu0 %v3890
    %5547 = vmatprep.subr.bf16.mxu0 0
    %5548 = vmatpush1.bf16.msra.mxu0 %v3891
    %5549 = vmatprep.subr.bf16.mxu0 0
    %5550 = vmatpush1.bf16.msra.mxu0 %v3892
    %5551 = vmatprep.subr.bf16.mxu0 0
    %5552 = vmatpush1.bf16.msra.mxu0 %v3893
    %5553 = vmatprep.subr.bf16.mxu0 0
    %5554 = vmatpush1.bf16.msra.mxu0 %v3894
    %5555 = vmatprep.mubr.bf16.mxu0 %v1432
    %5556 = vmatmul.mubr.bf16.gmra.mrb[0].mxu0 %v1418
    %v5557 = vpop.f32.mrb[0].mxu0
    %v5558 = vadd.f32 %v5518, %v5557
    %v5559 = vpop.f32.mrb[0].mxu0
    %v5560 = vpop.f32.mrb[0].mxu0
    %v5561 = vpop.f32.mrb[0].mxu0
    %5562 = vdwg.mxu0
    %5563 = vmatprep.subr.bf16.mxu0 0
    %5564 = vmatpush1.bf16.msra.mxu0 %v3895
    %5565 = vmatprep.subr.bf16.mxu0 0
    %5566 = vmatpush1.bf16.msra.mxu0 %v3896
    %5567 = vmatprep.subr.bf16.mxu0 0
    %5568 = vmatpush1.bf16.msra.mxu0 %v3897
    %5569 = vmatprep.subr.bf16.mxu0 0
    %5570 = vmatpush1.bf16.msra.mxu0 %v3898
    %5571 = vmatprep.subr.bf16.mxu0 0
    %5572 = vmatpush1.bf16.msra.mxu0 %v3899
    %5573 = vmatprep.subr.bf16.mxu0 0
    %5574 = vmatpush1.bf16.msra.mxu0 %v3900
    %5575 = vmatprep.subr.bf16.mxu0 0
    %5576 = vmatpush1.bf16.msra.mxu0 %v3901
    %5577 = vmatprep.subr.bf16.mxu0 0
    %5578 = vmatpush1.bf16.msra.mxu0 %v3902
    %5579 = vmatprep.subr.bf16.mxu0 0
    %5580 = vmatpush1.bf16.msra.mxu0 %v3903
    %5581 = vmatprep.subr.bf16.mxu0 0
    %5582 = vmatpush1.bf16.msra.mxu0 %v3904
    %5583 = vmatprep.subr.bf16.mxu0 0
    %5584 = vmatpush1.bf16.msra.mxu0 %v3905
    %5585 = vmatprep.subr.bf16.mxu0 0
    %5586 = vmatpush1.bf16.msra.mxu0 %v3906
    %5587 = vmatprep.subr.bf16.mxu0 0
    %5588 = vmatpush1.bf16.msra.mxu0 %v3907
    %5589 = vmatprep.subr.bf16.mxu0 0
    %5590 = vmatpush1.bf16.msra.mxu0 %v3908
    %5591 = vmatprep.subr.bf16.mxu0 0
    %5592 = vmatpush1.bf16.msra.mxu0 %v3909
    %5593 = vmatprep.subr.bf16.mxu0 0
    %5594 = vmatpush1.bf16.msra.mxu0 %v3910
    %5595 = vmatprep.mubr.bf16.mxu0 %v1434
    %5596 = vmatmul.mubr.bf16.gmra.mrb[0].mxu0 %v1433
    %v5597 = vpop.f32.mrb[0].mxu0
    %v5598 = vadd.f32 %v5558, %v5597
    %v5599 = vpop.f32.mrb[0].mxu0
    %v5600 = vpop.f32.mrb[0].mxu0
    %v5601 = vpop.f32.mrb[0].mxu0
    %5602 = vdwg.mxu0
    %5603 = vmatprep.subr.bf16.mxu0 0
    %5604 = vmatpush1.bf16.msra.mxu0 %v3911
    %5605 = vmatprep.subr.bf16.mxu0 0
    %5606 = vmatpush1.bf16.msra.mxu0 %v3912
    %5607 = vmatprep.subr.bf16.mxu0 0
    %5608 = vmatpush1.bf16.msra.mxu0 %v3913
    %5609 = vmatprep.subr.bf16.mxu0 0
    %5610 = vmatpush1.bf16.msra.mxu0 %v3914
    %5611 = vmatprep.subr.bf16.mxu0 0
    %5612 = vmatpush1.bf16.msra.mxu0 0
    %5613 = vmatprep.subr.bf16.mxu0 0
    %5614 = vmatpush1.bf16.msra.mxu0 0
    %5615 = vmatprep.subr.bf16.mxu0 0
    %5616 = vmatpush1.bf16.msra.mxu0 0
    %5617 = vmatprep.subr.bf16.mxu0 0
    %5618 = vmatpush1.bf16.msra.mxu0 0
    %5619 = vmatprep.subr.bf16.mxu0 0
    %5620 = vmatpush1.bf16.msra.mxu0 0
    %5621 = vmatprep.subr.bf16.mxu0 0
    %5622 = vmatpush1.bf16.msra.mxu0 0
    %5623 = vmatprep.subr.bf16.mxu0 0
    %5624 = vmatpush1.bf16.msra.mxu0 0
    %5625 = vmatprep.subr.bf16.mxu0 0
    %5626 = vmatpush1.bf16.msra.mxu0 0
    %5627 = vmatprep.subr.bf16.mxu0 0
    %5628 = vmatpush1.bf16.msra.mxu0 0
    %5629 = vmatprep.subr.bf16.mxu0 0
    %5630 = vmatpush1.bf16.msra.mxu0 0
    %5631 = vmatprep.subr.bf16.mxu0 0
    %5632 = vmatpush1.bf16.msra.mxu0 0
    %5633 = vmatprep.subr.bf16.mxu0 0
    %5634 = vmatpush1.bf16.msra.mxu0 0
    %5635 = vmatprep.mubr.bf16.mxu0 0
    %5636 = vmatmul.mubr.bf16.gmra.mrb[0].mxu0 %v4401
    %v5637 = vpop.f32.mrb[0].mxu0
    %v5638 = vadd.f32 %v5598, %v5637
    %v5639 = vpop.f32.mrb[0].mxu0
    %v5640 = vpop.f32.mrb[0].mxu0
    %v5641 = vpop.f32.mrb[0].mxu0
    %5642 = vdwg.mxu0
    %v5643 = vld [vmem:[%s3] sm:$0xf]
    %v5646 = vunpack.c.l.s4 1983009808
    %v5647 = vunpack.c.0.s8 %v5646
    %v5648 = vlaneseq
    %v5649 = vshrl.u32 %v5648, 7
    %v5650 = vsub.s32 %v5647, %v5649
    %v5651 = vrot.slane %v5643, %v5650
    %v5652 = vcombine.high %v5651, %v5651
    %v5655 = vpack.c.bf16 %v5651, %v5651
    %v5656 = vpack.c.bf16 %v5652, %v5652
    %v5657 = vld [vmem:[%s4] sm:$0xf]
    %v5658 = vld [vmem:[%s4 + $0x4] sm:$0xf]
    %v5659 = vld [vmem:[%s4 + $0x8] sm:$0xf]
    %v5660 = vld [vmem:[%s4 + $0xc] sm:$0xf]
    %v5661 = vld [vmem:[%s4 + $0x10] sm:$0xf]
    %v5662 = vld [vmem:[%s4 + $0x14] sm:$0xf]
    %v5663 = vld [vmem:[%s4 + $0x18] sm:$0xf]
    %v5664 = vld [vmem:[%s4 + $0x1c] sm:$0xf]
    %v5665 = vld [vmem:[%s4 + $0x20] sm:$0xf]
    %v5666 = vld [vmem:[%s4 + $0x24] sm:$0xf]
    %v5667 = vld [vmem:[%s4 + $0x28] sm:$0xf]
    %v5668 = vld [vmem:[%s4 + $0x2c] sm:$0xf]
    %v5669 = vld [vmem:[%s4 + $0x30] sm:$0xf]
    %v5670 = vld [vmem:[%s4 + $0x34] sm:$0xf]
    %v5671 = vld [vmem:[%s4 + $0x38] sm:$0xf]
    %v5672 = vld [vmem:[%s4 + $0x3c] sm:$0xf]
    %v5673 = vld [vmem:[%s4 + $0x40] sm:$0xf]
    %v5674 = vld [vmem:[%s4 + $0x44] sm:$0xf]
    %v5675 = vld [vmem:[%s4 + $0x48] sm:$0xf]
    %v5676 = vld [vmem:[%s4 + $0x4c] sm:$0xf]
    %v5677 = vld [vmem:[%s4 + $0x50] sm:$0xf]
    %v5678 = vld [vmem:[%s4 + $0x54] sm:$0xf]
    %v5679 = vld [vmem:[%s4 + $0x58] sm:$0xf]
    %v5680 = vld [vmem:[%s4 + $0x5c] sm:$0xf]
    %v5681 = vld [vmem:[%s4 + $0x60] sm:$0xf]
    %v5682 = vld [vmem:[%s4 + $0x64] sm:$0xf]
    %v5683 = vld [vmem:[%s4 + $0x68] sm:$0xf]
    %v5684 = vld [vmem:[%s4 + $0x6c] sm:$0xf]
    %v5685 = vld [vmem:[%s4 + $0x70] sm:$0xf]
    %v5686 = vld [vmem:[%s4 + $0x74] sm:$0xf]
    %v5687 = vld [vmem:[%s4 + $0x78] sm:$0xf]
    %v5688 = vld [vmem:[%s4 + $0x7c] sm:$0xf]
    %v5689 = vld [vmem:[%s5] sm:$0x1]
    %v5691 = vlaneseq
    %v5692 = vshrl.u32 %v5691, 7
    %v5693 = vsub.s32 0, %v5692
    %v5694 = vrot.slane %v5689, %v5693
    %v5728 = vunpack.c.l.b16 %v5657
    %v5729 = vunpack.c.l.b16 %v5658
    %v5730 = vunpack.c.l.b16 %v5659
    %v5731 = vunpack.c.l.b16 %v5660
    %v5732 = vunpack.c.l.b16 %v5661
    %v5733 = vunpack.c.l.b16 %v5662
    %v5734 = vunpack.c.l.b16 %v5663
    %v5735 = vunpack.c.l.b16 %v5664
    %v5736 = vunpack.c.l.b16 %v5665
    %v5737 = vunpack.c.l.b16 %v5666
    %v5738 = vunpack.c.l.b16 %v5667
    %v5739 = vunpack.c.l.b16 %v5668
    %v5740 = vunpack.c.l.b16 %v5669
    %v5741 = vunpack.c.l.b16 %v5670
    %v5742 = vunpack.c.l.b16 %v5671
    %v5743 = vunpack.c.l.b16 %v5672
    %v5744 = vunpack.c.l.b16 %v5673
    %v5745 = vunpack.c.l.b16 %v5674
    %v5746 = vunpack.c.l.b16 %v5675
    %v5747 = vunpack.c.l.b16 %v5676
    %v5748 = vunpack.c.l.b16 %v5677
    %v5749 = vunpack.c.l.b16 %v5678
    %v5750 = vunpack.c.l.b16 %v5679
    %v5751 = vunpack.c.l.b16 %v5680
    %v5752 = vunpack.c.l.b16 %v5681
    %v5753 = vunpack.c.l.b16 %v5682
    %v5754 = vunpack.c.l.b16 %v5683
    %v5755 = vunpack.c.l.b16 %v5684
    %v5756 = vunpack.c.l.b16 %v5685
    %v5757 = vunpack.c.l.b16 %v5686
    %v5758 = vunpack.c.l.b16 %v5687
    %v5759 = vunpack.c.l.b16 %v5688
    %v5760 = vpack.c.b16 %v5729, %v5728
    %v5761 = vpack.c.b16 %v5731, %v5730
    %v5762 = vpack.c.b16 %v5733, %v5732
    %v5763 = vpack.c.b16 %v5735, %v5734
    %v5764 = vpack.c.b16 %v5737, %v5736
    %v5765 = vpack.c.b16 %v5739, %v5738
    %v5766 = vpack.c.b16 %v5741, %v5740
    %v5767 = vpack.c.b16 %v5743, %v5742
    %v5768 = vpack.c.b16 %v5745, %v5744
    %v5769 = vpack.c.b16 %v5747, %v5746
    %v5770 = vpack.c.b16 %v5749, %v5748
    %v5771 = vpack.c.b16 %v5751, %v5750
    %v5772 = vpack.c.b16 %v5753, %v5752
    %v5773 = vpack.c.b16 %v5755, %v5754
    %v5774 = vpack.c.b16 %v5757, %v5756
    %v5775 = vpack.c.b16 %v5759, %v5758
    %5792 = vmatprep.subr.bf16.mxu0 0
    %5793 = vmatpush1.bf16.msra.mxu0 %v5760
    %5794 = vmatprep.subr.bf16.mxu0 0
    %5795 = vmatpush1.bf16.msra.mxu0 %v5761
    %5796 = vmatprep.subr.bf16.mxu0 0
    %5797 = vmatpush1.bf16.msra.mxu0 %v5762
    %5798 = vmatprep.subr.bf16.mxu0 0
    %5799 = vmatpush1.bf16.msra.mxu0 %v5763
    %5800 = vmatprep.subr.bf16.mxu0 0
    %5801 = vmatpush1.bf16.msra.mxu0 %v5764
    %5802 = vmatprep.subr.bf16.mxu0 0
    %5803 = vmatpush1.bf16.msra.mxu0 %v5765
    %5804 = vmatprep.subr.bf16.mxu0 0
    %5805 = vmatpush1.bf16.msra.mxu0 %v5766
    %5806 = vmatprep.subr.bf16.mxu0 0
    %5807 = vmatpush1.bf16.msra.mxu0 %v5767
    %5808 = vmatprep.subr.bf16.mxu0 0
    %5809 = vmatpush1.bf16.msra.mxu0 %v5768
    %5810 = vmatprep.subr.bf16.mxu0 0
    %5811 = vmatpush1.bf16.msra.mxu0 %v5769
    %5812 = vmatprep.subr.bf16.mxu0 0
    %5813 = vmatpush1.bf16.msra.mxu0 %v5770
    %5814 = vmatprep.subr.bf16.mxu0 0
    %5815 = vmatpush1.bf16.msra.mxu0 %v5771
    %5816 = vmatprep.subr.bf16.mxu0 0
    %5817 = vmatpush1.bf16.msra.mxu0 %v5772
    %5818 = vmatprep.subr.bf16.mxu0 0
    %5819 = vmatpush1.bf16.msra.mxu0 %v5773
    %5820 = vmatprep.subr.bf16.mxu0 0
    %5821 = vmatpush1.bf16.msra.mxu0 %v5774
    %5822 = vmatprep.subr.bf16.mxu0 0
    %5823 = vmatpush1.bf16.msra.mxu0 %v5775
    %5824 = vmatprep.mubr.bf16.mxu0 %v5656
    %5825 = vmatmul.mubr.bf16.gmra.mrb[0].mxu0 %v5655
    %v5826 = vpop.f32.mrb[0].mxu0
    %v5827 = vadd.f32 %v5694, %v5826
    %v5828 = vpop.f32.mrb[0].mxu0
    %v5829 = vpop.f32.mrb[0].mxu0
    %v5830 = vpop.f32.mrb[0].mxu0
    %5831 = vdwg.mxu0
    %v5832 = vxor.u32 %v5827, 2147483648
    %v5833 = vmul.f32 %v5832, 1.442695
    %v5834 = vpow.pop %v5833
    %v5835 = vadd.f32 %v5834, 1.0
    %v5836 = vrcp.pop %v5835
    %v5837 = vmul.f32 1.0, %v5836
    %v5838 = vmul.f32 %v5638, %v5837
    %v5839 = vpack.c.bf16 %v5838, %v5838
    %v5840 = vld [vmem:[%s6] sm:$0xff]
    %v5841 = vld [vmem:[%s6 + $0x8] sm:$0xff]
    %v5842 = vld [vmem:[%s6 + $0x10] sm:$0xff]
    %v5843 = vld [vmem:[%s6 + $0x18] sm:$0xff]
    %v5844 = vld [vmem:[%s6 + $0x20] sm:$0xff]
    %v5845 = vld [vmem:[%s6 + $0x28] sm:$0xff]
    %v5846 = vld [vmem:[%s6 + $0x30] sm:$0xff]
    %v5847 = vld [vmem:[%s6 + $0x38] sm:$0xff]
    %v5848 = vld [vmem:[%s7] sm:$0x3]
    %v5850 = vlaneseq
    %v5851 = vshrl.u32 %v5850, 7
    %v5852 = vsub.s32 0, %v5851
    %v5853 = vrot.slane %v5848, %v5852
    %v5854 = vlaneseq
    %v5855 = vshrl.u32 %v5854, 7
    %v5856 = vsub.s32 1, %v5855
    %v5857 = vrot.slane %v5848, %v5856
    %v5868 = vunpack.c.l.b16 %v5840
    %v5869 = vunpack.c.h.b16 %v5840
    %v5870 = vunpack.c.l.b16 %v5841
    %v5871 = vunpack.c.h.b16 %v5841
    %v5872 = vunpack.c.l.b16 %v5842
    %v5873 = vunpack.c.h.b16 %v5842
    %v5874 = vunpack.c.l.b16 %v5843
    %v5875 = vunpack.c.h.b16 %v5843
    %v5876 = vunpack.c.l.b16 %v5844
    %v5877 = vunpack.c.h.b16 %v5844
    %v5878 = vunpack.c.l.b16 %v5845
    %v5879 = vunpack.c.h.b16 %v5845
    %v5880 = vunpack.c.l.b16 %v5846
    %v5881 = vunpack.c.h.b16 %v5846
    %v5882 = vunpack.c.l.b16 %v5847
    %v5883 = vunpack.c.h.b16 %v5847
    %v5884 = vpack.c.b16 %v5870, %v5868
    %v5885 = vpack.c.b16 %v5871, %v5869
    %v5886 = vpack.c.b16 %v5874, %v5872
    %v5887 = vpack.c.b16 %v5875, %v5873
    %v5888 = vpack.c.b16 %v5878, %v5876
    %v5889 = vpack.c.b16 %v5879, %v5877
    %v5890 = vpack.c.b16 %v5882, %v5880
    %v5891 = vpack.c.b16 %v5883, %v5881
    %v5901 = vsel %vm4399, %v5839, 0
    %5903 = vmatprep.subr.bf16.mxu0 %v5885
    %5904 = vmatpush1.bf16.msra.mxu0 %v5884
    %5905 = vmatprep.subr.bf16.mxu0 %v5887
    %5906 = vmatpush1.bf16.msra.mxu0 %v5886
    %5907 = vmatprep.subr.bf16.mxu0 %v5889
    %5908 = vmatpush1.bf16.msra.mxu0 %v5888
    %5909 = vmatprep.subr.bf16.mxu0 %v5891
    %5910 = vmatpush1.bf16.msra.mxu0 %v5890
    %5911 = vmatprep.subr.bf16.mxu0 0
    %5912 = vmatpush1.bf16.msra.mxu0 0
    %5913 = vmatprep.subr.bf16.mxu0 0
    %5914 = vmatpush1.bf16.msra.mxu0 0
    %5915 = vmatprep.subr.bf16.mxu0 0
    %5916 = vmatpush1.bf16.msra.mxu0 0
    %5917 = vmatprep.subr.bf16.mxu0 0
    %5918 = vmatpush1.bf16.msra.mxu0 0
    %5919 = vmatprep.subr.bf16.mxu0 0
    %5920 = vmatpush1.bf16.msra.mxu0 0
    %5921 = vmatprep.subr.bf16.mxu0 0
    %5922 = vmatpush1.bf16.msra.mxu0 0
    %5923 = vmatprep.subr.bf16.mxu0 0
    %5924 = vmatpush1.bf16.msra.mxu0 0
    %5925 = vmatprep.subr.bf16.mxu0 0
    %5926 = vmatpush1.bf16.msra.mxu0 0
    %5927 = vmatprep.subr.bf16.mxu0 0
    %5928 = vmatpush1.bf16.msra.mxu0 0
    %5929 = vmatprep.subr.bf16.mxu0 0
    %5930 = vmatpush1.bf16.msra.mxu0 0
    %5931 = vmatprep.subr.bf16.mxu0 0
    %5932 = vmatpush1.bf16.msra.mxu0 0
    %5933 = vmatprep.subr.bf16.mxu0 0
    %5934 = vmatpush1.bf16.msra.mxu0 0
    %5935 = vmatprep.mubr.bf16.mxu0 0
    %5936 = vmatmul.mubr.bf16.gmra.mrb[0].mxu0 %v5901
    %v5937 = vpop.f32.mrb[0].mxu0
    %v5938 = vadd.f32 %v5853, %v5937
    %v5939 = vpop.f32.mrb[0].mxu0
    %v5940 = vadd.f32 %v5857, %v5939
    %v5941 = vpop.f32.mrb[0].mxu0
    %v5942 = vpop.f32.mrb[0].mxu0
    %5943 = vdwg.mxu0
    %v5944 = vmax.f32 %v5938, 0.0
    %v5945 = vmax.f32 %v5940, 0.0
    %v5946 = vpack.c.bf16 %v5944, %v5944
    %v5947 = vpack.c.bf16 %v5945, %v5945
    %v5948 = vld [vmem:[%s10] sm:$0xff]
    %v5949 = vld [vmem:[%s10 + $0x8] sm:$0xff]
    %v5950 = vld [vmem:[%s10 + $0x10] sm:$0xff]
    %v5951 = vld [vmem:[%s10 + $0x18] sm:$0xff]
    %v5952 = vld [vmem:[%s10 + $0x20] sm:$0xff]
    %v5953 = vld [vmem:[%s10 + $0x28] sm:$0xff]
    %v5954 = vld [vmem:[%s10 + $0x30] sm:$0xff]
    %v5955 = vld [vmem:[%s10 + $0x38] sm:$0xff]
    %v5956 = vld [vmem:[%s10 + $0x40] sm:$0xff]
    %v5957 = vld [vmem:[%s10 + $0x48] sm:$0xff]
    %v5958 = vld [vmem:[%s10 + $0x50] sm:$0xff]
    %v5959 = vld [vmem:[%s10 + $0x58] sm:$0xff]
    %v5960 = vld [vmem:[%s10 + $0x60] sm:$0xff]
    %v5961 = vld [vmem:[%s10 + $0x68] sm:$0xff]
    %v5962 = vld [vmem:[%s10 + $0x70] sm:$0xff]
    %v5963 = vld [vmem:[%s10 + $0x78] sm:$0xff]
    %v5964 = vld [vmem:[%s10 + $0x80] sm:$0xff]
    %v5965 = vld [vmem:[%s10 + $0x88] sm:$0xff]
    %v5966 = vld [vmem:[%s10 + $0x90] sm:$0xff]
    %v5967 = vld [vmem:[%s10 + $0x98] sm:$0xff]
    %v5968 = vld [vmem:[%s10 + $0xa0] sm:$0xff]
    %v5969 = vld [vmem:[%s10 + $0xa8] sm:$0xff]
    %v5970 = vld [vmem:[%s10 + $0xb0] sm:$0xff]
    %v5971 = vld [vmem:[%s10 + $0xb8] sm:$0xff]
    %v5972 = vld [vmem:[%s10 + $0xc0] sm:$0xff]
    %v5973 = vld [vmem:[%s10 + $0xc8] sm:$0xff]
    %v5974 = vld [vmem:[%s10 + $0xd0] sm:$0xff]
    %v5975 = vld [vmem:[%s10 + $0xd8] sm:$0xff]
    %v5976 = vld [vmem:[%s10 + $0xe0] sm:$0xff]
    %v5977 = vld [vmem:[%s10 + $0xe8] sm:$0xff]
    %v5978 = vld [vmem:[%s10 + $0xf0] sm:$0xff]
    %v5979 = vld [vmem:[%s10 + $0xf8] sm:$0xff]
    %v5980 = vld [vmem:[%s10 + $0x100] sm:$0xff]
    %v5981 = vld [vmem:[%s10 + $0x108] sm:$0xff]
    %v5982 = vld [vmem:[%s10 + $0x110] sm:$0xff]
    %v5983 = vld [vmem:[%s10 + $0x118] sm:$0xff]
    %v5984 = vld [vmem:[%s10 + $0x120] sm:$0xff]
    %v5985 = vld [vmem:[%s10 + $0x128] sm:$0xff]
    %v5986 = vld [vmem:[%s10 + $0x130] sm:$0xff]
    %v5987 = vld [vmem:[%s10 + $0x138] sm:$0xff]
    %v5988 = vld [vmem:[%s10 + $0x140] sm:$0xff]
    %v5989 = vld [vmem:[%s10 + $0x148] sm:$0xff]
    %v5990 = vld [vmem:[%s10 + $0x150] sm:$0xff]
    %v5991 = vld [vmem:[%s10 + $0x158] sm:$0xff]
    %v5992 = vld [vmem:[%s10 + $0x160] sm:$0xff]
    %v5993 = vld [vmem:[%s10 + $0x168] sm:$0xff]
    %v5994 = vld [vmem:[%s10 + $0x170] sm:$0xff]
    %v5995 = vld [vmem:[%s10 + $0x178] sm:$0xff]
    %v5996 = vld [vmem:[%s10 + $0x180] sm:$0xff]
    %v5997 = vld [vmem:[%s10 + $0x188] sm:$0xff]
    %v5998 = vld [vmem:[%s10 + $0x190] sm:$0xff]
    %v5999 = vld [vmem:[%s10 + $0x198] sm:$0xff]
    %v6000 = vld [vmem:[%s10 + $0x1a0] sm:$0xff]
    %v6001 = vld [vmem:[%s10 + $0x1a8] sm:$0xff]
    %v6002 = vld [vmem:[%s10 + $0x1b0] sm:$0xff]
    %v6003 = vld [vmem:[%s10 + $0x1b8] sm:$0xff]
    %v6004 = vld [vmem:[%s10 + $0x1c0] sm:$0xff]
    %v6005 = vld [vmem:[%s10 + $0x1c8] sm:$0xff]
    %v6006 = vld [vmem:[%s10 + $0x1d0] sm:$0xff]
    %v6007 = vld [vmem:[%s10 + $0x1d8] sm:$0xff]
    %v6008 = vld [vmem:[%s10 + $0x1e0] sm:$0xff]
    %v6009 = vld [vmem:[%s10 + $0x1e8] sm:$0xff]
    %v6010 = vld [vmem:[%s10 + $0x1f0] sm:$0xff]
    %v6011 = vld [vmem:[%s10 + $0x1f8] sm:$0xff]
    %v6012 = vld [vmem:[%s10 + $0x200] sm:$0xff]
    %v6013 = vld [vmem:[%s10 + $0x208] sm:$0xff]
    %v6014 = vld [vmem:[%s10 + $0x210] sm:$0xff]
    %v6015 = vld [vmem:[%s10 + $0x218] sm:$0xff]
    %v6016 = vld [vmem:[%s10 + $0x220] sm:$0xff]
    %v6017 = vld [vmem:[%s10 + $0x228] sm:$0xff]
    %v6018 = vld [vmem:[%s10 + $0x230] sm:$0xff]
    %v6019 = vld [vmem:[%s10 + $0x238] sm:$0xff]
    %v6020 = vld [vmem:[%s10 + $0x240] sm:$0xff]
    %v6021 = vld [vmem:[%s10 + $0x248] sm:$0xff]
    %v6022 = vld [vmem:[%s10 + $0x250] sm:$0xff]
    %v6023 = vld [vmem:[%s10 + $0x258] sm:$0xff]
    %v6024 = vld [vmem:[%s10 + $0x260] sm:$0xff]
    %v6025 = vld [vmem:[%s10 + $0x268] sm:$0xff]
    %v6026 = vld [vmem:[%s10 + $0x270] sm:$0xff]
    %v6027 = vld [vmem:[%s10 + $0x278] sm:$0xff]
    %v6028 = vld [vmem:[%s10 + $0x280] sm:$0xff]
    %v6029 = vld [vmem:[%s10 + $0x288] sm:$0xff]
    %v6030 = vld [vmem:[%s10 + $0x290] sm:$0xff]
    %v6031 = vld [vmem:[%s10 + $0x298] sm:$0xff]
    %v6032 = vld [vmem:[%s10 + $0x2a0] sm:$0xff]
    %v6033 = vld [vmem:[%s10 + $0x2a8] sm:$0xff]
    %v6034 = vld [vmem:[%s10 + $0x2b0] sm:$0xff]
    %v6035 = vld [vmem:[%s10 + $0x2b8] sm:$0xff]
    %v6036 = vld [vmem:[%s10 + $0x2c0] sm:$0xff]
    %v6037 = vld [vmem:[%s10 + $0x2c8] sm:$0xff]
    %v6038 = vld [vmem:[%s10 + $0x2d0] sm:$0xff]
    %v6039 = vld [vmem:[%s10 + $0x2d8] sm:$0xff]
    %v6040 = vld [vmem:[%s10 + $0x2e0] sm:$0xff]
    %v6041 = vld [vmem:[%s10 + $0x2e8] sm:$0xff]
    %v6042 = vld [vmem:[%s10 + $0x2f0] sm:$0xff]
    %v6043 = vld [vmem:[%s10 + $0x2f8] sm:$0xff]
    %v6044 = vld [vmem:[%s10 + $0x300] sm:$0xff]
    %v6045 = vld [vmem:[%s10 + $0x308] sm:$0xff]
    %v6046 = vld [vmem:[%s10 + $0x310] sm:$0xff]
    %v6047 = vld [vmem:[%s10 + $0x318] sm:$0xff]
    %v6048 = vld [vmem:[%s10 + $0x320] sm:$0xff]
    %v6049 = vld [vmem:[%s10 + $0x328] sm:$0xff]
    %v6050 = vld [vmem:[%s10 + $0x330] sm:$0xff]
    %v6051 = vld [vmem:[%s10 + $0x338] sm:$0xff]
    %v6052 = vld [vmem:[%s10 + $0x340] sm:$0xff]
    %v6053 = vld [vmem:[%s10 + $0x348] sm:$0xff]
    %v6054 = vld [vmem:[%s10 + $0x350] sm:$0xff]
    %v6055 = vld [vmem:[%s10 + $0x358] sm:$0xff]
    %v6056 = vld [vmem:[%s10 + $0x360] sm:$0xff]
    %v6057 = vld [vmem:[%s10 + $0x368] sm:$0xff]
    %v6058 = vld [vmem:[%s10 + $0x370] sm:$0xff]
    %v6059 = vld [vmem:[%s10 + $0x378] sm:$0xff]
    %v6060 = vld [vmem:[%s10 + $0x380] sm:$0xff]
    %v6061 = vld [vmem:[%s10 + $0x388] sm:$0xff]
    %v6062 = vld [vmem:[%s10 + $0x390] sm:$0xff]
    %v6063 = vld [vmem:[%s10 + $0x398] sm:$0xff]
    %v6064 = vld [vmem:[%s10 + $0x3a0] sm:$0xff]
    %v6065 = vld [vmem:[%s10 + $0x3a8] sm:$0xff]
    %v6066 = vld [vmem:[%s10 + $0x3b0] sm:$0xff]
    %v6067 = vld [vmem:[%s10 + $0x3b8] sm:$0xff]
    %v6068 = vld [vmem:[%s10 + $0x3c0] sm:$0xff]
    %v6069 = vld [vmem:[%s10 + $0x3c8] sm:$0xff]
    %v6070 = vld [vmem:[%s10 + $0x3d0] sm:$0xff]
    %v6071 = vld [vmem:[%s10 + $0x3d8] sm:$0xff]
    %v6072 = vld [vmem:[%s10 + $0x3e0] sm:$0xff]
    %v6073 = vld [vmem:[%s10 + $0x3e8] sm:$0xff]
    %v6074 = vld [vmem:[%s10 + $0x3f0] sm:$0xff]
    %v6075 = vld [vmem:[%s10 + $0x3f8] sm:$0xff]
    %v6076 = vld [vmem:[%s8] sm:$0xf]
    %v6079 = vunpack.c.l.s4 1983009808
    %v6080 = vunpack.c.0.s8 %v6079
    %v6081 = vlaneseq
    %v6082 = vshrl.u32 %v6081, 7
    %v6083 = vsub.s32 %v6080, %v6082
    %v6084 = vrot.slane %v6076, %v6083
    %v6085 = vcombine.high %v6084, %v6084
    %v6088 = vpack.c.bf16 %v6084, %v6084
    %v6089 = vpack.c.bf16 %v6085, %v6085
    %v6090 = vld [vmem:[%s11] sm:$0xff]
    %v6091 = vld [vmem:[%s11 + $0x8] sm:$0xff]
    %v6092 = vld [vmem:[%s11 + $0x10] sm:$0xff]
    %v6093 = vld [vmem:[%s11 + $0x18] sm:$0xff]
    %v6094 = vld [vmem:[%s11 + $0x20] sm:$0xff]
    %v6095 = vld [vmem:[%s11 + $0x28] sm:$0xff]
    %v6096 = vld [vmem:[%s11 + $0x30] sm:$0xff]
    %v6097 = vld [vmem:[%s11 + $0x38] sm:$0xff]
    %v6098 = vld [vmem:[%s11 + $0x40] sm:$0xff]
    %v6099 = vld [vmem:[%s11 + $0x48] sm:$0xff]
    %v6100 = vld [vmem:[%s11 + $0x50] sm:$0xff]
    %v6101 = vld [vmem:[%s11 + $0x58] sm:$0xff]
    %v6102 = vld [vmem:[%s11 + $0x60] sm:$0xff]
    %v6103 = vld [vmem:[%s11 + $0x68] sm:$0xff]
    %v6104 = vld [vmem:[%s11 + $0x70] sm:$0xff]
    %v6105 = vld [vmem:[%s11 + $0x78] sm:$0xff]
    %v6106 = vld [vmem:[%s11 + $0x80] sm:$0xff]
    %v6107 = vld [vmem:[%s11 + $0x88] sm:$0xff]
    %v6108 = vld [vmem:[%s11 + $0x90] sm:$0xff]
    %v6109 = vld [vmem:[%s11 + $0x98] sm:$0xff]
    %v6110 = vld [vmem:[%s11 + $0xa0] sm:$0xff]
    %v6111 = vld [vmem:[%s11 + $0xa8] sm:$0xff]
    %v6112 = vld [vmem:[%s11 + $0xb0] sm:$0xff]
    %v6113 = vld [vmem:[%s11 + $0xb8] sm:$0xff]
    %v6114 = vld [vmem:[%s11 + $0xc0] sm:$0xff]
    %v6115 = vld [vmem:[%s11 + $0xc8] sm:$0xff]
    %v6116 = vld [vmem:[%s11 + $0xd0] sm:$0xff]
    %v6117 = vld [vmem:[%s11 + $0xd8] sm:$0xff]
    %v6118 = vld [vmem:[%s11 + $0xe0] sm:$0xff]
    %v6119 = vld [vmem:[%s11 + $0xe8] sm:$0xff]
    %v6120 = vld [vmem:[%s11 + $0xf0] sm:$0xff]
    %v6121 = vld [vmem:[%s11 + $0xf8] sm:$0xff]
    %v6122 = vld [vmem:[%s11 + $0x100] sm:$0xff]
    %v6123 = vld [vmem:[%s11 + $0x108] sm:$0xff]
    %v6124 = vld [vmem:[%s11 + $0x110] sm:$0xff]
    %v6125 = vld [vmem:[%s11 + $0x118] sm:$0xff]
    %v6126 = vld [vmem:[%s11 + $0x120] sm:$0xff]
    %v6127 = vld [vmem:[%s11 + $0x128] sm:$0xff]
    %v6128 = vld [vmem:[%s11 + $0x130] sm:$0xff]
    %v6129 = vld [vmem:[%s11 + $0x138] sm:$0xff]
    %v6130 = vld [vmem:[%s11 + $0x140] sm:$0xff]
    %v6131 = vld [vmem:[%s11 + $0x148] sm:$0xff]
    %v6132 = vld [vmem:[%s11 + $0x150] sm:$0xff]
    %v6133 = vld [vmem:[%s11 + $0x158] sm:$0xff]
    %v6134 = vld [vmem:[%s11 + $0x160] sm:$0xff]
    %v6135 = vld [vmem:[%s11 + $0x168] sm:$0xff]
    %v6136 = vld [vmem:[%s11 + $0x170] sm:$0xff]
    %v6137 = vld [vmem:[%s11 + $0x178] sm:$0xff]
    %v6138 = vld [vmem:[%s11 + $0x180] sm:$0xff]
    %v6139 = vld [vmem:[%s11 + $0x188] sm:$0xff]
    %v6140 = vld [vmem:[%s11 + $0x190] sm:$0xff]
    %v6141 = vld [vmem:[%s11 + $0x198] sm:$0xff]
    %v6142 = vld [vmem:[%s11 + $0x1a0] sm:$0xff]
    %v6143 = vld [vmem:[%s11 + $0x1a8] sm:$0xff]
    %v6144 = vld [vmem:[%s11 + $0x1b0] sm:$0xff]
    %v6145 = vld [vmem:[%s11 + $0x1b8] sm:$0xff]
    %v6146 = vld [vmem:[%s11 + $0x1c0] sm:$0xff]
    %v6147 = vld [vmem:[%s11 + $0x1c8] sm:$0xff]
    %v6148 = vld [vmem:[%s11 + $0x1d0] sm:$0xff]
    %v6149 = vld [vmem:[%s11 + $0x1d8] sm:$0xff]
    %v6150 = vld [vmem:[%s11 + $0x1e0] sm:$0xff]
    %v6151 = vld [vmem:[%s11 + $0x1e8] sm:$0xff]
    %v6152 = vld [vmem:[%s11 + $0x1f0] sm:$0xff]
    %v6153 = vld [vmem:[%s11 + $0x1f8] sm:$0xff]
    %v6154 = vld [vmem:[%s11 + $0x200] sm:$0xff]
    %v6155 = vld [vmem:[%s11 + $0x208] sm:$0xff]
    %v6156 = vld [vmem:[%s11 + $0x210] sm:$0xff]
    %v6157 = vld [vmem:[%s11 + $0x218] sm:$0xff]
    %v6158 = vld [vmem:[%s11 + $0x220] sm:$0xff]
    %v6159 = vld [vmem:[%s11 + $0x228] sm:$0xff]
    %v6160 = vld [vmem:[%s11 + $0x230] sm:$0xff]
    %v6161 = vld [vmem:[%s11 + $0x238] sm:$0xff]
    %v6162 = vld [vmem:[%s11 + $0x240] sm:$0xff]
    %v6163 = vld [vmem:[%s11 + $0x248] sm:$0xff]
    %v6164 = vld [vmem:[%s11 + $0x250] sm:$0xff]
    %v6165 = vld [vmem:[%s11 + $0x258] sm:$0xff]
    %v6166 = vld [vmem:[%s11 + $0x260] sm:$0xff]
    %v6167 = vld [vmem:[%s11 + $0x268] sm:$0xff]
    %v6168 = vld [vmem:[%s11 + $0x270] sm:$0xff]
    %v6169 = vld [vmem:[%s11 + $0x278] sm:$0xff]
    %v6170 = vld [vmem:[%s11 + $0x280] sm:$0xff]
    %v6171 = vld [vmem:[%s11 + $0x288] sm:$0xff]
    %v6172 = vld [vmem:[%s11 + $0x290] sm:$0xff]
    %v6173 = vld [vmem:[%s11 + $0x298] sm:$0xff]
    %v6174 = vld [vmem:[%s11 + $0x2a0] sm:$0xff]
    %v6175 = vld [vmem:[%s11 + $0x2a8] sm:$0xff]
    %v6176 = vld [vmem:[%s11 + $0x2b0] sm:$0xff]
    %v6177 = vld [vmem:[%s11 + $0x2b8] sm:$0xff]
    %v6178 = vld [vmem:[%s11 + $0x2c0] sm:$0xff]
    %v6179 = vld [vmem:[%s11 + $0x2c8] sm:$0xff]
    %v6180 = vld [vmem:[%s11 + $0x2d0] sm:$0xff]
    %v6181 = vld [vmem:[%s11 + $0x2d8] sm:$0xff]
    %v6182 = vld [vmem:[%s11 + $0x2e0] sm:$0xff]
    %v6183 = vld [vmem:[%s11 + $0x2e8] sm:$0xff]
    %v6184 = vld [vmem:[%s11 + $0x2f0] sm:$0xff]
    %v6185 = vld [vmem:[%s11 + $0x2f8] sm:$0xff]
    %v6186 = vld [vmem:[%s11 + $0x300] sm:$0xff]
    %v6187 = vld [vmem:[%s11 + $0x308] sm:$0xff]
    %v6188 = vld [vmem:[%s11 + $0x310] sm:$0xff]
    %v6189 = vld [vmem:[%s11 + $0x318] sm:$0xff]
    %v6190 = vld [vmem:[%s11 + $0x320] sm:$0xff]
    %v6191 = vld [vmem:[%s11 + $0x328] sm:$0xff]
    %v6192 = vld [vmem:[%s11 + $0x330] sm:$0xff]
    %v6193 = vld [vmem:[%s11 + $0x338] sm:$0xff]
    %v6194 = vld [vmem:[%s11 + $0x340] sm:$0xff]
    %v6195 = vld [vmem:[%s11 + $0x348] sm:$0xff]
    %v6196 = vld [vmem:[%s11 + $0x350] sm:$0xff]
    %v6197 = vld [vmem:[%s11 + $0x358] sm:$0xff]
    %v6198 = vld [vmem:[%s11 + $0x360] sm:$0xff]
    %v6199 = vld [vmem:[%s11 + $0x368] sm:$0xff]
    %v6200 = vld [vmem:[%s11 + $0x370] sm:$0xff]
    %v6201 = vld [vmem:[%s11 + $0x378] sm:$0xff]
    %v6202 = vld [vmem:[%s11 + $0x380] sm:$0xff]
    %v6203 = vld [vmem:[%s11 + $0x388] sm:$0xff]
    %v6204 = vld [vmem:[%s11 + $0x390] sm:$0xff]
    %v6205 = vld [vmem:[%s11 + $0x398] sm:$0xff]
    %v6206 = vld [vmem:[%s11 + $0x3a0] sm:$0xff]
    %v6207 = vld [vmem:[%s11 + $0x3a8] sm:$0xff]
    %v6208 = vld [vmem:[%s11 + $0x3b0] sm:$0xff]
    %v6209 = vld [vmem:[%s11 + $0x3b8] sm:$0xff]
    %v6210 = vld [vmem:[%s11 + $0x3c0] sm:$0xff]
    %v6211 = vld [vmem:[%s11 + $0x3c8] sm:$0xff]
    %v6212 = vld [vmem:[%s11 + $0x3d0] sm:$0xff]
    %v6213 = vld [vmem:[%s11 + $0x3d8] sm:$0xff]
    %v6214 = vld [vmem:[%s11 + $0x3e0] sm:$0xff]
    %v6215 = vld [vmem:[%s11 + $0x3e8] sm:$0xff]
    %v6216 = vld [vmem:[%s11 + $0x3f0] sm:$0xff]
    %v6217 = vld [vmem:[%s11 + $0x3f8] sm:$0xff]
    %v6346 = vunpack.c.l.b16 %v6090
    %v6347 = vunpack.c.h.b16 %v6090
    %v6348 = vunpack.c.l.b16 %v6091
    %v6349 = vunpack.c.h.b16 %v6091
    %v6350 = vunpack.c.l.b16 %v6092
    %v6351 = vunpack.c.h.b16 %v6092
    %v6352 = vunpack.c.l.b16 %v6093
    %v6353 = vunpack.c.h.b16 %v6093
    %v6354 = vunpack.c.l.b16 %v6094
    %v6355 = vunpack.c.h.b16 %v6094
    %v6356 = vunpack.c.l.b16 %v6095
    %v6357 = vunpack.c.h.b16 %v6095
    %v6358 = vunpack.c.l.b16 %v6096
    %v6359 = vunpack.c.h.b16 %v6096
    %v6360 = vunpack.c.l.b16 %v6097
    %v6361 = vunpack.c.h.b16 %v6097
    %v6362 = vunpack.c.l.b16 %v6098
    %v6363 = vunpack.c.h.b16 %v6098
    %v6364 = vunpack.c.l.b16 %v6099
    %v6365 = vunpack.c.h.b16 %v6099
    %v6366 = vunpack.c.l.b16 %v6100
    %v6367 = vunpack.c.h.b16 %v6100
    %v6368 = vunpack.c.l.b16 %v6101
    %v6369 = vunpack.c.h.b16 %v6101
    %v6370 = vunpack.c.l.b16 %v6102
    %v6371 = vunpack.c.h.b16 %v6102
    %v6372 = vunpack.c.l.b16 %v6103
    %v6373 = vunpack.c.h.b16 %v6103
    %v6374 = vunpack.c.l.b16 %v6104
    %v6375 = vunpack.c.h.b16 %v6104
    %v6376 = vunpack.c.l.b16 %v6105
    %v6377 = vunpack.c.h.b16 %v6105
    %v6378 = vunpack.c.l.b16 %v6106
    %v6379 = vunpack.c.h.b16 %v6106
    %v6380 = vunpack.c.l.b16 %v6107
    %v6381 = vunpack.c.h.b16 %v6107
    %v6382 = vunpack.c.l.b16 %v6108
    %v6383 = vunpack.c.h.b16 %v6108
    %v6384 = vunpack.c.l.b16 %v6109
    %v6385 = vunpack.c.h.b16 %v6109
    %v6386 = vunpack.c.l.b16 %v6110
    %v6387 = vunpack.c.h.b16 %v6110
    %v6388 = vunpack.c.l.b16 %v6111
    %v6389 = vunpack.c.h.b16 %v6111
    %v6390 = vunpack.c.l.b16 %v6112
    %v6391 = vunpack.c.h.b16 %v6112
    %v6392 = vunpack.c.l.b16 %v6113
    %v6393 = vunpack.c.h.b16 %v6113
    %v6394 = vunpack.c.l.b16 %v6114
    %v6395 = vunpack.c.h.b16 %v6114
    %v6396 = vunpack.c.l.b16 %v6115
    %v6397 = vunpack.c.h.b16 %v6115
    %v6398 = vunpack.c.l.b16 %v6116
    %v6399 = vunpack.c.h.b16 %v6116
    %v6400 = vunpack.c.l.b16 %v6117
    %v6401 = vunpack.c.h.b16 %v6117
    %v6402 = vunpack.c.l.b16 %v6118
    %v6403 = vunpack.c.h.b16 %v6118
    %v6404 = vunpack.c.l.b16 %v6119
    %v6405 = vunpack.c.h.b16 %v6119
    %v6406 = vunpack.c.l.b16 %v6120
    %v6407 = vunpack.c.h.b16 %v6120
    %v6408 = vunpack.c.l.b16 %v6121
    %v6409 = vunpack.c.h.b16 %v6121
    %v6410 = vunpack.c.l.b16 %v6122
    %v6411 = vunpack.c.h.b16 %v6122
    %v6412 = vunpack.c.l.b16 %v6123
    %v6413 = vunpack.c.h.b16 %v6123
    %v6414 = vunpack.c.l.b16 %v6124
    %v6415 = vunpack.c.h.b16 %v6124
    %v6416 = vunpack.c.l.b16 %v6125
    %v6417 = vunpack.c.h.b16 %v6125
    %v6418 = vunpack.c.l.b16 %v6126
    %v6419 = vunpack.c.h.b16 %v6126
    %v6420 = vunpack.c.l.b16 %v6127
    %v6421 = vunpack.c.h.b16 %v6127
    %v6422 = vunpack.c.l.b16 %v6128
    %v6423 = vunpack.c.h.b16 %v6128
    %v6424 = vunpack.c.l.b16 %v6129
    %v6425 = vunpack.c.h.b16 %v6129
    %v6426 = vunpack.c.l.b16 %v6130
    %v6427 = vunpack.c.h.b16 %v6130
    %v6428 = vunpack.c.l.b16 %v6131
    %v6429 = vunpack.c.h.b16 %v6131
    %v6430 = vunpack.c.l.b16 %v6132
    %v6431 = vunpack.c.h.b16 %v6132
    %v6432 = vunpack.c.l.b16 %v6133
    %v6433 = vunpack.c.h.b16 %v6133
    %v6434 = vunpack.c.l.b16 %v6134
    %v6435 = vunpack.c.h.b16 %v6134
    %v6436 = vunpack.c.l.b16 %v6135
    %v6437 = vunpack.c.h.b16 %v6135
    %v6438 = vunpack.c.l.b16 %v6136
    %v6439 = vunpack.c.h.b16 %v6136
    %v6440 = vunpack.c.l.b16 %v6137
    %v6441 = vunpack.c.h.b16 %v6137
    %v6442 = vunpack.c.l.b16 %v6138
    %v6443 = vunpack.c.h.b16 %v6138
    %v6444 = vunpack.c.l.b16 %v6139
    %v6445 = vunpack.c.h.b16 %v6139
    %v6446 = vunpack.c.l.b16 %v6140
    %v6447 = vunpack.c.h.b16 %v6140
    %v6448 = vunpack.c.l.b16 %v6141
    %v6449 = vunpack.c.h.b16 %v6141
    %v6450 = vunpack.c.l.b16 %v6142
    %v6451 = vunpack.c.h.b16 %v6142
    %v6452 = vunpack.c.l.b16 %v6143
    %v6453 = vunpack.c.h.b16 %v6143
    %v6454 = vunpack.c.l.b16 %v6144
    %v6455 = vunpack.c.h.b16 %v6144
    %v6456 = vunpack.c.l.b16 %v6145
    %v6457 = vunpack.c.h.b16 %v6145
    %v6458 = vunpack.c.l.b16 %v6146
    %v6459 = vunpack.c.h.b16 %v6146
    %v6460 = vunpack.c.l.b16 %v6147
    %v6461 = vunpack.c.h.b16 %v6147
    %v6462 = vunpack.c.l.b16 %v6148
    %v6463 = vunpack.c.h.b16 %v6148
    %v6464 = vunpack.c.l.b16 %v6149
    %v6465 = vunpack.c.h.b16 %v6149
    %v6466 = vunpack.c.l.b16 %v6150
    %v6467 = vunpack.c.h.b16 %v6150
    %v6468 = vunpack.c.l.b16 %v6151
    %v6469 = vunpack.c.h.b16 %v6151
    %v6470 = vunpack.c.l.b16 %v6152
    %v6471 = vunpack.c.h.b16 %v6152
    %v6472 = vunpack.c.l.b16 %v6153
    %v6473 = vunpack.c.h.b16 %v6153
    %v6474 = vunpack.c.l.b16 %v6154
    %v6475 = vunpack.c.h.b16 %v6154
    %v6476 = vunpack.c.l.b16 %v6155
    %v6477 = vunpack.c.h.b16 %v6155
    %v6478 = vunpack.c.l.b16 %v6156
    %v6479 = vunpack.c.h.b16 %v6156
    %v6480 = vunpack.c.l.b16 %v6157
    %v6481 = vunpack.c.h.b16 %v6157
    %v6482 = vunpack.c.l.b16 %v6158
    %v6483 = vunpack.c.h.b16 %v6158
    %v6484 = vunpack.c.l.b16 %v6159
    %v6485 = vunpack.c.h.b16 %v6159
    %v6486 = vunpack.c.l.b16 %v6160
    %v6487 = vunpack.c.h.b16 %v6160
    %v6488 = vunpack.c.l.b16 %v6161
    %v6489 = vunpack.c.h.b16 %v6161
    %v6490 = vunpack.c.l.b16 %v6162
    %v6491 = vunpack.c.h.b16 %v6162
    %v6492 = vunpack.c.l.b16 %v6163
    %v6493 = vunpack.c.h.b16 %v6163
    %v6494 = vunpack.c.l.b16 %v6164
    %v6495 = vunpack.c.h.b16 %v6164
    %v6496 = vunpack.c.l.b16 %v6165
    %v6497 = vunpack.c.h.b16 %v6165
    %v6498 = vunpack.c.l.b16 %v6166
    %v6499 = vunpack.c.h.b16 %v6166
    %v6500 = vunpack.c.l.b16 %v6167
    %v6501 = vunpack.c.h.b16 %v6167
    %v6502 = vunpack.c.l.b16 %v6168
    %v6503 = vunpack.c.h.b16 %v6168
    %v6504 = vunpack.c.l.b16 %v6169
    %v6505 = vunpack.c.h.b16 %v6169
    %v6506 = vunpack.c.l.b16 %v6170
    %v6507 = vunpack.c.h.b16 %v6170
    %v6508 = vunpack.c.l.b16 %v6171
    %v6509 = vunpack.c.h.b16 %v6171
    %v6510 = vunpack.c.l.b16 %v6172
    %v6511 = vunpack.c.h.b16 %v6172
    %v6512 = vunpack.c.l.b16 %v6173
    %v6513 = vunpack.c.h.b16 %v6173
    %v6514 = vunpack.c.l.b16 %v6174
    %v6515 = vunpack.c.h.b16 %v6174
    %v6516 = vunpack.c.l.b16 %v6175
    %v6517 = vunpack.c.h.b16 %v6175
    %v6518 = vunpack.c.l.b16 %v6176
    %v6519 = vunpack.c.h.b16 %v6176
    %v6520 = vunpack.c.l.b16 %v6177
    %v6521 = vunpack.c.h.b16 %v6177
    %v6522 = vunpack.c.l.b16 %v6178
    %v6523 = vunpack.c.h.b16 %v6178
    %v6524 = vunpack.c.l.b16 %v6179
    %v6525 = vunpack.c.h.b16 %v6179
    %v6526 = vunpack.c.l.b16 %v6180
    %v6527 = vunpack.c.h.b16 %v6180
    %v6528 = vunpack.c.l.b16 %v6181
    %v6529 = vunpack.c.h.b16 %v6181
    %v6530 = vunpack.c.l.b16 %v6182
    %v6531 = vunpack.c.h.b16 %v6182
    %v6532 = vunpack.c.l.b16 %v6183
    %v6533 = vunpack.c.h.b16 %v6183
    %v6534 = vunpack.c.l.b16 %v6184
    %v6535 = vunpack.c.h.b16 %v6184
    %v6536 = vunpack.c.l.b16 %v6185
    %v6537 = vunpack.c.h.b16 %v6185
    %v6538 = vunpack.c.l.b16 %v6186
    %v6539 = vunpack.c.h.b16 %v6186
    %v6540 = vunpack.c.l.b16 %v6187
    %v6541 = vunpack.c.h.b16 %v6187
    %v6542 = vunpack.c.l.b16 %v6188
    %v6543 = vunpack.c.h.b16 %v6188
    %v6544 = vunpack.c.l.b16 %v6189
    %v6545 = vunpack.c.h.b16 %v6189
    %v6546 = vunpack.c.l.b16 %v6190
    %v6547 = vunpack.c.h.b16 %v6190
    %v6548 = vunpack.c.l.b16 %v6191
    %v6549 = vunpack.c.h.b16 %v6191
    %v6550 = vunpack.c.l.b16 %v6192
    %v6551 = vunpack.c.h.b16 %v6192
    %v6552 = vunpack.c.l.b16 %v6193
    %v6553 = vunpack.c.h.b16 %v6193
    %v6554 = vunpack.c.l.b16 %v6194
    %v6555 = vunpack.c.h.b16 %v6194
    %v6556 = vunpack.c.l.b16 %v6195
    %v6557 = vunpack.c.h.b16 %v6195
    %v6558 = vunpack.c.l.b16 %v6196
    %v6559 = vunpack.c.h.b16 %v6196
    %v6560 = vunpack.c.l.b16 %v6197
    %v6561 = vunpack.c.h.b16 %v6197
    %v6562 = vunpack.c.l.b16 %v6198
    %v6563 = vunpack.c.h.b16 %v6198
    %v6564 = vunpack.c.l.b16 %v6199
    %v6565 = vunpack.c.h.b16 %v6199
    %v6566 = vunpack.c.l.b16 %v6200
    %v6567 = vunpack.c.h.b16 %v6200
    %v6568 = vunpack.c.l.b16 %v6201
    %v6569 = vunpack.c.h.b16 %v6201
    %v6570 = vunpack.c.l.b16 %v6202
    %v6571 = vunpack.c.h.b16 %v6202
    %v6572 = vunpack.c.l.b16 %v6203
    %v6573 = vunpack.c.h.b16 %v6203
    %v6574 = vunpack.c.l.b16 %v6204
    %v6575 = vunpack.c.h.b16 %v6204
    %v6576 = vunpack.c.l.b16 %v6205
    %v6577 = vunpack.c.h.b16 %v6205
    %v6578 = vunpack.c.l.b16 %v6206
    %v6579 = vunpack.c.h.b16 %v6206
    %v6580 = vunpack.c.l.b16 %v6207
    %v6581 = vunpack.c.h.b16 %v6207
    %v6582 = vunpack.c.l.b16 %v6208
    %v6583 = vunpack.c.h.b16 %v6208
    %v6584 = vunpack.c.l.b16 %v6209
    %v6585 = vunpack.c.h.b16 %v6209
    %v6586 = vunpack.c.l.b16 %v6210
    %v6587 = vunpack.c.h.b16 %v6210
    %v6588 = vunpack.c.l.b16 %v6211
    %v6589 = vunpack.c.h.b16 %v6211
    %v6590 = vunpack.c.l.b16 %v6212
    %v6591 = vunpack.c.h.b16 %v6212
    %v6592 = vunpack.c.l.b16 %v6213
    %v6593 = vunpack.c.h.b16 %v6213
    %v6594 = vunpack.c.l.b16 %v6214
    %v6595 = vunpack.c.h.b16 %v6214
    %v6596 = vunpack.c.l.b16 %v6215
    %v6597 = vunpack.c.h.b16 %v6215
    %v6598 = vunpack.c.l.b16 %v6216
    %v6599 = vunpack.c.h.b16 %v6216
    %v6600 = vunpack.c.l.b16 %v6217
    %v6601 = vunpack.c.h.b16 %v6217
    %v6602 = vpack.c.b16 %v6354, %v6346
    %v6603 = vpack.c.b16 %v6355, %v6347
    %v6604 = vpack.c.b16 %v6356, %v6348
    %v6605 = vpack.c.b16 %v6357, %v6349
    %v6606 = vpack.c.b16 %v6358, %v6350
    %v6607 = vpack.c.b16 %v6359, %v6351
    %v6608 = vpack.c.b16 %v6360, %v6352
    %v6609 = vpack.c.b16 %v6361, %v6353
    %v6610 = vpack.c.b16 %v6370, %v6362
    %v6611 = vpack.c.b16 %v6371, %v6363
    %v6612 = vpack.c.b16 %v6372, %v6364
    %v6613 = vpack.c.b16 %v6373, %v6365
    %v6614 = vpack.c.b16 %v6374, %v6366
    %v6615 = vpack.c.b16 %v6375, %v6367
    %v6616 = vpack.c.b16 %v6376, %v6368
    %v6617 = vpack.c.b16 %v6377, %v6369
    %v6618 = vpack.c.b16 %v6386, %v6378
    %v6619 = vpack.c.b16 %v6387, %v6379
    %v6620 = vpack.c.b16 %v6388, %v6380
    %v6621 = vpack.c.b16 %v6389, %v6381
    %v6622 = vpack.c.b16 %v6390, %v6382
    %v6623 = vpack.c.b16 %v6391, %v6383
    %v6624 = vpack.c.b16 %v6392, %v6384
    %v6625 = vpack.c.b16 %v6393, %v6385
    %v6626 = vpack.c.b16 %v6402, %v6394
    %v6627 = vpack.c.b16 %v6403, %v6395
    %v6628 = vpack.c.b16 %v6404, %v6396
    %v6629 = vpack.c.b16 %v6405, %v6397
    %v6630 = vpack.c.b16 %v6406, %v6398
    %v6631 = vpack.c.b16 %v6407, %v6399
    %v6632 = vpack.c.b16 %v6408, %v6400
    %v6633 = vpack.c.b16 %v6409, %v6401
    %v6634 = vpack.c.b16 %v6418, %v6410
    %v6635 = vpack.c.b16 %v6419, %v6411
    %v6636 = vpack.c.b16 %v6420, %v6412
    %v6637 = vpack.c.b16 %v6421, %v6413
    %v6638 = vpack.c.b16 %v6422, %v6414
    %v6639 = vpack.c.b16 %v6423, %v6415
    %v6640 = vpack.c.b16 %v6424, %v6416
    %v6641 = vpack.c.b16 %v6425, %v6417
    %v6642 = vpack.c.b16 %v6434, %v6426
    %v6643 = vpack.c.b16 %v6435, %v6427
    %v6644 = vpack.c.b16 %v6436, %v6428
    %v6645 = vpack.c.b16 %v6437, %v6429
    %v6646 = vpack.c.b16 %v6438, %v6430
    %v6647 = vpack.c.b16 %v6439, %v6431
    %v6648 = vpack.c.b16 %v6440, %v6432
    %v6649 = vpack.c.b16 %v6441, %v6433
    %v6650 = vpack.c.b16 %v6450, %v6442
    %v6651 = vpack.c.b16 %v6451, %v6443
    %v6652 = vpack.c.b16 %v6452, %v6444
    %v6653 = vpack.c.b16 %v6453, %v6445
    %v6654 = vpack.c.b16 %v6454, %v6446
    %v6655 = vpack.c.b16 %v6455, %v6447
    %v6656 = vpack.c.b16 %v6456, %v6448
    %v6657 = vpack.c.b16 %v6457, %v6449
    %v6658 = vpack.c.b16 %v6466, %v6458
    %v6659 = vpack.c.b16 %v6467, %v6459
    %v6660 = vpack.c.b16 %v6468, %v6460
    %v6661 = vpack.c.b16 %v6469, %v6461
    %v6662 = vpack.c.b16 %v6470, %v6462
    %v6663 = vpack.c.b16 %v6471, %v6463
    %v6664 = vpack.c.b16 %v6472, %v6464
    %v6665 = vpack.c.b16 %v6473, %v6465
    %v6666 = vpack.c.b16 %v6482, %v6474
    %v6667 = vpack.c.b16 %v6483, %v6475
    %v6668 = vpack.c.b16 %v6484, %v6476
    %v6669 = vpack.c.b16 %v6485, %v6477
    %v6670 = vpack.c.b16 %v6486, %v6478
    %v6671 = vpack.c.b16 %v6487, %v6479
    %v6672 = vpack.c.b16 %v6488, %v6480
    %v6673 = vpack.c.b16 %v6489, %v6481
    %v6674 = vpack.c.b16 %v6498, %v6490
    %v6675 = vpack.c.b16 %v6499, %v6491
    %v6676 = vpack.c.b16 %v6500, %v6492
    %v6677 = vpack.c.b16 %v6501, %v6493
    %v6678 = vpack.c.b16 %v6502, %v6494
    %v6679 = vpack.c.b16 %v6503, %v6495
    %v6680 = vpack.c.b16 %v6504, %v6496
    %v6681 = vpack.c.b16 %v6505, %v6497
    %v6682 = vpack.c.b16 %v6514, %v6506
    %v6683 = vpack.c.b16 %v6515, %v6507
    %v6684 = vpack.c.b16 %v6516, %v6508
    %v6685 = vpack.c.b16 %v6517, %v6509
    %v6686 = vpack.c.b16 %v6518, %v6510
    %v6687 = vpack.c.b16 %v6519, %v6511
    %v6688 = vpack.c.b16 %v6520, %v6512
    %v6689 = vpack.c.b16 %v6521, %v6513
    %v6690 = vpack.c.b16 %v6530, %v6522
    %v6691 = vpack.c.b16 %v6531, %v6523
    %v6692 = vpack.c.b16 %v6532, %v6524
    %v6693 = vpack.c.b16 %v6533, %v6525
    %v6694 = vpack.c.b16 %v6534, %v6526
    %v6695 = vpack.c.b16 %v6535, %v6527
    %v6696 = vpack.c.b16 %v6536, %v6528
    %v6697 = vpack.c.b16 %v6537, %v6529
    %v6698 = vpack.c.b16 %v6546, %v6538
    %v6699 = vpack.c.b16 %v6547, %v6539
    %v6700 = vpack.c.b16 %v6548, %v6540
    %v6701 = vpack.c.b16 %v6549, %v6541
    %v6702 = vpack.c.b16 %v6550, %v6542
    %v6703 = vpack.c.b16 %v6551, %v6543
    %v6704 = vpack.c.b16 %v6552, %v6544
    %v6705 = vpack.c.b16 %v6553, %v6545
    %v6706 = vpack.c.b16 %v6562, %v6554
    %v6707 = vpack.c.b16 %v6563, %v6555
    %v6708 = vpack.c.b16 %v6564, %v6556
    %v6709 = vpack.c.b16 %v6565, %v6557
    %v6710 = vpack.c.b16 %v6566, %v6558
    %v6711 = vpack.c.b16 %v6567, %v6559
    %v6712 = vpack.c.b16 %v6568, %v6560
    %v6713 = vpack.c.b16 %v6569, %v6561
    %v6714 = vpack.c.b16 %v6578, %v6570
    %v6715 = vpack.c.b16 %v6579, %v6571
    %v6716 = vpack.c.b16 %v6580, %v6572
    %v6717 = vpack.c.b16 %v6581, %v6573
    %v6718 = vpack.c.b16 %v6582, %v6574
    %v6719 = vpack.c.b16 %v6583, %v6575
    %v6720 = vpack.c.b16 %v6584, %v6576
    %v6721 = vpack.c.b16 %v6585, %v6577
    %v6722 = vpack.c.b16 %v6594, %v6586
    %v6723 = vpack.c.b16 %v6595, %v6587
    %v6724 = vpack.c.b16 %v6596, %v6588
    %v6725 = vpack.c.b16 %v6597, %v6589
    %v6726 = vpack.c.b16 %v6598, %v6590
    %v6727 = vpack.c.b16 %v6599, %v6591
    %v6728 = vpack.c.b16 %v6600, %v6592
    %v6729 = vpack.c.b16 %v6601, %v6593
    %6858 = vmatprep.subr.bf16.mxu0 %v6603
    %6859 = vmatpush1.bf16.msra.mxu0 %v6602
    %6860 = vmatprep.subr.bf16.mxu0 %v6611
    %6861 = vmatpush1.bf16.msra.mxu0 %v6610
    %6862 = vmatprep.subr.bf16.mxu0 %v6619
    %6863 = vmatpush1.bf16.msra.mxu0 %v6618
    %6864 = vmatprep.subr.bf16.mxu0 %v6627
    %6865 = vmatpush1.bf16.msra.mxu0 %v6626
    %6866 = vmatprep.subr.bf16.mxu0 %v6635
    %6867 = vmatpush1.bf16.msra.mxu0 %v6634
    %6868 = vmatprep.subr.bf16.mxu0 %v6643
    %6869 = vmatpush1.bf16.msra.mxu0 %v6642
    %6870 = vmatprep.subr.bf16.mxu0 %v6651
    %6871 = vmatpush1.bf16.msra.mxu0 %v6650
    %6872 = vmatprep.subr.bf16.mxu0 %v6659
    %6873 = vmatpush1.bf16.msra.mxu0 %v6658
    %6874 = vmatprep.subr.bf16.mxu0 %v6667
    %6875 = vmatpush1.bf16.msra.mxu0 %v6666
    %6876 = vmatprep.subr.bf16.mxu0 %v6675
    %6877 = vmatpush1.bf16.msra.mxu0 %v6674
    %6878 = vmatprep.subr.bf16.mxu0 %v6683
    %6879 = vmatpush1.bf16.msra.mxu0 %v6682
    %6880 = vmatprep.subr.bf16.mxu0 %v6691
    %6881 = vmatpush1.bf16.msra.mxu0 %v6690
    %6882 = vmatprep.subr.bf16.mxu0 %v6699
    %6883 = vmatpush1.bf16.msra.mxu0 %v6698
    %6884 = vmatprep.subr.bf16.mxu0 %v6707
    %6885 = vmatpush1.bf16.msra.mxu0 %v6706
    %6886 = vmatprep.subr.bf16.mxu0 %v6715
    %6887 = vmatpush1.bf16.msra.mxu0 %v6714
    %6888 = vmatprep.subr.bf16.mxu0 %v6723
    %6889 = vmatpush1.bf16.msra.mxu0 %v6722
    %6890 = vmatprep.mubr.bf16.mxu0 %v6089
    %6891 = vmatmul.mubr.bf16.gmra.mrb[0].mxu0 %v6088
    %v6892 = vpop.f32.mrb[0].mxu0
    %v6893 = vadd.f32 0.0, %v6892
    %v6894 = vpop.f32.mrb[0].mxu0
    %v6895 = vadd.f32 0.0, %v6894
    %v6896 = vpop.f32.mrb[0].mxu0
    %v6897 = vpop.f32.mrb[0].mxu0
    %6898 = vdwg.mxu0
    %6899 = vmatprep.subr.bf16.mxu0 %v6605
    %6900 = vmatpush1.bf16.msra.mxu0 %v6604
    %6901 = vmatprep.subr.bf16.mxu0 %v6613
    %6902 = vmatpush1.bf16.msra.mxu0 %v6612
    %6903 = vmatprep.subr.bf16.mxu0 %v6621
    %6904 = vmatpush1.bf16.msra.mxu0 %v6620
    %6905 = vmatprep.subr.bf16.mxu0 %v6629
    %6906 = vmatpush1.bf16.msra.mxu0 %v6628
    %6907 = vmatprep.subr.bf16.mxu0 %v6637
    %6908 = vmatpush1.bf16.msra.mxu0 %v6636
    %6909 = vmatprep.subr.bf16.mxu0 %v6645
    %6910 = vmatpush1.bf16.msra.mxu0 %v6644
    %6911 = vmatprep.subr.bf16.mxu0 %v6653
    %6912 = vmatpush1.bf16.msra.mxu0 %v6652
    %6913 = vmatprep.subr.bf16.mxu0 %v6661
    %6914 = vmatpush1.bf16.msra.mxu0 %v6660
    %6915 = vmatprep.subr.bf16.mxu0 %v6669
    %6916 = vmatpush1.bf16.msra.mxu0 %v6668
    %6917 = vmatprep.subr.bf16.mxu0 %v6677
    %6918 = vmatpush1.bf16.msra.mxu0 %v6676
    %6919 = vmatprep.subr.bf16.mxu0 %v6685
    %6920 = vmatpush1.bf16.msra.mxu0 %v6684
    %6921 = vmatprep.subr.bf16.mxu0 %v6693
    %6922 = vmatpush1.bf16.msra.mxu0 %v6692
    %6923 = vmatprep.subr.bf16.mxu0 %v6701
    %6924 = vmatpush1.bf16.msra.mxu0 %v6700
    %6925 = vmatprep.subr.bf16.mxu0 %v6709
    %6926 = vmatpush1.bf16.msra.mxu0 %v6708
    %6927 = vmatprep.subr.bf16.mxu0 %v6717
    %6928 = vmatpush1.bf16.msra.mxu0 %v6716
    %6929 = vmatprep.subr.bf16.mxu0 %v6725
    %6930 = vmatpush1.bf16.msra.mxu0 %v6724
    %6931 = vmatprep.mubr.bf16.mxu0 %v6089
    %6932 = vmatmul.mubr.bf16.gmra.mrb[0].mxu0 %v6088
    %v6933 = vpop.f32.mrb[0].mxu0
    %v6934 = vadd.f32 0.0, %v6933
    %v6935 = vpop.f32.mrb[0].mxu0
    %v6936 = vadd.f32 0.0, %v6935
    %v6937 = vpop.f32.mrb[0].mxu0
    %v6938 = vpop.f32.mrb[0].mxu0
    %6939 = vdwg.mxu0
    %6940 = vmatprep.subr.bf16.mxu0 %v6607
    %6941 = vmatpush1.bf16.msra.mxu0 %v6606
    %6942 = vmatprep.subr.bf16.mxu0 %v6615
    %6943 = vmatpush1.bf16.msra.mxu0 %v6614
    %6944 = vmatprep.subr.bf16.mxu0 %v6623
    %6945 = vmatpush1.bf16.msra.mxu0 %v6622
    %6946 = vmatprep.subr.bf16.mxu0 %v6631
    %6947 = vmatpush1.bf16.msra.mxu0 %v6630
    %6948 = vmatprep.subr.bf16.mxu0 %v6639
    %6949 = vmatpush1.bf16.msra.mxu0 %v6638
    %6950 = vmatprep.subr.bf16.mxu0 %v6647
    %6951 = vmatpush1.bf16.msra.mxu0 %v6646
    %6952 = vmatprep.subr.bf16.mxu0 %v6655
    %6953 = vmatpush1.bf16.msra.mxu0 %v6654
    %6954 = vmatprep.subr.bf16.mxu0 %v6663
    %6955 = vmatpush1.bf16.msra.mxu0 %v6662
    %6956 = vmatprep.subr.bf16.mxu0 %v6671
    %6957 = vmatpush1.bf16.msra.mxu0 %v6670
    %6958 = vmatprep.subr.bf16.mxu0 %v6679
    %6959 = vmatpush1.bf16.msra.mxu0 %v6678
    %6960 = vmatprep.subr.bf16.mxu0 %v6687
    %6961 = vmatpush1.bf16.msra.mxu0 %v6686
    %6962 = vmatprep.subr.bf16.mxu0 %v6695
    %6963 = vmatpush1.bf16.msra.mxu0 %v6694
    %6964 = vmatprep.subr.bf16.mxu0 %v6703
    %6965 = vmatpush1.bf16.msra.mxu0 %v6702
    %6966 = vmatprep.subr.bf16.mxu0 %v6711
    %6967 = vmatpush1.bf16.msra.mxu0 %v6710
    %6968 = vmatprep.subr.bf16.mxu0 %v6719
    %6969 = vmatpush1.bf16.msra.mxu0 %v6718
    %6970 = vmatprep.subr.bf16.mxu0 %v6727
    %6971 = vmatpush1.bf16.msra.mxu0 %v6726
    %6972 = vmatprep.mubr.bf16.mxu0 %v6089
    %6973 = vmatmul.mubr.bf16.gmra.mrb[0].mxu0 %v6088
    %v6974 = vpop.f32.mrb[0].mxu0
    %v6975 = vadd.f32 0.0, %v6974
    %v6976 = vpop.f32.mrb[0].mxu0
    %v6977 = vadd.f32 0.0, %v6976
    %v6978 = vpop.f32.mrb[0].mxu0
    %v6979 = vpop.f32.mrb[0].mxu0
    %6980 = vdwg.mxu0
    %6981 = vmatprep.subr.bf16.mxu0 %v6609
    %6982 = vmatpush1.bf16.msra.mxu0 %v6608
    %6983 = vmatprep.subr.bf16.mxu0 %v6617
    %6984 = vmatpush1.bf16.msra.mxu0 %v6616
    %6985 = vmatprep.subr.bf16.mxu0 %v6625
    %6986 = vmatpush1.bf16.msra.mxu0 %v6624
    %6987 = vmatprep.subr.bf16.mxu0 %v6633
    %6988 = vmatpush1.bf16.msra.mxu0 %v6632
    %6989 = vmatprep.subr.bf16.mxu0 %v6641
    %6990 = vmatpush1.bf16.msra.mxu0 %v6640
    %6991 = vmatprep.subr.bf16.mxu0 %v6649
    %6992 = vmatpush1.bf16.msra.mxu0 %v6648
    %6993 = vmatprep.subr.bf16.mxu0 %v6657
    %6994 = vmatpush1.bf16.msra.mxu0 %v6656
    %6995 = vmatprep.subr.bf16.mxu0 %v6665
    %6996 = vmatpush1.bf16.msra.mxu0 %v6664
    %6997 = vmatprep.subr.bf16.mxu0 %v6673
    %6998 = vmatpush1.bf16.msra.mxu0 %v6672
    %6999 = vmatprep.subr.bf16.mxu0 %v6681
    %7000 = vmatpush1.bf16.msra.mxu0 %v6680
    %7001 = vmatprep.subr.bf16.mxu0 %v6689
    %7002 = vmatpush1.bf16.msra.mxu0 %v6688
    %7003 = vmatprep.subr.bf16.mxu0 %v6697
    %7004 = vmatpush1.bf16.msra.mxu0 %v6696
    %7005 = vmatprep.subr.bf16.mxu0 %v6705
    %7006 = vmatpush1.bf16.msra.mxu0 %v6704
    %7007 = vmatprep.subr.bf16.mxu0 %v6713
    %7008 = vmatpush1.bf16.msra.mxu0 %v6712
    %7009 = vmatprep.subr.bf16.mxu0 %v6721
    %7010 = vmatpush1.bf16.msra.mxu0 %v6720
    %7011 = vmatprep.subr.bf16.mxu0 %v6729
    %7012 = vmatpush1.bf16.msra.mxu0 %v6728
    %7013 = vmatprep.mubr.bf16.mxu0 %v6089
    %7014 = vmatmul.mubr.bf16.gmra.mrb[0].mxu0 %v6088
    %v7015 = vpop.f32.mrb[0].mxu0
    %v7016 = vadd.f32 0.0, %v7015
    %v7017 = vpop.f32.mrb[0].mxu0
    %v7018 = vadd.f32 0.0, %v7017
    %v7019 = vpop.f32.mrb[0].mxu0
    %v7020 = vpop.f32.mrb[0].mxu0
    %7021 = vdwg.mxu0
    %v7150 = vunpack.c.l.b16 %v5948
    %v7151 = vunpack.c.h.b16 %v5948
    %v7152 = vunpack.c.l.b16 %v5949
    %v7153 = vunpack.c.h.b16 %v5949
    %v7154 = vunpack.c.l.b16 %v5950
    %v7155 = vunpack.c.h.b16 %v5950
    %v7156 = vunpack.c.l.b16 %v5951
    %v7157 = vunpack.c.h.b16 %v5951
    %v7158 = vunpack.c.l.b16 %v5952
    %v7159 = vunpack.c.h.b16 %v5952
    %v7160 = vunpack.c.l.b16 %v5953
    %v7161 = vunpack.c.h.b16 %v5953
    %v7162 = vunpack.c.l.b16 %v5954
    %v7163 = vunpack.c.h.b16 %v5954
    %v7164 = vunpack.c.l.b16 %v5955
    %v7165 = vunpack.c.h.b16 %v5955
    %v7166 = vunpack.c.l.b16 %v5956
    %v7167 = vunpack.c.h.b16 %v5956
    %v7168 = vunpack.c.l.b16 %v5957
    %v7169 = vunpack.c.h.b16 %v5957
    %v7170 = vunpack.c.l.b16 %v5958
    %v7171 = vunpack.c.h.b16 %v5958
    %v7172 = vunpack.c.l.b16 %v5959
    %v7173 = vunpack.c.h.b16 %v5959
    %v7174 = vunpack.c.l.b16 %v5960
    %v7175 = vunpack.c.h.b16 %v5960
    %v7176 = vunpack.c.l.b16 %v5961
    %v7177 = vunpack.c.h.b16 %v5961
    %v7178 = vunpack.c.l.b16 %v5962
    %v7179 = vunpack.c.h.b16 %v5962
    %v7180 = vunpack.c.l.b16 %v5963
    %v7181 = vunpack.c.h.b16 %v5963
    %v7182 = vunpack.c.l.b16 %v5964
    %v7183 = vunpack.c.h.b16 %v5964
    %v7184 = vunpack.c.l.b16 %v5965
    %v7185 = vunpack.c.h.b16 %v5965
    %v7186 = vunpack.c.l.b16 %v5966
    %v7187 = vunpack.c.h.b16 %v5966
    %v7188 = vunpack.c.l.b16 %v5967
    %v7189 = vunpack.c.h.b16 %v5967
    %v7190 = vunpack.c.l.b16 %v5968
    %v7191 = vunpack.c.h.b16 %v5968
    %v7192 = vunpack.c.l.b16 %v5969
    %v7193 = vunpack.c.h.b16 %v5969
    %v7194 = vunpack.c.l.b16 %v5970
    %v7195 = vunpack.c.h.b16 %v5970
    %v7196 = vunpack.c.l.b16 %v5971
    %v7197 = vunpack.c.h.b16 %v5971
    %v7198 = vunpack.c.l.b16 %v5972
    %v7199 = vunpack.c.h.b16 %v5972
    %v7200 = vunpack.c.l.b16 %v5973
    %v7201 = vunpack.c.h.b16 %v5973
    %v7202 = vunpack.c.l.b16 %v5974
    %v7203 = vunpack.c.h.b16 %v5974
    %v7204 = vunpack.c.l.b16 %v5975
    %v7205 = vunpack.c.h.b16 %v5975
    %v7206 = vunpack.c.l.b16 %v5976
    %v7207 = vunpack.c.h.b16 %v5976
    %v7208 = vunpack.c.l.b16 %v5977
    %v7209 = vunpack.c.h.b16 %v5977
    %v7210 = vunpack.c.l.b16 %v5978
    %v7211 = vunpack.c.h.b16 %v5978
    %v7212 = vunpack.c.l.b16 %v5979
    %v7213 = vunpack.c.h.b16 %v5979
    %v7214 = vunpack.c.l.b16 %v5980
    %v7215 = vunpack.c.h.b16 %v5980
    %v7216 = vunpack.c.l.b16 %v5981
    %v7217 = vunpack.c.h.b16 %v5981
    %v7218 = vunpack.c.l.b16 %v5982
    %v7219 = vunpack.c.h.b16 %v5982
    %v7220 = vunpack.c.l.b16 %v5983
    %v7221 = vunpack.c.h.b16 %v5983
    %v7222 = vunpack.c.l.b16 %v5984
    %v7223 = vunpack.c.h.b16 %v5984
    %v7224 = vunpack.c.l.b16 %v5985
    %v7225 = vunpack.c.h.b16 %v5985
    %v7226 = vunpack.c.l.b16 %v5986
    %v7227 = vunpack.c.h.b16 %v5986
    %v7228 = vunpack.c.l.b16 %v5987
    %v7229 = vunpack.c.h.b16 %v5987
    %v7230 = vunpack.c.l.b16 %v5988
    %v7231 = vunpack.c.h.b16 %v5988
    %v7232 = vunpack.c.l.b16 %v5989
    %v7233 = vunpack.c.h.b16 %v5989
    %v7234 = vunpack.c.l.b16 %v5990
    %v7235 = vunpack.c.h.b16 %v5990
    %v7236 = vunpack.c.l.b16 %v5991
    %v7237 = vunpack.c.h.b16 %v5991
    %v7238 = vunpack.c.l.b16 %v5992
    %v7239 = vunpack.c.h.b16 %v5992
    %v7240 = vunpack.c.l.b16 %v5993
    %v7241 = vunpack.c.h.b16 %v5993
    %v7242 = vunpack.c.l.b16 %v5994
    %v7243 = vunpack.c.h.b16 %v5994
    %v7244 = vunpack.c.l.b16 %v5995
    %v7245 = vunpack.c.h.b16 %v5995
    %v7246 = vunpack.c.l.b16 %v5996
    %v7247 = vunpack.c.h.b16 %v5996
    %v7248 = vunpack.c.l.b16 %v5997
    %v7249 = vunpack.c.h.b16 %v5997
    %v7250 = vunpack.c.l.b16 %v5998
    %v7251 = vunpack.c.h.b16 %v5998
    %v7252 = vunpack.c.l.b16 %v5999
    %v7253 = vunpack.c.h.b16 %v5999
    %v7254 = vunpack.c.l.b16 %v6000
    %v7255 = vunpack.c.h.b16 %v6000
    %v7256 = vunpack.c.l.b16 %v6001
    %v7257 = vunpack.c.h.b16 %v6001
    %v7258 = vunpack.c.l.b16 %v6002
    %v7259 = vunpack.c.h.b16 %v6002
    %v7260 = vunpack.c.l.b16 %v6003
    %v7261 = vunpack.c.h.b16 %v6003
    %v7262 = vunpack.c.l.b16 %v6004
    %v7263 = vunpack.c.h.b16 %v6004
    %v7264 = vunpack.c.l.b16 %v6005
    %v7265 = vunpack.c.h.b16 %v6005
    %v7266 = vunpack.c.l.b16 %v6006
    %v7267 = vunpack.c.h.b16 %v6006
    %v7268 = vunpack.c.l.b16 %v6007
    %v7269 = vunpack.c.h.b16 %v6007
    %v7270 = vunpack.c.l.b16 %v6008
    %v7271 = vunpack.c.h.b16 %v6008
    %v7272 = vunpack.c.l.b16 %v6009
    %v7273 = vunpack.c.h.b16 %v6009
    %v7274 = vunpack.c.l.b16 %v6010
    %v7275 = vunpack.c.h.b16 %v6010
    %v7276 = vunpack.c.l.b16 %v6011
    %v7277 = vunpack.c.h.b16 %v6011
    %v7278 = vunpack.c.l.b16 %v6012
    %v7279 = vunpack.c.h.b16 %v6012
    %v7280 = vunpack.c.l.b16 %v6013
    %v7281 = vunpack.c.h.b16 %v6013
    %v7282 = vunpack.c.l.b16 %v6014
    %v7283 = vunpack.c.h.b16 %v6014
    %v7284 = vunpack.c.l.b16 %v6015
    %v7285 = vunpack.c.h.b16 %v6015
    %v7286 = vunpack.c.l.b16 %v6016
    %v7287 = vunpack.c.h.b16 %v6016
    %v7288 = vunpack.c.l.b16 %v6017
    %v7289 = vunpack.c.h.b16 %v6017
    %v7290 = vunpack.c.l.b16 %v6018
    %v7291 = vunpack.c.h.b16 %v6018
    %v7292 = vunpack.c.l.b16 %v6019
    %v7293 = vunpack.c.h.b16 %v6019
    %v7294 = vunpack.c.l.b16 %v6020
    %v7295 = vunpack.c.h.b16 %v6020
    %v7296 = vunpack.c.l.b16 %v6021
    %v7297 = vunpack.c.h.b16 %v6021
    %v7298 = vunpack.c.l.b16 %v6022
    %v7299 = vunpack.c.h.b16 %v6022
    %v7300 = vunpack.c.l.b16 %v6023
    %v7301 = vunpack.c.h.b16 %v6023
    %v7302 = vunpack.c.l.b16 %v6024
    %v7303 = vunpack.c.h.b16 %v6024
    %v7304 = vunpack.c.l.b16 %v6025
    %v7305 = vunpack.c.h.b16 %v6025
    %v7306 = vunpack.c.l.b16 %v6026
    %v7307 = vunpack.c.h.b16 %v6026
    %v7308 = vunpack.c.l.b16 %v6027
    %v7309 = vunpack.c.h.b16 %v6027
    %v7310 = vunpack.c.l.b16 %v6028
    %v7311 = vunpack.c.h.b16 %v6028
    %v7312 = vunpack.c.l.b16 %v6029
    %v7313 = vunpack.c.h.b16 %v6029
    %v7314 = vunpack.c.l.b16 %v6030
    %v7315 = vunpack.c.h.b16 %v6030
    %v7316 = vunpack.c.l.b16 %v6031
    %v7317 = vunpack.c.h.b16 %v6031
    %v7318 = vunpack.c.l.b16 %v6032
    %v7319 = vunpack.c.h.b16 %v6032
    %v7320 = vunpack.c.l.b16 %v6033
    %v7321 = vunpack.c.h.b16 %v6033
    %v7322 = vunpack.c.l.b16 %v6034
    %v7323 = vunpack.c.h.b16 %v6034
    %v7324 = vunpack.c.l.b16 %v6035
    %v7325 = vunpack.c.h.b16 %v6035
    %v7326 = vunpack.c.l.b16 %v6036
    %v7327 = vunpack.c.h.b16 %v6036
    %v7328 = vunpack.c.l.b16 %v6037
    %v7329 = vunpack.c.h.b16 %v6037
    %v7330 = vunpack.c.l.b16 %v6038
    %v7331 = vunpack.c.h.b16 %v6038
    %v7332 = vunpack.c.l.b16 %v6039
    %v7333 = vunpack.c.h.b16 %v6039
    %v7334 = vunpack.c.l.b16 %v6040
    %v7335 = vunpack.c.h.b16 %v6040
    %v7336 = vunpack.c.l.b16 %v6041
    %v7337 = vunpack.c.h.b16 %v6041
    %v7338 = vunpack.c.l.b16 %v6042
    %v7339 = vunpack.c.h.b16 %v6042
    %v7340 = vunpack.c.l.b16 %v6043
    %v7341 = vunpack.c.h.b16 %v6043
    %v7342 = vunpack.c.l.b16 %v6044
    %v7343 = vunpack.c.h.b16 %v6044
    %v7344 = vunpack.c.l.b16 %v6045
    %v7345 = vunpack.c.h.b16 %v6045
    %v7346 = vunpack.c.l.b16 %v6046
    %v7347 = vunpack.c.h.b16 %v6046
    %v7348 = vunpack.c.l.b16 %v6047
    %v7349 = vunpack.c.h.b16 %v6047
    %v7350 = vunpack.c.l.b16 %v6048
    %v7351 = vunpack.c.h.b16 %v6048
    %v7352 = vunpack.c.l.b16 %v6049
    %v7353 = vunpack.c.h.b16 %v6049
    %v7354 = vunpack.c.l.b16 %v6050
    %v7355 = vunpack.c.h.b16 %v6050
    %v7356 = vunpack.c.l.b16 %v6051
    %v7357 = vunpack.c.h.b16 %v6051
    %v7358 = vunpack.c.l.b16 %v6052
    %v7359 = vunpack.c.h.b16 %v6052
    %v7360 = vunpack.c.l.b16 %v6053
    %v7361 = vunpack.c.h.b16 %v6053
    %v7362 = vunpack.c.l.b16 %v6054
    %v7363 = vunpack.c.h.b16 %v6054
    %v7364 = vunpack.c.l.b16 %v6055
    %v7365 = vunpack.c.h.b16 %v6055
    %v7366 = vunpack.c.l.b16 %v6056
    %v7367 = vunpack.c.h.b16 %v6056
    %v7368 = vunpack.c.l.b16 %v6057
    %v7369 = vunpack.c.h.b16 %v6057
    %v7370 = vunpack.c.l.b16 %v6058
    %v7371 = vunpack.c.h.b16 %v6058
    %v7372 = vunpack.c.l.b16 %v6059
    %v7373 = vunpack.c.h.b16 %v6059
    %v7374 = vunpack.c.l.b16 %v6060
    %v7375 = vunpack.c.h.b16 %v6060
    %v7376 = vunpack.c.l.b16 %v6061
    %v7377 = vunpack.c.h.b16 %v6061
    %v7378 = vunpack.c.l.b16 %v6062
    %v7379 = vunpack.c.h.b16 %v6062
    %v7380 = vunpack.c.l.b16 %v6063
    %v7381 = vunpack.c.h.b16 %v6063
    %v7382 = vunpack.c.l.b16 %v6064
    %v7383 = vunpack.c.h.b16 %v6064
    %v7384 = vunpack.c.l.b16 %v6065
    %v7385 = vunpack.c.h.b16 %v6065
    %v7386 = vunpack.c.l.b16 %v6066
    %v7387 = vunpack.c.h.b16 %v6066
    %v7388 = vunpack.c.l.b16 %v6067
    %v7389 = vunpack.c.h.b16 %v6067
    %v7390 = vunpack.c.l.b16 %v6068
    %v7391 = vunpack.c.h.b16 %v6068
    %v7392 = vunpack.c.l.b16 %v6069
    %v7393 = vunpack.c.h.b16 %v6069
    %v7394 = vunpack.c.l.b16 %v6070
    %v7395 = vunpack.c.h.b16 %v6070
    %v7396 = vunpack.c.l.b16 %v6071
    %v7397 = vunpack.c.h.b16 %v6071
    %v7398 = vunpack.c.l.b16 %v6072
    %v7399 = vunpack.c.h.b16 %v6072
    %v7400 = vunpack.c.l.b16 %v6073
    %v7401 = vunpack.c.h.b16 %v6073
    %v7402 = vunpack.c.l.b16 %v6074
    %v7403 = vunpack.c.h.b16 %v6074
    %v7404 = vunpack.c.l.b16 %v6075
    %v7405 = vunpack.c.h.b16 %v6075
    %v7406 = vpack.c.b16 %v7158, %v7150
    %v7407 = vpack.c.b16 %v7159, %v7151
    %v7408 = vpack.c.b16 %v7160, %v7152
    %v7409 = vpack.c.b16 %v7161, %v7153
    %v7410 = vpack.c.b16 %v7162, %v7154
    %v7411 = vpack.c.b16 %v7163, %v7155
    %v7412 = vpack.c.b16 %v7164, %v7156
    %v7413 = vpack.c.b16 %v7165, %v7157
    %v7414 = vpack.c.b16 %v7174, %v7166
    %v7415 = vpack.c.b16 %v7175, %v7167
    %v7416 = vpack.c.b16 %v7176, %v7168
    %v7417 = vpack.c.b16 %v7177, %v7169
    %v7418 = vpack.c.b16 %v7178, %v7170
    %v7419 = vpack.c.b16 %v7179, %v7171
    %v7420 = vpack.c.b16 %v7180, %v7172
    %v7421 = vpack.c.b16 %v7181, %v7173
    %v7422 = vpack.c.b16 %v7190, %v7182
    %v7423 = vpack.c.b16 %v7191, %v7183
    %v7424 = vpack.c.b16 %v7192, %v7184
    %v7425 = vpack.c.b16 %v7193, %v7185
    %v7426 = vpack.c.b16 %v7194, %v7186
    %v7427 = vpack.c.b16 %v7195, %v7187
    %v7428 = vpack.c.b16 %v7196, %v7188
    %v7429 = vpack.c.b16 %v7197, %v7189
    %v7430 = vpack.c.b16 %v7206, %v7198
    %v7431 = vpack.c.b16 %v7207, %v7199
    %v7432 = vpack.c.b16 %v7208, %v7200
    %v7433 = vpack.c.b16 %v7209, %v7201
    %v7434 = vpack.c.b16 %v7210, %v7202
    %v7435 = vpack.c.b16 %v7211, %v7203
    %v7436 = vpack.c.b16 %v7212, %v7204
    %v7437 = vpack.c.b16 %v7213, %v7205
    %v7438 = vpack.c.b16 %v7222, %v7214
    %v7439 = vpack.c.b16 %v7223, %v7215
    %v7440 = vpack.c.b16 %v7224, %v7216
    %v7441 = vpack.c.b16 %v7225, %v7217
    %v7442 = vpack.c.b16 %v7226, %v7218
    %v7443 = vpack.c.b16 %v7227, %v7219
    %v7444 = vpack.c.b16 %v7228, %v7220
    %v7445 = vpack.c.b16 %v7229, %v7221
    %v7446 = vpack.c.b16 %v7238, %v7230
    %v7447 = vpack.c.b16 %v7239, %v7231
    %v7448 = vpack.c.b16 %v7240, %v7232
    %v7449 = vpack.c.b16 %v7241, %v7233
    %v7450 = vpack.c.b16 %v7242, %v7234
    %v7451 = vpack.c.b16 %v7243, %v7235
    %v7452 = vpack.c.b16 %v7244, %v7236
    %v7453 = vpack.c.b16 %v7245, %v7237
    %v7454 = vpack.c.b16 %v7254, %v7246
    %v7455 = vpack.c.b16 %v7255, %v7247
    %v7456 = vpack.c.b16 %v7256, %v7248
    %v7457 = vpack.c.b16 %v7257, %v7249
    %v7458 = vpack.c.b16 %v7258, %v7250
    %v7459 = vpack.c.b16 %v7259, %v7251
    %v7460 = vpack.c.b16 %v7260, %v7252
    %v7461 = vpack.c.b16 %v7261, %v7253
    %v7462 = vpack.c.b16 %v7270, %v7262
    %v7463 = vpack.c.b16 %v7271, %v7263
    %v7464 = vpack.c.b16 %v7272, %v7264
    %v7465 = vpack.c.b16 %v7273, %v7265
    %v7466 = vpack.c.b16 %v7274, %v7266
    %v7467 = vpack.c.b16 %v7275, %v7267
    %v7468 = vpack.c.b16 %v7276, %v7268
    %v7469 = vpack.c.b16 %v7277, %v7269
    %v7470 = vpack.c.b16 %v7286, %v7278
    %v7471 = vpack.c.b16 %v7287, %v7279
    %v7472 = vpack.c.b16 %v7288, %v7280
    %v7473 = vpack.c.b16 %v7289, %v7281
    %v7474 = vpack.c.b16 %v7290, %v7282
    %v7475 = vpack.c.b16 %v7291, %v7283
    %v7476 = vpack.c.b16 %v7292, %v7284
    %v7477 = vpack.c.b16 %v7293, %v7285
    %v7478 = vpack.c.b16 %v7302, %v7294
    %v7479 = vpack.c.b16 %v7303, %v7295
    %v7480 = vpack.c.b16 %v7304, %v7296
    %v7481 = vpack.c.b16 %v7305, %v7297
    %v7482 = vpack.c.b16 %v7306, %v7298
    %v7483 = vpack.c.b16 %v7307, %v7299
    %v7484 = vpack.c.b16 %v7308, %v7300
    %v7485 = vpack.c.b16 %v7309, %v7301
    %v7486 = vpack.c.b16 %v7318, %v7310
    %v7487 = vpack.c.b16 %v7319, %v7311
    %v7488 = vpack.c.b16 %v7320, %v7312
    %v7489 = vpack.c.b16 %v7321, %v7313
    %v7490 = vpack.c.b16 %v7322, %v7314
    %v7491 = vpack.c.b16 %v7323, %v7315
    %v7492 = vpack.c.b16 %v7324, %v7316
    %v7493 = vpack.c.b16 %v7325, %v7317
    %v7494 = vpack.c.b16 %v7334, %v7326
    %v7495 = vpack.c.b16 %v7335, %v7327
    %v7496 = vpack.c.b16 %v7336, %v7328
    %v7497 = vpack.c.b16 %v7337, %v7329
    %v7498 = vpack.c.b16 %v7338, %v7330
    %v7499 = vpack.c.b16 %v7339, %v7331
    %v7500 = vpack.c.b16 %v7340, %v7332
    %v7501 = vpack.c.b16 %v7341, %v7333
    %v7502 = vpack.c.b16 %v7350, %v7342
    %v7503 = vpack.c.b16 %v7351, %v7343
    %v7504 = vpack.c.b16 %v7352, %v7344
    %v7505 = vpack.c.b16 %v7353, %v7345
    %v7506 = vpack.c.b16 %v7354, %v7346
    %v7507 = vpack.c.b16 %v7355, %v7347
    %v7508 = vpack.c.b16 %v7356, %v7348
    %v7509 = vpack.c.b16 %v7357, %v7349
    %v7510 = vpack.c.b16 %v7366, %v7358
    %v7511 = vpack.c.b16 %v7367, %v7359
    %v7512 = vpack.c.b16 %v7368, %v7360
    %v7513 = vpack.c.b16 %v7369, %v7361
    %v7514 = vpack.c.b16 %v7370, %v7362
    %v7515 = vpack.c.b16 %v7371, %v7363
    %v7516 = vpack.c.b16 %v7372, %v7364
    %v7517 = vpack.c.b16 %v7373, %v7365
    %v7518 = vpack.c.b16 %v7382, %v7374
    %v7519 = vpack.c.b16 %v7383, %v7375
    %v7520 = vpack.c.b16 %v7384, %v7376
    %v7521 = vpack.c.b16 %v7385, %v7377
    %v7522 = vpack.c.b16 %v7386, %v7378
    %v7523 = vpack.c.b16 %v7387, %v7379
    %v7524 = vpack.c.b16 %v7388, %v7380
    %v7525 = vpack.c.b16 %v7389, %v7381
    %v7526 = vpack.c.b16 %v7398, %v7390
    %v7527 = vpack.c.b16 %v7399, %v7391
    %v7528 = vpack.c.b16 %v7400, %v7392
    %v7529 = vpack.c.b16 %v7401, %v7393
    %v7530 = vpack.c.b16 %v7402, %v7394
    %v7531 = vpack.c.b16 %v7403, %v7395
    %v7532 = vpack.c.b16 %v7404, %v7396
    %v7533 = vpack.c.b16 %v7405, %v7397
    %7662 = vmatprep.subr.bf16.mxu0 %v7407
    %7663 = vmatpush1.bf16.msra.mxu0 %v7406
    %7664 = vmatprep.subr.bf16.mxu0 %v7415
    %7665 = vmatpush1.bf16.msra.mxu0 %v7414
    %7666 = vmatprep.subr.bf16.mxu0 %v7423
    %7667 = vmatpush1.bf16.msra.mxu0 %v7422
    %7668 = vmatprep.subr.bf16.mxu0 %v7431
    %7669 = vmatpush1.bf16.msra.mxu0 %v7430
    %7670 = vmatprep.subr.bf16.mxu0 %v7439
    %7671 = vmatpush1.bf16.msra.mxu0 %v7438
    %7672 = vmatprep.subr.bf16.mxu0 %v7447
    %7673 = vmatpush1.bf16.msra.mxu0 %v7446
    %7674 = vmatprep.subr.bf16.mxu0 %v7455
    %7675 = vmatpush1.bf16.msra.mxu0 %v7454
    %7676 = vmatprep.subr.bf16.mxu0 %v7463
    %7677 = vmatpush1.bf16.msra.mxu0 %v7462
    %7678 = vmatprep.subr.bf16.mxu0 %v7471
    %7679 = vmatpush1.bf16.msra.mxu0 %v7470
    %7680 = vmatprep.subr.bf16.mxu0 %v7479
    %7681 = vmatpush1.bf16.msra.mxu0 %v7478
    %7682 = vmatprep.subr.bf16.mxu0 %v7487
    %7683 = vmatpush1.bf16.msra.mxu0 %v7486
    %7684 = vmatprep.subr.bf16.mxu0 %v7495
    %7685 = vmatpush1.bf16.msra.mxu0 %v7494
    %7686 = vmatprep.subr.bf16.mxu0 %v7503
    %7687 = vmatpush1.bf16.msra.mxu0 %v7502
    %7688 = vmatprep.subr.bf16.mxu0 %v7511
    %7689 = vmatpush1.bf16.msra.mxu0 %v7510
    %7690 = vmatprep.subr.bf16.mxu0 %v7519
    %7691 = vmatpush1.bf16.msra.mxu0 %v7518
    %7692 = vmatprep.subr.bf16.mxu0 %v7527
    %7693 = vmatpush1.bf16.msra.mxu0 %v7526
    %7694 = vmatprep.mubr.bf16.mxu0 %v5947
    %7695 = vmatmul.mubr.bf16.gmra.mrb[0].mxu0 %v5946
    %v7696 = vpop.f32.mrb[0].mxu0
    %v7697 = vadd.f32 %v6893, %v7696
    %v7698 = vpop.f32.mrb[0].mxu0
    %v7699 = vadd.f32 %v6895, %v7698
    %v7700 = vpop.f32.mrb[0].mxu0
    %v7701 = vpop.f32.mrb[0].mxu0
    %7702 = vdwg.mxu0
    %7703 = vmatprep.subr.bf16.mxu0 %v7409
    %7704 = vmatpush1.bf16.msra.mxu0 %v7408
    %7705 = vmatprep.subr.bf16.mxu0 %v7417
    %7706 = vmatpush1.bf16.msra.mxu0 %v7416
    %7707 = vmatprep.subr.bf16.mxu0 %v7425
    %7708 = vmatpush1.bf16.msra.mxu0 %v7424
    %7709 = vmatprep.subr.bf16.mxu0 %v7433
    %7710 = vmatpush1.bf16.msra.mxu0 %v7432
    %7711 = vmatprep.subr.bf16.mxu0 %v7441
    %7712 = vmatpush1.bf16.msra.mxu0 %v7440
    %7713 = vmatprep.subr.bf16.mxu0 %v7449
    %7714 = vmatpush1.bf16.msra.mxu0 %v7448
    %7715 = vmatprep.subr.bf16.mxu0 %v7457
    %7716 = vmatpush1.bf16.msra.mxu0 %v7456
    %7717 = vmatprep.subr.bf16.mxu0 %v7465
    %7718 = vmatpush1.bf16.msra.mxu0 %v7464
    %7719 = vmatprep.subr.bf16.mxu0 %v7473
    %7720 = vmatpush1.bf16.msra.mxu0 %v7472
    %7721 = vmatprep.subr.bf16.mxu0 %v7481
    %7722 = vmatpush1.bf16.msra.mxu0 %v7480
    %7723 = vmatprep.subr.bf16.mxu0 %v7489
    %7724 = vmatpush1.bf16.msra.mxu0 %v7488
    %7725 = vmatprep.subr.bf16.mxu0 %v7497
    %7726 = vmatpush1.bf16.msra.mxu0 %v7496
    %7727 = vmatprep.subr.bf16.mxu0 %v7505
    %7728 = vmatpush1.bf16.msra.mxu0 %v7504
    %7729 = vmatprep.subr.bf16.mxu0 %v7513
    %7730 = vmatpush1.bf16.msra.mxu0 %v7512
    %7731 = vmatprep.subr.bf16.mxu0 %v7521
    %7732 = vmatpush1.bf16.msra.mxu0 %v7520
    %7733 = vmatprep.subr.bf16.mxu0 %v7529
    %7734 = vmatpush1.bf16.msra.mxu0 %v7528
    %7735 = vmatprep.mubr.bf16.mxu0 %v5947
    %7736 = vmatmul.mubr.bf16.gmra.mrb[0].mxu0 %v5946
    %v7737 = vpop.f32.mrb[0].mxu0
    %v7738 = vadd.f32 %v6934, %v7737
    %v7739 = vpop.f32.mrb[0].mxu0
    %v7740 = vadd.f32 %v6936, %v7739
    %v7741 = vpop.f32.mrb[0].mxu0
    %v7742 = vpop.f32.mrb[0].mxu0
    %7743 = vdwg.mxu0
    %7744 = vmatprep.subr.bf16.mxu0 %v7411
    %7745 = vmatpush1.bf16.msra.mxu0 %v7410
    %7746 = vmatprep.subr.bf16.mxu0 %v7419
    %7747 = vmatpush1.bf16.msra.mxu0 %v7418
    %7748 = vmatprep.subr.bf16.mxu0 %v7427
    %7749 = vmatpush1.bf16.msra.mxu0 %v7426
    %7750 = vmatprep.subr.bf16.mxu0 %v7435
    %7751 = vmatpush1.bf16.msra.mxu0 %v7434
    %7752 = vmatprep.subr.bf16.mxu0 %v7443
    %7753 = vmatpush1.bf16.msra.mxu0 %v7442
    %7754 = vmatprep.subr.bf16.mxu0 %v7451
    %7755 = vmatpush1.bf16.msra.mxu0 %v7450
    %7756 = vmatprep.subr.bf16.mxu0 %v7459
    %7757 = vmatpush1.bf16.msra.mxu0 %v7458
    %7758 = vmatprep.subr.bf16.mxu0 %v7467
    %7759 = vmatpush1.bf16.msra.mxu0 %v7466
    %7760 = vmatprep.subr.bf16.mxu0 %v7475
    %7761 = vmatpush1.bf16.msra.mxu0 %v7474
    %7762 = vmatprep.subr.bf16.mxu0 %v7483
    %7763 = vmatpush1.bf16.msra.mxu0 %v7482
    %7764 = vmatprep.subr.bf16.mxu0 %v7491
    %7765 = vmatpush1.bf16.msra.mxu0 %v7490
    %7766 = vmatprep.subr.bf16.mxu0 %v7499
    %7767 = vmatpush1.bf16.msra.mxu0 %v7498
    %7768 = vmatprep.subr.bf16.mxu0 %v7507
    %7769 = vmatpush1.bf16.msra.mxu0 %v7506
    %7770 = vmatprep.subr.bf16.mxu0 %v7515
    %7771 = vmatpush1.bf16.msra.mxu0 %v7514
    %7772 = vmatprep.subr.bf16.mxu0 %v7523
    %7773 = vmatpush1.bf16.msra.mxu0 %v7522
    %7774 = vmatprep.subr.bf16.mxu0 %v7531
    %7775 = vmatpush1.bf16.msra.mxu0 %v7530
    %7776 = vmatprep.mubr.bf16.mxu0 %v5947
    %7777 = vmatmul.mubr.bf16.gmra.mrb[0].mxu0 %v5946
    %v7778 = vpop.f32.mrb[0].mxu0
    %v7779 = vadd.f32 %v6975, %v7778
    %v7780 = vpop.f32.mrb[0].mxu0
    %v7781 = vadd.f32 %v6977, %v7780
    %v7782 = vpop.f32.mrb[0].mxu0
    %v7783 = vpop.f32.mrb[0].mxu0
    %7784 = vdwg.mxu0
    %7785 = vmatprep.subr.bf16.mxu0 %v7413
    %7786 = vmatpush1.bf16.msra.mxu0 %v7412
    %7787 = vmatprep.subr.bf16.mxu0 %v7421
    %7788 = vmatpush1.bf16.msra.mxu0 %v7420
    %7789 = vmatprep.subr.bf16.mxu0 %v7429
    %7790 = vmatpush1.bf16.msra.mxu0 %v7428
    %7791 = vmatprep.subr.bf16.mxu0 %v7437
    %7792 = vmatpush1.bf16.msra.mxu0 %v7436
    %7793 = vmatprep.subr.bf16.mxu0 %v7445
    %7794 = vmatpush1.bf16.msra.mxu0 %v7444
    %7795 = vmatprep.subr.bf16.mxu0 %v7453
    %7796 = vmatpush1.bf16.msra.mxu0 %v7452
    %7797 = vmatprep.subr.bf16.mxu0 %v7461
    %7798 = vmatpush1.bf16.msra.mxu0 %v7460
    %7799 = vmatprep.subr.bf16.mxu0 %v7469
    %7800 = vmatpush1.bf16.msra.mxu0 %v7468
    %7801 = vmatprep.subr.bf16.mxu0 %v7477
    %7802 = vmatpush1.bf16.msra.mxu0 %v7476
    %7803 = vmatprep.subr.bf16.mxu0 %v7485
    %7804 = vmatpush1.bf16.msra.mxu0 %v7484
    %7805 = vmatprep.subr.bf16.mxu0 %v7493
    %7806 = vmatpush1.bf16.msra.mxu0 %v7492
    %7807 = vmatprep.subr.bf16.mxu0 %v7501
    %7808 = vmatpush1.bf16.msra.mxu0 %v7500
    %7809 = vmatprep.subr.bf16.mxu0 %v7509
    %7810 = vmatpush1.bf16.msra.mxu0 %v7508
    %7811 = vmatprep.subr.bf16.mxu0 %v7517
    %7812 = vmatpush1.bf16.msra.mxu0 %v7516
    %7813 = vmatprep.subr.bf16.mxu0 %v7525
    %7814 = vmatpush1.bf16.msra.mxu0 %v7524
    %7815 = vmatprep.subr.bf16.mxu0 %v7533
    %7816 = vmatpush1.bf16.msra.mxu0 %v7532
    %7817 = vmatprep.mubr.bf16.mxu0 %v5947
    %7818 = vmatmul.mubr.bf16.gmra.mrb[0].mxu0 %v5946
    %v7819 = vpop.f32.mrb[0].mxu0
    %v7820 = vadd.f32 %v7016, %v7819
    %v7821 = vpop.f32.mrb[0].mxu0
    %v7822 = vadd.f32 %v7018, %v7821
    %v7823 = vpop.f32.mrb[0].mxu0
    %v7824 = vpop.f32.mrb[0].mxu0
    %7825 = vdwg.mxu0
    %v7826 = vld [vmem:[%s12] sm:$0xff]
    %v7828 = vlaneseq
    %v7829 = vshrl.u32 %v7828, 7
    %v7830 = vsub.s32 0, %v7829
    %v7831 = vrot.slane %v7826, %v7830
    %v7832 = vlaneseq
    %v7833 = vshrl.u32 %v7832, 7
    %v7834 = vsub.s32 1, %v7833
    %v7835 = vrot.slane %v7826, %v7834
    %v7836 = vlaneseq
    %v7837 = vshrl.u32 %v7836, 7
    %v7838 = vsub.s32 2, %v7837
    %v7839 = vrot.slane %v7826, %v7838
    %v7840 = vlaneseq
    %v7841 = vshrl.u32 %v7840, 7
    %v7842 = vsub.s32 3, %v7841
    %v7843 = vrot.slane %v7826, %v7842
    %v7844 = vlaneseq
    %v7845 = vshrl.u32 %v7844, 7
    %v7846 = vsub.s32 4, %v7845
    %v7847 = vrot.slane %v7826, %v7846
    %v7848 = vlaneseq
    %v7849 = vshrl.u32 %v7848, 7
    %v7850 = vsub.s32 5, %v7849
    %v7851 = vrot.slane %v7826, %v7850
    %v7852 = vlaneseq
    %v7853 = vshrl.u32 %v7852, 7
    %v7854 = vsub.s32 6, %v7853
    %v7855 = vrot.slane %v7826, %v7854
    %v7856 = vlaneseq
    %v7857 = vshrl.u32 %v7856, 7
    %v7858 = vsub.s32 7, %v7857
    %v7859 = vrot.slane %v7826, %v7858
    %v7868 = vadd.f32 %v7697, %v7831
    %v7869 = vadd.f32 %v7699, %v7835
    %v7870 = vadd.f32 %v7738, %v7839
    %v7871 = vadd.f32 %v7740, %v7843
    %v7872 = vadd.f32 %v7779, %v7847
    %v7873 = vadd.f32 %v7781, %v7851
    %v7874 = vadd.f32 %v7820, %v7855
    %v7875 = vadd.f32 %v7822, %v7859
    %v7876 = vxor.u32 %v7868, 2147483648
    %v7877 = vxor.u32 %v7869, 2147483648
    %v7878 = vmul.f32 %v7876, 1.442695
    %v7879 = vpow.pop %v7878
    %v7880 = vmul.f32 %v7877, 1.442695
    %v7881 = vpow.pop %v7880
    %v7882 = vadd.f32 %v7879, 1.0
    %v7883 = vadd.f32 %v7881, 1.0
    %v7884 = vrcp.pop %v7882
    %v7885 = vmul.f32 1.0, %v7884
    %v7886 = vrcp.pop %v7883
    %v7887 = vmul.f32 1.0, %v7886
    %v7888 = vxor.u32 %v7870, 2147483648
    %v7889 = vxor.u32 %v7871, 2147483648
    %v7890 = vmul.f32 %v7888, 1.442695
    %v7891 = vpow.pop %v7890
    %v7892 = vmul.f32 %v7889, 1.442695
    %v7893 = vpow.pop %v7892
    %v7894 = vadd.f32 %v7891, 1.0
    %v7895 = vadd.f32 %v7893, 1.0
    %v7896 = vrcp.pop %v7894
    %v7897 = vmul.f32 1.0, %v7896
    %v7898 = vrcp.pop %v7895
    %v7899 = vmul.f32 1.0, %v7898
    %v7900 = vtanh.pop %v7872
    %v7901 = vtanh.pop %v7873
    %v7902 = vxor.u32 %v7874, 2147483648
    %v7903 = vxor.u32 %v7875, 2147483648
    %v7904 = vmul.f32 %v7902, 1.442695
    %v7905 = vpow.pop %v7904
    %v7906 = vmul.f32 %v7903, 1.442695
    %v7907 = vpow.pop %v7906
    %v7908 = vadd.f32 %v7905, 1.0
    %v7909 = vadd.f32 %v7907, 1.0
    %v7910 = vrcp.pop %v7908
    %v7911 = vmul.f32 1.0, %v7910
    %v7912 = vrcp.pop %v7909
    %v7913 = vmul.f32 1.0, %v7912
    %v7914 = vld [vmem:[%s9] sm:$0xf]
    %v7917 = vunpack.c.l.s4 1983009808
    %v7918 = vunpack.c.0.s8 %v7917
    %v7919 = vlaneseq
    %v7920 = vshrl.u32 %v7919, 7
    %v7921 = vsub.s32 %v7918, %v7920
    %v7922 = vrot.slane %v7914, %v7921
    %v7923 = vcombine.high %v7922, %v7922
    %v7926 = vmul.f32 %v7897, %v7922
    %v7927 = vmul.f32 %v7899, %v7923
    %v7928 = vmul.f32 %v7885, %v7900
    %v7929 = vmul.f32 %v7887, %v7901
    %v7930 = vadd.f32 %v7926, %v7928
    %v7931 = vadd.f32 %v7927, %v7929
    %v7932 = vtanh.pop %v7930
    %v7933 = vtanh.pop %v7931
    %v7934 = vmul.f32 %v7911, %v7932
    %v7935 = vmul.f32 %v7913, %v7933
    %v7938 = vcombine.low %v7934, %v7935
    %v7940 = vunpack.c.l.s4 1983009808
    %v7941 = vunpack.c.0.s8 %v7940
    %v7942 = vlaneseq
    %v7943 = vshrl.u32 %v7942, 7
    %v7944 = vsub.s32 %v7941, %v7943
    %v7945 = vrot.slane %v7938, %v7944
    %7947 = vst [vmem:[#allocation4] sm:$0xf] %v7945
    %v7950 = vcombine.low %v7930, %v7931
    %v7952 = vunpack.c.l.s4 1983009808
    %v7953 = vunpack.c.0.s8 %v7952
    %v7954 = vlaneseq
    %v7955 = vshrl.u32 %v7954, 7
    %v7956 = vsub.s32 %v7953, %v7955
    %v7957 = vrot.slane %v7950, %v7956
    %7959 = vst [vmem:[#allocation6] sm:$0xf] %v7957
    %v7960 = vpack.c.bf16 %v7934, %v7934
    %v7961 = vpack.c.bf16 %v7935, %v7935
    %v7962 = vld [vmem:[%s14] sm:$0xf]
    %v7963 = vld [vmem:[%s14 + $0x4] sm:$0xf]
    %v7964 = vld [vmem:[%s14 + $0x8] sm:$0xf]
    %v7965 = vld [vmem:[%s14 + $0xc] sm:$0xf]
    %v7966 = vld [vmem:[%s14 + $0x10] sm:$0xf]
    %v7967 = vld [vmem:[%s14 + $0x14] sm:$0xf]
    %v7968 = vld [vmem:[%s14 + $0x18] sm:$0xf]
    %v7969 = vld [vmem:[%s14 + $0x1c] sm:$0xf]
    %v7970 = vld [vmem:[%s14 + $0x20] sm:$0xf]
    %v7971 = vld [vmem:[%s14 + $0x24] sm:$0xf]
    %v7972 = vld [vmem:[%s14 + $0x28] sm:$0xf]
    %v7973 = vld [vmem:[%s14 + $0x2c] sm:$0xf]
    %v7974 = vld [vmem:[%s14 + $0x30] sm:$0xf]
    %v7975 = vld [vmem:[%s14 + $0x34] sm:$0xf]
    %v7976 = vld [vmem:[%s14 + $0x38] sm:$0xf]
    %v7977 = vld [vmem:[%s14 + $0x3c] sm:$0xf]
    %v7978 = vld [vmem:[%s14 + $0x40] sm:$0xf]
    %v7979 = vld [vmem:[%s14 + $0x44] sm:$0xf]
    %v7980 = vld [vmem:[%s14 + $0x48] sm:$0xf]
    %v7981 = vld [vmem:[%s14 + $0x4c] sm:$0xf]
    %v7982 = vld [vmem:[%s14 + $0x50] sm:$0xf]
    %v7983 = vld [vmem:[%s14 + $0x54] sm:$0xf]
    %v7984 = vld [vmem:[%s14 + $0x58] sm:$0xf]
    %v7985 = vld [vmem:[%s14 + $0x5c] sm:$0xf]
    %v7986 = vld [vmem:[%s14 + $0x60] sm:$0xf]
    %v7987 = vld [vmem:[%s14 + $0x64] sm:$0xf]
    %v7988 = vld [vmem:[%s14 + $0x68] sm:$0xf]
    %v7989 = vld [vmem:[%s14 + $0x6c] sm:$0xf]
    %v7990 = vld [vmem:[%s14 + $0x70] sm:$0xf]
    %v7991 = vld [vmem:[%s14 + $0x74] sm:$0xf]
    %v7992 = vld [vmem:[%s14 + $0x78] sm:$0xf]
    %v7993 = vld [vmem:[%s14 + $0x7c] sm:$0xf]
    %v7994 = vld [vmem:[%s13] sm:$0x3]
    %v7995 = vpack.c.bf16 %v7994, %v7994
    %v7996 = vld [vmem:[%s15] sm:$0xf]
    %v7997 = vld [vmem:[%s15 + $0x4] sm:$0xf]
    %v7998 = vld [vmem:[%s15 + $0x8] sm:$0xf]
    %v7999 = vld [vmem:[%s15 + $0xc] sm:$0xf]
    %v8004 = vunpack.c.l.b16 %v7996
    %v8005 = vunpack.c.l.b16 %v7997
    %v8006 = vunpack.c.l.b16 %v7998
    %v8007 = vunpack.c.l.b16 %v7999
    %v8008 = vpack.c.b16 %v8005, %v8004
    %v8009 = vpack.c.b16 %v8007, %v8006
    %vm8012 = vcmask 261120
    %v8014 = vsel %vm8012, %v7995, 0
    %8016 = vmatprep.subr.bf16.mxu0 0
    %8017 = vmatpush1.bf16.msra.mxu0 %v8008
    %8018 = vmatprep.subr.bf16.mxu0 0
    %8019 = vmatpush1.bf16.msra.mxu0 %v8009
    %8020 = vmatprep.subr.bf16.mxu0 0
    %8021 = vmatpush1.bf16.msra.mxu0 0
    %8022 = vmatprep.subr.bf16.mxu0 0
    %8023 = vmatpush1.bf16.msra.mxu0 0
    %8024 = vmatprep.subr.bf16.mxu0 0
    %8025 = vmatpush1.bf16.msra.mxu0 0
    %8026 = vmatprep.subr.bf16.mxu0 0
    %8027 = vmatpush1.bf16.msra.mxu0 0
    %8028 = vmatprep.subr.bf16.mxu0 0
    %8029 = vmatpush1.bf16.msra.mxu0 0
    %8030 = vmatprep.subr.bf16.mxu0 0
    %8031 = vmatpush1.bf16.msra.mxu0 0
    %8032 = vmatprep.subr.bf16.mxu0 0
    %8033 = vmatpush1.bf16.msra.mxu0 0
    %8034 = vmatprep.subr.bf16.mxu0 0
    %8035 = vmatpush1.bf16.msra.mxu0 0
    %8036 = vmatprep.subr.bf16.mxu0 0
    %8037 = vmatpush1.bf16.msra.mxu0 0
    %8038 = vmatprep.subr.bf16.mxu0 0
    %8039 = vmatpush1.bf16.msra.mxu0 0
    %8040 = vmatprep.subr.bf16.mxu0 0
    %8041 = vmatpush1.bf16.msra.mxu0 0
    %8042 = vmatprep.subr.bf16.mxu0 0
    %8043 = vmatpush1.bf16.msra.mxu0 0
    %8044 = vmatprep.subr.bf16.mxu0 0
    %8045 = vmatpush1.bf16.msra.mxu0 0
    %8046 = vmatprep.subr.bf16.mxu0 0
    %8047 = vmatpush1.bf16.msra.mxu0 0
    %8048 = vmatprep.mubr.bf16.mxu0 0
    %8049 = vmatmul.mubr.bf16.gmra.mrb[0].mxu0 %v8014
    %v8050 = vpop.f32.mrb[0].mxu0
    %v8051 = vadd.f32 0.0, %v8050
    %v8052 = vpop.f32.mrb[0].mxu0
    %v8053 = vpop.f32.mrb[0].mxu0
    %v8054 = vpop.f32.mrb[0].mxu0
    %8055 = vdwg.mxu0
    %v8088 = vunpack.c.l.b16 %v7962
    %v8089 = vunpack.c.l.b16 %v7963
    %v8090 = vunpack.c.l.b16 %v7964
    %v8091 = vunpack.c.l.b16 %v7965
    %v8092 = vunpack.c.l.b16 %v7966
    %v8093 = vunpack.c.l.b16 %v7967
    %v8094 = vunpack.c.l.b16 %v7968
    %v8095 = vunpack.c.l.b16 %v7969
    %v8096 = vunpack.c.l.b16 %v7970
    %v8097 = vunpack.c.l.b16 %v7971
    %v8098 = vunpack.c.l.b16 %v7972
    %v8099 = vunpack.c.l.b16 %v7973
    %v8100 = vunpack.c.l.b16 %v7974
    %v8101 = vunpack.c.l.b16 %v7975
    %v8102 = vunpack.c.l.b16 %v7976
    %v8103 = vunpack.c.l.b16 %v7977
    %v8104 = vunpack.c.l.b16 %v7978
    %v8105 = vunpack.c.l.b16 %v7979
    %v8106 = vunpack.c.l.b16 %v7980
    %v8107 = vunpack.c.l.b16 %v7981
    %v8108 = vunpack.c.l.b16 %v7982
    %v8109 = vunpack.c.l.b16 %v7983
    %v8110 = vunpack.c.l.b16 %v7984
    %v8111 = vunpack.c.l.b16 %v7985
    %v8112 = vunpack.c.l.b16 %v7986
    %v8113 = vunpack.c.l.b16 %v7987
    %v8114 = vunpack.c.l.b16 %v7988
    %v8115 = vunpack.c.l.b16 %v7989
    %v8116 = vunpack.c.l.b16 %v7990
    %v8117 = vunpack.c.l.b16 %v7991
    %v8118 = vunpack.c.l.b16 %v7992
    %v8119 = vunpack.c.l.b16 %v7993
    %v8120 = vpack.c.b16 %v8089, %v8088
    %v8121 = vpack.c.b16 %v8091, %v8090
    %v8122 = vpack.c.b16 %v8093, %v8092
    %v8123 = vpack.c.b16 %v8095, %v8094
    %v8124 = vpack.c.b16 %v8097, %v8096
    %v8125 = vpack.c.b16 %v8099, %v8098
    %v8126 = vpack.c.b16 %v8101, %v8100
    %v8127 = vpack.c.b16 %v8103, %v8102
    %v8128 = vpack.c.b16 %v8105, %v8104
    %v8129 = vpack.c.b16 %v8107, %v8106
    %v8130 = vpack.c.b16 %v8109, %v8108
    %v8131 = vpack.c.b16 %v8111, %v8110
    %v8132 = vpack.c.b16 %v8113, %v8112
    %v8133 = vpack.c.b16 %v8115, %v8114
    %v8134 = vpack.c.b16 %v8117, %v8116
    %v8135 = vpack.c.b16 %v8119, %v8118
    %8152 = vmatprep.subr.bf16.mxu0 0
    %8153 = vmatpush1.bf16.msra.mxu0 %v8120
    %8154 = vmatprep.subr.bf16.mxu0 0
    %8155 = vmatpush1.bf16.msra.mxu0 %v8121
    %8156 = vmatprep.subr.bf16.mxu0 0
    %8157 = vmatpush1.bf16.msra.mxu0 %v8122
    %8158 = vmatprep.subr.bf16.mxu0 0
    %8159 = vmatpush1.bf16.msra.mxu0 %v8123
    %8160 = vmatprep.subr.bf16.mxu0 0
    %8161 = vmatpush1.bf16.msra.mxu0 %v8124
    %8162 = vmatprep.subr.bf16.mxu0 0
    %8163 = vmatpush1.bf16.msra.mxu0 %v8125
    %8164 = vmatprep.subr.bf16.mxu0 0
    %8165 = vmatpush1.bf16.msra.mxu0 %v8126
    %8166 = vmatprep.subr.bf16.mxu0 0
    %8167 = vmatpush1.bf16.msra.mxu0 %v8127
    %8168 = vmatprep.subr.bf16.mxu0 0
    %8169 = vmatpush1.bf16.msra.mxu0 %v8128
    %8170 = vmatprep.subr.bf16.mxu0 0
    %8171 = vmatpush1.bf16.msra.mxu0 %v8129
    %8172 = vmatprep.subr.bf16.mxu0 0
    %8173 = vmatpush1.bf16.msra.mxu0 %v8130
    %8174 = vmatprep.subr.bf16.mxu0 0
    %8175 = vmatpush1.bf16.msra.mxu0 %v8131
    %8176 = vmatprep.subr.bf16.mxu0 0
    %8177 = vmatpush1.bf16.msra.mxu0 %v8132
    %8178 = vmatprep.subr.bf16.mxu0 0
    %8179 = vmatpush1.bf16.msra.mxu0 %v8133
    %8180 = vmatprep.subr.bf16.mxu0 0
    %8181 = vmatpush1.bf16.msra.mxu0 %v8134
    %8182 = vmatprep.subr.bf16.mxu0 0
    %8183 = vmatpush1.bf16.msra.mxu0 %v8135
    %8184 = vmatprep.mubr.bf16.mxu0 %v7961
    %8185 = vmatmul.mubr.bf16.gmra.mrb[0].mxu0 %v7960
    %v8186 = vpop.f32.mrb[0].mxu0
    %v8187 = vadd.f32 %v8051, %v8186
    %v8188 = vpop.f32.mrb[0].mxu0
    %v8189 = vpop.f32.mrb[0].mxu0
    %v8190 = vpop.f32.mrb[0].mxu0
    %8191 = vdwg.mxu0
    %v8192 = vld [vmem:[%s16] sm:$0x1]
    %v8194 = vlaneseq
    %v8195 = vshrl.u32 %v8194, 7
    %v8196 = vsub.s32 0, %v8195
    %v8197 = vrot.slane %v8192, %v8196
    %v8199 = vadd.f32 %v8187, %v8197
    %8200 = vst [vmem:[#allocation2] sm:$0x3] %v8199
    // Predicated region
    $region70: #{ga_forward.5} parent=1 // pred_check
      _
    $region71: #{ga_forward.5} parent=1 // pred_check_branch
      %8202 = sbr.rel (0) target = $region73
    $region72: #{ga_forward.5} parent=1 // pred_region
      %s8204 = ssub.s32 32, 32
      %8205 = vsyncadd [#allocation3], %s8204
      %s8207 = sshll.u32 [#allocation2], 4
      %s8208 = int_to_ptr.vmem [resolvable:$true] %s8207
      %8210 = dma.vmem_to_hbm [thread:$0]  %s8208, 32, %s17, [#allocation3]
    $region73: #{ga_forward.5} parent=1 // pred_fallthru
      _
    // Predicated region
    $region74: #{ga_forward.5} parent=1 // pred_check
      _
    $region75: #{ga_forward.5} parent=1 // pred_check_branch
      %8212 = sbr.rel (0) target = $region77
    $region76: #{ga_forward.5} parent=1 // pred_region
      %s8214 = ssub.s32 64, 64
      %8215 = vsyncadd [#allocation5], %s8214
      %s8217 = sshll.u32 [#allocation4], 4
      %s8218 = int_to_ptr.vmem [resolvable:$true] %s8217
      %8220 = dma.vmem_to_hbm [thread:$0]  %s8218, 64, %s18, [#allocation5]
    $region77: #{ga_forward.5} parent=1 // pred_fallthru
      _
    // Predicated region
    $region78: #{ga_forward.5} parent=1 // pred_check
      _
    $region79: #{ga_forward.5} parent=1 // pred_check_branch
      %8222 = sbr.rel (0) target = $region81
    $region80: #{ga_forward.5} parent=1 // pred_region
      %s8224 = ssub.s32 64, 64
      %8225 = vsyncadd [#allocation5], %s8224
      %s8227 = sshll.u32 [#allocation6], 4
      %s8228 = int_to_ptr.vmem [resolvable:$true] %s8227
      %8230 = dma.vmem_to_hbm [thread:$0]  %s8228, 64, %s19, [#allocation5]
    $region81: #{ga_forward.5} parent=1 // pred_fallthru
      _
    // Predicated region
    $region82: #{ga_forward.5} parent=1 // pred_check
      _
    $region83: #{ga_forward.5} parent=1 // pred_check_branch
      %8232 = sbr.rel (0) target = $region85
    $region84: #{ga_forward.5} parent=1 // pred_region
      %8233 = dma.done [#allocation3], 32
    $region85: #{ga_forward.5} parent=1 // pred_fallthru
      _
    // Predicated region
    $region86: #{ga_forward.5} parent=1 // pred_check
      _
    $region87: #{ga_forward.5} parent=1 // pred_check_branch
      %8235 = sbr.rel (0) target = $region89
    $region88: #{ga_forward.5} parent=1 // pred_region
      %8236 = dma.done [#allocation5], 64
    $region89: #{ga_forward.5} parent=1 // pred_fallthru
      _
    // Predicated region
    $region90: #{ga_forward.5} parent=1 // pred_check
      _
    $region91: #{ga_forward.5} parent=1 // pred_check_branch
      %8238 = sbr.rel (0) target = $region93
    $region92: #{ga_forward.5} parent=1 // pred_region
      %8239 = dma.done [#allocation5], 64
    $region93: #{ga_forward.5} parent=1 // pred_fallthru
      _
    %8240 = vsyncpa [#allocation3], 1
    %8241 = vsyncpa [#allocation5], 1

</llo_original>
